<compile_context>
chip_gen: v5e
topology: v5e:2x2
jax: 0.10.0
libtpu: 0.0.40
codegen_flags: <defaults>
</compile_context>

<pallas_src>
import functools

import jax
import jax.numpy as jnp
from jax import lax
from jax.experimental import pallas as pl
from jax.experimental.pallas import tpu as pltpu

NEG_SLOPE = 0.1


def _round_up(x, m):
    return (x + m - 1) // m * m


def _fused_weighting_kernel(x_ref, w1_ref, b1_ref, w2_ref, b2_ref, w3_ref,
                            b3_ref, o_ref, y1_ref, y2_ref, stg1_ref, stg2_ref,
                            *, H, W, Wp):
    """All three conv layers for one batch element; intermediates stay in VMEM.

    Activation layout ("flat padded"): shape ((H+2)*Wp, C) where row r = a*Wp + j
    holds pixel (a-1, j-1) for 1 <= a <= H, 1 <= j <= W and zeros elsewhere.
    Wp = round_up(W+2, 8) keeps every row slab sublane-aligned.
    """
    M = H * Wp

    # Valid (non-halo) columns of each flattened row: j in [1, W].
    col = lax.broadcasted_iota(jnp.int32, (M, 1), 0) % Wp
    valid = jnp.logical_and(col >= 1, col <= W)

    def conv_mxu(load_slab, w_ref, b_ref, dst_ref, stg_ref):
        """3x3 conv + bias + leaky_relu on the MXU (bf16 in, f32 accumulate).

        dx = 0/2 taps need the accumulator shifted by -/+ one flat row; the shift
        is done on the narrow Cout side through a small staging scratch (aligned
        store, +-1-row reload) instead of re-slicing the wide input 9 times.
        """
        cout = w_ref.shape[-1]
        accs = [jnp.zeros((M, cout), jnp.float32) for _ in range(3)]
        for dy in range(3):
            slab = load_slab(dy)                           # (M, Cin) bf16, aligned
            for dx in range(3):
                accs[dx] += jnp.dot(slab, w_ref[3 * dy + dx],
                                    preferred_element_type=jnp.float32)

        # Guard rows so stale scratch never feeds the (masked) edge rows.
        edge = jnp.zeros((8, cout), jnp.float32)
        stg_ref[0:8, :] = edge
        stg_ref[8 + M:16 + M, :] = edge

        # acc[r] = accs0[r-1] + accs1[r] + accs2[r+1]
        stg_ref[8:8 + M, :] = accs[0]
        acc = accs[1] + stg_ref[7:7 + M, :]
        stg_ref[8:8 + M, :] = accs[2]
        acc = acc + stg_ref[9:9 + M, :]

        acc = acc + b_ref[...]
        acc = jnp.where(acc >= 0, acc, NEG_SLOPE * acc)    # leaky_relu(0.1)
        acc = jnp.where(valid, acc, 0.0)                   # re-zero halo columns

        zeros_row = jnp.zeros((Wp, cout), dst_ref.dtype)
        dst_ref[0:Wp, :] = zeros_row                       # top halo row
        dst_ref[Wp:Wp + M, :] = acc.astype(dst_ref.dtype)  # interior rows
        dst_ref[Wp + M:Wp + M + Wp, :] = zeros_row         # bottom halo row

    # ---- layer 1: Cin -> 196 (bf16 MXU, y1 stays in VMEM as bf16) ----
    conv_mxu(lambda dy: x_ref[0, dy * Wp:dy * Wp + M, :],
             w1_ref, b1_ref, y1_ref, stg1_ref)
    # ---- layer 2: 196 -> 64 (bf16 MXU, y2 stays in VMEM as f32) ----
    conv_mxu(lambda dy: y1_ref[dy * Wp:dy * Wp + M, :],
             w2_ref, b2_ref, y2_ref, stg2_ref)

    # ---- layer 3: 64 -> 1 on the VPU/XLU: an MXU matmul would be <1% utilized
    #      and a 1-lane output would hit masked stores; instead multiply by the
    #      per-tap weight vector, reduce over the 64 lanes, combine dx by cheap
    #      lane slices, and store a lane-dense (H, W) slab. ----
    c2 = w3_ref.shape[-1]
    accs = [jnp.zeros((H, Wp), jnp.float32) for _ in range(3)]
    for dy in range(3):
        slab = y2_ref[dy * Wp:dy * Wp + M, :].reshape(H, Wp, c2)    # f32
        for dx in range(3):
            w_vec = w3_ref[3 * dy + dx].reshape(1, 1, c2)           # f32
            accs[dx] += jnp.sum(slab * w_vec, axis=-1)              # lane reduce
    out = (accs[0][:, 0:W] + accs[1][:, 1:W + 1] + accs[2][:, 2:W + 2]
           + b3_ref[...])                                           # (H, W)
    o_ref[...] = out.reshape(1, H, W).astype(o_ref.dtype)


def weighting_net_forward(x_nchw, params):
    """Pallas implementation of WeightingNet.forward (NCHW in / NCHW out)."""
    N, cin, H, W = x_nchw.shape
    c1 = params["w1"].shape[-1]
    c2 = params["w2"].shape[-1]
    Wp = _round_up(W + 2, 8)
    HpWp = (H + 2) * Wp
    M = H * Wp

    # NCHW -> NHWC, single zero-pad (H by 1; W to the aligned padded width),
    # flatten rows, bf16 for the MXU.  This is the only activation pad pass.
    x = jnp.transpose(x_nchw.astype(jnp.bfloat16), (0, 2, 3, 1))
    x = jnp.pad(x, ((0, 0), (1, 1), (1, Wp - W - 1), (0, 0)))
    x = x.reshape(N, HpWp, cin)

    w1 = params["w1"].astype(jnp.bfloat16).reshape(9, cin, c1)
    w2 = params["w2"].astype(jnp.bfloat16).reshape(9, c1, c2)
    w3 = params["w3"].astype(jnp.float32).reshape(9, 1, c2)
    b1 = params["b1"].astype(jnp.float32)
    b2 = params["b2"].astype(jnp.float32)
    b3 = params["b3"].astype(jnp.float32)

    kernel = functools.partial(_fused_weighting_kernel, H=H, W=W, Wp=Wp)

    flops = 2 * N * H * W * 9 * (cin * c1 + c1 * c2 + c2 * 1)
    bytes_accessed = (x.size * 2 + w1.size * 2 + w2.size * 2 + w3.size * 4
                      + (b1.size + b2.size + b3.size) * 4 + N * H * W * 4)

    # TODO(synk): for large images add spatial (row) tiling with a 1-pixel halo so
    # the per-step block fits v7x's 64 MiB VMEM and both TensorCores get work even
    # at batch 1; at these sizes the whole image fits comfortably per grid step.
    out = pl.pallas_call(
        kernel,
        out_shape=jax.ShapeDtypeStruct((N, H, W), jnp.float32),
        grid=(N,),
        in_specs=[
            pl.BlockSpec((1, HpWp, cin), lambda n: (n, 0, 0)),
            pl.BlockSpec((9, cin, c1), lambda n: (0, 0, 0)),
            pl.BlockSpec((1, c1), lambda n: (0, 0)),
            pl.BlockSpec((9, c1, c2), lambda n: (0, 0, 0)),
            pl.BlockSpec((1, c2), lambda n: (0, 0)),
            pl.BlockSpec((9, 1, c2), lambda n: (0, 0, 0)),
            pl.BlockSpec((1, 1), lambda n: (0, 0)),
        ],
        out_specs=pl.BlockSpec((1, H, W), lambda n: (n, 0, 0)),
        scratch_shapes=[
            pltpu.VMEM((HpWp, c1), jnp.bfloat16),   # y1 (padded, VMEM-resident)
            pltpu.VMEM((HpWp, c2), jnp.float32),    # y2 (padded, VMEM-resident)
            pltpu.VMEM((M + 16, c1), jnp.float32),  # staging for +-1 row shift
            pltpu.VMEM((M + 16, c2), jnp.float32),
        ],
        compiler_params=pltpu.CompilerParams(
            dimension_semantics=("parallel",),
            vmem_limit_bytes=64 * 1024 * 1024),
        cost_estimate=pl.CostEstimate(flops=flops, transcendentals=0,
                                      bytes_accessed=bytes_accessed),
    )(x, w1, b1, w2, b2, w3, b3)

    return out[:, None, :, :]   # (N, 1, H, W)


def init_params(key, cin=352, cout=1):
    """Deterministic synthetic parameters (shapes match the nn.Conv2d layers)."""
    ks = jax.random.split(key, 6)

    def w(k, ci, co):
        fan_in = ci * 9
        return jax.random.normal(k, (3, 3, ci, co), jnp.float32) / jnp.sqrt(
            jnp.float32(fan_in))

    def b(k, co):
        return jax.random.normal(k, (1, co), jnp.float32) * 0.01

    return dict(
        w1=w(ks[0], cin, 196), b1=b(ks[1], 196),
        w2=w(ks[2], 196, 64), b2=b(ks[3], 64),
        w3=w(ks[4], 64, cout), b3=b(ks[5], cout),
    )


def ref_forward(x_nchw, params):
    """Pure-JAX f32 reference (semantics of the PyTorch module)."""
    x = jnp.transpose(x_nchw, (0, 2, 3, 1))

    def conv(x, w, b):
        y = lax.conv_general_dilated(
            x, w, window_strides=(1, 1), padding="SAME",
            dimension_numbers=("NHWC", "HWIO", "NHWC"))
        return y + b.reshape(1, 1, 1, -1)

    x = jax.nn.leaky_relu(conv(x, params["w1"], params["b1"]), NEG_SLOPE)
    x = jax.nn.leaky_relu(conv(x, params["w2"], params["b2"]), NEG_SLOPE)
    x = conv(x, params["w3"], params["b3"])
    return jnp.transpose(x, (0, 3, 1, 2))


if __name__ == "__main__":
    key = jax.random.PRNGKey(0)
    kx, kp = jax.random.split(key)

    # Small shapes consistent with the module defaults (input=352, output=1).
    N, Cin, H, W = 2, 352, 8, 8
    x = jax.random.normal(kx, (N, Cin, H, W), jnp.float32)
    params = init_params(kp, cin=Cin, cout=1)

    out = jax.block_until_ready(weighting_net_forward(x, params))
    ref = jax.block_until_ready(ref_forward(x, params))

    assert out.shape == (N, 1, H, W), out.shape
    err = float(jnp.max(jnp.abs(out - ref)))
    # bf16 matmuls (f32 accumulation) vs. the f32 reference -> loosened tolerance.
    assert jnp.allclose(out, ref, atol=5e-2, rtol=5e-2), f"max abs err {err}"
    print("KERNEL_OK")
</pallas_src>

<mosaic_0001>
module attributes {stable_mosaic.version = 11 : i64} {
  func.func @_fused_weighting_kernel(%arg0: i32, %arg1: memref<1x160x352xbf16, #tpu.memory_space<vmem>>, %arg2: memref<9x352x196xbf16, #tpu.memory_space<vmem>>, %arg3: memref<1x196xf32, #tpu.memory_space<vmem>>, %arg4: memref<9x196x64xbf16, #tpu.memory_space<vmem>>, %arg5: memref<1x64xf32, #tpu.memory_space<vmem>>, %arg6: memref<9x1x64xf32, #tpu.memory_space<vmem>>, %arg7: memref<1x1xf32, #tpu.memory_space<vmem>>, %arg8: memref<1x8x8xf32, #tpu.memory_space<vmem>>, %arg9: memref<160x196xbf16, #tpu.memory_space<vmem>>, %arg10: memref<160x64xf32, #tpu.memory_space<vmem>>, %arg11: memref<144x196xf32, #tpu.memory_space<vmem>>, %arg12: memref<144x64xf32, #tpu.memory_space<vmem>>) attributes {dimension_semantics = [#tpu.dimension_semantics<parallel>], iteration_bounds = array<i64: 2>, scalar_prefetch = 0 : i64, scratch_operands = 4 : i64, tpu.core_type = #tpu.core_type<tc>, window_params = [{transform_indices = @transform_0, window_bounds = array<i64: 1, 160, 352>}, {pipeline_mode = #tpu.pipeline_mode<synchronous>, transform_indices = @transform_1, window_bounds = array<i64: 9, 352, 196>}, {pipeline_mode = #tpu.pipeline_mode<synchronous>, transform_indices = @transform_2, window_bounds = array<i64: 1, 196>}, {pipeline_mode = #tpu.pipeline_mode<synchronous>, transform_indices = @transform_3, window_bounds = array<i64: 9, 196, 64>}, {pipeline_mode = #tpu.pipeline_mode<synchronous>, transform_indices = @transform_4, window_bounds = array<i64: 1, 64>}, {pipeline_mode = #tpu.pipeline_mode<synchronous>, transform_indices = @transform_5, window_bounds = array<i64: 9, 1, 64>}, {pipeline_mode = #tpu.pipeline_mode<synchronous>, transform_indices = @transform_6, window_bounds = array<i64: 1, 1>}, {transform_indices = @transform_7, window_bounds = array<i64: 1, 8, 8>}]} {
    %0 = tpu.iota {dimensions = array<i32: 0>} : vector<128x1xi32>
    %c16_i32 = arith.constant 16 : i32
    %c0_i32 = arith.constant 0 : i32
    %1 = arith.cmpi eq, %c16_i32, %c0_i32 : i32
    %c1_i32 = arith.constant 1 : i32
    %2 = arith.select %1, %c1_i32, %c16_i32 : i32
    %3 = vector.broadcast %2 : i32 to vector<128x1xi32>
    %4 = arith.remsi %0, %3 : vector<128x1xi32>
    %c0_i32_0 = arith.constant 0 : i32
    %5 = vector.broadcast %c0_i32_0 : i32 to vector<128x1xi32>
    %6 = arith.cmpi ne, %4, %5 : vector<128x1xi32>
    %c0_i32_1 = arith.constant 0 : i32
    %7 = vector.broadcast %c0_i32_1 : i32 to vector<128x1xi32>
    %8 = arith.cmpi slt, %4, %7 : vector<128x1xi32>
    %c0_i32_2 = arith.constant 0 : i32
    %9 = arith.cmpi slt, %2, %c0_i32_2 : i32
    %10 = vector.broadcast %9 : i1 to vector<128x1xi1>
    %11 = vector.broadcast %10 : vector<128x1xi1> to vector<128x1xi1>
    %12 = arith.xori %8, %11 : vector<128x1xi1>
    %13 = arith.andi %12, %6 : vector<128x1xi1>
    %14 = vector.broadcast %2 : i32 to vector<128x1xi32>
    %15 = arith.addi %4, %14 : vector<128x1xi32>
    %16 = arith.select %13, %15, %4 : vector<128x1xi1>, vector<128x1xi32>
    %c1_i32_3 = arith.constant 1 : i32
    %17 = vector.broadcast %c1_i32_3 : i32 to vector<128x1xi32>
    %18 = arith.cmpi sge, %16, %17 : vector<128x1xi32>
    %c8_i32 = arith.constant 8 : i32
    %19 = vector.broadcast %c8_i32 : i32 to vector<128x1xi32>
    %20 = arith.cmpi sle, %16, %19 : vector<128x1xi32>
    %21 = arith.andi %18, %20 : vector<128x1xi1>
    %cst = arith.constant 0.000000e+00 : f32
    %22 = vector.broadcast %cst : f32 to vector<128x196xf32>
    %cst_4 = arith.constant 0.000000e+00 : f32
    %23 = vector.broadcast %cst_4 : f32 to vector<128x196xf32>
    %cst_5 = arith.constant 0.000000e+00 : f32
    %24 = vector.broadcast %cst_5 : f32 to vector<128x196xf32>
    %c0 = arith.constant 0 : index
    %c0_6 = arith.constant 0 : index
    %c0_7 = arith.constant 0 : index
    %25 = vector.load %arg1[%c0, %c0_6, %c0_7] : memref<1x160x352xbf16, #tpu.memory_space<vmem>>, vector<1x128x352xbf16>
    %26 = vector.shape_cast %25 : vector<1x128x352xbf16> to vector<128x352xbf16>
    %c0_8 = arith.constant 0 : index
    %c0_9 = arith.constant 0 : index
    %c0_10 = arith.constant 0 : index
    %27 = vector.load %arg2[%c0_8, %c0_9, %c0_10] : memref<9x352x196xbf16, #tpu.memory_space<vmem>>, vector<1x352x196xbf16>
    %28 = vector.shape_cast %27 : vector<1x352x196xbf16> to vector<352x196xbf16>
    %cst_11 = arith.constant dense<0.000000e+00> : vector<128x196xf32>
    %29 = tpu.matmul %26, %28, %cst_11 {dimension_numbers = #tpu.dot_dimension_numbers<[1], [0], [0], [1], [0, 0, 1, 1], [], []>} : vector<128x352xbf16>, vector<352x196xbf16>, vector<128x196xf32> -> vector<128x196xf32>
    %30 = arith.addf %22, %29 : vector<128x196xf32>
    %c1 = arith.constant 1 : index
    %c0_12 = arith.constant 0 : index
    %c0_13 = arith.constant 0 : index
    %31 = vector.load %arg2[%c1, %c0_12, %c0_13] : memref<9x352x196xbf16, #tpu.memory_space<vmem>>, vector<1x352x196xbf16>
    %32 = vector.shape_cast %31 : vector<1x352x196xbf16> to vector<352x196xbf16>
    %cst_14 = arith.constant dense<0.000000e+00> : vector<128x196xf32>
    %33 = tpu.matmul %26, %32, %cst_14 {dimension_numbers = #tpu.dot_dimension_numbers<[1], [0], [0], [1], [0, 0, 1, 1], [], []>} : vector<128x352xbf16>, vector<352x196xbf16>, vector<128x196xf32> -> vector<128x196xf32>
    %34 = arith.addf %23, %33 : vector<128x196xf32>
    %c2 = arith.constant 2 : index
    %c0_15 = arith.constant 0 : index
    %c0_16 = arith.constant 0 : index
    %35 = vector.load %arg2[%c2, %c0_15, %c0_16] : memref<9x352x196xbf16, #tpu.memory_space<vmem>>, vector<1x352x196xbf16>
    %36 = vector.shape_cast %35 : vector<1x352x196xbf16> to vector<352x196xbf16>
    %cst_17 = arith.constant dense<0.000000e+00> : vector<128x196xf32>
    %37 = tpu.matmul %26, %36, %cst_17 {dimension_numbers = #tpu.dot_dimension_numbers<[1], [0], [0], [1], [0, 0, 1, 1], [], []>} : vector<128x352xbf16>, vector<352x196xbf16>, vector<128x196xf32> -> vector<128x196xf32>
    %38 = arith.addf %24, %37 : vector<128x196xf32>
    %c0_18 = arith.constant 0 : index
    %c16 = arith.constant 16 : index
    %c0_19 = arith.constant 0 : index
    %39 = vector.load %arg1[%c0_18, %c16, %c0_19] : memref<1x160x352xbf16, #tpu.memory_space<vmem>>, vector<1x128x352xbf16>
    %40 = vector.shape_cast %39 : vector<1x128x352xbf16> to vector<128x352xbf16>
    %c3 = arith.constant 3 : index
    %c0_20 = arith.constant 0 : index
    %c0_21 = arith.constant 0 : index
    %41 = vector.load %arg2[%c3, %c0_20, %c0_21] : memref<9x352x196xbf16, #tpu.memory_space<vmem>>, vector<1x352x196xbf16>
    %42 = vector.shape_cast %41 : vector<1x352x196xbf16> to vector<352x196xbf16>
    %cst_22 = arith.constant dense<0.000000e+00> : vector<128x196xf32>
    %43 = tpu.matmul %40, %42, %cst_22 {dimension_numbers = #tpu.dot_dimension_numbers<[1], [0], [0], [1], [0, 0, 1, 1], [], []>} : vector<128x352xbf16>, vector<352x196xbf16>, vector<128x196xf32> -> vector<128x196xf32>
    %44 = arith.addf %30, %43 : vector<128x196xf32>
    %c4 = arith.constant 4 : index
    %c0_23 = arith.constant 0 : index
    %c0_24 = arith.constant 0 : index
    %45 = vector.load %arg2[%c4, %c0_23, %c0_24] : memref<9x352x196xbf16, #tpu.memory_space<vmem>>, vector<1x352x196xbf16>
    %46 = vector.shape_cast %45 : vector<1x352x196xbf16> to vector<352x196xbf16>
    %cst_25 = arith.constant dense<0.000000e+00> : vector<128x196xf32>
    %47 = tpu.matmul %40, %46, %cst_25 {dimension_numbers = #tpu.dot_dimension_numbers<[1], [0], [0], [1], [0, 0, 1, 1], [], []>} : vector<128x352xbf16>, vector<352x196xbf16>, vector<128x196xf32> -> vector<128x196xf32>
    %48 = arith.addf %34, %47 : vector<128x196xf32>
    %c5 = arith.constant 5 : index
    %c0_26 = arith.constant 0 : index
    %c0_27 = arith.constant 0 : index
    %49 = vector.load %arg2[%c5, %c0_26, %c0_27] : memref<9x352x196xbf16, #tpu.memory_space<vmem>>, vector<1x352x196xbf16>
    %50 = vector.shape_cast %49 : vector<1x352x196xbf16> to vector<352x196xbf16>
    %cst_28 = arith.constant dense<0.000000e+00> : vector<128x196xf32>
    %51 = tpu.matmul %40, %50, %cst_28 {dimension_numbers = #tpu.dot_dimension_numbers<[1], [0], [0], [1], [0, 0, 1, 1], [], []>} : vector<128x352xbf16>, vector<352x196xbf16>, vector<128x196xf32> -> vector<128x196xf32>
    %52 = arith.addf %38, %51 : vector<128x196xf32>
    %c0_29 = arith.constant 0 : index
    %c32 = arith.constant 32 : index
    %c0_30 = arith.constant 0 : index
    %53 = vector.load %arg1[%c0_29, %c32, %c0_30] : memref<1x160x352xbf16, #tpu.memory_space<vmem>>, vector<1x128x352xbf16>
    %54 = vector.shape_cast %53 : vector<1x128x352xbf16> to vector<128x352xbf16>
    %c6 = arith.constant 6 : index
    %c0_31 = arith.constant 0 : index
    %c0_32 = arith.constant 0 : index
    %55 = vector.load %arg2[%c6, %c0_31, %c0_32] : memref<9x352x196xbf16, #tpu.memory_space<vmem>>, vector<1x352x196xbf16>
    %56 = vector.shape_cast %55 : vector<1x352x196xbf16> to vector<352x196xbf16>
    %cst_33 = arith.constant dense<0.000000e+00> : vector<128x196xf32>
    %57 = tpu.matmul %54, %56, %cst_33 {dimension_numbers = #tpu.dot_dimension_numbers<[1], [0], [0], [1], [0, 0, 1, 1], [], []>} : vector<128x352xbf16>, vector<352x196xbf16>, vector<128x196xf32> -> vector<128x196xf32>
    %58 = arith.addf %44, %57 : vector<128x196xf32>
    %c7 = arith.constant 7 : index
    %c0_34 = arith.constant 0 : index
    %c0_35 = arith.constant 0 : index
    %59 = vector.load %arg2[%c7, %c0_34, %c0_35] : memref<9x352x196xbf16, #tpu.memory_space<vmem>>, vector<1x352x196xbf16>
    %60 = vector.shape_cast %59 : vector<1x352x196xbf16> to vector<352x196xbf16>
    %cst_36 = arith.constant dense<0.000000e+00> : vector<128x196xf32>
    %61 = tpu.matmul %54, %60, %cst_36 {dimension_numbers = #tpu.dot_dimension_numbers<[1], [0], [0], [1], [0, 0, 1, 1], [], []>} : vector<128x352xbf16>, vector<352x196xbf16>, vector<128x196xf32> -> vector<128x196xf32>
    %62 = arith.addf %48, %61 : vector<128x196xf32>
    %c8 = arith.constant 8 : index
    %c0_37 = arith.constant 0 : index
    %c0_38 = arith.constant 0 : index
    %63 = vector.load %arg2[%c8, %c0_37, %c0_38] : memref<9x352x196xbf16, #tpu.memory_space<vmem>>, vector<1x352x196xbf16>
    %64 = vector.shape_cast %63 : vector<1x352x196xbf16> to vector<352x196xbf16>
    %cst_39 = arith.constant dense<0.000000e+00> : vector<128x196xf32>
    %65 = tpu.matmul %54, %64, %cst_39 {dimension_numbers = #tpu.dot_dimension_numbers<[1], [0], [0], [1], [0, 0, 1, 1], [], []>} : vector<128x352xbf16>, vector<352x196xbf16>, vector<128x196xf32> -> vector<128x196xf32>
    %66 = arith.addf %52, %65 : vector<128x196xf32>
    %cst_40 = arith.constant 0.000000e+00 : f32
    %67 = vector.broadcast %cst_40 : f32 to vector<8x196xf32>
    %c0_41 = arith.constant 0 : index
    %c0_42 = arith.constant 0 : index
    %68 = vector.load %arg11[%c0_41, %c0_42] : memref<144x196xf32, #tpu.memory_space<vmem>>, vector<8x196xf32>
    tpu.vector_store %arg11[%c0_41, %c0_42], %67 {strides = array<i32>} : memref<144x196xf32, #tpu.memory_space<vmem>>, vector<8x196xf32>,
    %c136 = arith.constant 136 : index
    %c0_43 = arith.constant 0 : index
    %69 = vector.load %arg11[%c136, %c0_43] : memref<144x196xf32, #tpu.memory_space<vmem>>, vector<8x196xf32>
    tpu.vector_store %arg11[%c136, %c0_43], %67 {strides = array<i32>} : memref<144x196xf32, #tpu.memory_space<vmem>>, vector<8x196xf32>,
    %c8_44 = arith.constant 8 : index
    %c0_45 = arith.constant 0 : index
    %70 = vector.load %arg11[%c8_44, %c0_45] : memref<144x196xf32, #tpu.memory_space<vmem>>, vector<128x196xf32>
    tpu.vector_store %arg11[%c8_44, %c0_45], %58 {strides = array<i32>} : memref<144x196xf32, #tpu.memory_space<vmem>>, vector<128x196xf32>,
    %c7_46 = arith.constant 7 : index
    %c0_47 = arith.constant 0 : index
    %71 = vector.load %arg11[%c7_46, %c0_47] : memref<144x196xf32, #tpu.memory_space<vmem>>, vector<128x196xf32>
    %72 = arith.addf %62, %71 : vector<128x196xf32>
    %c8_48 = arith.constant 8 : index
    %c0_49 = arith.constant 0 : index
    %73 = vector.load %arg11[%c8_48, %c0_49] : memref<144x196xf32, #tpu.memory_space<vmem>>, vector<128x196xf32>
    tpu.vector_store %arg11[%c8_48, %c0_49], %66 {strides = array<i32>} : memref<144x196xf32, #tpu.memory_space<vmem>>, vector<128x196xf32>,
    %c9 = arith.constant 9 : index
    %c0_50 = arith.constant 0 : index
    %74 = vector.load %arg11[%c9, %c0_50] : memref<144x196xf32, #tpu.memory_space<vmem>>, vector<128x196xf32>
    %75 = arith.addf %72, %74 : vector<128x196xf32>
    %c0_51 = arith.constant 0 : index
    %c0_52 = arith.constant 0 : index
    %76 = vector.load %arg3[%c0_51, %c0_52] : memref<1x196xf32, #tpu.memory_space<vmem>>, vector<1x196xf32>
    %77 = vector.broadcast %76 : vector<1x196xf32> to vector<128x196xf32>
    %78 = arith.addf %75, %77 : vector<128x196xf32>
    %cst_53 = arith.constant 0.000000e+00 : f32
    %79 = vector.broadcast %cst_53 : f32 to vector<128x196xf32>
    %80 = arith.cmpf oge, %78, %79 : vector<128x196xf32>
    %cst_54 = arith.constant 1.000000e-01 : f32
    %81 = vector.broadcast %cst_54 : f32 to vector<128x196xf32>
    %82 = arith.mulf %81, %78 : vector<128x196xf32>
    %83 = arith.select %80, %78, %82 : vector<128x196xi1>, vector<128x196xf32>
    %cst_55 = arith.constant 0.000000e+00 : f32
    %84 = vector.shape_cast %21 : vector<128x1xi1> to vector<128x1xi1>
    %85 = vector.broadcast %84 : vector<128x1xi1> to vector<128x196xi1>
    %86 = vector.broadcast %cst_55 : f32 to vector<128x196xf32>
    %87 = arith.select %85, %83, %86 : vector<128x196xi1>, vector<128x196xf32>
    %cst_56 = arith.constant 0.000000e+00 : bf16
    %88 = vector.broadcast %cst_56 : bf16 to vector<16x196xbf16>
    %c0_57 = arith.constant 0 : index
    %c0_58 = arith.constant 0 : index
    %89 = vector.load %arg9[%c0_57, %c0_58] : memref<160x196xbf16, #tpu.memory_space<vmem>>, vector<16x196xbf16>
    tpu.vector_store %arg9[%c0_57, %c0_58], %88 {strides = array<i32>} : memref<160x196xbf16, #tpu.memory_space<vmem>>, vector<16x196xbf16>,
    %90 = arith.truncf %87 : vector<128x196xf32> to vector<128x196xbf16>
    %c16_59 = arith.constant 16 : index
    %c0_60 = arith.constant 0 : index
    %91 = vector.load %arg9[%c16_59, %c0_60] : memref<160x196xbf16, #tpu.memory_space<vmem>>, vector<128x196xbf16>
    tpu.vector_store %arg9[%c16_59, %c0_60], %90 {strides = array<i32>} : memref<160x196xbf16, #tpu.memory_space<vmem>>, vector<128x196xbf16>,
    %c144 = arith.constant 144 : index
    %c0_61 = arith.constant 0 : index
    %92 = vector.load %arg9[%c144, %c0_61] : memref<160x196xbf16, #tpu.memory_space<vmem>>, vector<16x196xbf16>
    tpu.vector_store %arg9[%c144, %c0_61], %88 {strides = array<i32>} : memref<160x196xbf16, #tpu.memory_space<vmem>>, vector<16x196xbf16>,
    %cst_62 = arith.constant 0.000000e+00 : f32
    %93 = vector.broadcast %cst_62 : f32 to vector<128x64xf32>
    %cst_63 = arith.constant 0.000000e+00 : f32
    %94 = vector.broadcast %cst_63 : f32 to vector<128x64xf32>
    %cst_64 = arith.constant 0.000000e+00 : f32
    %95 = vector.broadcast %cst_64 : f32 to vector<128x64xf32>
    %c0_65 = arith.constant 0 : index
    %c0_66 = arith.constant 0 : index
    %96 = vector.load %arg9[%c0_65, %c0_66] : memref<160x196xbf16, #tpu.memory_space<vmem>>, vector<128x196xbf16>
    %c0_67 = arith.constant 0 : index
    %c0_68 = arith.constant 0 : index
    %c0_69 = arith.constant 0 : index
    %97 = vector.load %arg4[%c0_67, %c0_68, %c0_69] : memref<9x196x64xbf16, #tpu.memory_space<vmem>>, vector<1x196x64xbf16>
    %98 = vector.shape_cast %97 : vector<1x196x64xbf16> to vector<196x64xbf16>
    %cst_70 = arith.constant dense<0.000000e+00> : vector<128x64xf32>
    %99 = tpu.matmul %96, %98, %cst_70 {dimension_numbers = #tpu.dot_dimension_numbers<[1], [0], [0], [1], [0, 0, 1, 1], [], []>} : vector<128x196xbf16>, vector<196x64xbf16>, vector<128x64xf32> -> vector<128x64xf32>
    %100 = arith.addf %93, %99 : vector<128x64xf32>
    %c1_71 = arith.constant 1 : index
    %c0_72 = arith.constant 0 : index
    %c0_73 = arith.constant 0 : index
    %101 = vector.load %arg4[%c1_71, %c0_72, %c0_73] : memref<9x196x64xbf16, #tpu.memory_space<vmem>>, vector<1x196x64xbf16>
    %102 = vector.shape_cast %101 : vector<1x196x64xbf16> to vector<196x64xbf16>
    %cst_74 = arith.constant dense<0.000000e+00> : vector<128x64xf32>
    %103 = tpu.matmul %96, %102, %cst_74 {dimension_numbers = #tpu.dot_dimension_numbers<[1], [0], [0], [1], [0, 0, 1, 1], [], []>} : vector<128x196xbf16>, vector<196x64xbf16>, vector<128x64xf32> -> vector<128x64xf32>
    %104 = arith.addf %94, %103 : vector<128x64xf32>
    %c2_75 = arith.constant 2 : index
    %c0_76 = arith.constant 0 : index
    %c0_77 = arith.constant 0 : index
    %105 = vector.load %arg4[%c2_75, %c0_76, %c0_77] : memref<9x196x64xbf16, #tpu.memory_space<vmem>>, vector<1x196x64xbf16>
    %106 = vector.shape_cast %105 : vector<1x196x64xbf16> to vector<196x64xbf16>
    %cst_78 = arith.constant dense<0.000000e+00> : vector<128x64xf32>
    %107 = tpu.matmul %96, %106, %cst_78 {dimension_numbers = #tpu.dot_dimension_numbers<[1], [0], [0], [1], [0, 0, 1, 1], [], []>} : vector<128x196xbf16>, vector<196x64xbf16>, vector<128x64xf32> -> vector<128x64xf32>
    %108 = arith.addf %95, %107 : vector<128x64xf32>
    %c16_79 = arith.constant 16 : index
    %c0_80 = arith.constant 0 : index
    %109 = vector.load %arg9[%c16_79, %c0_80] : memref<160x196xbf16, #tpu.memory_space<vmem>>, vector<128x196xbf16>
    %c3_81 = arith.constant 3 : index
    %c0_82 = arith.constant 0 : index
    %c0_83 = arith.constant 0 : index
    %110 = vector.load %arg4[%c3_81, %c0_82, %c0_83] : memref<9x196x64xbf16, #tpu.memory_space<vmem>>, vector<1x196x64xbf16>
    %111 = vector.shape_cast %110 : vector<1x196x64xbf16> to vector<196x64xbf16>
    %cst_84 = arith.constant dense<0.000000e+00> : vector<128x64xf32>
    %112 = tpu.matmul %109, %111, %cst_84 {dimension_numbers = #tpu.dot_dimension_numbers<[1], [0], [0], [1], [0, 0, 1, 1], [], []>} : vector<128x196xbf16>, vector<196x64xbf16>, vector<128x64xf32> -> vector<128x64xf32>
    %113 = arith.addf %100, %112 : vector<128x64xf32>
    %c4_85 = arith.constant 4 : index
    %c0_86 = arith.constant 0 : index
    %c0_87 = arith.constant 0 : index
    %114 = vector.load %arg4[%c4_85, %c0_86, %c0_87] : memref<9x196x64xbf16, #tpu.memory_space<vmem>>, vector<1x196x64xbf16>
    %115 = vector.shape_cast %114 : vector<1x196x64xbf16> to vector<196x64xbf16>
    %cst_88 = arith.constant dense<0.000000e+00> : vector<128x64xf32>
    %116 = tpu.matmul %109, %115, %cst_88 {dimension_numbers = #tpu.dot_dimension_numbers<[1], [0], [0], [1], [0, 0, 1, 1], [], []>} : vector<128x196xbf16>, vector<196x64xbf16>, vector<128x64xf32> -> vector<128x64xf32>
    %117 = arith.addf %104, %116 : vector<128x64xf32>
    %c5_89 = arith.constant 5 : index
    %c0_90 = arith.constant 0 : index
    %c0_91 = arith.constant 0 : index
    %118 = vector.load %arg4[%c5_89, %c0_90, %c0_91] : memref<9x196x64xbf16, #tpu.memory_space<vmem>>, vector<1x196x64xbf16>
    %119 = vector.shape_cast %118 : vector<1x196x64xbf16> to vector<196x64xbf16>
    %cst_92 = arith.constant dense<0.000000e+00> : vector<128x64xf32>
    %120 = tpu.matmul %109, %119, %cst_92 {dimension_numbers = #tpu.dot_dimension_numbers<[1], [0], [0], [1], [0, 0, 1, 1], [], []>} : vector<128x196xbf16>, vector<196x64xbf16>, vector<128x64xf32> -> vector<128x64xf32>
    %121 = arith.addf %108, %120 : vector<128x64xf32>
    %c32_93 = arith.constant 32 : index
    %c0_94 = arith.constant 0 : index
    %122 = vector.load %arg9[%c32_93, %c0_94] : memref<160x196xbf16, #tpu.memory_space<vmem>>, vector<128x196xbf16>
    %c6_95 = arith.constant 6 : index
    %c0_96 = arith.constant 0 : index
    %c0_97 = arith.constant 0 : index
    %123 = vector.load %arg4[%c6_95, %c0_96, %c0_97] : memref<9x196x64xbf16, #tpu.memory_space<vmem>>, vector<1x196x64xbf16>
    %124 = vector.shape_cast %123 : vector<1x196x64xbf16> to vector<196x64xbf16>
    %cst_98 = arith.constant dense<0.000000e+00> : vector<128x64xf32>
    %125 = tpu.matmul %122, %124, %cst_98 {dimension_numbers = #tpu.dot_dimension_numbers<[1], [0], [0], [1], [0, 0, 1, 1], [], []>} : vector<128x196xbf16>, vector<196x64xbf16>, vector<128x64xf32> -> vector<128x64xf32>
    %126 = arith.addf %113, %125 : vector<128x64xf32>
    %c7_99 = arith.constant 7 : index
    %c0_100 = arith.constant 0 : index
    %c0_101 = arith.constant 0 : index
    %127 = vector.load %arg4[%c7_99, %c0_100, %c0_101] : memref<9x196x64xbf16, #tpu.memory_space<vmem>>, vector<1x196x64xbf16>
    %128 = vector.shape_cast %127 : vector<1x196x64xbf16> to vector<196x64xbf16>
    %cst_102 = arith.constant dense<0.000000e+00> : vector<128x64xf32>
    %129 = tpu.matmul %122, %128, %cst_102 {dimension_numbers = #tpu.dot_dimension_numbers<[1], [0], [0], [1], [0, 0, 1, 1], [], []>} : vector<128x196xbf16>, vector<196x64xbf16>, vector<128x64xf32> -> vector<128x64xf32>
    %130 = arith.addf %117, %129 : vector<128x64xf32>
    %c8_103 = arith.constant 8 : index
    %c0_104 = arith.constant 0 : index
    %c0_105 = arith.constant 0 : index
    %131 = vector.load %arg4[%c8_103, %c0_104, %c0_105] : memref<9x196x64xbf16, #tpu.memory_space<vmem>>, vector<1x196x64xbf16>
    %132 = vector.shape_cast %131 : vector<1x196x64xbf16> to vector<196x64xbf16>
    %cst_106 = arith.constant dense<0.000000e+00> : vector<128x64xf32>
    %133 = tpu.matmul %122, %132, %cst_106 {dimension_numbers = #tpu.dot_dimension_numbers<[1], [0], [0], [1], [0, 0, 1, 1], [], []>} : vector<128x196xbf16>, vector<196x64xbf16>, vector<128x64xf32> -> vector<128x64xf32>
    %134 = arith.addf %121, %133 : vector<128x64xf32>
    %cst_107 = arith.constant 0.000000e+00 : f32
    %135 = vector.broadcast %cst_107 : f32 to vector<8x64xf32>
    %c0_108 = arith.constant 0 : index
    %c0_109 = arith.constant 0 : index
    %136 = vector.load %arg12[%c0_108, %c0_109] : memref<144x64xf32, #tpu.memory_space<vmem>>, vector<8x64xf32>
    tpu.vector_store %arg12[%c0_108, %c0_109], %135 {strides = array<i32>} : memref<144x64xf32, #tpu.memory_space<vmem>>, vector<8x64xf32>,
    %c136_110 = arith.constant 136 : index
    %c0_111 = arith.constant 0 : index
    %137 = vector.load %arg12[%c136_110, %c0_111] : memref<144x64xf32, #tpu.memory_space<vmem>>, vector<8x64xf32>
    tpu.vector_store %arg12[%c136_110, %c0_111], %135 {strides = array<i32>} : memref<144x64xf32, #tpu.memory_space<vmem>>, vector<8x64xf32>,
    %c8_112 = arith.constant 8 : index
    %c0_113 = arith.constant 0 : index
    %138 = vector.load %arg12[%c8_112, %c0_113] : memref<144x64xf32, #tpu.memory_space<vmem>>, vector<128x64xf32>
    tpu.vector_store %arg12[%c8_112, %c0_113], %126 {strides = array<i32>} : memref<144x64xf32, #tpu.memory_space<vmem>>, vector<128x64xf32>,
    %c7_114 = arith.constant 7 : index
    %c0_115 = arith.constant 0 : index
    %139 = vector.load %arg12[%c7_114, %c0_115] : memref<144x64xf32, #tpu.memory_space<vmem>>, vector<128x64xf32>
    %140 = arith.addf %130, %139 : vector<128x64xf32>
    %c8_116 = arith.constant 8 : index
    %c0_117 = arith.constant 0 : index
    %141 = vector.load %arg12[%c8_116, %c0_117] : memref<144x64xf32, #tpu.memory_space<vmem>>, vector<128x64xf32>
    tpu.vector_store %arg12[%c8_116, %c0_117], %134 {strides = array<i32>} : memref<144x64xf32, #tpu.memory_space<vmem>>, vector<128x64xf32>,
    %c9_118 = arith.constant 9 : index
    %c0_119 = arith.constant 0 : index
    %142 = vector.load %arg12[%c9_118, %c0_119] : memref<144x64xf32, #tpu.memory_space<vmem>>, vector<128x64xf32>
    %143 = arith.addf %140, %142 : vector<128x64xf32>
    %c0_120 = arith.constant 0 : index
    %c0_121 = arith.constant 0 : index
    %144 = vector.load %arg5[%c0_120, %c0_121] : memref<1x64xf32, #tpu.memory_space<vmem>>, vector<1x64xf32>
    %145 = vector.broadcast %144 : vector<1x64xf32> to vector<128x64xf32>
    %146 = arith.addf %143, %145 : vector<128x64xf32>
    %cst_122 = arith.constant 0.000000e+00 : f32
    %147 = vector.broadcast %cst_122 : f32 to vector<128x64xf32>
    %148 = arith.cmpf oge, %146, %147 : vector<128x64xf32>
    %cst_123 = arith.constant 1.000000e-01 : f32
    %149 = vector.broadcast %cst_123 : f32 to vector<128x64xf32>
    %150 = arith.mulf %149, %146 : vector<128x64xf32>
    %151 = arith.select %148, %146, %150 : vector<128x64xi1>, vector<128x64xf32>
    %cst_124 = arith.constant 0.000000e+00 : f32
    %152 = vector.shape_cast %21 : vector<128x1xi1> to vector<128x1xi1>
    %153 = vector.broadcast %152 : vector<128x1xi1> to vector<128x64xi1>
    %154 = vector.broadcast %cst_124 : f32 to vector<128x64xf32>
    %155 = arith.select %153, %151, %154 : vector<128x64xi1>, vector<128x64xf32>
    %cst_125 = arith.constant 0.000000e+00 : f32
    %156 = vector.broadcast %cst_125 : f32 to vector<16x64xf32>
    %c0_126 = arith.constant 0 : index
    %c0_127 = arith.constant 0 : index
    %157 = vector.load %arg10[%c0_126, %c0_127] : memref<160x64xf32, #tpu.memory_space<vmem>>, vector<16x64xf32>
    tpu.vector_store %arg10[%c0_126, %c0_127], %156 {strides = array<i32>} : memref<160x64xf32, #tpu.memory_space<vmem>>, vector<16x64xf32>,
    %c16_128 = arith.constant 16 : index
    %c0_129 = arith.constant 0 : index
    %158 = vector.load %arg10[%c16_128, %c0_129] : memref<160x64xf32, #tpu.memory_space<vmem>>, vector<128x64xf32>
    tpu.vector_store %arg10[%c16_128, %c0_129], %155 {strides = array<i32>} : memref<160x64xf32, #tpu.memory_space<vmem>>, vector<128x64xf32>,
    %c144_130 = arith.constant 144 : index
    %c0_131 = arith.constant 0 : index
    %159 = vector.load %arg10[%c144_130, %c0_131] : memref<160x64xf32, #tpu.memory_space<vmem>>, vector<16x64xf32>
    tpu.vector_store %arg10[%c144_130, %c0_131], %156 {strides = array<i32>} : memref<160x64xf32, #tpu.memory_space<vmem>>, vector<16x64xf32>,
    %cst_132 = arith.constant 0.000000e+00 : f32
    %160 = vector.broadcast %cst_132 : f32 to vector<8x16xf32>
    %cst_133 = arith.constant 0.000000e+00 : f32
    %161 = vector.broadcast %cst_133 : f32 to vector<8x16xf32>
    %cst_134 = arith.constant 0.000000e+00 : f32
    %162 = vector.broadcast %cst_134 : f32 to vector<8x16xf32>
    %c0_135 = arith.constant 0 : index
    %c0_136 = arith.constant 0 : index
    %163 = vector.load %arg10[%c0_135, %c0_136] : memref<160x64xf32, #tpu.memory_space<vmem>>, vector<128x64xf32>
    %164 = vector.shape_cast %163 : vector<128x64xf32> to vector<8x16x64xf32>
    %c0_137 = arith.constant 0 : index
    %c0_138 = arith.constant 0 : index
    %c0_139 = arith.constant 0 : index
    %165 = vector.load %arg6[%c0_137, %c0_138, %c0_139] : memref<9x1x64xf32, #tpu.memory_space<vmem>>, vector<1x1x64xf32>
    %166 = vector.shape_cast %165 : vector<1x1x64xf32> to vector<1x64xf32>
    %167 = vector.shape_cast %166 : vector<1x64xf32> to vector<1x1x64xf32>
    %168 = vector.broadcast %167 : vector<1x1x64xf32> to vector<8x16x64xf32>
    %169 = arith.mulf %164, %168 : vector<8x16x64xf32>
    %cst_140 = arith.constant dense<0.000000e+00> : vector<8x16xf32>
    %170 = vector.multi_reduction <add>, %169, %cst_140 [2] : vector<8x16x64xf32> to vector<8x16xf32>
    %171 = arith.addf %160, %170 : vector<8x16xf32>
    %c1_141 = arith.constant 1 : index
    %c0_142 = arith.constant 0 : index
    %c0_143 = arith.constant 0 : index
    %172 = vector.load %arg6[%c1_141, %c0_142, %c0_143] : memref<9x1x64xf32, #tpu.memory_space<vmem>>, vector<1x1x64xf32>
    %173 = vector.shape_cast %172 : vector<1x1x64xf32> to vector<1x64xf32>
    %174 = vector.shape_cast %173 : vector<1x64xf32> to vector<1x1x64xf32>
    %175 = vector.broadcast %174 : vector<1x1x64xf32> to vector<8x16x64xf32>
    %176 = arith.mulf %164, %175 : vector<8x16x64xf32>
    %cst_144 = arith.constant dense<0.000000e+00> : vector<8x16xf32>
    %177 = vector.multi_reduction <add>, %176, %cst_144 [2] : vector<8x16x64xf32> to vector<8x16xf32>
    %178 = arith.addf %161, %177 : vector<8x16xf32>
    %c2_145 = arith.constant 2 : index
    %c0_146 = arith.constant 0 : index
    %c0_147 = arith.constant 0 : index
    %179 = vector.load %arg6[%c2_145, %c0_146, %c0_147] : memref<9x1x64xf32, #tpu.memory_space<vmem>>, vector<1x1x64xf32>
    %180 = vector.shape_cast %179 : vector<1x1x64xf32> to vector<1x64xf32>
    %181 = vector.shape_cast %180 : vector<1x64xf32> to vector<1x1x64xf32>
    %182 = vector.broadcast %181 : vector<1x1x64xf32> to vector<8x16x64xf32>
    %183 = arith.mulf %164, %182 : vector<8x16x64xf32>
    %cst_148 = arith.constant dense<0.000000e+00> : vector<8x16xf32>
    %184 = vector.multi_reduction <add>, %183, %cst_148 [2] : vector<8x16x64xf32> to vector<8x16xf32>
    %185 = arith.addf %162, %184 : vector<8x16xf32>
    %c16_149 = arith.constant 16 : index
    %c0_150 = arith.constant 0 : index
    %186 = vector.load %arg10[%c16_149, %c0_150] : memref<160x64xf32, #tpu.memory_space<vmem>>, vector<128x64xf32>
    %187 = vector.shape_cast %186 : vector<128x64xf32> to vector<8x16x64xf32>
    %c3_151 = arith.constant 3 : index
    %c0_152 = arith.constant 0 : index
    %c0_153 = arith.constant 0 : index
    %188 = vector.load %arg6[%c3_151, %c0_152, %c0_153] : memref<9x1x64xf32, #tpu.memory_space<vmem>>, vector<1x1x64xf32>
    %189 = vector.shape_cast %188 : vector<1x1x64xf32> to vector<1x64xf32>
    %190 = vector.shape_cast %189 : vector<1x64xf32> to vector<1x1x64xf32>
    %191 = vector.broadcast %190 : vector<1x1x64xf32> to vector<8x16x64xf32>
    %192 = arith.mulf %187, %191 : vector<8x16x64xf32>
    %cst_154 = arith.constant dense<0.000000e+00> : vector<8x16xf32>
    %193 = vector.multi_reduction <add>, %192, %cst_154 [2] : vector<8x16x64xf32> to vector<8x16xf32>
    %194 = arith.addf %171, %193 : vector<8x16xf32>
    %c4_155 = arith.constant 4 : index
    %c0_156 = arith.constant 0 : index
    %c0_157 = arith.constant 0 : index
    %195 = vector.load %arg6[%c4_155, %c0_156, %c0_157] : memref<9x1x64xf32, #tpu.memory_space<vmem>>, vector<1x1x64xf32>
    %196 = vector.shape_cast %195 : vector<1x1x64xf32> to vector<1x64xf32>
    %197 = vector.shape_cast %196 : vector<1x64xf32> to vector<1x1x64xf32>
    %198 = vector.broadcast %197 : vector<1x1x64xf32> to vector<8x16x64xf32>
    %199 = arith.mulf %187, %198 : vector<8x16x64xf32>
    %cst_158 = arith.constant dense<0.000000e+00> : vector<8x16xf32>
    %200 = vector.multi_reduction <add>, %199, %cst_158 [2] : vector<8x16x64xf32> to vector<8x16xf32>
    %201 = arith.addf %178, %200 : vector<8x16xf32>
    %c5_159 = arith.constant 5 : index
    %c0_160 = arith.constant 0 : index
    %c0_161 = arith.constant 0 : index
    %202 = vector.load %arg6[%c5_159, %c0_160, %c0_161] : memref<9x1x64xf32, #tpu.memory_space<vmem>>, vector<1x1x64xf32>
    %203 = vector.shape_cast %202 : vector<1x1x64xf32> to vector<1x64xf32>
    %204 = vector.shape_cast %203 : vector<1x64xf32> to vector<1x1x64xf32>
    %205 = vector.broadcast %204 : vector<1x1x64xf32> to vector<8x16x64xf32>
    %206 = arith.mulf %187, %205 : vector<8x16x64xf32>
    %cst_162 = arith.constant dense<0.000000e+00> : vector<8x16xf32>
    %207 = vector.multi_reduction <add>, %206, %cst_162 [2] : vector<8x16x64xf32> to vector<8x16xf32>
    %208 = arith.addf %185, %207 : vector<8x16xf32>
    %c32_163 = arith.constant 32 : index
    %c0_164 = arith.constant 0 : index
    %209 = vector.load %arg10[%c32_163, %c0_164] : memref<160x64xf32, #tpu.memory_space<vmem>>, vector<128x64xf32>
    %210 = vector.shape_cast %209 : vector<128x64xf32> to vector<8x16x64xf32>
    %c6_165 = arith.constant 6 : index
    %c0_166 = arith.constant 0 : index
    %c0_167 = arith.constant 0 : index
    %211 = vector.load %arg6[%c6_165, %c0_166, %c0_167] : memref<9x1x64xf32, #tpu.memory_space<vmem>>, vector<1x1x64xf32>
    %212 = vector.shape_cast %211 : vector<1x1x64xf32> to vector<1x64xf32>
    %213 = vector.shape_cast %212 : vector<1x64xf32> to vector<1x1x64xf32>
    %214 = vector.broadcast %213 : vector<1x1x64xf32> to vector<8x16x64xf32>
    %215 = arith.mulf %210, %214 : vector<8x16x64xf32>
    %cst_168 = arith.constant dense<0.000000e+00> : vector<8x16xf32>
    %216 = vector.multi_reduction <add>, %215, %cst_168 [2] : vector<8x16x64xf32> to vector<8x16xf32>
    %217 = arith.addf %194, %216 : vector<8x16xf32>
    %c7_169 = arith.constant 7 : index
    %c0_170 = arith.constant 0 : index
    %c0_171 = arith.constant 0 : index
    %218 = vector.load %arg6[%c7_169, %c0_170, %c0_171] : memref<9x1x64xf32, #tpu.memory_space<vmem>>, vector<1x1x64xf32>
    %219 = vector.shape_cast %218 : vector<1x1x64xf32> to vector<1x64xf32>
    %220 = vector.shape_cast %219 : vector<1x64xf32> to vector<1x1x64xf32>
    %221 = vector.broadcast %220 : vector<1x1x64xf32> to vector<8x16x64xf32>
    %222 = arith.mulf %210, %221 : vector<8x16x64xf32>
    %cst_172 = arith.constant dense<0.000000e+00> : vector<8x16xf32>
    %223 = vector.multi_reduction <add>, %222, %cst_172 [2] : vector<8x16x64xf32> to vector<8x16xf32>
    %224 = arith.addf %201, %223 : vector<8x16xf32>
    %c8_173 = arith.constant 8 : index
    %c0_174 = arith.constant 0 : index
    %c0_175 = arith.constant 0 : index
    %225 = vector.load %arg6[%c8_173, %c0_174, %c0_175] : memref<9x1x64xf32, #tpu.memory_space<vmem>>, vector<1x1x64xf32>
    %226 = vector.shape_cast %225 : vector<1x1x64xf32> to vector<1x64xf32>
    %227 = vector.shape_cast %226 : vector<1x64xf32> to vector<1x1x64xf32>
    %228 = vector.broadcast %227 : vector<1x1x64xf32> to vector<8x16x64xf32>
    %229 = arith.mulf %210, %228 : vector<8x16x64xf32>
    %cst_176 = arith.constant dense<0.000000e+00> : vector<8x16xf32>
    %230 = vector.multi_reduction <add>, %229, %cst_176 [2] : vector<8x16x64xf32> to vector<8x16xf32>
    %231 = arith.addf %208, %230 : vector<8x16xf32>
    %232 = vector.extract_strided_slice %217 {offsets = [0, 0], sizes = [8, 8], strides = [1, 1]} : vector<8x16xf32> to vector<8x8xf32>
    %233 = vector.extract_strided_slice %224 {offsets = [0, 1], sizes = [8, 8], strides = [1, 1]} : vector<8x16xf32> to vector<8x8xf32>
    %234 = arith.addf %232, %233 : vector<8x8xf32>
    %235 = vector.extract_strided_slice %231 {offsets = [0, 2], sizes = [8, 8], strides = [1, 1]} : vector<8x16xf32> to vector<8x8xf32>
    %236 = arith.addf %234, %235 : vector<8x8xf32>
    %c0_177 = arith.constant 0 : index
    %c0_178 = arith.constant 0 : index
    %237 = vector.load %arg7[%c0_177, %c0_178] : memref<1x1xf32, #tpu.memory_space<vmem>>, vector<1x1xf32>
    %238 = vector.broadcast %237 : vector<1x1xf32> to vector<8x8xf32>
    %239 = arith.addf %236, %238 : vector<8x8xf32>
    %240 = vector.shape_cast %239 : vector<8x8xf32> to vector<1x8x8xf32>
    %c0_179 = arith.constant 0 : index
    %c0_180 = arith.constant 0 : index
    %c0_181 = arith.constant 0 : index
    %241 = vector.load %arg8[%c0_179, %c0_180, %c0_181] : memref<1x8x8xf32, #tpu.memory_space<vmem>>, vector<1x8x8xf32>
    tpu.vector_store %arg8[%c0_179, %c0_180, %c0_181], %240 {strides = array<i32>} : memref<1x8x8xf32, #tpu.memory_space<vmem>>, vector<1x8x8xf32>,
    return
  }
  func.func @transform_0(%arg0: i32) -> (i32, i32, i32) {
    %c0_i32 = arith.constant 0 : i32
    %c0_i32_0 = arith.constant 0 : i32
    %c0_i32_1 = arith.constant 0 : i32
    return %arg0, %c0_i32, %c0_i32_0 : i32, i32, i32
  }
  func.func @transform_1(%arg0: i32) -> (i32, i32, i32) {
    %c0_i32 = arith.constant 0 : i32
    %c0_i32_0 = arith.constant 0 : i32
    %c0_i32_1 = arith.constant 0 : i32
    %c0_i32_2 = arith.constant 0 : i32
    return %c0_i32, %c0_i32_0, %c0_i32_1 : i32, i32, i32
  }
  func.func @transform_2(%arg0: i32) -> (i32, i32) {
    %c0_i32 = arith.constant 0 : i32
    %c0_i32_0 = arith.constant 0 : i32
    %c0_i32_1 = arith.constant 0 : i32
    return %c0_i32, %c0_i32_0 : i32, i32
  }
  func.func @transform_3(%arg0: i32) -> (i32, i32, i32) {
    %c0_i32 = arith.constant 0 : i32
    %c0_i32_0 = arith.constant 0 : i32
    %c0_i32_1 = arith.constant 0 : i32
    %c0_i32_2 = arith.constant 0 : i32
    return %c0_i32, %c0_i32_0, %c0_i32_1 : i32, i32, i32
  }
  func.func @transform_4(%arg0: i32) -> (i32, i32) {
    %c0_i32 = arith.constant 0 : i32
    %c0_i32_0 = arith.constant 0 : i32
    %c0_i32_1 = arith.constant 0 : i32
    return %c0_i32, %c0_i32_0 : i32, i32
  }
  func.func @transform_5(%arg0: i32) -> (i32, i32, i32) {
    %c0_i32 = arith.constant 0 : i32
    %c0_i32_0 = arith.constant 0 : i32
    %c0_i32_1 = arith.constant 0 : i32
    %c0_i32_2 = arith.constant 0 : i32
    return %c0_i32, %c0_i32_0, %c0_i32_1 : i32, i32, i32
  }
  func.func @transform_6(%arg0: i32) -> (i32, i32) {
    %c0_i32 = arith.constant 0 : i32
    %c0_i32_0 = arith.constant 0 : i32
    %c0_i32_1 = arith.constant 0 : i32
    return %c0_i32, %c0_i32_0 : i32, i32
  }
  func.func @transform_7(%arg0: i32) -> (i32, i32, i32) {
    %c0_i32 = arith.constant 0 : i32
    %c0_i32_0 = arith.constant 0 : i32
    %c0_i32_1 = arith.constant 0 : i32
    return %arg0, %c0_i32, %c0_i32_0 : i32, i32, i32
  }
}

</mosaic_0001>

<llo_original>
// kernel: tpu_custom_call.1
$region0: #{tpu_custom_call.1}
  #allocation0 [shape = 'u32[]', space=smem, size = 0x4, offset = 0x4, fixed_abs, tag = 'smem constant byte address 0x4 - core index']
  #allocation1 [shape = 'u32[72,128]{1,0:T(1,128)}', space=vmem, size = 0x9000, scoped, tag = 'internal scratch']
  #allocation2 [shape = 'bf16[160,196]{1,0:T(8,128)(2,1)}', space=vmem, size = 0x14000, scoped, tag = 'scratch operand']
  #allocation3 [shape = 'f32[160,64]{1,0:T(8,128)}', space=vmem, size = 0x14000, scoped, tag = 'scratch operand']
  #allocation4 [shape = 'f32[144,196]{1,0:T(8,128)}', space=vmem, size = 0x24000, scoped, tag = 'scratch operand']
  #allocation5 [shape = 'f32[144,64]{1,0:T(8,128)}', space=vmem, size = 0x12000, scoped, tag = 'scratch operand']
  #allocation6 [shape = 'f32[1,1]{1,0:T(1,128)S(1)}', space=vmem, size = 0x200, scoped, tag = 'scoped memory for tpu_custom_call.1']
  %s0 = inlined_call_operand.vmem [shape: bf16[2,160,352], index: 0, kind: input, shape index: {}]
  %s1 = inlined_call_operand.vmem [shape: bf16[9,352,196], index: 1, kind: input, shape index: {}]
  %s2 = inlined_call_operand.vmem [shape: f32[1,196], index: 2, kind: input, shape index: {}]
  %s3 = inlined_call_operand.vmem [shape: bf16[9,196,64], index: 3, kind: input, shape index: {}]
  %s4 = inlined_call_operand.vmem [shape: f32[1,64], index: 4, kind: input, shape index: {}]
  %s5 = inlined_call_operand.vmem [shape: f32[9,1,64], index: 5, kind: input, shape index: {}]
  %s6 = inlined_call_operand.<no memory space> [shape: f32[1,1], index: 6, kind: input, shape index: {}]
  %s7 = inlined_call_operand.hbm [shape: f32[2,8,8], index: 7, kind: output, shape index: {}]
  %s8 = sld [smem:[#allocation0]]
  $region61: #{tpu_custom_call.1} parent=0
    _
  %s10 = ssub.s32 1, %s8
  %s11 = scalar_select 0, %s10, %s8
  %v12 = vstv %s6
  %13 = vst [vmem:[#allocation6] sm:$0x1] %v12
  $region1: #{tpu_custom_call.1} parent=0
    #allocation7 [shape = 'u8[8192]{0}', space=vmem, size = 0x2000, scoped, tag = 'output window, operand 0']
    #allocation8 [shape = 's32[2]{0}', space=sflag, size = 0x8, scoped, tag = 'scoped memory for tpu_custom_call.1']
    %14 = vsyncpa [#allocation8], 0
    %s15 = scalar_lea.sflag [#allocation8], 1
    %16 = vsyncpa %s15, 0
    loop: start=0, step=1, limit=4
    $region2: #{tpu_custom_call.1} parent=1 // loop_pre_header
      _
    $region3: #{tpu_custom_call.1} parent=1 // loop_header
      %s18 = sphi 0, %s22
      %p19 = scmp.ge.s32.totalorder %s18, 4
      %s28 = sphi 0, %s30
      %s31 = sphi 0, %s28
      %s32 = sphi 0, %s31
      %s48 = sphi 0, %s32
      %s52 = sphi 0, %s52
      %s54 = sphi 0, %s52
      %s55 = sphi 0, %s54
      %s69 = sphi 0, %s55
      %s73 = sphi 0, %s73
      %s75 = sphi 0, %s73
      %s76 = sphi 0, %s75
      %s90 = sphi 0, %s76
      %s94 = sphi 0, %s94
      %s96 = sphi 0, %s94
      %s97 = sphi 0, %s96
      %s111 = sphi 0, %s97
      %s115 = sphi 0, %s115
      %s117 = sphi 0, %s115
      %s118 = sphi 0, %s117
      %s132 = sphi 0, %s118
      %s136 = sphi 0, %s136
      %s138 = sphi 0, %s136
      %s139 = sphi 0, %s138
      %s153 = sphi 0, %s139
      %s157 = sphi 0, %s157
      %s159 = sphi 0, %s157
      %s160 = sphi 0, %s159
      %s174 = sphi 0, %s160
      %s180 = sphi 0, %s182
      %s183 = sphi 0, %s180
      %s184 = sphi 0, %s183
      %s200 = sphi 0, %s184
    $region4: #{tpu_custom_call.1} parent=1 // loop_header_branch
      %21 = sbr.rel (%p19) target = $region8
    $region5: #{tpu_custom_call.1} parent=1 // loop_body
      %s23 = ssub.s32 %s18, 1
      %s24 = ssub.s32 %s18, 2
      %s25 = sadd.s32 %s18, 1
      %s26 = ssub.s32 %s18, %s25
      %p27 = scmp.eq.s32.totalorder %s26, 0
      %s29 = sadd.s32 %s28, 1
      %s30 = scalar_select %p27, %s28, %s29
      %p33 = pneg %p27
      %p34 = scmp.eq.s32.totalorder %s18, 1
      %p35 = por %p33, %p34
      %p36 = scmp.ne.s32.totalorder %s28, %s31
      %p37 = scmp.eq.s32.totalorder %s18, 0
      %p38 = por %p36, %p37
      %p39 = scmp.ne.s32.totalorder %s28, %s31
      %p40 = scmp.eq.s32.totalorder %s23, 1
      %p41 = por %p39, %p40
      %p42 = scmp.ne.s32.totalorder %s31, %s32
      %p43 = scmp.eq.s32.totalorder %s23, 0
      %p44 = por %p42, %p43
      %p45 = scmp.ne.s32.totalorder %s31, %s32
      %p46 = scmp.eq.s32.totalorder %s24, 1
      %p47 = por %p45, %p46
      %p49 = scmp.ne.s32.totalorder %s32, %s48
      %p50 = scmp.eq.s32.totalorder %s24, 0
      %p51 = por %p49, %p50
      %s53 = sadd.s32 %s52, 1
      %p56 = scmp.eq.s32.totalorder %s18, 1
      %p57 = scmp.ne.s32.totalorder %s52, %s54
      %p58 = scmp.eq.s32.totalorder %s18, 0
      %p59 = por %p57, %p58
      %p60 = scmp.ne.s32.totalorder %s52, %s54
      %p61 = scmp.eq.s32.totalorder %s23, 1
      %p62 = por %p60, %p61
      %p63 = scmp.ne.s32.totalorder %s54, %s55
      %p64 = scmp.eq.s32.totalorder %s23, 0
      %p65 = por %p63, %p64
      %p66 = scmp.ne.s32.totalorder %s54, %s55
      %p67 = scmp.eq.s32.totalorder %s24, 1
      %p68 = por %p66, %p67
      %p70 = scmp.ne.s32.totalorder %s55, %s69
      %p71 = scmp.eq.s32.totalorder %s24, 0
      %p72 = por %p70, %p71
      %s74 = sadd.s32 %s73, 1
      %p77 = scmp.eq.s32.totalorder %s18, 1
      %p78 = scmp.ne.s32.totalorder %s73, %s75
      %p79 = scmp.eq.s32.totalorder %s18, 0
      %p80 = por %p78, %p79
      %p81 = scmp.ne.s32.totalorder %s73, %s75
      %p82 = scmp.eq.s32.totalorder %s23, 1
      %p83 = por %p81, %p82
      %p84 = scmp.ne.s32.totalorder %s75, %s76
      %p85 = scmp.eq.s32.totalorder %s23, 0
      %p86 = por %p84, %p85
      %p87 = scmp.ne.s32.totalorder %s75, %s76
      %p88 = scmp.eq.s32.totalorder %s24, 1
      %p89 = por %p87, %p88
      %p91 = scmp.ne.s32.totalorder %s76, %s90
      %p92 = scmp.eq.s32.totalorder %s24, 0
      %p93 = por %p91, %p92
      %s95 = sadd.s32 %s94, 1
      %p98 = scmp.eq.s32.totalorder %s18, 1
      %p99 = scmp.ne.s32.totalorder %s94, %s96
      %p100 = scmp.eq.s32.totalorder %s18, 0
      %p101 = por %p99, %p100
      %p102 = scmp.ne.s32.totalorder %s94, %s96
      %p103 = scmp.eq.s32.totalorder %s23, 1
      %p104 = por %p102, %p103
      %p105 = scmp.ne.s32.totalorder %s96, %s97
      %p106 = scmp.eq.s32.totalorder %s23, 0
      %p107 = por %p105, %p106
      %p108 = scmp.ne.s32.totalorder %s96, %s97
      %p109 = scmp.eq.s32.totalorder %s24, 1
      %p110 = por %p108, %p109
      %p112 = scmp.ne.s32.totalorder %s97, %s111
      %p113 = scmp.eq.s32.totalorder %s24, 0
      %p114 = por %p112, %p113
      %s116 = sadd.s32 %s115, 1
      %p119 = scmp.eq.s32.totalorder %s18, 1
      %p120 = scmp.ne.s32.totalorder %s115, %s117
      %p121 = scmp.eq.s32.totalorder %s18, 0
      %p122 = por %p120, %p121
      %p123 = scmp.ne.s32.totalorder %s115, %s117
      %p124 = scmp.eq.s32.totalorder %s23, 1
      %p125 = por %p123, %p124
      %p126 = scmp.ne.s32.totalorder %s117, %s118
      %p127 = scmp.eq.s32.totalorder %s23, 0
      %p128 = por %p126, %p127
      %p129 = scmp.ne.s32.totalorder %s117, %s118
      %p130 = scmp.eq.s32.totalorder %s24, 1
      %p131 = por %p129, %p130
      %p133 = scmp.ne.s32.totalorder %s118, %s132
      %p134 = scmp.eq.s32.totalorder %s24, 0
      %p135 = por %p133, %p134
      %s137 = sadd.s32 %s136, 1
      %p140 = scmp.eq.s32.totalorder %s18, 1
      %p141 = scmp.ne.s32.totalorder %s136, %s138
      %p142 = scmp.eq.s32.totalorder %s18, 0
      %p143 = por %p141, %p142
      %p144 = scmp.ne.s32.totalorder %s136, %s138
      %p145 = scmp.eq.s32.totalorder %s23, 1
      %p146 = por %p144, %p145
      %p147 = scmp.ne.s32.totalorder %s138, %s139
      %p148 = scmp.eq.s32.totalorder %s23, 0
      %p149 = por %p147, %p148
      %p150 = scmp.ne.s32.totalorder %s138, %s139
      %p151 = scmp.eq.s32.totalorder %s24, 1
      %p152 = por %p150, %p151
      %p154 = scmp.ne.s32.totalorder %s139, %s153
      %p155 = scmp.eq.s32.totalorder %s24, 0
      %p156 = por %p154, %p155
      %s158 = sadd.s32 %s157, 1
      %p161 = scmp.eq.s32.totalorder %s18, 1
      %p162 = scmp.ne.s32.totalorder %s157, %s159
      %p163 = scmp.eq.s32.totalorder %s18, 0
      %p164 = por %p162, %p163
      %p165 = scmp.ne.s32.totalorder %s157, %s159
      %p166 = scmp.eq.s32.totalorder %s23, 1
      %p167 = por %p165, %p166
      %p168 = scmp.ne.s32.totalorder %s159, %s160
      %p169 = scmp.eq.s32.totalorder %s23, 0
      %p170 = por %p168, %p169
      %p171 = scmp.ne.s32.totalorder %s159, %s160
      %p172 = scmp.eq.s32.totalorder %s24, 1
      %p173 = por %p171, %p172
      %p175 = scmp.ne.s32.totalorder %s160, %s174
      %p176 = scmp.eq.s32.totalorder %s24, 0
      %p177 = por %p175, %p176
      %s178 = ssub.s32 %s18, %s25
      %p179 = scmp.eq.s32.totalorder %s178, 0
      %s181 = sadd.s32 %s180, 1
      %s182 = scalar_select %p179, %s180, %s181
      %p185 = pneg %p179
      %p186 = scmp.eq.s32.totalorder %s18, 1
      %p187 = por %p185, %p186
      %p188 = scmp.ne.s32.totalorder %s180, %s183
      %p189 = scmp.eq.s32.totalorder %s18, 0
      %p190 = por %p188, %p189
      %p191 = scmp.ne.s32.totalorder %s180, %s183
      %p192 = scmp.eq.s32.totalorder %s23, 1
      %p193 = por %p191, %p192
      %p194 = scmp.ne.s32.totalorder %s183, %s184
      %p195 = scmp.eq.s32.totalorder %s23, 0
      %p196 = por %p194, %p195
      %p197 = scmp.ne.s32.totalorder %s183, %s184
      %p198 = scmp.eq.s32.totalorder %s24, 1
      %p199 = por %p197, %p198
      %p201 = scmp.ne.s32.totalorder %s184, %s200
      %p202 = scmp.eq.s32.totalorder %s24, 0
      %p203 = por %p201, %p202
      %p204 = scmp.le.s32.totalorder 1, %s18
      %p205 = scmp.lt.s32.totalorder %s18, 3
      %p206 = pnand %p204, %p205
      %p207 = pneg %p206
      // Predicated region
      $region9: #{tpu_custom_call.1} parent=5 // pred_check
        _
      $region10: #{tpu_custom_call.1} parent=5 // pred_check_branch
        %209 = sbr.rel (%p206) target = $region12
      $region11: #{tpu_custom_call.1} parent=5 // pred_region
        %s210 = ssub.s32 %s18, 1
        // Predicated region
        $region13: #{tpu_custom_call.1} parent=11 // pred_check
          %p211 = pneg %p65
        $region14: #{tpu_custom_call.1} parent=11 // pred_check_branch
          %213 = sbr.rel (%p211) target = $region16
        $region15: #{tpu_custom_call.1} parent=11 // pred_region
          _
        $region16: #{tpu_custom_call.1} parent=11 // pred_fallthru
          _
        // Predicated region
        $region17: #{tpu_custom_call.1} parent=11 // pred_check
          %p214 = pneg %p86
        $region18: #{tpu_custom_call.1} parent=11 // pred_check_branch
          %216 = sbr.rel (%p214) target = $region20
        $region19: #{tpu_custom_call.1} parent=11 // pred_region
          _
        $region20: #{tpu_custom_call.1} parent=11 // pred_fallthru
          _
        // Predicated region
        $region21: #{tpu_custom_call.1} parent=11 // pred_check
          %p217 = pneg %p107
        $region22: #{tpu_custom_call.1} parent=11 // pred_check_branch
          %219 = sbr.rel (%p217) target = $region24
        $region23: #{tpu_custom_call.1} parent=11 // pred_region
          _
        $region24: #{tpu_custom_call.1} parent=11 // pred_fallthru
          _
        // Predicated region
        $region25: #{tpu_custom_call.1} parent=11 // pred_check
          %p220 = pneg %p128
        $region26: #{tpu_custom_call.1} parent=11 // pred_check_branch
          %222 = sbr.rel (%p220) target = $region28
        $region27: #{tpu_custom_call.1} parent=11 // pred_region
          _
        $region28: #{tpu_custom_call.1} parent=11 // pred_fallthru
          _
        // Predicated region
        $region29: #{tpu_custom_call.1} parent=11 // pred_check
          %p223 = pneg %p149
        $region30: #{tpu_custom_call.1} parent=11 // pred_check_branch
          %225 = sbr.rel (%p223) target = $region32
        $region31: #{tpu_custom_call.1} parent=11 // pred_region
          _
        $region32: #{tpu_custom_call.1} parent=11 // pred_fallthru
          _
        // Predicated region
        $region33: #{tpu_custom_call.1} parent=11 // pred_check
          %p226 = pneg %p170
        $region34: #{tpu_custom_call.1} parent=11 // pred_check_branch
          %228 = sbr.rel (%p226) target = $region36
        $region35: #{tpu_custom_call.1} parent=11 // pred_region
          _
        $region36: #{tpu_custom_call.1} parent=11 // pred_fallthru
          _
      $region12: #{tpu_custom_call.1} parent=5 // pred_fallthru
        _
      %p229 = scmp.lt.s32.totalorder %s18, 2
      // Predicated region
      $region37: #{tpu_custom_call.1} parent=5 // pred_check
        %p230 = pneg %p229
      $region38: #{tpu_custom_call.1} parent=5 // pred_check_branch
        %232 = sbr.rel (%p230) target = $region40
      $region39: #{tpu_custom_call.1} parent=5 // pred_region
        // Predicated region
        $region41: #{tpu_custom_call.1} parent=39 // pred_check
          %p233 = pneg %p38
        $region42: #{tpu_custom_call.1} parent=39 // pred_check_branch
          %235 = sbr.rel (%p233) target = $region44
        $region43: #{tpu_custom_call.1} parent=39 // pred_region
          %p236 = scmp.lt.s32.totalorder %s18, 1
          %s237 = scalar_select %p236, %s18, 1
          %s238 = smul.addr %s237, 60
          %s239 = smul.addr %s238, 4
          %s240 = scalar_lea.vmem %s0, %s239
        $region44: #{tpu_custom_call.1} parent=39 // pred_fallthru
          _
      $region40: #{tpu_custom_call.1} parent=5 // pred_fallthru
        _
      %p241 = scmp.le.s32.totalorder 1, %s18
      %p242 = scmp.lt.s32.totalorder %s18, 3
      %p243 = pnand %p241, %p242
      %p244 = pneg %p243
      // Predicated region
      $region45: #{tpu_custom_call.1} parent=5 // pred_check
        _
      $region46: #{tpu_custom_call.1} parent=5 // pred_check_branch
        %246 = sbr.rel (%p243) target = $region48
      $region47: #{tpu_custom_call.1} parent=5 // pred_region
        %s247 = ssub.s32 %s18, 1
        %p248 = scmp.lt.s32.totalorder %s23, 1
        %s249 = scalar_select %p248, %s23, 1
        %s250 = smul.addr %s249, 60
        %s251 = smul.addr %s250, 4
        %s252 = scalar_lea.vmem %s0, %s251
        %p253 = pneg %p44
        %p254 = pneg %p41
        %p255 = pneg %p65
        %p256 = pneg %p62
        %p257 = pneg %p86
        %p258 = pneg %p83
        %p259 = pneg %p107
        %p260 = pneg %p104
        %p261 = pneg %p128
        %p262 = pneg %p125
        %p263 = pneg %p149
        %p264 = pneg %p146
        %p265 = pneg %p170
        %p266 = pneg %p167
        %p267 = pneg %p196
        %p268 = pneg %p193
        %s269 = sand.u32 %s183, 1
        %s270 = scalar_lea.sflag [#allocation8], %s269
        %s271 = sand.u32 %s183, 1
        %s272 = smul.addr %s271, 8
        %s273 = scalar_lea.vmem [#allocation7], %s272
        %p274 = scmp.lt.s32.totalorder %s23, 1
        %s275 = scalar_select %p274, %s23, 1
        %s276 = smul.addr %s275, 60
        %s277 = smul.addr %s276, 4
        %s278 = scalar_lea.vmem %s0, %s277
        %v280 = vlaneseq
        %v281 = vshrl.u32 %v280, 7
        %v282 = vadd.s32 %v281, 8
        %v283 = vadd.s32 %v281, 16
        %v284 = vadd.s32 %v281, 24
        %v285 = vadd.s32 %v281, 32
        %v286 = vadd.s32 %v281, 40
        %v287 = vadd.s32 %v281, 48
        %v288 = vadd.s32 %v281, 56
        %v289 = vadd.s32 %v281, 64
        %v290 = vadd.s32 %v281, 72
        %v291 = vadd.s32 %v281, 80
        %v292 = vadd.s32 %v281, 88
        %v293 = vadd.s32 %v281, 96
        %v294 = vadd.s32 %v281, 104
        %v295 = vadd.s32 %v281, 112
        %v296 = vadd.s32 %v281, 120
        %vm297 = vcmp.lt.s32.totalorder %v281, 0
        %v298 = vsub.s32 0, %v281
        %v299 = vsel %vm297, %v298, %v281
        %v300 = vshrl.u32 %v299, 4
        %v301 = vand.u32 %v299, 15
        %v302 = vsub.s32 0, %v301
        %v303 = vsel %vm297, %v302, %v301
        %vm304 = vcmp.lt.s32.totalorder %v282, 0
        %v305 = vsub.s32 0, %v282
        %v306 = vsel %vm304, %v305, %v282
        %v307 = vshrl.u32 %v306, 4
        %v308 = vand.u32 %v306, 15
        %v309 = vsub.s32 0, %v308
        %v310 = vsel %vm304, %v309, %v308
        %vm311 = vcmp.lt.s32.totalorder %v283, 0
        %v312 = vsub.s32 0, %v283
        %v313 = vsel %vm311, %v312, %v283
        %v314 = vshrl.u32 %v313, 4
        %v315 = vand.u32 %v313, 15
        %v316 = vsub.s32 0, %v315
        %v317 = vsel %vm311, %v316, %v315
        %vm318 = vcmp.lt.s32.totalorder %v284, 0
        %v319 = vsub.s32 0, %v284
        %v320 = vsel %vm318, %v319, %v284
        %v321 = vshrl.u32 %v320, 4
        %v322 = vand.u32 %v320, 15
        %v323 = vsub.s32 0, %v322
        %v324 = vsel %vm318, %v323, %v322
        %vm325 = vcmp.lt.s32.totalorder %v285, 0
        %v326 = vsub.s32 0, %v285
        %v327 = vsel %vm325, %v326, %v285
        %v328 = vshrl.u32 %v327, 4
        %v329 = vand.u32 %v327, 15
        %v330 = vsub.s32 0, %v329
        %v331 = vsel %vm325, %v330, %v329
        %vm332 = vcmp.lt.s32.totalorder %v286, 0
        %v333 = vsub.s32 0, %v286
        %v334 = vsel %vm332, %v333, %v286
        %v335 = vshrl.u32 %v334, 4
        %v336 = vand.u32 %v334, 15
        %v337 = vsub.s32 0, %v336
        %v338 = vsel %vm332, %v337, %v336
        %vm339 = vcmp.lt.s32.totalorder %v287, 0
        %v340 = vsub.s32 0, %v287
        %v341 = vsel %vm339, %v340, %v287
        %v342 = vshrl.u32 %v341, 4
        %v343 = vand.u32 %v341, 15
        %v344 = vsub.s32 0, %v343
        %v345 = vsel %vm339, %v344, %v343
        %vm346 = vcmp.lt.s32.totalorder %v288, 0
        %v347 = vsub.s32 0, %v288
        %v348 = vsel %vm346, %v347, %v288
        %v349 = vshrl.u32 %v348, 4
        %v350 = vand.u32 %v348, 15
        %v351 = vsub.s32 0, %v350
        %v352 = vsel %vm346, %v351, %v350
        %vm353 = vcmp.lt.s32.totalorder %v289, 0
        %v354 = vsub.s32 0, %v289
        %v355 = vsel %vm353, %v354, %v289
        %v356 = vshrl.u32 %v355, 4
        %v357 = vand.u32 %v355, 15
        %v358 = vsub.s32 0, %v357
        %v359 = vsel %vm353, %v358, %v357
        %vm360 = vcmp.lt.s32.totalorder %v290, 0
        %v361 = vsub.s32 0, %v290
        %v362 = vsel %vm360, %v361, %v290
        %v363 = vshrl.u32 %v362, 4
        %v364 = vand.u32 %v362, 15
        %v365 = vsub.s32 0, %v364
        %v366 = vsel %vm360, %v365, %v364
        %vm367 = vcmp.lt.s32.totalorder %v291, 0
        %v368 = vsub.s32 0, %v291
        %v369 = vsel %vm367, %v368, %v291
        %v370 = vshrl.u32 %v369, 4
        %v371 = vand.u32 %v369, 15
        %v372 = vsub.s32 0, %v371
        %v373 = vsel %vm367, %v372, %v371
        %vm374 = vcmp.lt.s32.totalorder %v292, 0
        %v375 = vsub.s32 0, %v292
        %v376 = vsel %vm374, %v375, %v292
        %v377 = vshrl.u32 %v376, 4
        %v378 = vand.u32 %v376, 15
        %v379 = vsub.s32 0, %v378
        %v380 = vsel %vm374, %v379, %v378
        %vm381 = vcmp.lt.s32.totalorder %v293, 0
        %v382 = vsub.s32 0, %v293
        %v383 = vsel %vm381, %v382, %v293
        %v384 = vshrl.u32 %v383, 4
        %v385 = vand.u32 %v383, 15
        %v386 = vsub.s32 0, %v385
        %v387 = vsel %vm381, %v386, %v385
        %vm388 = vcmp.lt.s32.totalorder %v294, 0
        %v389 = vsub.s32 0, %v294
        %v390 = vsel %vm388, %v389, %v294
        %v391 = vshrl.u32 %v390, 4
        %v392 = vand.u32 %v390, 15
        %v393 = vsub.s32 0, %v392
        %v394 = vsel %vm388, %v393, %v392
        %vm395 = vcmp.lt.s32.totalorder %v295, 0
        %v396 = vsub.s32 0, %v295
        %v397 = vsel %vm395, %v396, %v295
        %v398 = vshrl.u32 %v397, 4
        %v399 = vand.u32 %v397, 15
        %v400 = vsub.s32 0, %v399
        %v401 = vsel %vm395, %v400, %v399
        %vm402 = vcmp.lt.s32.totalorder %v296, 0
        %v403 = vsub.s32 0, %v296
        %v404 = vsel %vm402, %v403, %v296
        %v405 = vshrl.u32 %v404, 4
        %v406 = vand.u32 %v404, 15
        %v407 = vsub.s32 0, %v406
        %v408 = vsel %vm402, %v407, %v406
        %vm409 = vcmp.ne.s32.totalorder %v303, 0
        %vm410 = vcmp.ne.s32.totalorder %v310, 0
        %vm411 = vcmp.ne.s32.totalorder %v317, 0
        %vm412 = vcmp.ne.s32.totalorder %v324, 0
        %vm413 = vcmp.ne.s32.totalorder %v331, 0
        %vm414 = vcmp.ne.s32.totalorder %v338, 0
        %vm415 = vcmp.ne.s32.totalorder %v345, 0
        %vm416 = vcmp.ne.s32.totalorder %v352, 0
        %vm417 = vcmp.ne.s32.totalorder %v359, 0
        %vm418 = vcmp.ne.s32.totalorder %v366, 0
        %vm419 = vcmp.ne.s32.totalorder %v373, 0
        %vm420 = vcmp.ne.s32.totalorder %v380, 0
        %vm421 = vcmp.ne.s32.totalorder %v387, 0
        %vm422 = vcmp.ne.s32.totalorder %v394, 0
        %vm423 = vcmp.ne.s32.totalorder %v401, 0
        %vm424 = vcmp.ne.s32.totalorder %v408, 0
        %vm425 = vcmp.lt.s32.totalorder %v303, 0
        %vm426 = vcmp.lt.s32.totalorder %v310, 0
        %vm427 = vcmp.lt.s32.totalorder %v317, 0
        %vm428 = vcmp.lt.s32.totalorder %v324, 0
        %vm429 = vcmp.lt.s32.totalorder %v331, 0
        %vm430 = vcmp.lt.s32.totalorder %v338, 0
        %vm431 = vcmp.lt.s32.totalorder %v345, 0
        %vm432 = vcmp.lt.s32.totalorder %v352, 0
        %vm433 = vcmp.lt.s32.totalorder %v359, 0
        %vm434 = vcmp.lt.s32.totalorder %v366, 0
        %vm435 = vcmp.lt.s32.totalorder %v373, 0
        %vm436 = vcmp.lt.s32.totalorder %v380, 0
        %vm437 = vcmp.lt.s32.totalorder %v387, 0
        %vm438 = vcmp.lt.s32.totalorder %v394, 0
        %vm439 = vcmp.lt.s32.totalorder %v401, 0
        %vm440 = vcmp.lt.s32.totalorder %v408, 0
        %vm441 = vmand %vm425, %vm409
        %vm442 = vmand %vm426, %vm410
        %vm443 = vmand %vm427, %vm411
        %vm444 = vmand %vm428, %vm412
        %vm445 = vmand %vm429, %vm413
        %vm446 = vmand %vm430, %vm414
        %vm447 = vmand %vm431, %vm415
        %vm448 = vmand %vm432, %vm416
        %vm449 = vmand %vm433, %vm417
        %vm450 = vmand %vm434, %vm418
        %vm451 = vmand %vm435, %vm419
        %vm452 = vmand %vm436, %vm420
        %vm453 = vmand %vm437, %vm421
        %vm454 = vmand %vm438, %vm422
        %vm455 = vmand %vm439, %vm423
        %vm456 = vmand %vm440, %vm424
        %v457 = vadd.s32 %v303, 16
        %v458 = vadd.s32 %v310, 16
        %v459 = vadd.s32 %v317, 16
        %v460 = vadd.s32 %v324, 16
        %v461 = vadd.s32 %v331, 16
        %v462 = vadd.s32 %v338, 16
        %v463 = vadd.s32 %v345, 16
        %v464 = vadd.s32 %v352, 16
        %v465 = vadd.s32 %v359, 16
        %v466 = vadd.s32 %v366, 16
        %v467 = vadd.s32 %v373, 16
        %v468 = vadd.s32 %v380, 16
        %v469 = vadd.s32 %v387, 16
        %v470 = vadd.s32 %v394, 16
        %v471 = vadd.s32 %v401, 16
        %v472 = vadd.s32 %v408, 16
        %v473 = vsel %vm441, %v457, %v303
        %v474 = vsel %vm442, %v458, %v310
        %v475 = vsel %vm443, %v459, %v317
        %v476 = vsel %vm444, %v460, %v324
        %v477 = vsel %vm445, %v461, %v331
        %v478 = vsel %vm446, %v462, %v338
        %v479 = vsel %vm447, %v463, %v345
        %v480 = vsel %vm448, %v464, %v352
        %v481 = vsel %vm449, %v465, %v359
        %v482 = vsel %vm450, %v466, %v366
        %v483 = vsel %vm451, %v467, %v373
        %v484 = vsel %vm452, %v468, %v380
        %v485 = vsel %vm453, %v469, %v387
        %v486 = vsel %vm454, %v470, %v394
        %v487 = vsel %vm455, %v471, %v401
        %v488 = vsel %vm456, %v472, %v408
        %vm489 = vcmp.ge.s32.totalorder %v473, 1
        %vm490 = vcmp.ge.s32.totalorder %v474, 1
        %vm491 = vcmp.ge.s32.totalorder %v475, 1
        %vm492 = vcmp.ge.s32.totalorder %v476, 1
        %vm493 = vcmp.ge.s32.totalorder %v477, 1
        %vm494 = vcmp.ge.s32.totalorder %v478, 1
        %vm495 = vcmp.ge.s32.totalorder %v479, 1
        %vm496 = vcmp.ge.s32.totalorder %v480, 1
        %vm497 = vcmp.ge.s32.totalorder %v481, 1
        %vm498 = vcmp.ge.s32.totalorder %v482, 1
        %vm499 = vcmp.ge.s32.totalorder %v483, 1
        %vm500 = vcmp.ge.s32.totalorder %v484, 1
        %vm501 = vcmp.ge.s32.totalorder %v485, 1
        %vm502 = vcmp.ge.s32.totalorder %v486, 1
        %vm503 = vcmp.ge.s32.totalorder %v487, 1
        %vm504 = vcmp.ge.s32.totalorder %v488, 1
        %vm505 = vcmp.le.s32.totalorder %v473, 8
        %vm506 = vcmp.le.s32.totalorder %v474, 8
        %vm507 = vcmp.le.s32.totalorder %v475, 8
        %vm508 = vcmp.le.s32.totalorder %v476, 8
        %vm509 = vcmp.le.s32.totalorder %v477, 8
        %vm510 = vcmp.le.s32.totalorder %v478, 8
        %vm511 = vcmp.le.s32.totalorder %v479, 8
        %vm512 = vcmp.le.s32.totalorder %v480, 8
        %vm513 = vcmp.le.s32.totalorder %v481, 8
        %vm514 = vcmp.le.s32.totalorder %v482, 8
        %vm515 = vcmp.le.s32.totalorder %v483, 8
        %vm516 = vcmp.le.s32.totalorder %v484, 8
        %vm517 = vcmp.le.s32.totalorder %v485, 8
        %vm518 = vcmp.le.s32.totalorder %v486, 8
        %vm519 = vcmp.le.s32.totalorder %v487, 8
        %vm520 = vcmp.le.s32.totalorder %v488, 8
        %vm521 = vmand %vm489, %vm505
        %vm522 = vmand %vm490, %vm506
        %vm523 = vmand %vm491, %vm507
        %vm524 = vmand %vm492, %vm508
        %vm525 = vmand %vm493, %vm509
        %vm526 = vmand %vm494, %vm510
        %vm527 = vmand %vm495, %vm511
        %vm528 = vmand %vm496, %vm512
        %vm529 = vmand %vm497, %vm513
        %vm530 = vmand %vm498, %vm514
        %vm531 = vmand %vm499, %vm515
        %vm532 = vmand %vm500, %vm516
        %vm533 = vmand %vm501, %vm517
        %vm534 = vmand %vm502, %vm518
        %vm535 = vmand %vm503, %vm519
        %vm536 = vmand %vm504, %vm520
        %v537 = vld [vmem:[%s278] sm:$0xff]
        %v538 = vld [vmem:[%s278 + $0x8] sm:$0xf]
        %v539 = vld [vmem:[%s278 + $0xc] sm:$0xff]
        %v540 = vld [vmem:[%s278 + $0x14] sm:$0xf]
        %v541 = vld [vmem:[%s278 + $0x18] sm:$0xff]
        %v542 = vld [vmem:[%s278 + $0x20] sm:$0xf]
        %v543 = vld [vmem:[%s278 + $0x24] sm:$0xff]
        %v544 = vld [vmem:[%s278 + $0x2c] sm:$0xf]
        %v545 = vld [vmem:[%s278 + $0x30] sm:$0xff]
        %v546 = vld [vmem:[%s278 + $0x38] sm:$0xf]
        %v547 = vld [vmem:[%s278 + $0x3c] sm:$0xff]
        %v548 = vld [vmem:[%s278 + $0x44] sm:$0xf]
        %v549 = vld [vmem:[%s278 + $0x48] sm:$0xff]
        %v550 = vld [vmem:[%s278 + $0x50] sm:$0xf]
        %v551 = vld [vmem:[%s278 + $0x54] sm:$0xff]
        %v552 = vld [vmem:[%s278 + $0x5c] sm:$0xf]
        %v553 = vld [vmem:[%s278 + $0x60] sm:$0xff]
        %v554 = vld [vmem:[%s278 + $0x68] sm:$0xf]
        %v555 = vld [vmem:[%s278 + $0x6c] sm:$0xff]
        %v556 = vld [vmem:[%s278 + $0x74] sm:$0xf]
        %v557 = vld [vmem:[%s278 + $0x78] sm:$0xff]
        %v558 = vld [vmem:[%s278 + $0x80] sm:$0xf]
        %v559 = vld [vmem:[%s278 + $0x84] sm:$0xff]
        %v560 = vld [vmem:[%s278 + $0x8c] sm:$0xf]
        %v561 = vld [vmem:[%s278 + $0x90] sm:$0xff]
        %v562 = vld [vmem:[%s278 + $0x98] sm:$0xf]
        %v563 = vld [vmem:[%s278 + $0x9c] sm:$0xff]
        %v564 = vld [vmem:[%s278 + $0xa4] sm:$0xf]
        %v565 = vld [vmem:[%s278 + $0xa8] sm:$0xff]
        %v566 = vld [vmem:[%s278 + $0xb0] sm:$0xf]
        %v567 = vld [vmem:[%s278 + $0xb4] sm:$0xff]
        %v568 = vld [vmem:[%s278 + $0xbc] sm:$0xf]
        %v569 = vld [vmem:[%s1] sm:$0xff]
        %v570 = vld [vmem:[%s1 + $0x8] sm:$0xff]
        %v571 = vld [vmem:[%s1 + $0x10] sm:$0xff]
        %v572 = vld [vmem:[%s1 + $0x18] sm:$0xff]
        %v573 = vld [vmem:[%s1 + $0x20] sm:$0xff]
        %v574 = vld [vmem:[%s1 + $0x28] sm:$0xff]
        %v575 = vld [vmem:[%s1 + $0x30] sm:$0xff]
        %v576 = vld [vmem:[%s1 + $0x38] sm:$0xff]
        %v577 = vld [vmem:[%s1 + $0x40] sm:$0xff]
        %v578 = vld [vmem:[%s1 + $0x48] sm:$0xff]
        %v579 = vld [vmem:[%s1 + $0x50] sm:$0xff]
        %v580 = vld [vmem:[%s1 + $0x58] sm:$0xff]
        %v581 = vld [vmem:[%s1 + $0x60] sm:$0xff]
        %v582 = vld [vmem:[%s1 + $0x68] sm:$0xff]
        %v583 = vld [vmem:[%s1 + $0x70] sm:$0xff]
        %v584 = vld [vmem:[%s1 + $0x78] sm:$0xff]
        %v585 = vld [vmem:[%s1 + $0x80] sm:$0xff]
        %v586 = vld [vmem:[%s1 + $0x88] sm:$0xff]
        %v587 = vld [vmem:[%s1 + $0x90] sm:$0xff]
        %v588 = vld [vmem:[%s1 + $0x98] sm:$0xff]
        %v589 = vld [vmem:[%s1 + $0xa0] sm:$0xff]
        %v590 = vld [vmem:[%s1 + $0xa8] sm:$0xff]
        %v591 = vld [vmem:[%s1 + $0xb0] sm:$0xff]
        %v592 = vld [vmem:[%s1 + $0xb8] sm:$0xff]
        %v593 = vld [vmem:[%s1 + $0xc0] sm:$0xff]
        %v594 = vld [vmem:[%s1 + $0xc8] sm:$0xff]
        %v595 = vld [vmem:[%s1 + $0xd0] sm:$0xff]
        %v596 = vld [vmem:[%s1 + $0xd8] sm:$0xff]
        %v597 = vld [vmem:[%s1 + $0xe0] sm:$0xff]
        %v598 = vld [vmem:[%s1 + $0xe8] sm:$0xff]
        %v599 = vld [vmem:[%s1 + $0xf0] sm:$0xff]
        %v600 = vld [vmem:[%s1 + $0xf8] sm:$0xff]
        %v601 = vld [vmem:[%s1 + $0x100] sm:$0xff]
        %v602 = vld [vmem:[%s1 + $0x108] sm:$0xff]
        %v603 = vld [vmem:[%s1 + $0x110] sm:$0xff]
        %v604 = vld [vmem:[%s1 + $0x118] sm:$0xff]
        %v605 = vld [vmem:[%s1 + $0x120] sm:$0xff]
        %v606 = vld [vmem:[%s1 + $0x128] sm:$0xff]
        %v607 = vld [vmem:[%s1 + $0x130] sm:$0xff]
        %v608 = vld [vmem:[%s1 + $0x138] sm:$0xff]
        %v609 = vld [vmem:[%s1 + $0x140] sm:$0xff]
        %v610 = vld [vmem:[%s1 + $0x148] sm:$0xff]
        %v611 = vld [vmem:[%s1 + $0x150] sm:$0xff]
        %v612 = vld [vmem:[%s1 + $0x158] sm:$0xff]
        %s613 = scalar_lea.vmem %s1, 352
        %v614 = vld [vmem:[%s613] sm:$0xff]
        %v615 = vld [vmem:[%s613 + $0x8] sm:$0xff]
        %v616 = vld [vmem:[%s613 + $0x10] sm:$0xff]
        %v617 = vld [vmem:[%s613 + $0x18] sm:$0xff]
        %v618 = vld [vmem:[%s613 + $0x20] sm:$0xff]
        %v619 = vld [vmem:[%s613 + $0x28] sm:$0xff]
        %v620 = vld [vmem:[%s613 + $0x30] sm:$0xff]
        %v621 = vld [vmem:[%s613 + $0x38] sm:$0xff]
        %v622 = vld [vmem:[%s613 + $0x40] sm:$0xff]
        %v623 = vld [vmem:[%s613 + $0x48] sm:$0xff]
        %v624 = vld [vmem:[%s613 + $0x50] sm:$0xff]
        %v625 = vld [vmem:[%s613 + $0x58] sm:$0xff]
        %v626 = vld [vmem:[%s613 + $0x60] sm:$0xff]
        %v627 = vld [vmem:[%s613 + $0x68] sm:$0xff]
        %v628 = vld [vmem:[%s613 + $0x70] sm:$0xff]
        %v629 = vld [vmem:[%s613 + $0x78] sm:$0xff]
        %v630 = vld [vmem:[%s613 + $0x80] sm:$0xff]
        %v631 = vld [vmem:[%s613 + $0x88] sm:$0xff]
        %v632 = vld [vmem:[%s613 + $0x90] sm:$0xff]
        %v633 = vld [vmem:[%s613 + $0x98] sm:$0xff]
        %v634 = vld [vmem:[%s613 + $0xa0] sm:$0xff]
        %v635 = vld [vmem:[%s613 + $0xa8] sm:$0xff]
        %v636 = vld [vmem:[%s613 + $0xb0] sm:$0xff]
        %v637 = vld [vmem:[%s613 + $0xb8] sm:$0xff]
        %v638 = vld [vmem:[%s613 + $0xc0] sm:$0xff]
        %v639 = vld [vmem:[%s613 + $0xc8] sm:$0xff]
        %v640 = vld [vmem:[%s613 + $0xd0] sm:$0xff]
        %v641 = vld [vmem:[%s613 + $0xd8] sm:$0xff]
        %v642 = vld [vmem:[%s613 + $0xe0] sm:$0xff]
        %v643 = vld [vmem:[%s613 + $0xe8] sm:$0xff]
        %v644 = vld [vmem:[%s613 + $0xf0] sm:$0xff]
        %v645 = vld [vmem:[%s613 + $0xf8] sm:$0xff]
        %v646 = vld [vmem:[%s613 + $0x100] sm:$0xff]
        %v647 = vld [vmem:[%s613 + $0x108] sm:$0xff]
        %v648 = vld [vmem:[%s613 + $0x110] sm:$0xff]
        %v649 = vld [vmem:[%s613 + $0x118] sm:$0xff]
        %v650 = vld [vmem:[%s613 + $0x120] sm:$0xff]
        %v651 = vld [vmem:[%s613 + $0x128] sm:$0xff]
        %v652 = vld [vmem:[%s613 + $0x130] sm:$0xff]
        %v653 = vld [vmem:[%s613 + $0x138] sm:$0xff]
        %v654 = vld [vmem:[%s613 + $0x140] sm:$0xff]
        %v655 = vld [vmem:[%s613 + $0x148] sm:$0xff]
        %v656 = vld [vmem:[%s613 + $0x150] sm:$0xff]
        %v657 = vld [vmem:[%s613 + $0x158] sm:$0xff]
        %s658 = scalar_lea.vmem %s1, 704
        %v659 = vld [vmem:[%s658] sm:$0xff]
        %v660 = vld [vmem:[%s658 + $0x8] sm:$0xff]
        %v661 = vld [vmem:[%s658 + $0x10] sm:$0xff]
        %v662 = vld [vmem:[%s658 + $0x18] sm:$0xff]
        %v663 = vld [vmem:[%s658 + $0x20] sm:$0xff]
        %v664 = vld [vmem:[%s658 + $0x28] sm:$0xff]
        %v665 = vld [vmem:[%s658 + $0x30] sm:$0xff]
        %v666 = vld [vmem:[%s658 + $0x38] sm:$0xff]
        %v667 = vld [vmem:[%s658 + $0x40] sm:$0xff]
        %v668 = vld [vmem:[%s658 + $0x48] sm:$0xff]
        %v669 = vld [vmem:[%s658 + $0x50] sm:$0xff]
        %v670 = vld [vmem:[%s658 + $0x58] sm:$0xff]
        %v671 = vld [vmem:[%s658 + $0x60] sm:$0xff]
        %v672 = vld [vmem:[%s658 + $0x68] sm:$0xff]
        %v673 = vld [vmem:[%s658 + $0x70] sm:$0xff]
        %v674 = vld [vmem:[%s658 + $0x78] sm:$0xff]
        %v675 = vld [vmem:[%s658 + $0x80] sm:$0xff]
        %v676 = vld [vmem:[%s658 + $0x88] sm:$0xff]
        %v677 = vld [vmem:[%s658 + $0x90] sm:$0xff]
        %v678 = vld [vmem:[%s658 + $0x98] sm:$0xff]
        %v679 = vld [vmem:[%s658 + $0xa0] sm:$0xff]
        %v680 = vld [vmem:[%s658 + $0xa8] sm:$0xff]
        %v681 = vld [vmem:[%s658 + $0xb0] sm:$0xff]
        %v682 = vld [vmem:[%s658 + $0xb8] sm:$0xff]
        %v683 = vld [vmem:[%s658 + $0xc0] sm:$0xff]
        %v684 = vld [vmem:[%s658 + $0xc8] sm:$0xff]
        %v685 = vld [vmem:[%s658 + $0xd0] sm:$0xff]
        %v686 = vld [vmem:[%s658 + $0xd8] sm:$0xff]
        %v687 = vld [vmem:[%s658 + $0xe0] sm:$0xff]
        %v688 = vld [vmem:[%s658 + $0xe8] sm:$0xff]
        %v689 = vld [vmem:[%s658 + $0xf0] sm:$0xff]
        %v690 = vld [vmem:[%s658 + $0xf8] sm:$0xff]
        %v691 = vld [vmem:[%s658 + $0x100] sm:$0xff]
        %v692 = vld [vmem:[%s658 + $0x108] sm:$0xff]
        %v693 = vld [vmem:[%s658 + $0x110] sm:$0xff]
        %v694 = vld [vmem:[%s658 + $0x118] sm:$0xff]
        %v695 = vld [vmem:[%s658 + $0x120] sm:$0xff]
        %v696 = vld [vmem:[%s658 + $0x128] sm:$0xff]
        %v697 = vld [vmem:[%s658 + $0x130] sm:$0xff]
        %v698 = vld [vmem:[%s658 + $0x138] sm:$0xff]
        %v699 = vld [vmem:[%s658 + $0x140] sm:$0xff]
        %v700 = vld [vmem:[%s658 + $0x148] sm:$0xff]
        %v701 = vld [vmem:[%s658 + $0x150] sm:$0xff]
        %v702 = vld [vmem:[%s658 + $0x158] sm:$0xff]
        %v703 = vld [vmem:[%s278 + $0xc0] sm:$0xff]
        %v704 = vld [vmem:[%s278 + $0xc8] sm:$0xf]
        %v705 = vld [vmem:[%s278 + $0xcc] sm:$0xff]
        %v706 = vld [vmem:[%s278 + $0xd4] sm:$0xf]
        %s707 = scalar_lea.vmem %s1, 1056
        %v708 = vld [vmem:[%s707] sm:$0xff]
        %v709 = vld [vmem:[%s707 + $0x8] sm:$0xff]
        %v710 = vld [vmem:[%s707 + $0x10] sm:$0xff]
        %v711 = vld [vmem:[%s707 + $0x18] sm:$0xff]
        %v712 = vld [vmem:[%s707 + $0x20] sm:$0xff]
        %v713 = vld [vmem:[%s707 + $0x28] sm:$0xff]
        %v714 = vld [vmem:[%s707 + $0x30] sm:$0xff]
        %v715 = vld [vmem:[%s707 + $0x38] sm:$0xff]
        %v716 = vld [vmem:[%s707 + $0x40] sm:$0xff]
        %v717 = vld [vmem:[%s707 + $0x48] sm:$0xff]
        %v718 = vld [vmem:[%s707 + $0x50] sm:$0xff]
        %v719 = vld [vmem:[%s707 + $0x58] sm:$0xff]
        %v720 = vld [vmem:[%s707 + $0x60] sm:$0xff]
        %v721 = vld [vmem:[%s707 + $0x68] sm:$0xff]
        %v722 = vld [vmem:[%s707 + $0x70] sm:$0xff]
        %v723 = vld [vmem:[%s707 + $0x78] sm:$0xff]
        %v724 = vld [vmem:[%s707 + $0x80] sm:$0xff]
        %v725 = vld [vmem:[%s707 + $0x88] sm:$0xff]
        %v726 = vld [vmem:[%s707 + $0x90] sm:$0xff]
        %v727 = vld [vmem:[%s707 + $0x98] sm:$0xff]
        %v728 = vld [vmem:[%s707 + $0xa0] sm:$0xff]
        %v729 = vld [vmem:[%s707 + $0xa8] sm:$0xff]
        %v730 = vld [vmem:[%s707 + $0xb0] sm:$0xff]
        %v731 = vld [vmem:[%s707 + $0xb8] sm:$0xff]
        %v732 = vld [vmem:[%s707 + $0xc0] sm:$0xff]
        %v733 = vld [vmem:[%s707 + $0xc8] sm:$0xff]
        %v734 = vld [vmem:[%s707 + $0xd0] sm:$0xff]
        %v735 = vld [vmem:[%s707 + $0xd8] sm:$0xff]
        %v736 = vld [vmem:[%s707 + $0xe0] sm:$0xff]
        %v737 = vld [vmem:[%s707 + $0xe8] sm:$0xff]
        %v738 = vld [vmem:[%s707 + $0xf0] sm:$0xff]
        %v739 = vld [vmem:[%s707 + $0xf8] sm:$0xff]
        %v740 = vld [vmem:[%s707 + $0x100] sm:$0xff]
        %v741 = vld [vmem:[%s707 + $0x108] sm:$0xff]
        %v742 = vld [vmem:[%s707 + $0x110] sm:$0xff]
        %v743 = vld [vmem:[%s707 + $0x118] sm:$0xff]
        %v744 = vld [vmem:[%s707 + $0x120] sm:$0xff]
        %v745 = vld [vmem:[%s707 + $0x128] sm:$0xff]
        %v746 = vld [vmem:[%s707 + $0x130] sm:$0xff]
        %v747 = vld [vmem:[%s707 + $0x138] sm:$0xff]
        %v748 = vld [vmem:[%s707 + $0x140] sm:$0xff]
        %v749 = vld [vmem:[%s707 + $0x148] sm:$0xff]
        %v750 = vld [vmem:[%s707 + $0x150] sm:$0xff]
        %v751 = vld [vmem:[%s707 + $0x158] sm:$0xff]
        %v784 = vunpack.c.l.b16 %v541
        %v785 = vunpack.c.h.b16 %v541
        %v786 = vunpack.c.l.b16 %v542
        %v787 = vunpack.c.l.b16 %v543
        %v788 = vunpack.c.h.b16 %v543
        %v789 = vunpack.c.l.b16 %v544
        %v790 = vunpack.c.l.b16 %v545
        %v791 = vunpack.c.h.b16 %v545
        %v792 = vunpack.c.l.b16 %v546
        %v793 = vunpack.c.l.b16 %v547
        %v794 = vunpack.c.h.b16 %v547
        %v795 = vunpack.c.l.b16 %v548
        %v796 = vunpack.c.l.b16 %v549
        %v797 = vunpack.c.h.b16 %v549
        %v798 = vunpack.c.l.b16 %v550
        %v799 = vunpack.c.l.b16 %v551
        %v800 = vunpack.c.h.b16 %v551
        %v801 = vunpack.c.l.b16 %v552
        %v802 = vunpack.c.l.b16 %v553
        %v803 = vunpack.c.h.b16 %v553
        %v804 = vunpack.c.l.b16 %v554
        %v805 = vunpack.c.l.b16 %v555
        %v806 = vunpack.c.h.b16 %v555
        %v807 = vunpack.c.l.b16 %v556
        %v808 = vunpack.c.l.b16 %v557
        %v809 = vunpack.c.h.b16 %v557
        %v810 = vunpack.c.l.b16 %v558
        %v811 = vunpack.c.l.b16 %v559
        %v812 = vunpack.c.h.b16 %v559
        %v813 = vunpack.c.l.b16 %v560
        %v814 = vunpack.c.l.b16 %v561
        %v815 = vunpack.c.h.b16 %v561
        %v816 = vunpack.c.l.b16 %v562
        %v817 = vunpack.c.l.b16 %v563
        %v818 = vunpack.c.h.b16 %v563
        %v819 = vunpack.c.l.b16 %v564
        %v820 = vunpack.c.l.b16 %v565
        %v821 = vunpack.c.h.b16 %v565
        %v822 = vunpack.c.l.b16 %v566
        %v823 = vunpack.c.l.b16 %v567
        %v824 = vunpack.c.h.b16 %v567
        %v825 = vunpack.c.l.b16 %v568
        %v826 = vunpack.c.l.b16 %v703
        %v827 = vunpack.c.h.b16 %v703
        %v828 = vunpack.c.l.b16 %v704
        %v829 = vunpack.c.l.b16 %v705
        %v830 = vunpack.c.h.b16 %v705
        %v831 = vunpack.c.l.b16 %v706
        %v832 = vpack.c.b16 %v787, %v784
        %v833 = vpack.c.b16 %v788, %v785
        %v834 = vpack.c.b16 %v789, %v786
        %v835 = vpack.c.b16 %v793, %v790
        %v836 = vpack.c.b16 %v794, %v791
        %v837 = vpack.c.b16 %v795, %v792
        %v838 = vpack.c.b16 %v799, %v796
        %v839 = vpack.c.b16 %v800, %v797
        %v840 = vpack.c.b16 %v801, %v798
        %v841 = vpack.c.b16 %v805, %v802
        %v842 = vpack.c.b16 %v806, %v803
        %v843 = vpack.c.b16 %v807, %v804
        %v844 = vpack.c.b16 %v811, %v808
        %v845 = vpack.c.b16 %v812, %v809
        %v846 = vpack.c.b16 %v813, %v810
        %v847 = vpack.c.b16 %v817, %v814
        %v848 = vpack.c.b16 %v818, %v815
        %v849 = vpack.c.b16 %v819, %v816
        %v850 = vpack.c.b16 %v823, %v820
        %v851 = vpack.c.b16 %v824, %v821
        %v852 = vpack.c.b16 %v825, %v822
        %v853 = vpack.c.b16 %v829, %v826
        %v854 = vpack.c.b16 %v830, %v827
        %v855 = vpack.c.b16 %v831, %v828
        %v916 = vunpack.c.l.b16 %v708
        %v917 = vunpack.c.h.b16 %v708
        %v918 = vunpack.c.l.b16 %v709
        %v919 = vunpack.c.h.b16 %v709
        %v920 = vunpack.c.l.b16 %v710
        %v921 = vunpack.c.h.b16 %v710
        %v922 = vunpack.c.l.b16 %v711
        %v923 = vunpack.c.h.b16 %v711
        %v924 = vunpack.c.l.b16 %v712
        %v925 = vunpack.c.h.b16 %v712
        %v926 = vunpack.c.l.b16 %v713
        %v927 = vunpack.c.h.b16 %v713
        %v928 = vunpack.c.l.b16 %v714
        %v929 = vunpack.c.h.b16 %v714
        %v930 = vunpack.c.l.b16 %v715
        %v931 = vunpack.c.h.b16 %v715
        %v932 = vunpack.c.l.b16 %v716
        %v933 = vunpack.c.h.b16 %v716
        %v934 = vunpack.c.l.b16 %v717
        %v935 = vunpack.c.h.b16 %v717
        %v936 = vunpack.c.l.b16 %v718
        %v937 = vunpack.c.h.b16 %v718
        %v938 = vunpack.c.l.b16 %v719
        %v939 = vunpack.c.h.b16 %v719
        %v940 = vunpack.c.l.b16 %v720
        %v941 = vunpack.c.h.b16 %v720
        %v942 = vunpack.c.l.b16 %v721
        %v943 = vunpack.c.h.b16 %v721
        %v944 = vunpack.c.l.b16 %v722
        %v945 = vunpack.c.h.b16 %v722
        %v946 = vunpack.c.l.b16 %v723
        %v947 = vunpack.c.h.b16 %v723
        %v948 = vunpack.c.l.b16 %v724
        %v949 = vunpack.c.h.b16 %v724
        %v950 = vunpack.c.l.b16 %v725
        %v951 = vunpack.c.h.b16 %v725
        %v952 = vunpack.c.l.b16 %v726
        %v953 = vunpack.c.h.b16 %v726
        %v954 = vunpack.c.l.b16 %v727
        %v955 = vunpack.c.h.b16 %v727
        %v956 = vunpack.c.l.b16 %v728
        %v957 = vunpack.c.h.b16 %v728
        %v958 = vunpack.c.l.b16 %v729
        %v959 = vunpack.c.h.b16 %v729
        %v960 = vunpack.c.l.b16 %v730
        %v961 = vunpack.c.h.b16 %v730
        %v962 = vunpack.c.l.b16 %v731
        %v963 = vunpack.c.h.b16 %v731
        %v964 = vunpack.c.l.b16 %v732
        %v965 = vunpack.c.h.b16 %v732
        %v966 = vunpack.c.l.b16 %v733
        %v967 = vunpack.c.h.b16 %v733
        %v968 = vunpack.c.l.b16 %v734
        %v969 = vunpack.c.h.b16 %v734
        %v970 = vunpack.c.l.b16 %v735
        %v971 = vunpack.c.h.b16 %v735
        %v972 = vunpack.c.l.b16 %v736
        %v973 = vunpack.c.h.b16 %v736
        %v974 = vunpack.c.l.b16 %v737
        %v975 = vunpack.c.h.b16 %v737
        %v976 = vunpack.c.l.b16 %v738
        %v977 = vunpack.c.h.b16 %v738
        %v978 = vunpack.c.l.b16 %v739
        %v979 = vunpack.c.h.b16 %v739
        %v980 = vunpack.c.l.b16 %v740
        %v981 = vunpack.c.h.b16 %v740
        %v982 = vunpack.c.l.b16 %v741
        %v983 = vunpack.c.h.b16 %v741
        %v984 = vunpack.c.l.b16 %v742
        %v985 = vunpack.c.h.b16 %v742
        %v986 = vunpack.c.l.b16 %v743
        %v987 = vunpack.c.h.b16 %v743
        %v988 = vunpack.c.l.b16 %v744
        %v989 = vunpack.c.h.b16 %v744
        %v990 = vunpack.c.l.b16 %v745
        %v991 = vunpack.c.h.b16 %v745
        %v992 = vunpack.c.l.b16 %v746
        %v993 = vunpack.c.h.b16 %v746
        %v994 = vunpack.c.l.b16 %v747
        %v995 = vunpack.c.h.b16 %v747
        %v996 = vunpack.c.l.b16 %v748
        %v997 = vunpack.c.h.b16 %v748
        %v998 = vunpack.c.l.b16 %v749
        %v999 = vunpack.c.h.b16 %v749
        %v1000 = vunpack.c.l.b16 %v750
        %v1001 = vunpack.c.h.b16 %v750
        %v1002 = vunpack.c.l.b16 %v751
        %v1003 = vunpack.c.h.b16 %v751
        %v1004 = vpack.c.b16 %v918, %v916
        %v1005 = vpack.c.b16 %v919, %v917
        %v1006 = vpack.c.b16 %v922, %v920
        %v1007 = vpack.c.b16 %v923, %v921
        %v1008 = vpack.c.b16 %v926, %v924
        %v1009 = vpack.c.b16 %v927, %v925
        %v1010 = vpack.c.b16 %v930, %v928
        %v1011 = vpack.c.b16 %v931, %v929
        %v1012 = vpack.c.b16 %v934, %v932
        %v1013 = vpack.c.b16 %v935, %v933
        %v1014 = vpack.c.b16 %v938, %v936
        %v1015 = vpack.c.b16 %v939, %v937
        %v1016 = vpack.c.b16 %v942, %v940
        %v1017 = vpack.c.b16 %v943, %v941
        %v1018 = vpack.c.b16 %v946, %v944
        %v1019 = vpack.c.b16 %v947, %v945
        %v1020 = vpack.c.b16 %v950, %v948
        %v1021 = vpack.c.b16 %v951, %v949
        %v1022 = vpack.c.b16 %v954, %v952
        %v1023 = vpack.c.b16 %v955, %v953
        %v1024 = vpack.c.b16 %v958, %v956
        %v1025 = vpack.c.b16 %v959, %v957
        %v1026 = vpack.c.b16 %v962, %v960
        %v1027 = vpack.c.b16 %v963, %v961
        %v1028 = vpack.c.b16 %v966, %v964
        %v1029 = vpack.c.b16 %v967, %v965
        %v1030 = vpack.c.b16 %v970, %v968
        %v1031 = vpack.c.b16 %v971, %v969
        %v1032 = vpack.c.b16 %v974, %v972
        %v1033 = vpack.c.b16 %v975, %v973
        %v1034 = vpack.c.b16 %v978, %v976
        %v1035 = vpack.c.b16 %v979, %v977
        %v1036 = vpack.c.b16 %v982, %v980
        %v1037 = vpack.c.b16 %v983, %v981
        %v1038 = vpack.c.b16 %v986, %v984
        %v1039 = vpack.c.b16 %v987, %v985
        %v1040 = vpack.c.b16 %v990, %v988
        %v1041 = vpack.c.b16 %v991, %v989
        %v1042 = vpack.c.b16 %v994, %v992
        %v1043 = vpack.c.b16 %v995, %v993
        %v1044 = vpack.c.b16 %v998, %v996
        %v1045 = vpack.c.b16 %v999, %v997
        %v1046 = vpack.c.b16 %v1002, %v1000
        %v1047 = vpack.c.b16 %v1003, %v1001
        %vm1092 = vcmask 785408
        %v1094 = vsel %vm1092, %v834, 0
        %v1097 = vsel %vm1092, %v837, 0
        %v1100 = vsel %vm1092, %v840, 0
        %v1103 = vsel %vm1092, %v843, 0
        %v1106 = vsel %vm1092, %v846, 0
        %v1109 = vsel %vm1092, %v849, 0
        %v1112 = vsel %vm1092, %v852, 0
        %v1115 = vsel %vm1092, %v855, 0
        %1117 = vmatpush.bf16.msra.mxu0 %v1018
        %1118 = vmatpush.bf16.msra.mxu0 %v1016
        %1119 = vmatpush.bf16.msra.mxu0 %v1014
        %1120 = vmatpush.bf16.msra.mxu0 %v1012
        %1121 = vmatpush.bf16.msra.mxu0 %v1010
        %1122 = vmatpush.bf16.msra.mxu0 %v1008
        %1123 = vmatpush.bf16.msra.mxu0 %v1006
        %1124 = vmatpush.bf16.msra.mxu0 %v1004
        %1125 = vmatmul.bf16.gmra.mxu0 %v832
        %v1126 = vpop.f32.mrf.mxu0
        %v1127 = vadd.f32 0.0, %v1126
        %v1128 = vpop.f32.mrf.mxu0
        %v1129 = vadd.f32 0.0, %v1128
        %1130 = vmatmul.bf16.gmra.mxu0 %v835
        %v1131 = vpop.f32.mrf.mxu0
        %v1132 = vadd.f32 0.0, %v1131
        %v1133 = vpop.f32.mrf.mxu0
        %v1134 = vadd.f32 0.0, %v1133
        %1135 = vmatmul.bf16.gmra.mxu0 %v838
        %v1136 = vpop.f32.mrf.mxu0
        %v1137 = vadd.f32 0.0, %v1136
        %v1138 = vpop.f32.mrf.mxu0
        %v1139 = vadd.f32 0.0, %v1138
        %1140 = vmatmul.bf16.gmra.mxu0 %v841
        %v1141 = vpop.f32.mrf.mxu0
        %v1142 = vadd.f32 0.0, %v1141
        %v1143 = vpop.f32.mrf.mxu0
        %v1144 = vadd.f32 0.0, %v1143
        %1145 = vmatmul.bf16.gmra.mxu0 %v844
        %v1146 = vpop.f32.mrf.mxu0
        %v1147 = vadd.f32 0.0, %v1146
        %v1148 = vpop.f32.mrf.mxu0
        %v1149 = vadd.f32 0.0, %v1148
        %1150 = vmatmul.bf16.gmra.mxu0 %v847
        %v1151 = vpop.f32.mrf.mxu0
        %v1152 = vadd.f32 0.0, %v1151
        %v1153 = vpop.f32.mrf.mxu0
        %v1154 = vadd.f32 0.0, %v1153
        %1155 = vmatmul.bf16.gmra.mxu0 %v850
        %v1156 = vpop.f32.mrf.mxu0
        %v1157 = vadd.f32 0.0, %v1156
        %v1158 = vpop.f32.mrf.mxu0
        %v1159 = vadd.f32 0.0, %v1158
        %1160 = vmatmul.bf16.gmra.mxu0 %v853
        %v1161 = vpop.f32.mrf.mxu0
        %v1162 = vadd.f32 0.0, %v1161
        %v1163 = vpop.f32.mrf.mxu0
        %v1164 = vadd.f32 0.0, %v1163
        %1165 = vdwg.mxu0
        %1166 = vmatpush.bf16.msra.mxu0 %v1034
        %1167 = vmatpush.bf16.msra.mxu0 %v1032
        %1168 = vmatpush.bf16.msra.mxu0 %v1030
        %1169 = vmatpush.bf16.msra.mxu0 %v1028
        %1170 = vmatpush.bf16.msra.mxu0 %v1026
        %1171 = vmatpush.bf16.msra.mxu0 %v1024
        %1172 = vmatpush.bf16.msra.mxu0 %v1022
        %1173 = vmatpush.bf16.msra.mxu0 %v1020
        %1174 = vmatmul.bf16.gmra.mxu0 %v833
        %v1175 = vpop.f32.mrf.mxu0
        %v1176 = vadd.f32 %v1127, %v1175
        %v1177 = vpop.f32.mrf.mxu0
        %v1178 = vadd.f32 %v1129, %v1177
        %1179 = vmatmul.bf16.gmra.mxu0 %v836
        %v1180 = vpop.f32.mrf.mxu0
        %v1181 = vadd.f32 %v1132, %v1180
        %v1182 = vpop.f32.mrf.mxu0
        %v1183 = vadd.f32 %v1134, %v1182
        %1184 = vmatmul.bf16.gmra.mxu0 %v839
        %v1185 = vpop.f32.mrf.mxu0
        %v1186 = vadd.f32 %v1137, %v1185
        %v1187 = vpop.f32.mrf.mxu0
        %v1188 = vadd.f32 %v1139, %v1187
        %1189 = vmatmul.bf16.gmra.mxu0 %v842
        %v1190 = vpop.f32.mrf.mxu0
        %v1191 = vadd.f32 %v1142, %v1190
        %v1192 = vpop.f32.mrf.mxu0
        %v1193 = vadd.f32 %v1144, %v1192
        %1194 = vmatmul.bf16.gmra.mxu0 %v845
        %v1195 = vpop.f32.mrf.mxu0
        %v1196 = vadd.f32 %v1147, %v1195
        %v1197 = vpop.f32.mrf.mxu0
        %v1198 = vadd.f32 %v1149, %v1197
        %1199 = vmatmul.bf16.gmra.mxu0 %v848
        %v1200 = vpop.f32.mrf.mxu0
        %v1201 = vadd.f32 %v1152, %v1200
        %v1202 = vpop.f32.mrf.mxu0
        %v1203 = vadd.f32 %v1154, %v1202
        %1204 = vmatmul.bf16.gmra.mxu0 %v851
        %v1205 = vpop.f32.mrf.mxu0
        %v1206 = vadd.f32 %v1157, %v1205
        %v1207 = vpop.f32.mrf.mxu0
        %v1208 = vadd.f32 %v1159, %v1207
        %1209 = vmatmul.bf16.gmra.mxu0 %v854
        %v1210 = vpop.f32.mrf.mxu0
        %v1211 = vadd.f32 %v1162, %v1210
        %v1212 = vpop.f32.mrf.mxu0
        %v1213 = vadd.f32 %v1164, %v1212
        %1214 = vdwg.mxu0
        %1215 = vmatpush.bf16.msra.mxu0 0
        %1216 = vmatpush.bf16.msra.mxu0 0
        %1217 = vmatpush.bf16.msra.mxu0 %v1046
        %1218 = vmatpush.bf16.msra.mxu0 %v1044
        %1219 = vmatpush.bf16.msra.mxu0 %v1042
        %1220 = vmatpush.bf16.msra.mxu0 %v1040
        %1221 = vmatpush.bf16.msra.mxu0 %v1038
        %1222 = vmatpush.bf16.msra.mxu0 %v1036
        %1223 = vmatmul.bf16.gmra.mxu0 %v1094
        %v1224 = vpop.f32.mrf.mxu0
        %v1225 = vadd.f32 %v1176, %v1224
        %v1226 = vpop.f32.mrf.mxu0
        %v1227 = vadd.f32 %v1178, %v1226
        %1228 = vmatmul.bf16.gmra.mxu0 %v1097
        %v1229 = vpop.f32.mrf.mxu0
        %v1230 = vadd.f32 %v1181, %v1229
        %v1231 = vpop.f32.mrf.mxu0
        %v1232 = vadd.f32 %v1183, %v1231
        %1233 = vmatmul.bf16.gmra.mxu0 %v1100
        %v1234 = vpop.f32.mrf.mxu0
        %v1235 = vadd.f32 %v1186, %v1234
        %v1236 = vpop.f32.mrf.mxu0
        %v1237 = vadd.f32 %v1188, %v1236
        %1238 = vmatmul.bf16.gmra.mxu0 %v1103
        %v1239 = vpop.f32.mrf.mxu0
        %v1240 = vadd.f32 %v1191, %v1239
        %v1241 = vpop.f32.mrf.mxu0
        %v1242 = vadd.f32 %v1193, %v1241
        %1243 = vmatmul.bf16.gmra.mxu0 %v1106
        %v1244 = vpop.f32.mrf.mxu0
        %v1245 = vadd.f32 %v1196, %v1244
        %v1246 = vpop.f32.mrf.mxu0
        %v1247 = vadd.f32 %v1198, %v1246
        %1248 = vmatmul.bf16.gmra.mxu0 %v1109
        %v1249 = vpop.f32.mrf.mxu0
        %v1250 = vadd.f32 %v1201, %v1249
        %v1251 = vpop.f32.mrf.mxu0
        %v1252 = vadd.f32 %v1203, %v1251
        %1253 = vmatmul.bf16.gmra.mxu0 %v1112
        %v1254 = vpop.f32.mrf.mxu0
        %v1255 = vadd.f32 %v1206, %v1254
        %v1256 = vpop.f32.mrf.mxu0
        %v1257 = vadd.f32 %v1208, %v1256
        %1258 = vmatmul.bf16.gmra.mxu0 %v1115
        %v1259 = vpop.f32.mrf.mxu0
        %v1260 = vadd.f32 %v1211, %v1259
        %v1261 = vpop.f32.mrf.mxu0
        %v1262 = vadd.f32 %v1213, %v1261
        %1263 = vdwg.mxu0
        %1264 = vmatpush.bf16.msra.mxu0 %v1019
        %1265 = vmatpush.bf16.msra.mxu0 %v1017
        %1266 = vmatpush.bf16.msra.mxu0 %v1015
        %1267 = vmatpush.bf16.msra.mxu0 %v1013
        %1268 = vmatpush.bf16.msra.mxu0 %v1011
        %1269 = vmatpush.bf16.msra.mxu0 %v1009
        %1270 = vmatpush.bf16.msra.mxu0 %v1007
        %1271 = vmatpush.bf16.msra.mxu0 %v1005
        %1272 = vmatmul.bf16.gmra.mxu0 %v832
        %v1273 = vpop.f32.mrf.mxu0
        %v1274 = vadd.f32 0.0, %v1273
        %v1275 = vpop.f32.mrf.mxu0
        %v1276 = vadd.f32 0.0, %v1275
        %1277 = vmatmul.bf16.gmra.mxu0 %v835
        %v1278 = vpop.f32.mrf.mxu0
        %v1279 = vadd.f32 0.0, %v1278
        %v1280 = vpop.f32.mrf.mxu0
        %v1281 = vadd.f32 0.0, %v1280
        %1282 = vmatmul.bf16.gmra.mxu0 %v838
        %v1283 = vpop.f32.mrf.mxu0
        %v1284 = vadd.f32 0.0, %v1283
        %v1285 = vpop.f32.mrf.mxu0
        %v1286 = vadd.f32 0.0, %v1285
        %1287 = vmatmul.bf16.gmra.mxu0 %v841
        %v1288 = vpop.f32.mrf.mxu0
        %v1289 = vadd.f32 0.0, %v1288
        %v1290 = vpop.f32.mrf.mxu0
        %v1291 = vadd.f32 0.0, %v1290
        %1292 = vmatmul.bf16.gmra.mxu0 %v844
        %v1293 = vpop.f32.mrf.mxu0
        %v1294 = vadd.f32 0.0, %v1293
        %v1295 = vpop.f32.mrf.mxu0
        %v1296 = vadd.f32 0.0, %v1295
        %1297 = vmatmul.bf16.gmra.mxu0 %v847
        %v1298 = vpop.f32.mrf.mxu0
        %v1299 = vadd.f32 0.0, %v1298
        %v1300 = vpop.f32.mrf.mxu0
        %v1301 = vadd.f32 0.0, %v1300
        %1302 = vmatmul.bf16.gmra.mxu0 %v850
        %v1303 = vpop.f32.mrf.mxu0
        %v1304 = vadd.f32 0.0, %v1303
        %v1305 = vpop.f32.mrf.mxu0
        %v1306 = vadd.f32 0.0, %v1305
        %1307 = vmatmul.bf16.gmra.mxu0 %v853
        %v1308 = vpop.f32.mrf.mxu0
        %v1309 = vadd.f32 0.0, %v1308
        %v1310 = vpop.f32.mrf.mxu0
        %v1311 = vadd.f32 0.0, %v1310
        %1312 = vdwg.mxu0
        %1313 = vmatpush.bf16.msra.mxu0 %v1035
        %1314 = vmatpush.bf16.msra.mxu0 %v1033
        %1315 = vmatpush.bf16.msra.mxu0 %v1031
        %1316 = vmatpush.bf16.msra.mxu0 %v1029
        %1317 = vmatpush.bf16.msra.mxu0 %v1027
        %1318 = vmatpush.bf16.msra.mxu0 %v1025
        %1319 = vmatpush.bf16.msra.mxu0 %v1023
        %1320 = vmatpush.bf16.msra.mxu0 %v1021
        %1321 = vmatmul.bf16.gmra.mxu0 %v833
        %v1322 = vpop.f32.mrf.mxu0
        %v1323 = vadd.f32 %v1274, %v1322
        %v1324 = vpop.f32.mrf.mxu0
        %v1325 = vadd.f32 %v1276, %v1324
        %1326 = vmatmul.bf16.gmra.mxu0 %v836
        %v1327 = vpop.f32.mrf.mxu0
        %v1328 = vadd.f32 %v1279, %v1327
        %v1329 = vpop.f32.mrf.mxu0
        %v1330 = vadd.f32 %v1281, %v1329
        %1331 = vmatmul.bf16.gmra.mxu0 %v839
        %v1332 = vpop.f32.mrf.mxu0
        %v1333 = vadd.f32 %v1284, %v1332
        %v1334 = vpop.f32.mrf.mxu0
        %v1335 = vadd.f32 %v1286, %v1334
        %1336 = vmatmul.bf16.gmra.mxu0 %v842
        %v1337 = vpop.f32.mrf.mxu0
        %v1338 = vadd.f32 %v1289, %v1337
        %v1339 = vpop.f32.mrf.mxu0
        %v1340 = vadd.f32 %v1291, %v1339
        %1341 = vmatmul.bf16.gmra.mxu0 %v845
        %v1342 = vpop.f32.mrf.mxu0
        %v1343 = vadd.f32 %v1294, %v1342
        %v1344 = vpop.f32.mrf.mxu0
        %v1345 = vadd.f32 %v1296, %v1344
        %1346 = vmatmul.bf16.gmra.mxu0 %v848
        %v1347 = vpop.f32.mrf.mxu0
        %v1348 = vadd.f32 %v1299, %v1347
        %v1349 = vpop.f32.mrf.mxu0
        %v1350 = vadd.f32 %v1301, %v1349
        %1351 = vmatmul.bf16.gmra.mxu0 %v851
        %v1352 = vpop.f32.mrf.mxu0
        %v1353 = vadd.f32 %v1304, %v1352
        %v1354 = vpop.f32.mrf.mxu0
        %v1355 = vadd.f32 %v1306, %v1354
        %1356 = vmatmul.bf16.gmra.mxu0 %v854
        %v1357 = vpop.f32.mrf.mxu0
        %v1358 = vadd.f32 %v1309, %v1357
        %v1359 = vpop.f32.mrf.mxu0
        %v1360 = vadd.f32 %v1311, %v1359
        %1361 = vdwg.mxu0
        %1362 = vmatpush.bf16.msra.mxu0 0
        %1363 = vmatpush.bf16.msra.mxu0 0
        %1364 = vmatpush.bf16.msra.mxu0 %v1047
        %1365 = vmatpush.bf16.msra.mxu0 %v1045
        %1366 = vmatpush.bf16.msra.mxu0 %v1043
        %1367 = vmatpush.bf16.msra.mxu0 %v1041
        %1368 = vmatpush.bf16.msra.mxu0 %v1039
        %1369 = vmatpush.bf16.msra.mxu0 %v1037
        %1370 = vmatmul.bf16.gmra.mxu0 %v1094
        %v1371 = vpop.f32.mrf.mxu0
        %v1372 = vadd.f32 %v1323, %v1371
        %v1373 = vpop.f32.mrf.mxu0
        %v1374 = vadd.f32 %v1325, %v1373
        %1375 = vmatmul.bf16.gmra.mxu0 %v1097
        %v1376 = vpop.f32.mrf.mxu0
        %v1377 = vadd.f32 %v1328, %v1376
        %v1378 = vpop.f32.mrf.mxu0
        %v1379 = vadd.f32 %v1330, %v1378
        %1380 = vmatmul.bf16.gmra.mxu0 %v1100
        %v1381 = vpop.f32.mrf.mxu0
        %v1382 = vadd.f32 %v1333, %v1381
        %v1383 = vpop.f32.mrf.mxu0
        %v1384 = vadd.f32 %v1335, %v1383
        %1385 = vmatmul.bf16.gmra.mxu0 %v1103
        %v1386 = vpop.f32.mrf.mxu0
        %v1387 = vadd.f32 %v1338, %v1386
        %v1388 = vpop.f32.mrf.mxu0
        %v1389 = vadd.f32 %v1340, %v1388
        %1390 = vmatmul.bf16.gmra.mxu0 %v1106
        %v1391 = vpop.f32.mrf.mxu0
        %v1392 = vadd.f32 %v1343, %v1391
        %v1393 = vpop.f32.mrf.mxu0
        %v1394 = vadd.f32 %v1345, %v1393
        %1395 = vmatmul.bf16.gmra.mxu0 %v1109
        %v1396 = vpop.f32.mrf.mxu0
        %v1397 = vadd.f32 %v1348, %v1396
        %v1398 = vpop.f32.mrf.mxu0
        %v1399 = vadd.f32 %v1350, %v1398
        %1400 = vmatmul.bf16.gmra.mxu0 %v1112
        %v1401 = vpop.f32.mrf.mxu0
        %v1402 = vadd.f32 %v1353, %v1401
        %v1403 = vpop.f32.mrf.mxu0
        %v1404 = vadd.f32 %v1355, %v1403
        %1405 = vmatmul.bf16.gmra.mxu0 %v1115
        %v1406 = vpop.f32.mrf.mxu0
        %v1407 = vadd.f32 %v1358, %v1406
        %v1408 = vpop.f32.mrf.mxu0
        %v1409 = vadd.f32 %v1360, %v1408
        %1410 = vdwg.mxu0
        %v1415 = vunpack.c.l.b16 %v537
        %v1416 = vunpack.c.h.b16 %v537
        %v1417 = vunpack.c.l.b16 %v538
        %v1418 = vunpack.c.l.b16 %v539
        %v1419 = vunpack.c.h.b16 %v539
        %v1420 = vunpack.c.l.b16 %v540
        %v1421 = vpack.c.b16 %v1418, %v1415
        %v1422 = vpack.c.b16 %v1419, %v1416
        %v1423 = vpack.c.b16 %v1420, %v1417
        %v1470 = vunpack.c.l.b16 %v569
        %v1471 = vunpack.c.h.b16 %v569
        %v1472 = vunpack.c.l.b16 %v570
        %v1473 = vunpack.c.h.b16 %v570
        %v1474 = vunpack.c.l.b16 %v571
        %v1475 = vunpack.c.h.b16 %v571
        %v1476 = vunpack.c.l.b16 %v572
        %v1477 = vunpack.c.h.b16 %v572
        %v1478 = vunpack.c.l.b16 %v573
        %v1479 = vunpack.c.h.b16 %v573
        %v1480 = vunpack.c.l.b16 %v574
        %v1481 = vunpack.c.h.b16 %v574
        %v1482 = vunpack.c.l.b16 %v575
        %v1483 = vunpack.c.h.b16 %v575
        %v1484 = vunpack.c.l.b16 %v576
        %v1485 = vunpack.c.h.b16 %v576
        %v1486 = vunpack.c.l.b16 %v577
        %v1487 = vunpack.c.h.b16 %v577
        %v1488 = vunpack.c.l.b16 %v578
        %v1489 = vunpack.c.h.b16 %v578
        %v1490 = vunpack.c.l.b16 %v579
        %v1491 = vunpack.c.h.b16 %v579
        %v1492 = vunpack.c.l.b16 %v580
        %v1493 = vunpack.c.h.b16 %v580
        %v1494 = vunpack.c.l.b16 %v581
        %v1495 = vunpack.c.h.b16 %v581
        %v1496 = vunpack.c.l.b16 %v582
        %v1497 = vunpack.c.h.b16 %v582
        %v1498 = vunpack.c.l.b16 %v583
        %v1499 = vunpack.c.h.b16 %v583
        %v1500 = vunpack.c.l.b16 %v584
        %v1501 = vunpack.c.h.b16 %v584
        %v1502 = vunpack.c.l.b16 %v585
        %v1503 = vunpack.c.h.b16 %v585
        %v1504 = vunpack.c.l.b16 %v586
        %v1505 = vunpack.c.h.b16 %v586
        %v1506 = vunpack.c.l.b16 %v587
        %v1507 = vunpack.c.h.b16 %v587
        %v1508 = vunpack.c.l.b16 %v588
        %v1509 = vunpack.c.h.b16 %v588
        %v1510 = vunpack.c.l.b16 %v589
        %v1511 = vunpack.c.h.b16 %v589
        %v1512 = vunpack.c.l.b16 %v590
        %v1513 = vunpack.c.h.b16 %v590
        %v1514 = vunpack.c.l.b16 %v591
        %v1515 = vunpack.c.h.b16 %v591
        %v1516 = vunpack.c.l.b16 %v592
        %v1517 = vunpack.c.h.b16 %v592
        %v1518 = vunpack.c.l.b16 %v593
        %v1519 = vunpack.c.h.b16 %v593
        %v1520 = vunpack.c.l.b16 %v594
        %v1521 = vunpack.c.h.b16 %v594
        %v1522 = vunpack.c.l.b16 %v595
        %v1523 = vunpack.c.h.b16 %v595
        %v1524 = vunpack.c.l.b16 %v596
        %v1525 = vunpack.c.h.b16 %v596
        %v1526 = vunpack.c.l.b16 %v597
        %v1527 = vunpack.c.h.b16 %v597
        %v1528 = vunpack.c.l.b16 %v598
        %v1529 = vunpack.c.h.b16 %v598
        %v1530 = vunpack.c.l.b16 %v599
        %v1531 = vunpack.c.h.b16 %v599
        %v1532 = vunpack.c.l.b16 %v600
        %v1533 = vunpack.c.h.b16 %v600
        %v1534 = vunpack.c.l.b16 %v601
        %v1535 = vunpack.c.h.b16 %v601
        %v1536 = vunpack.c.l.b16 %v602
        %v1537 = vunpack.c.h.b16 %v602
        %v1538 = vunpack.c.l.b16 %v603
        %v1539 = vunpack.c.h.b16 %v603
        %v1540 = vunpack.c.l.b16 %v604
        %v1541 = vunpack.c.h.b16 %v604
        %v1542 = vunpack.c.l.b16 %v605
        %v1543 = vunpack.c.h.b16 %v605
        %v1544 = vunpack.c.l.b16 %v606
        %v1545 = vunpack.c.h.b16 %v606
        %v1546 = vunpack.c.l.b16 %v607
        %v1547 = vunpack.c.h.b16 %v607
        %v1548 = vunpack.c.l.b16 %v608
        %v1549 = vunpack.c.h.b16 %v608
        %v1550 = vunpack.c.l.b16 %v609
        %v1551 = vunpack.c.h.b16 %v609
        %v1552 = vunpack.c.l.b16 %v610
        %v1553 = vunpack.c.h.b16 %v610
        %v1554 = vunpack.c.l.b16 %v611
        %v1555 = vunpack.c.h.b16 %v611
        %v1556 = vunpack.c.l.b16 %v612
        %v1557 = vunpack.c.h.b16 %v612
        %v1558 = vpack.c.b16 %v1472, %v1470
        %v1559 = vpack.c.b16 %v1473, %v1471
        %v1560 = vpack.c.b16 %v1476, %v1474
        %v1561 = vpack.c.b16 %v1477, %v1475
        %v1562 = vpack.c.b16 %v1480, %v1478
        %v1563 = vpack.c.b16 %v1481, %v1479
        %v1564 = vpack.c.b16 %v1484, %v1482
        %v1565 = vpack.c.b16 %v1485, %v1483
        %v1566 = vpack.c.b16 %v1488, %v1486
        %v1567 = vpack.c.b16 %v1489, %v1487
        %v1568 = vpack.c.b16 %v1492, %v1490
        %v1569 = vpack.c.b16 %v1493, %v1491
        %v1570 = vpack.c.b16 %v1496, %v1494
        %v1571 = vpack.c.b16 %v1497, %v1495
        %v1572 = vpack.c.b16 %v1500, %v1498
        %v1573 = vpack.c.b16 %v1501, %v1499
        %v1574 = vpack.c.b16 %v1504, %v1502
        %v1575 = vpack.c.b16 %v1505, %v1503
        %v1576 = vpack.c.b16 %v1508, %v1506
        %v1577 = vpack.c.b16 %v1509, %v1507
        %v1578 = vpack.c.b16 %v1512, %v1510
        %v1579 = vpack.c.b16 %v1513, %v1511
        %v1580 = vpack.c.b16 %v1516, %v1514
        %v1581 = vpack.c.b16 %v1517, %v1515
        %v1582 = vpack.c.b16 %v1520, %v1518
        %v1583 = vpack.c.b16 %v1521, %v1519
        %v1584 = vpack.c.b16 %v1524, %v1522
        %v1585 = vpack.c.b16 %v1525, %v1523
        %v1586 = vpack.c.b16 %v1528, %v1526
        %v1587 = vpack.c.b16 %v1529, %v1527
        %v1588 = vpack.c.b16 %v1532, %v1530
        %v1589 = vpack.c.b16 %v1533, %v1531
        %v1590 = vpack.c.b16 %v1536, %v1534
        %v1591 = vpack.c.b16 %v1537, %v1535
        %v1592 = vpack.c.b16 %v1540, %v1538
        %v1593 = vpack.c.b16 %v1541, %v1539
        %v1594 = vpack.c.b16 %v1544, %v1542
        %v1595 = vpack.c.b16 %v1545, %v1543
        %v1596 = vpack.c.b16 %v1548, %v1546
        %v1597 = vpack.c.b16 %v1549, %v1547
        %v1598 = vpack.c.b16 %v1552, %v1550
        %v1599 = vpack.c.b16 %v1553, %v1551
        %v1600 = vpack.c.b16 %v1556, %v1554
        %v1601 = vpack.c.b16 %v1557, %v1555
        %v1647 = vsel %vm1092, %v1423, 0
        %1649 = vmatpush.bf16.msra.mxu0 %v1572
        %1650 = vmatpush.bf16.msra.mxu0 %v1570
        %1651 = vmatpush.bf16.msra.mxu0 %v1568
        %1652 = vmatpush.bf16.msra.mxu0 %v1566
        %1653 = vmatpush.bf16.msra.mxu0 %v1564
        %1654 = vmatpush.bf16.msra.mxu0 %v1562
        %1655 = vmatpush.bf16.msra.mxu0 %v1560
        %1656 = vmatpush.bf16.msra.mxu0 %v1558
        %1657 = vmatmul.bf16.gmra.mxu0 %v1421
        %v1658 = vpop.f32.mrf.mxu0
        %v1659 = vadd.f32 %v1225, %v1658
        %v1660 = vpop.f32.mrf.mxu0
        %v1661 = vadd.f32 %v1227, %v1660
        %1662 = vmatmul.bf16.gmra.mxu0 %v832
        %v1663 = vpop.f32.mrf.mxu0
        %v1664 = vadd.f32 %v1230, %v1663
        %v1665 = vpop.f32.mrf.mxu0
        %v1666 = vadd.f32 %v1232, %v1665
        %1667 = vmatmul.bf16.gmra.mxu0 %v835
        %v1668 = vpop.f32.mrf.mxu0
        %v1669 = vadd.f32 %v1235, %v1668
        %v1670 = vpop.f32.mrf.mxu0
        %v1671 = vadd.f32 %v1237, %v1670
        %1672 = vmatmul.bf16.gmra.mxu0 %v838
        %v1673 = vpop.f32.mrf.mxu0
        %v1674 = vadd.f32 %v1240, %v1673
        %v1675 = vpop.f32.mrf.mxu0
        %v1676 = vadd.f32 %v1242, %v1675
        %1677 = vmatmul.bf16.gmra.mxu0 %v841
        %v1678 = vpop.f32.mrf.mxu0
        %v1679 = vadd.f32 %v1245, %v1678
        %v1680 = vpop.f32.mrf.mxu0
        %v1681 = vadd.f32 %v1247, %v1680
        %1682 = vmatmul.bf16.gmra.mxu0 %v844
        %v1683 = vpop.f32.mrf.mxu0
        %v1684 = vadd.f32 %v1250, %v1683
        %v1685 = vpop.f32.mrf.mxu0
        %v1686 = vadd.f32 %v1252, %v1685
        %1687 = vmatmul.bf16.gmra.mxu0 %v847
        %v1688 = vpop.f32.mrf.mxu0
        %v1689 = vadd.f32 %v1255, %v1688
        %v1690 = vpop.f32.mrf.mxu0
        %v1691 = vadd.f32 %v1257, %v1690
        %1692 = vmatmul.bf16.gmra.mxu0 %v850
        %v1693 = vpop.f32.mrf.mxu0
        %v1694 = vadd.f32 %v1260, %v1693
        %v1695 = vpop.f32.mrf.mxu0
        %v1696 = vadd.f32 %v1262, %v1695
        %1697 = vdwg.mxu0
        %1698 = vmatpush.bf16.msra.mxu0 %v1588
        %1699 = vmatpush.bf16.msra.mxu0 %v1586
        %1700 = vmatpush.bf16.msra.mxu0 %v1584
        %1701 = vmatpush.bf16.msra.mxu0 %v1582
        %1702 = vmatpush.bf16.msra.mxu0 %v1580
        %1703 = vmatpush.bf16.msra.mxu0 %v1578
        %1704 = vmatpush.bf16.msra.mxu0 %v1576
        %1705 = vmatpush.bf16.msra.mxu0 %v1574
        %1706 = vmatmul.bf16.gmra.mxu0 %v1422
        %v1707 = vpop.f32.mrf.mxu0
        %v1708 = vadd.f32 %v1659, %v1707
        %v1709 = vpop.f32.mrf.mxu0
        %v1710 = vadd.f32 %v1661, %v1709
        %1711 = vmatmul.bf16.gmra.mxu0 %v833
        %v1712 = vpop.f32.mrf.mxu0
        %v1713 = vadd.f32 %v1664, %v1712
        %v1714 = vpop.f32.mrf.mxu0
        %v1715 = vadd.f32 %v1666, %v1714
        %1716 = vmatmul.bf16.gmra.mxu0 %v836
        %v1717 = vpop.f32.mrf.mxu0
        %v1718 = vadd.f32 %v1669, %v1717
        %v1719 = vpop.f32.mrf.mxu0
        %v1720 = vadd.f32 %v1671, %v1719
        %1721 = vmatmul.bf16.gmra.mxu0 %v839
        %v1722 = vpop.f32.mrf.mxu0
        %v1723 = vadd.f32 %v1674, %v1722
        %v1724 = vpop.f32.mrf.mxu0
        %v1725 = vadd.f32 %v1676, %v1724
        %1726 = vmatmul.bf16.gmra.mxu0 %v842
        %v1727 = vpop.f32.mrf.mxu0
        %v1728 = vadd.f32 %v1679, %v1727
        %v1729 = vpop.f32.mrf.mxu0
        %v1730 = vadd.f32 %v1681, %v1729
        %1731 = vmatmul.bf16.gmra.mxu0 %v845
        %v1732 = vpop.f32.mrf.mxu0
        %v1733 = vadd.f32 %v1684, %v1732
        %v1734 = vpop.f32.mrf.mxu0
        %v1735 = vadd.f32 %v1686, %v1734
        %1736 = vmatmul.bf16.gmra.mxu0 %v848
        %v1737 = vpop.f32.mrf.mxu0
        %v1738 = vadd.f32 %v1689, %v1737
        %v1739 = vpop.f32.mrf.mxu0
        %v1740 = vadd.f32 %v1691, %v1739
        %1741 = vmatmul.bf16.gmra.mxu0 %v851
        %v1742 = vpop.f32.mrf.mxu0
        %v1743 = vadd.f32 %v1694, %v1742
        %v1744 = vpop.f32.mrf.mxu0
        %v1745 = vadd.f32 %v1696, %v1744
        %1746 = vdwg.mxu0
        %1747 = vmatpush.bf16.msra.mxu0 0
        %1748 = vmatpush.bf16.msra.mxu0 0
        %1749 = vmatpush.bf16.msra.mxu0 %v1600
        %1750 = vmatpush.bf16.msra.mxu0 %v1598
        %1751 = vmatpush.bf16.msra.mxu0 %v1596
        %1752 = vmatpush.bf16.msra.mxu0 %v1594
        %1753 = vmatpush.bf16.msra.mxu0 %v1592
        %1754 = vmatpush.bf16.msra.mxu0 %v1590
        %1755 = vmatmul.bf16.gmra.mxu0 %v1647
        %v1756 = vpop.f32.mrf.mxu0
        %v1757 = vadd.f32 %v1708, %v1756
        %v1758 = vpop.f32.mrf.mxu0
        %v1759 = vadd.f32 %v1710, %v1758
        %1760 = vmatmul.bf16.gmra.mxu0 %v1094
        %v1761 = vpop.f32.mrf.mxu0
        %v1762 = vadd.f32 %v1713, %v1761
        %v1763 = vpop.f32.mrf.mxu0
        %v1764 = vadd.f32 %v1715, %v1763
        %1765 = vmatmul.bf16.gmra.mxu0 %v1097
        %v1766 = vpop.f32.mrf.mxu0
        %v1767 = vadd.f32 %v1718, %v1766
        %v1768 = vpop.f32.mrf.mxu0
        %v1769 = vadd.f32 %v1720, %v1768
        %1770 = vmatmul.bf16.gmra.mxu0 %v1100
        %v1771 = vpop.f32.mrf.mxu0
        %v1772 = vadd.f32 %v1723, %v1771
        %v1773 = vpop.f32.mrf.mxu0
        %v1774 = vadd.f32 %v1725, %v1773
        %1775 = vmatmul.bf16.gmra.mxu0 %v1103
        %v1776 = vpop.f32.mrf.mxu0
        %v1777 = vadd.f32 %v1728, %v1776
        %v1778 = vpop.f32.mrf.mxu0
        %v1779 = vadd.f32 %v1730, %v1778
        %1780 = vmatmul.bf16.gmra.mxu0 %v1106
        %v1781 = vpop.f32.mrf.mxu0
        %v1782 = vadd.f32 %v1733, %v1781
        %v1783 = vpop.f32.mrf.mxu0
        %v1784 = vadd.f32 %v1735, %v1783
        %1785 = vmatmul.bf16.gmra.mxu0 %v1109
        %v1786 = vpop.f32.mrf.mxu0
        %v1787 = vadd.f32 %v1738, %v1786
        %v1788 = vpop.f32.mrf.mxu0
        %v1789 = vadd.f32 %v1740, %v1788
        %1790 = vmatmul.bf16.gmra.mxu0 %v1112
        %v1791 = vpop.f32.mrf.mxu0
        %v1792 = vadd.f32 %v1743, %v1791
        %v1793 = vpop.f32.mrf.mxu0
        %v1794 = vadd.f32 %v1745, %v1793
        %1795 = vdwg.mxu0
        %1796 = vmatpush.bf16.msra.mxu0 %v1573
        %1797 = vmatpush.bf16.msra.mxu0 %v1571
        %1798 = vmatpush.bf16.msra.mxu0 %v1569
        %1799 = vmatpush.bf16.msra.mxu0 %v1567
        %1800 = vmatpush.bf16.msra.mxu0 %v1565
        %1801 = vmatpush.bf16.msra.mxu0 %v1563
        %1802 = vmatpush.bf16.msra.mxu0 %v1561
        %1803 = vmatpush.bf16.msra.mxu0 %v1559
        %1804 = vmatmul.bf16.gmra.mxu0 %v1421
        %v1805 = vpop.f32.mrf.mxu0
        %v1806 = vadd.f32 %v1372, %v1805
        %v1807 = vpop.f32.mrf.mxu0
        %v1808 = vadd.f32 %v1374, %v1807
        %1809 = vmatmul.bf16.gmra.mxu0 %v832
        %v1810 = vpop.f32.mrf.mxu0
        %v1811 = vadd.f32 %v1377, %v1810
        %v1812 = vpop.f32.mrf.mxu0
        %v1813 = vadd.f32 %v1379, %v1812
        %1814 = vmatmul.bf16.gmra.mxu0 %v835
        %v1815 = vpop.f32.mrf.mxu0
        %v1816 = vadd.f32 %v1382, %v1815
        %v1817 = vpop.f32.mrf.mxu0
        %v1818 = vadd.f32 %v1384, %v1817
        %1819 = vmatmul.bf16.gmra.mxu0 %v838
        %v1820 = vpop.f32.mrf.mxu0
        %v1821 = vadd.f32 %v1387, %v1820
        %v1822 = vpop.f32.mrf.mxu0
        %v1823 = vadd.f32 %v1389, %v1822
        %1824 = vmatmul.bf16.gmra.mxu0 %v841
        %v1825 = vpop.f32.mrf.mxu0
        %v1826 = vadd.f32 %v1392, %v1825
        %v1827 = vpop.f32.mrf.mxu0
        %v1828 = vadd.f32 %v1394, %v1827
        %1829 = vmatmul.bf16.gmra.mxu0 %v844
        %v1830 = vpop.f32.mrf.mxu0
        %v1831 = vadd.f32 %v1397, %v1830
        %v1832 = vpop.f32.mrf.mxu0
        %v1833 = vadd.f32 %v1399, %v1832
        %1834 = vmatmul.bf16.gmra.mxu0 %v847
        %v1835 = vpop.f32.mrf.mxu0
        %v1836 = vadd.f32 %v1402, %v1835
        %v1837 = vpop.f32.mrf.mxu0
        %v1838 = vadd.f32 %v1404, %v1837
        %1839 = vmatmul.bf16.gmra.mxu0 %v850
        %v1840 = vpop.f32.mrf.mxu0
        %v1841 = vadd.f32 %v1407, %v1840
        %v1842 = vpop.f32.mrf.mxu0
        %v1843 = vadd.f32 %v1409, %v1842
        %1844 = vdwg.mxu0
        %1845 = vmatpush.bf16.msra.mxu0 %v1589
        %1846 = vmatpush.bf16.msra.mxu0 %v1587
        %1847 = vmatpush.bf16.msra.mxu0 %v1585
        %1848 = vmatpush.bf16.msra.mxu0 %v1583
        %1849 = vmatpush.bf16.msra.mxu0 %v1581
        %1850 = vmatpush.bf16.msra.mxu0 %v1579
        %1851 = vmatpush.bf16.msra.mxu0 %v1577
        %1852 = vmatpush.bf16.msra.mxu0 %v1575
        %1853 = vmatmul.bf16.gmra.mxu0 %v1422
        %v1854 = vpop.f32.mrf.mxu0
        %v1855 = vadd.f32 %v1806, %v1854
        %v1856 = vpop.f32.mrf.mxu0
        %v1857 = vadd.f32 %v1808, %v1856
        %1858 = vmatmul.bf16.gmra.mxu0 %v833
        %v1859 = vpop.f32.mrf.mxu0
        %v1860 = vadd.f32 %v1811, %v1859
        %v1861 = vpop.f32.mrf.mxu0
        %v1862 = vadd.f32 %v1813, %v1861
        %1863 = vmatmul.bf16.gmra.mxu0 %v836
        %v1864 = vpop.f32.mrf.mxu0
        %v1865 = vadd.f32 %v1816, %v1864
        %v1866 = vpop.f32.mrf.mxu0
        %v1867 = vadd.f32 %v1818, %v1866
        %1868 = vmatmul.bf16.gmra.mxu0 %v839
        %v1869 = vpop.f32.mrf.mxu0
        %v1870 = vadd.f32 %v1821, %v1869
        %v1871 = vpop.f32.mrf.mxu0
        %v1872 = vadd.f32 %v1823, %v1871
        %1873 = vmatmul.bf16.gmra.mxu0 %v842
        %v1874 = vpop.f32.mrf.mxu0
        %v1875 = vadd.f32 %v1826, %v1874
        %v1876 = vpop.f32.mrf.mxu0
        %v1877 = vadd.f32 %v1828, %v1876
        %1878 = vmatmul.bf16.gmra.mxu0 %v845
        %v1879 = vpop.f32.mrf.mxu0
        %v1880 = vadd.f32 %v1831, %v1879
        %v1881 = vpop.f32.mrf.mxu0
        %v1882 = vadd.f32 %v1833, %v1881
        %1883 = vmatmul.bf16.gmra.mxu0 %v848
        %v1884 = vpop.f32.mrf.mxu0
        %v1885 = vadd.f32 %v1836, %v1884
        %v1886 = vpop.f32.mrf.mxu0
        %v1887 = vadd.f32 %v1838, %v1886
        %1888 = vmatmul.bf16.gmra.mxu0 %v851
        %v1889 = vpop.f32.mrf.mxu0
        %v1890 = vadd.f32 %v1841, %v1889
        %v1891 = vpop.f32.mrf.mxu0
        %v1892 = vadd.f32 %v1843, %v1891
        %1893 = vdwg.mxu0
        %1894 = vmatpush.bf16.msra.mxu0 0
        %1895 = vmatpush.bf16.msra.mxu0 0
        %1896 = vmatpush.bf16.msra.mxu0 %v1601
        %1897 = vmatpush.bf16.msra.mxu0 %v1599
        %1898 = vmatpush.bf16.msra.mxu0 %v1597
        %1899 = vmatpush.bf16.msra.mxu0 %v1595
        %1900 = vmatpush.bf16.msra.mxu0 %v1593
        %1901 = vmatpush.bf16.msra.mxu0 %v1591
        %1902 = vmatmul.bf16.gmra.mxu0 %v1647
        %v1903 = vpop.f32.mrf.mxu0
        %v1904 = vadd.f32 %v1855, %v1903
        %v1905 = vpop.f32.mrf.mxu0
        %v1906 = vadd.f32 %v1857, %v1905
        %1907 = vmatmul.bf16.gmra.mxu0 %v1094
        %v1908 = vpop.f32.mrf.mxu0
        %v1909 = vadd.f32 %v1860, %v1908
        %v1910 = vpop.f32.mrf.mxu0
        %v1911 = vadd.f32 %v1862, %v1910
        %1912 = vmatmul.bf16.gmra.mxu0 %v1097
        %v1913 = vpop.f32.mrf.mxu0
        %v1914 = vadd.f32 %v1865, %v1913
        %v1915 = vpop.f32.mrf.mxu0
        %v1916 = vadd.f32 %v1867, %v1915
        %1917 = vmatmul.bf16.gmra.mxu0 %v1100
        %v1918 = vpop.f32.mrf.mxu0
        %v1919 = vadd.f32 %v1870, %v1918
        %v1920 = vpop.f32.mrf.mxu0
        %v1921 = vadd.f32 %v1872, %v1920
        %1922 = vmatmul.bf16.gmra.mxu0 %v1103
        %v1923 = vpop.f32.mrf.mxu0
        %v1924 = vadd.f32 %v1875, %v1923
        %v1925 = vpop.f32.mrf.mxu0
        %v1926 = vadd.f32 %v1877, %v1925
        %1927 = vmatmul.bf16.gmra.mxu0 %v1106
        %v1928 = vpop.f32.mrf.mxu0
        %v1929 = vadd.f32 %v1880, %v1928
        %v1930 = vpop.f32.mrf.mxu0
        %v1931 = vadd.f32 %v1882, %v1930
        %1932 = vmatmul.bf16.gmra.mxu0 %v1109
        %v1933 = vpop.f32.mrf.mxu0
        %v1934 = vadd.f32 %v1885, %v1933
        %v1935 = vpop.f32.mrf.mxu0
        %v1936 = vadd.f32 %v1887, %v1935
        %1937 = vmatmul.bf16.gmra.mxu0 %v1112
        %v1938 = vpop.f32.mrf.mxu0
        %v1939 = vadd.f32 %v1890, %v1938
        %v1940 = vpop.f32.mrf.mxu0
        %v1941 = vadd.f32 %v1892, %v1940
        %1942 = vdwg.mxu0
        %s1943 = scalar_lea.vmem %s1, 1408
        %v1944 = vld [vmem:[%s1943] sm:$0xff]
        %v1945 = vld [vmem:[%s1943 + $0x8] sm:$0xff]
        %v1946 = vld [vmem:[%s1943 + $0x10] sm:$0xff]
        %v1947 = vld [vmem:[%s1943 + $0x18] sm:$0xff]
        %v1948 = vld [vmem:[%s1943 + $0x20] sm:$0xff]
        %v1949 = vld [vmem:[%s1943 + $0x28] sm:$0xff]
        %v1950 = vld [vmem:[%s1943 + $0x30] sm:$0xff]
        %v1951 = vld [vmem:[%s1943 + $0x38] sm:$0xff]
        %v1952 = vld [vmem:[%s1943 + $0x40] sm:$0xff]
        %v1953 = vld [vmem:[%s1943 + $0x48] sm:$0xff]
        %v1954 = vld [vmem:[%s1943 + $0x50] sm:$0xff]
        %v1955 = vld [vmem:[%s1943 + $0x58] sm:$0xff]
        %v1956 = vld [vmem:[%s1943 + $0x60] sm:$0xff]
        %v1957 = vld [vmem:[%s1943 + $0x68] sm:$0xff]
        %v1958 = vld [vmem:[%s1943 + $0x70] sm:$0xff]
        %v1959 = vld [vmem:[%s1943 + $0x78] sm:$0xff]
        %v1960 = vld [vmem:[%s1943 + $0x80] sm:$0xff]
        %v1961 = vld [vmem:[%s1943 + $0x88] sm:$0xff]
        %v1962 = vld [vmem:[%s1943 + $0x90] sm:$0xff]
        %v1963 = vld [vmem:[%s1943 + $0x98] sm:$0xff]
        %v1964 = vld [vmem:[%s1943 + $0xa0] sm:$0xff]
        %v1965 = vld [vmem:[%s1943 + $0xa8] sm:$0xff]
        %v1966 = vld [vmem:[%s1943 + $0xb0] sm:$0xff]
        %v1967 = vld [vmem:[%s1943 + $0xb8] sm:$0xff]
        %v1968 = vld [vmem:[%s1943 + $0xc0] sm:$0xff]
        %v1969 = vld [vmem:[%s1943 + $0xc8] sm:$0xff]
        %v1970 = vld [vmem:[%s1943 + $0xd0] sm:$0xff]
        %v1971 = vld [vmem:[%s1943 + $0xd8] sm:$0xff]
        %v1972 = vld [vmem:[%s1943 + $0xe0] sm:$0xff]
        %v1973 = vld [vmem:[%s1943 + $0xe8] sm:$0xff]
        %v1974 = vld [vmem:[%s1943 + $0xf0] sm:$0xff]
        %v1975 = vld [vmem:[%s1943 + $0xf8] sm:$0xff]
        %v1976 = vld [vmem:[%s1943 + $0x100] sm:$0xff]
        %v1977 = vld [vmem:[%s1943 + $0x108] sm:$0xff]
        %v1978 = vld [vmem:[%s1943 + $0x110] sm:$0xff]
        %v1979 = vld [vmem:[%s1943 + $0x118] sm:$0xff]
        %v1980 = vld [vmem:[%s1943 + $0x120] sm:$0xff]
        %v1981 = vld [vmem:[%s1943 + $0x128] sm:$0xff]
        %v1982 = vld [vmem:[%s1943 + $0x130] sm:$0xff]
        %v1983 = vld [vmem:[%s1943 + $0x138] sm:$0xff]
        %v1984 = vld [vmem:[%s1943 + $0x140] sm:$0xff]
        %v1985 = vld [vmem:[%s1943 + $0x148] sm:$0xff]
        %v1986 = vld [vmem:[%s1943 + $0x150] sm:$0xff]
        %v1987 = vld [vmem:[%s1943 + $0x158] sm:$0xff]
        %v2032 = vunpack.c.l.b16 %v1944
        %v2033 = vunpack.c.h.b16 %v1944
        %v2034 = vunpack.c.l.b16 %v1945
        %v2035 = vunpack.c.h.b16 %v1945
        %v2036 = vunpack.c.l.b16 %v1946
        %v2037 = vunpack.c.h.b16 %v1946
        %v2038 = vunpack.c.l.b16 %v1947
        %v2039 = vunpack.c.h.b16 %v1947
        %v2040 = vunpack.c.l.b16 %v1948
        %v2041 = vunpack.c.h.b16 %v1948
        %v2042 = vunpack.c.l.b16 %v1949
        %v2043 = vunpack.c.h.b16 %v1949
        %v2044 = vunpack.c.l.b16 %v1950
        %v2045 = vunpack.c.h.b16 %v1950
        %v2046 = vunpack.c.l.b16 %v1951
        %v2047 = vunpack.c.h.b16 %v1951
        %v2048 = vunpack.c.l.b16 %v1952
        %v2049 = vunpack.c.h.b16 %v1952
        %v2050 = vunpack.c.l.b16 %v1953
        %v2051 = vunpack.c.h.b16 %v1953
        %v2052 = vunpack.c.l.b16 %v1954
        %v2053 = vunpack.c.h.b16 %v1954
        %v2054 = vunpack.c.l.b16 %v1955
        %v2055 = vunpack.c.h.b16 %v1955
        %v2056 = vunpack.c.l.b16 %v1956
        %v2057 = vunpack.c.h.b16 %v1956
        %v2058 = vunpack.c.l.b16 %v1957
        %v2059 = vunpack.c.h.b16 %v1957
        %v2060 = vunpack.c.l.b16 %v1958
        %v2061 = vunpack.c.h.b16 %v1958
        %v2062 = vunpack.c.l.b16 %v1959
        %v2063 = vunpack.c.h.b16 %v1959
        %v2064 = vunpack.c.l.b16 %v1960
        %v2065 = vunpack.c.h.b16 %v1960
        %v2066 = vunpack.c.l.b16 %v1961
        %v2067 = vunpack.c.h.b16 %v1961
        %v2068 = vunpack.c.l.b16 %v1962
        %v2069 = vunpack.c.h.b16 %v1962
        %v2070 = vunpack.c.l.b16 %v1963
        %v2071 = vunpack.c.h.b16 %v1963
        %v2072 = vunpack.c.l.b16 %v1964
        %v2073 = vunpack.c.h.b16 %v1964
        %v2074 = vunpack.c.l.b16 %v1965
        %v2075 = vunpack.c.h.b16 %v1965
        %v2076 = vunpack.c.l.b16 %v1966
        %v2077 = vunpack.c.h.b16 %v1966
        %v2078 = vunpack.c.l.b16 %v1967
        %v2079 = vunpack.c.h.b16 %v1967
        %v2080 = vunpack.c.l.b16 %v1968
        %v2081 = vunpack.c.h.b16 %v1968
        %v2082 = vunpack.c.l.b16 %v1969
        %v2083 = vunpack.c.h.b16 %v1969
        %v2084 = vunpack.c.l.b16 %v1970
        %v2085 = vunpack.c.h.b16 %v1970
        %v2086 = vunpack.c.l.b16 %v1971
        %v2087 = vunpack.c.h.b16 %v1971
        %v2088 = vunpack.c.l.b16 %v1972
        %v2089 = vunpack.c.h.b16 %v1972
        %v2090 = vunpack.c.l.b16 %v1973
        %v2091 = vunpack.c.h.b16 %v1973
        %v2092 = vunpack.c.l.b16 %v1974
        %v2093 = vunpack.c.h.b16 %v1974
        %v2094 = vunpack.c.l.b16 %v1975
        %v2095 = vunpack.c.h.b16 %v1975
        %v2096 = vunpack.c.l.b16 %v1976
        %v2097 = vunpack.c.h.b16 %v1976
        %v2098 = vunpack.c.l.b16 %v1977
        %v2099 = vunpack.c.h.b16 %v1977
        %v2100 = vunpack.c.l.b16 %v1978
        %v2101 = vunpack.c.h.b16 %v1978
        %v2102 = vunpack.c.l.b16 %v1979
        %v2103 = vunpack.c.h.b16 %v1979
        %v2104 = vunpack.c.l.b16 %v1980
        %v2105 = vunpack.c.h.b16 %v1980
        %v2106 = vunpack.c.l.b16 %v1981
        %v2107 = vunpack.c.h.b16 %v1981
        %v2108 = vunpack.c.l.b16 %v1982
        %v2109 = vunpack.c.h.b16 %v1982
        %v2110 = vunpack.c.l.b16 %v1983
        %v2111 = vunpack.c.h.b16 %v1983
        %v2112 = vunpack.c.l.b16 %v1984
        %v2113 = vunpack.c.h.b16 %v1984
        %v2114 = vunpack.c.l.b16 %v1985
        %v2115 = vunpack.c.h.b16 %v1985
        %v2116 = vunpack.c.l.b16 %v1986
        %v2117 = vunpack.c.h.b16 %v1986
        %v2118 = vunpack.c.l.b16 %v1987
        %v2119 = vunpack.c.h.b16 %v1987
        %v2120 = vpack.c.b16 %v2034, %v2032
        %v2121 = vpack.c.b16 %v2035, %v2033
        %v2122 = vpack.c.b16 %v2038, %v2036
        %v2123 = vpack.c.b16 %v2039, %v2037
        %v2124 = vpack.c.b16 %v2042, %v2040
        %v2125 = vpack.c.b16 %v2043, %v2041
        %v2126 = vpack.c.b16 %v2046, %v2044
        %v2127 = vpack.c.b16 %v2047, %v2045
        %v2128 = vpack.c.b16 %v2050, %v2048
        %v2129 = vpack.c.b16 %v2051, %v2049
        %v2130 = vpack.c.b16 %v2054, %v2052
        %v2131 = vpack.c.b16 %v2055, %v2053
        %v2132 = vpack.c.b16 %v2058, %v2056
        %v2133 = vpack.c.b16 %v2059, %v2057
        %v2134 = vpack.c.b16 %v2062, %v2060
        %v2135 = vpack.c.b16 %v2063, %v2061
        %v2136 = vpack.c.b16 %v2066, %v2064
        %v2137 = vpack.c.b16 %v2067, %v2065
        %v2138 = vpack.c.b16 %v2070, %v2068
        %v2139 = vpack.c.b16 %v2071, %v2069
        %v2140 = vpack.c.b16 %v2074, %v2072
        %v2141 = vpack.c.b16 %v2075, %v2073
        %v2142 = vpack.c.b16 %v2078, %v2076
        %v2143 = vpack.c.b16 %v2079, %v2077
        %v2144 = vpack.c.b16 %v2082, %v2080
        %v2145 = vpack.c.b16 %v2083, %v2081
        %v2146 = vpack.c.b16 %v2086, %v2084
        %v2147 = vpack.c.b16 %v2087, %v2085
        %v2148 = vpack.c.b16 %v2090, %v2088
        %v2149 = vpack.c.b16 %v2091, %v2089
        %v2150 = vpack.c.b16 %v2094, %v2092
        %v2151 = vpack.c.b16 %v2095, %v2093
        %v2152 = vpack.c.b16 %v2098, %v2096
        %v2153 = vpack.c.b16 %v2099, %v2097
        %v2154 = vpack.c.b16 %v2102, %v2100
        %v2155 = vpack.c.b16 %v2103, %v2101
        %v2156 = vpack.c.b16 %v2106, %v2104
        %v2157 = vpack.c.b16 %v2107, %v2105
        %v2158 = vpack.c.b16 %v2110, %v2108
        %v2159 = vpack.c.b16 %v2111, %v2109
        %v2160 = vpack.c.b16 %v2114, %v2112
        %v2161 = vpack.c.b16 %v2115, %v2113
        %v2162 = vpack.c.b16 %v2118, %v2116
        %v2163 = vpack.c.b16 %v2119, %v2117
        %2208 = vmatpush.bf16.msra.mxu0 %v2134
        %2209 = vmatpush.bf16.msra.mxu0 %v2132
        %2210 = vmatpush.bf16.msra.mxu0 %v2130
        %2211 = vmatpush.bf16.msra.mxu0 %v2128
        %2212 = vmatpush.bf16.msra.mxu0 %v2126
        %2213 = vmatpush.bf16.msra.mxu0 %v2124
        %2214 = vmatpush.bf16.msra.mxu0 %v2122
        %2215 = vmatpush.bf16.msra.mxu0 %v2120
        %2216 = vmatmul.bf16.gmra.mxu0 %v832
        %v2217 = vpop.f32.mrf.mxu0
        %v2218 = vadd.f32 0.0, %v2217
        %v2219 = vpop.f32.mrf.mxu0
        %v2220 = vadd.f32 0.0, %v2219
        %2221 = vmatmul.bf16.gmra.mxu0 %v835
        %v2222 = vpop.f32.mrf.mxu0
        %v2223 = vadd.f32 0.0, %v2222
        %v2224 = vpop.f32.mrf.mxu0
        %v2225 = vadd.f32 0.0, %v2224
        %2226 = vmatmul.bf16.gmra.mxu0 %v838
        %v2227 = vpop.f32.mrf.mxu0
        %v2228 = vadd.f32 0.0, %v2227
        %v2229 = vpop.f32.mrf.mxu0
        %v2230 = vadd.f32 0.0, %v2229
        %2231 = vmatmul.bf16.gmra.mxu0 %v841
        %v2232 = vpop.f32.mrf.mxu0
        %v2233 = vadd.f32 0.0, %v2232
        %v2234 = vpop.f32.mrf.mxu0
        %v2235 = vadd.f32 0.0, %v2234
        %2236 = vmatmul.bf16.gmra.mxu0 %v844
        %v2237 = vpop.f32.mrf.mxu0
        %v2238 = vadd.f32 0.0, %v2237
        %v2239 = vpop.f32.mrf.mxu0
        %v2240 = vadd.f32 0.0, %v2239
        %2241 = vmatmul.bf16.gmra.mxu0 %v847
        %v2242 = vpop.f32.mrf.mxu0
        %v2243 = vadd.f32 0.0, %v2242
        %v2244 = vpop.f32.mrf.mxu0
        %v2245 = vadd.f32 0.0, %v2244
        %2246 = vmatmul.bf16.gmra.mxu0 %v850
        %v2247 = vpop.f32.mrf.mxu0
        %v2248 = vadd.f32 0.0, %v2247
        %v2249 = vpop.f32.mrf.mxu0
        %v2250 = vadd.f32 0.0, %v2249
        %2251 = vmatmul.bf16.gmra.mxu0 %v853
        %v2252 = vpop.f32.mrf.mxu0
        %v2253 = vadd.f32 0.0, %v2252
        %v2254 = vpop.f32.mrf.mxu0
        %v2255 = vadd.f32 0.0, %v2254
        %2256 = vdwg.mxu0
        %2257 = vmatpush.bf16.msra.mxu0 %v2150
        %2258 = vmatpush.bf16.msra.mxu0 %v2148
        %2259 = vmatpush.bf16.msra.mxu0 %v2146
        %2260 = vmatpush.bf16.msra.mxu0 %v2144
        %2261 = vmatpush.bf16.msra.mxu0 %v2142
        %2262 = vmatpush.bf16.msra.mxu0 %v2140
        %2263 = vmatpush.bf16.msra.mxu0 %v2138
        %2264 = vmatpush.bf16.msra.mxu0 %v2136
        %2265 = vmatmul.bf16.gmra.mxu0 %v833
        %v2266 = vpop.f32.mrf.mxu0
        %v2267 = vadd.f32 %v2218, %v2266
        %v2268 = vpop.f32.mrf.mxu0
        %v2269 = vadd.f32 %v2220, %v2268
        %2270 = vmatmul.bf16.gmra.mxu0 %v836
        %v2271 = vpop.f32.mrf.mxu0
        %v2272 = vadd.f32 %v2223, %v2271
        %v2273 = vpop.f32.mrf.mxu0
        %v2274 = vadd.f32 %v2225, %v2273
        %2275 = vmatmul.bf16.gmra.mxu0 %v839
        %v2276 = vpop.f32.mrf.mxu0
        %v2277 = vadd.f32 %v2228, %v2276
        %v2278 = vpop.f32.mrf.mxu0
        %v2279 = vadd.f32 %v2230, %v2278
        %2280 = vmatmul.bf16.gmra.mxu0 %v842
        %v2281 = vpop.f32.mrf.mxu0
        %v2282 = vadd.f32 %v2233, %v2281
        %v2283 = vpop.f32.mrf.mxu0
        %v2284 = vadd.f32 %v2235, %v2283
        %2285 = vmatmul.bf16.gmra.mxu0 %v845
        %v2286 = vpop.f32.mrf.mxu0
        %v2287 = vadd.f32 %v2238, %v2286
        %v2288 = vpop.f32.mrf.mxu0
        %v2289 = vadd.f32 %v2240, %v2288
        %2290 = vmatmul.bf16.gmra.mxu0 %v848
        %v2291 = vpop.f32.mrf.mxu0
        %v2292 = vadd.f32 %v2243, %v2291
        %v2293 = vpop.f32.mrf.mxu0
        %v2294 = vadd.f32 %v2245, %v2293
        %2295 = vmatmul.bf16.gmra.mxu0 %v851
        %v2296 = vpop.f32.mrf.mxu0
        %v2297 = vadd.f32 %v2248, %v2296
        %v2298 = vpop.f32.mrf.mxu0
        %v2299 = vadd.f32 %v2250, %v2298
        %2300 = vmatmul.bf16.gmra.mxu0 %v854
        %v2301 = vpop.f32.mrf.mxu0
        %v2302 = vadd.f32 %v2253, %v2301
        %v2303 = vpop.f32.mrf.mxu0
        %v2304 = vadd.f32 %v2255, %v2303
        %2305 = vdwg.mxu0
        %2306 = vmatpush.bf16.msra.mxu0 0
        %2307 = vmatpush.bf16.msra.mxu0 0
        %2308 = vmatpush.bf16.msra.mxu0 %v2162
        %2309 = vmatpush.bf16.msra.mxu0 %v2160
        %2310 = vmatpush.bf16.msra.mxu0 %v2158
        %2311 = vmatpush.bf16.msra.mxu0 %v2156
        %2312 = vmatpush.bf16.msra.mxu0 %v2154
        %2313 = vmatpush.bf16.msra.mxu0 %v2152
        %2314 = vmatmul.bf16.gmra.mxu0 %v1094
        %v2315 = vpop.f32.mrf.mxu0
        %v2316 = vadd.f32 %v2267, %v2315
        %v2317 = vpop.f32.mrf.mxu0
        %v2318 = vadd.f32 %v2269, %v2317
        %2319 = vmatmul.bf16.gmra.mxu0 %v1097
        %v2320 = vpop.f32.mrf.mxu0
        %v2321 = vadd.f32 %v2272, %v2320
        %v2322 = vpop.f32.mrf.mxu0
        %v2323 = vadd.f32 %v2274, %v2322
        %2324 = vmatmul.bf16.gmra.mxu0 %v1100
        %v2325 = vpop.f32.mrf.mxu0
        %v2326 = vadd.f32 %v2277, %v2325
        %v2327 = vpop.f32.mrf.mxu0
        %v2328 = vadd.f32 %v2279, %v2327
        %2329 = vmatmul.bf16.gmra.mxu0 %v1103
        %v2330 = vpop.f32.mrf.mxu0
        %v2331 = vadd.f32 %v2282, %v2330
        %v2332 = vpop.f32.mrf.mxu0
        %v2333 = vadd.f32 %v2284, %v2332
        %2334 = vmatmul.bf16.gmra.mxu0 %v1106
        %v2335 = vpop.f32.mrf.mxu0
        %v2336 = vadd.f32 %v2287, %v2335
        %v2337 = vpop.f32.mrf.mxu0
        %v2338 = vadd.f32 %v2289, %v2337
        %2339 = vmatmul.bf16.gmra.mxu0 %v1109
        %v2340 = vpop.f32.mrf.mxu0
        %v2341 = vadd.f32 %v2292, %v2340
        %v2342 = vpop.f32.mrf.mxu0
        %v2343 = vadd.f32 %v2294, %v2342
        %2344 = vmatmul.bf16.gmra.mxu0 %v1112
        %v2345 = vpop.f32.mrf.mxu0
        %v2346 = vadd.f32 %v2297, %v2345
        %v2347 = vpop.f32.mrf.mxu0
        %v2348 = vadd.f32 %v2299, %v2347
        %2349 = vmatmul.bf16.gmra.mxu0 %v1115
        %v2350 = vpop.f32.mrf.mxu0
        %v2351 = vadd.f32 %v2302, %v2350
        %v2352 = vpop.f32.mrf.mxu0
        %v2353 = vadd.f32 %v2304, %v2352
        %2354 = vdwg.mxu0
        %2355 = vmatpush.bf16.msra.mxu0 %v2135
        %2356 = vmatpush.bf16.msra.mxu0 %v2133
        %2357 = vmatpush.bf16.msra.mxu0 %v2131
        %2358 = vmatpush.bf16.msra.mxu0 %v2129
        %2359 = vmatpush.bf16.msra.mxu0 %v2127
        %2360 = vmatpush.bf16.msra.mxu0 %v2125
        %2361 = vmatpush.bf16.msra.mxu0 %v2123
        %2362 = vmatpush.bf16.msra.mxu0 %v2121
        %2363 = vmatmul.bf16.gmra.mxu0 %v832
        %v2364 = vpop.f32.mrf.mxu0
        %v2365 = vadd.f32 0.0, %v2364
        %v2366 = vpop.f32.mrf.mxu0
        %v2367 = vadd.f32 0.0, %v2366
        %2368 = vmatmul.bf16.gmra.mxu0 %v835
        %v2369 = vpop.f32.mrf.mxu0
        %v2370 = vadd.f32 0.0, %v2369
        %v2371 = vpop.f32.mrf.mxu0
        %v2372 = vadd.f32 0.0, %v2371
        %2373 = vmatmul.bf16.gmra.mxu0 %v838
        %v2374 = vpop.f32.mrf.mxu0
        %v2375 = vadd.f32 0.0, %v2374
        %v2376 = vpop.f32.mrf.mxu0
        %v2377 = vadd.f32 0.0, %v2376
        %2378 = vmatmul.bf16.gmra.mxu0 %v841
        %v2379 = vpop.f32.mrf.mxu0
        %v2380 = vadd.f32 0.0, %v2379
        %v2381 = vpop.f32.mrf.mxu0
        %v2382 = vadd.f32 0.0, %v2381
        %2383 = vmatmul.bf16.gmra.mxu0 %v844
        %v2384 = vpop.f32.mrf.mxu0
        %v2385 = vadd.f32 0.0, %v2384
        %v2386 = vpop.f32.mrf.mxu0
        %v2387 = vadd.f32 0.0, %v2386
        %2388 = vmatmul.bf16.gmra.mxu0 %v847
        %v2389 = vpop.f32.mrf.mxu0
        %v2390 = vadd.f32 0.0, %v2389
        %v2391 = vpop.f32.mrf.mxu0
        %v2392 = vadd.f32 0.0, %v2391
        %2393 = vmatmul.bf16.gmra.mxu0 %v850
        %v2394 = vpop.f32.mrf.mxu0
        %v2395 = vadd.f32 0.0, %v2394
        %v2396 = vpop.f32.mrf.mxu0
        %v2397 = vadd.f32 0.0, %v2396
        %2398 = vmatmul.bf16.gmra.mxu0 %v853
        %v2399 = vpop.f32.mrf.mxu0
        %v2400 = vadd.f32 0.0, %v2399
        %v2401 = vpop.f32.mrf.mxu0
        %v2402 = vadd.f32 0.0, %v2401
        %2403 = vdwg.mxu0
        %2404 = vmatpush.bf16.msra.mxu0 %v2151
        %2405 = vmatpush.bf16.msra.mxu0 %v2149
        %2406 = vmatpush.bf16.msra.mxu0 %v2147
        %2407 = vmatpush.bf16.msra.mxu0 %v2145
        %2408 = vmatpush.bf16.msra.mxu0 %v2143
        %2409 = vmatpush.bf16.msra.mxu0 %v2141
        %2410 = vmatpush.bf16.msra.mxu0 %v2139
        %2411 = vmatpush.bf16.msra.mxu0 %v2137
        %2412 = vmatmul.bf16.gmra.mxu0 %v833
        %v2413 = vpop.f32.mrf.mxu0
        %v2414 = vadd.f32 %v2365, %v2413
        %v2415 = vpop.f32.mrf.mxu0
        %v2416 = vadd.f32 %v2367, %v2415
        %2417 = vmatmul.bf16.gmra.mxu0 %v836
        %v2418 = vpop.f32.mrf.mxu0
        %v2419 = vadd.f32 %v2370, %v2418
        %v2420 = vpop.f32.mrf.mxu0
        %v2421 = vadd.f32 %v2372, %v2420
        %2422 = vmatmul.bf16.gmra.mxu0 %v839
        %v2423 = vpop.f32.mrf.mxu0
        %v2424 = vadd.f32 %v2375, %v2423
        %v2425 = vpop.f32.mrf.mxu0
        %v2426 = vadd.f32 %v2377, %v2425
        %2427 = vmatmul.bf16.gmra.mxu0 %v842
        %v2428 = vpop.f32.mrf.mxu0
        %v2429 = vadd.f32 %v2380, %v2428
        %v2430 = vpop.f32.mrf.mxu0
        %v2431 = vadd.f32 %v2382, %v2430
        %2432 = vmatmul.bf16.gmra.mxu0 %v845
        %v2433 = vpop.f32.mrf.mxu0
        %v2434 = vadd.f32 %v2385, %v2433
        %v2435 = vpop.f32.mrf.mxu0
        %v2436 = vadd.f32 %v2387, %v2435
        %2437 = vmatmul.bf16.gmra.mxu0 %v848
        %v2438 = vpop.f32.mrf.mxu0
        %v2439 = vadd.f32 %v2390, %v2438
        %v2440 = vpop.f32.mrf.mxu0
        %v2441 = vadd.f32 %v2392, %v2440
        %2442 = vmatmul.bf16.gmra.mxu0 %v851
        %v2443 = vpop.f32.mrf.mxu0
        %v2444 = vadd.f32 %v2395, %v2443
        %v2445 = vpop.f32.mrf.mxu0
        %v2446 = vadd.f32 %v2397, %v2445
        %2447 = vmatmul.bf16.gmra.mxu0 %v854
        %v2448 = vpop.f32.mrf.mxu0
        %v2449 = vadd.f32 %v2400, %v2448
        %v2450 = vpop.f32.mrf.mxu0
        %v2451 = vadd.f32 %v2402, %v2450
        %2452 = vdwg.mxu0
        %2453 = vmatpush.bf16.msra.mxu0 0
        %2454 = vmatpush.bf16.msra.mxu0 0
        %2455 = vmatpush.bf16.msra.mxu0 %v2163
        %2456 = vmatpush.bf16.msra.mxu0 %v2161
        %2457 = vmatpush.bf16.msra.mxu0 %v2159
        %2458 = vmatpush.bf16.msra.mxu0 %v2157
        %2459 = vmatpush.bf16.msra.mxu0 %v2155
        %2460 = vmatpush.bf16.msra.mxu0 %v2153
        %2461 = vmatmul.bf16.gmra.mxu0 %v1094
        %v2462 = vpop.f32.mrf.mxu0
        %v2463 = vadd.f32 %v2414, %v2462
        %v2464 = vpop.f32.mrf.mxu0
        %v2465 = vadd.f32 %v2416, %v2464
        %2466 = vmatmul.bf16.gmra.mxu0 %v1097
        %v2467 = vpop.f32.mrf.mxu0
        %v2468 = vadd.f32 %v2419, %v2467
        %v2469 = vpop.f32.mrf.mxu0
        %v2470 = vadd.f32 %v2421, %v2469
        %2471 = vmatmul.bf16.gmra.mxu0 %v1100
        %v2472 = vpop.f32.mrf.mxu0
        %v2473 = vadd.f32 %v2424, %v2472
        %v2474 = vpop.f32.mrf.mxu0
        %v2475 = vadd.f32 %v2426, %v2474
        %2476 = vmatmul.bf16.gmra.mxu0 %v1103
        %v2477 = vpop.f32.mrf.mxu0
        %v2478 = vadd.f32 %v2429, %v2477
        %v2479 = vpop.f32.mrf.mxu0
        %v2480 = vadd.f32 %v2431, %v2479
        %2481 = vmatmul.bf16.gmra.mxu0 %v1106
        %v2482 = vpop.f32.mrf.mxu0
        %v2483 = vadd.f32 %v2434, %v2482
        %v2484 = vpop.f32.mrf.mxu0
        %v2485 = vadd.f32 %v2436, %v2484
        %2486 = vmatmul.bf16.gmra.mxu0 %v1109
        %v2487 = vpop.f32.mrf.mxu0
        %v2488 = vadd.f32 %v2439, %v2487
        %v2489 = vpop.f32.mrf.mxu0
        %v2490 = vadd.f32 %v2441, %v2489
        %2491 = vmatmul.bf16.gmra.mxu0 %v1112
        %v2492 = vpop.f32.mrf.mxu0
        %v2493 = vadd.f32 %v2444, %v2492
        %v2494 = vpop.f32.mrf.mxu0
        %v2495 = vadd.f32 %v2446, %v2494
        %2496 = vmatmul.bf16.gmra.mxu0 %v1115
        %v2497 = vpop.f32.mrf.mxu0
        %v2498 = vadd.f32 %v2449, %v2497
        %v2499 = vpop.f32.mrf.mxu0
        %v2500 = vadd.f32 %v2451, %v2499
        %2501 = vdwg.mxu0
        %v2546 = vunpack.c.l.b16 %v614
        %v2547 = vunpack.c.h.b16 %v614
        %v2548 = vunpack.c.l.b16 %v615
        %v2549 = vunpack.c.h.b16 %v615
        %v2550 = vunpack.c.l.b16 %v616
        %v2551 = vunpack.c.h.b16 %v616
        %v2552 = vunpack.c.l.b16 %v617
        %v2553 = vunpack.c.h.b16 %v617
        %v2554 = vunpack.c.l.b16 %v618
        %v2555 = vunpack.c.h.b16 %v618
        %v2556 = vunpack.c.l.b16 %v619
        %v2557 = vunpack.c.h.b16 %v619
        %v2558 = vunpack.c.l.b16 %v620
        %v2559 = vunpack.c.h.b16 %v620
        %v2560 = vunpack.c.l.b16 %v621
        %v2561 = vunpack.c.h.b16 %v621
        %v2562 = vunpack.c.l.b16 %v622
        %v2563 = vunpack.c.h.b16 %v622
        %v2564 = vunpack.c.l.b16 %v623
        %v2565 = vunpack.c.h.b16 %v623
        %v2566 = vunpack.c.l.b16 %v624
        %v2567 = vunpack.c.h.b16 %v624
        %v2568 = vunpack.c.l.b16 %v625
        %v2569 = vunpack.c.h.b16 %v625
        %v2570 = vunpack.c.l.b16 %v626
        %v2571 = vunpack.c.h.b16 %v626
        %v2572 = vunpack.c.l.b16 %v627
        %v2573 = vunpack.c.h.b16 %v627
        %v2574 = vunpack.c.l.b16 %v628
        %v2575 = vunpack.c.h.b16 %v628
        %v2576 = vunpack.c.l.b16 %v629
        %v2577 = vunpack.c.h.b16 %v629
        %v2578 = vunpack.c.l.b16 %v630
        %v2579 = vunpack.c.h.b16 %v630
        %v2580 = vunpack.c.l.b16 %v631
        %v2581 = vunpack.c.h.b16 %v631
        %v2582 = vunpack.c.l.b16 %v632
        %v2583 = vunpack.c.h.b16 %v632
        %v2584 = vunpack.c.l.b16 %v633
        %v2585 = vunpack.c.h.b16 %v633
        %v2586 = vunpack.c.l.b16 %v634
        %v2587 = vunpack.c.h.b16 %v634
        %v2588 = vunpack.c.l.b16 %v635
        %v2589 = vunpack.c.h.b16 %v635
        %v2590 = vunpack.c.l.b16 %v636
        %v2591 = vunpack.c.h.b16 %v636
        %v2592 = vunpack.c.l.b16 %v637
        %v2593 = vunpack.c.h.b16 %v637
        %v2594 = vunpack.c.l.b16 %v638
        %v2595 = vunpack.c.h.b16 %v638
        %v2596 = vunpack.c.l.b16 %v639
        %v2597 = vunpack.c.h.b16 %v639
        %v2598 = vunpack.c.l.b16 %v640
        %v2599 = vunpack.c.h.b16 %v640
        %v2600 = vunpack.c.l.b16 %v641
        %v2601 = vunpack.c.h.b16 %v641
        %v2602 = vunpack.c.l.b16 %v642
        %v2603 = vunpack.c.h.b16 %v642
        %v2604 = vunpack.c.l.b16 %v643
        %v2605 = vunpack.c.h.b16 %v643
        %v2606 = vunpack.c.l.b16 %v644
        %v2607 = vunpack.c.h.b16 %v644
        %v2608 = vunpack.c.l.b16 %v645
        %v2609 = vunpack.c.h.b16 %v645
        %v2610 = vunpack.c.l.b16 %v646
        %v2611 = vunpack.c.h.b16 %v646
        %v2612 = vunpack.c.l.b16 %v647
        %v2613 = vunpack.c.h.b16 %v647
        %v2614 = vunpack.c.l.b16 %v648
        %v2615 = vunpack.c.h.b16 %v648
        %v2616 = vunpack.c.l.b16 %v649
        %v2617 = vunpack.c.h.b16 %v649
        %v2618 = vunpack.c.l.b16 %v650
        %v2619 = vunpack.c.h.b16 %v650
        %v2620 = vunpack.c.l.b16 %v651
        %v2621 = vunpack.c.h.b16 %v651
        %v2622 = vunpack.c.l.b16 %v652
        %v2623 = vunpack.c.h.b16 %v652
        %v2624 = vunpack.c.l.b16 %v653
        %v2625 = vunpack.c.h.b16 %v653
        %v2626 = vunpack.c.l.b16 %v654
        %v2627 = vunpack.c.h.b16 %v654
        %v2628 = vunpack.c.l.b16 %v655
        %v2629 = vunpack.c.h.b16 %v655
        %v2630 = vunpack.c.l.b16 %v656
        %v2631 = vunpack.c.h.b16 %v656
        %v2632 = vunpack.c.l.b16 %v657
        %v2633 = vunpack.c.h.b16 %v657
        %v2634 = vpack.c.b16 %v2548, %v2546
        %v2635 = vpack.c.b16 %v2549, %v2547
        %v2636 = vpack.c.b16 %v2552, %v2550
        %v2637 = vpack.c.b16 %v2553, %v2551
        %v2638 = vpack.c.b16 %v2556, %v2554
        %v2639 = vpack.c.b16 %v2557, %v2555
        %v2640 = vpack.c.b16 %v2560, %v2558
        %v2641 = vpack.c.b16 %v2561, %v2559
        %v2642 = vpack.c.b16 %v2564, %v2562
        %v2643 = vpack.c.b16 %v2565, %v2563
        %v2644 = vpack.c.b16 %v2568, %v2566
        %v2645 = vpack.c.b16 %v2569, %v2567
        %v2646 = vpack.c.b16 %v2572, %v2570
        %v2647 = vpack.c.b16 %v2573, %v2571
        %v2648 = vpack.c.b16 %v2576, %v2574
        %v2649 = vpack.c.b16 %v2577, %v2575
        %v2650 = vpack.c.b16 %v2580, %v2578
        %v2651 = vpack.c.b16 %v2581, %v2579
        %v2652 = vpack.c.b16 %v2584, %v2582
        %v2653 = vpack.c.b16 %v2585, %v2583
        %v2654 = vpack.c.b16 %v2588, %v2586
        %v2655 = vpack.c.b16 %v2589, %v2587
        %v2656 = vpack.c.b16 %v2592, %v2590
        %v2657 = vpack.c.b16 %v2593, %v2591
        %v2658 = vpack.c.b16 %v2596, %v2594
        %v2659 = vpack.c.b16 %v2597, %v2595
        %v2660 = vpack.c.b16 %v2600, %v2598
        %v2661 = vpack.c.b16 %v2601, %v2599
        %v2662 = vpack.c.b16 %v2604, %v2602
        %v2663 = vpack.c.b16 %v2605, %v2603
        %v2664 = vpack.c.b16 %v2608, %v2606
        %v2665 = vpack.c.b16 %v2609, %v2607
        %v2666 = vpack.c.b16 %v2612, %v2610
        %v2667 = vpack.c.b16 %v2613, %v2611
        %v2668 = vpack.c.b16 %v2616, %v2614
        %v2669 = vpack.c.b16 %v2617, %v2615
        %v2670 = vpack.c.b16 %v2620, %v2618
        %v2671 = vpack.c.b16 %v2621, %v2619
        %v2672 = vpack.c.b16 %v2624, %v2622
        %v2673 = vpack.c.b16 %v2625, %v2623
        %v2674 = vpack.c.b16 %v2628, %v2626
        %v2675 = vpack.c.b16 %v2629, %v2627
        %v2676 = vpack.c.b16 %v2632, %v2630
        %v2677 = vpack.c.b16 %v2633, %v2631
        %2722 = vmatpush.bf16.msra.mxu0 %v2648
        %2723 = vmatpush.bf16.msra.mxu0 %v2646
        %2724 = vmatpush.bf16.msra.mxu0 %v2644
        %2725 = vmatpush.bf16.msra.mxu0 %v2642
        %2726 = vmatpush.bf16.msra.mxu0 %v2640
        %2727 = vmatpush.bf16.msra.mxu0 %v2638
        %2728 = vmatpush.bf16.msra.mxu0 %v2636
        %2729 = vmatpush.bf16.msra.mxu0 %v2634
        %2730 = vmatmul.bf16.gmra.mxu0 %v1421
        %v2731 = vpop.f32.mrf.mxu0
        %v2732 = vadd.f32 %v2316, %v2731
        %v2733 = vpop.f32.mrf.mxu0
        %v2734 = vadd.f32 %v2318, %v2733
        %2735 = vmatmul.bf16.gmra.mxu0 %v832
        %v2736 = vpop.f32.mrf.mxu0
        %v2737 = vadd.f32 %v2321, %v2736
        %v2738 = vpop.f32.mrf.mxu0
        %v2739 = vadd.f32 %v2323, %v2738
        %2740 = vmatmul.bf16.gmra.mxu0 %v835
        %v2741 = vpop.f32.mrf.mxu0
        %v2742 = vadd.f32 %v2326, %v2741
        %v2743 = vpop.f32.mrf.mxu0
        %v2744 = vadd.f32 %v2328, %v2743
        %2745 = vmatmul.bf16.gmra.mxu0 %v838
        %v2746 = vpop.f32.mrf.mxu0
        %v2747 = vadd.f32 %v2331, %v2746
        %v2748 = vpop.f32.mrf.mxu0
        %v2749 = vadd.f32 %v2333, %v2748
        %2750 = vmatmul.bf16.gmra.mxu0 %v841
        %v2751 = vpop.f32.mrf.mxu0
        %v2752 = vadd.f32 %v2336, %v2751
        %v2753 = vpop.f32.mrf.mxu0
        %v2754 = vadd.f32 %v2338, %v2753
        %2755 = vmatmul.bf16.gmra.mxu0 %v844
        %v2756 = vpop.f32.mrf.mxu0
        %v2757 = vadd.f32 %v2341, %v2756
        %v2758 = vpop.f32.mrf.mxu0
        %v2759 = vadd.f32 %v2343, %v2758
        %2760 = vmatmul.bf16.gmra.mxu0 %v847
        %v2761 = vpop.f32.mrf.mxu0
        %v2762 = vadd.f32 %v2346, %v2761
        %v2763 = vpop.f32.mrf.mxu0
        %v2764 = vadd.f32 %v2348, %v2763
        %2765 = vmatmul.bf16.gmra.mxu0 %v850
        %v2766 = vpop.f32.mrf.mxu0
        %v2767 = vadd.f32 %v2351, %v2766
        %v2768 = vpop.f32.mrf.mxu0
        %v2769 = vadd.f32 %v2353, %v2768
        %2770 = vdwg.mxu0
        %2771 = vmatpush.bf16.msra.mxu0 %v2664
        %2772 = vmatpush.bf16.msra.mxu0 %v2662
        %2773 = vmatpush.bf16.msra.mxu0 %v2660
        %2774 = vmatpush.bf16.msra.mxu0 %v2658
        %2775 = vmatpush.bf16.msra.mxu0 %v2656
        %2776 = vmatpush.bf16.msra.mxu0 %v2654
        %2777 = vmatpush.bf16.msra.mxu0 %v2652
        %2778 = vmatpush.bf16.msra.mxu0 %v2650
        %2779 = vmatmul.bf16.gmra.mxu0 %v1422
        %v2780 = vpop.f32.mrf.mxu0
        %v2781 = vadd.f32 %v2732, %v2780
        %v2782 = vpop.f32.mrf.mxu0
        %v2783 = vadd.f32 %v2734, %v2782
        %2784 = vmatmul.bf16.gmra.mxu0 %v833
        %v2785 = vpop.f32.mrf.mxu0
        %v2786 = vadd.f32 %v2737, %v2785
        %v2787 = vpop.f32.mrf.mxu0
        %v2788 = vadd.f32 %v2739, %v2787
        %2789 = vmatmul.bf16.gmra.mxu0 %v836
        %v2790 = vpop.f32.mrf.mxu0
        %v2791 = vadd.f32 %v2742, %v2790
        %v2792 = vpop.f32.mrf.mxu0
        %v2793 = vadd.f32 %v2744, %v2792
        %2794 = vmatmul.bf16.gmra.mxu0 %v839
        %v2795 = vpop.f32.mrf.mxu0
        %v2796 = vadd.f32 %v2747, %v2795
        %v2797 = vpop.f32.mrf.mxu0
        %v2798 = vadd.f32 %v2749, %v2797
        %2799 = vmatmul.bf16.gmra.mxu0 %v842
        %v2800 = vpop.f32.mrf.mxu0
        %v2801 = vadd.f32 %v2752, %v2800
        %v2802 = vpop.f32.mrf.mxu0
        %v2803 = vadd.f32 %v2754, %v2802
        %2804 = vmatmul.bf16.gmra.mxu0 %v845
        %v2805 = vpop.f32.mrf.mxu0
        %v2806 = vadd.f32 %v2757, %v2805
        %v2807 = vpop.f32.mrf.mxu0
        %v2808 = vadd.f32 %v2759, %v2807
        %2809 = vmatmul.bf16.gmra.mxu0 %v848
        %v2810 = vpop.f32.mrf.mxu0
        %v2811 = vadd.f32 %v2762, %v2810
        %v2812 = vpop.f32.mrf.mxu0
        %v2813 = vadd.f32 %v2764, %v2812
        %2814 = vmatmul.bf16.gmra.mxu0 %v851
        %v2815 = vpop.f32.mrf.mxu0
        %v2816 = vadd.f32 %v2767, %v2815
        %v2817 = vpop.f32.mrf.mxu0
        %v2818 = vadd.f32 %v2769, %v2817
        %2819 = vdwg.mxu0
        %2820 = vmatpush.bf16.msra.mxu0 0
        %2821 = vmatpush.bf16.msra.mxu0 0
        %2822 = vmatpush.bf16.msra.mxu0 %v2676
        %2823 = vmatpush.bf16.msra.mxu0 %v2674
        %2824 = vmatpush.bf16.msra.mxu0 %v2672
        %2825 = vmatpush.bf16.msra.mxu0 %v2670
        %2826 = vmatpush.bf16.msra.mxu0 %v2668
        %2827 = vmatpush.bf16.msra.mxu0 %v2666
        %2828 = vmatmul.bf16.gmra.mxu0 %v1647
        %v2829 = vpop.f32.mrf.mxu0
        %v2830 = vadd.f32 %v2781, %v2829
        %v2831 = vpop.f32.mrf.mxu0
        %v2832 = vadd.f32 %v2783, %v2831
        %2833 = vmatmul.bf16.gmra.mxu0 %v1094
        %v2834 = vpop.f32.mrf.mxu0
        %v2835 = vadd.f32 %v2786, %v2834
        %v2836 = vpop.f32.mrf.mxu0
        %v2837 = vadd.f32 %v2788, %v2836
        %2838 = vmatmul.bf16.gmra.mxu0 %v1097
        %v2839 = vpop.f32.mrf.mxu0
        %v2840 = vadd.f32 %v2791, %v2839
        %v2841 = vpop.f32.mrf.mxu0
        %v2842 = vadd.f32 %v2793, %v2841
        %2843 = vmatmul.bf16.gmra.mxu0 %v1100
        %v2844 = vpop.f32.mrf.mxu0
        %v2845 = vadd.f32 %v2796, %v2844
        %v2846 = vpop.f32.mrf.mxu0
        %v2847 = vadd.f32 %v2798, %v2846
        %2848 = vmatmul.bf16.gmra.mxu0 %v1103
        %v2849 = vpop.f32.mrf.mxu0
        %v2850 = vadd.f32 %v2801, %v2849
        %v2851 = vpop.f32.mrf.mxu0
        %v2852 = vadd.f32 %v2803, %v2851
        %2853 = vmatmul.bf16.gmra.mxu0 %v1106
        %v2854 = vpop.f32.mrf.mxu0
        %v2855 = vadd.f32 %v2806, %v2854
        %v2856 = vpop.f32.mrf.mxu0
        %v2857 = vadd.f32 %v2808, %v2856
        %2858 = vmatmul.bf16.gmra.mxu0 %v1109
        %v2859 = vpop.f32.mrf.mxu0
        %v2860 = vadd.f32 %v2811, %v2859
        %v2861 = vpop.f32.mrf.mxu0
        %v2862 = vadd.f32 %v2813, %v2861
        %2863 = vmatmul.bf16.gmra.mxu0 %v1112
        %v2864 = vpop.f32.mrf.mxu0
        %v2865 = vadd.f32 %v2816, %v2864
        %v2866 = vpop.f32.mrf.mxu0
        %v2867 = vadd.f32 %v2818, %v2866
        %2868 = vdwg.mxu0
        %2869 = vmatpush.bf16.msra.mxu0 %v2649
        %2870 = vmatpush.bf16.msra.mxu0 %v2647
        %2871 = vmatpush.bf16.msra.mxu0 %v2645
        %2872 = vmatpush.bf16.msra.mxu0 %v2643
        %2873 = vmatpush.bf16.msra.mxu0 %v2641
        %2874 = vmatpush.bf16.msra.mxu0 %v2639
        %2875 = vmatpush.bf16.msra.mxu0 %v2637
        %2876 = vmatpush.bf16.msra.mxu0 %v2635
        %2877 = vmatmul.bf16.gmra.mxu0 %v1421
        %v2878 = vpop.f32.mrf.mxu0
        %v2879 = vadd.f32 %v2463, %v2878
        %v2880 = vpop.f32.mrf.mxu0
        %v2881 = vadd.f32 %v2465, %v2880
        %2882 = vmatmul.bf16.gmra.mxu0 %v832
        %v2883 = vpop.f32.mrf.mxu0
        %v2884 = vadd.f32 %v2468, %v2883
        %v2885 = vpop.f32.mrf.mxu0
        %v2886 = vadd.f32 %v2470, %v2885
        %2887 = vmatmul.bf16.gmra.mxu0 %v835
        %v2888 = vpop.f32.mrf.mxu0
        %v2889 = vadd.f32 %v2473, %v2888
        %v2890 = vpop.f32.mrf.mxu0
        %v2891 = vadd.f32 %v2475, %v2890
        %2892 = vmatmul.bf16.gmra.mxu0 %v838
        %v2893 = vpop.f32.mrf.mxu0
        %v2894 = vadd.f32 %v2478, %v2893
        %v2895 = vpop.f32.mrf.mxu0
        %v2896 = vadd.f32 %v2480, %v2895
        %2897 = vmatmul.bf16.gmra.mxu0 %v841
        %v2898 = vpop.f32.mrf.mxu0
        %v2899 = vadd.f32 %v2483, %v2898
        %v2900 = vpop.f32.mrf.mxu0
        %v2901 = vadd.f32 %v2485, %v2900
        %2902 = vmatmul.bf16.gmra.mxu0 %v844
        %v2903 = vpop.f32.mrf.mxu0
        %v2904 = vadd.f32 %v2488, %v2903
        %v2905 = vpop.f32.mrf.mxu0
        %v2906 = vadd.f32 %v2490, %v2905
        %2907 = vmatmul.bf16.gmra.mxu0 %v847
        %v2908 = vpop.f32.mrf.mxu0
        %v2909 = vadd.f32 %v2493, %v2908
        %v2910 = vpop.f32.mrf.mxu0
        %v2911 = vadd.f32 %v2495, %v2910
        %2912 = vmatmul.bf16.gmra.mxu0 %v850
        %v2913 = vpop.f32.mrf.mxu0
        %v2914 = vadd.f32 %v2498, %v2913
        %v2915 = vpop.f32.mrf.mxu0
        %v2916 = vadd.f32 %v2500, %v2915
        %2917 = vdwg.mxu0
        %2918 = vmatpush.bf16.msra.mxu0 %v2665
        %2919 = vmatpush.bf16.msra.mxu0 %v2663
        %2920 = vmatpush.bf16.msra.mxu0 %v2661
        %2921 = vmatpush.bf16.msra.mxu0 %v2659
        %2922 = vmatpush.bf16.msra.mxu0 %v2657
        %2923 = vmatpush.bf16.msra.mxu0 %v2655
        %2924 = vmatpush.bf16.msra.mxu0 %v2653
        %2925 = vmatpush.bf16.msra.mxu0 %v2651
        %2926 = vmatmul.bf16.gmra.mxu0 %v1422
        %v2927 = vpop.f32.mrf.mxu0
        %v2928 = vadd.f32 %v2879, %v2927
        %v2929 = vpop.f32.mrf.mxu0
        %v2930 = vadd.f32 %v2881, %v2929
        %2931 = vmatmul.bf16.gmra.mxu0 %v833
        %v2932 = vpop.f32.mrf.mxu0
        %v2933 = vadd.f32 %v2884, %v2932
        %v2934 = vpop.f32.mrf.mxu0
        %v2935 = vadd.f32 %v2886, %v2934
        %2936 = vmatmul.bf16.gmra.mxu0 %v836
        %v2937 = vpop.f32.mrf.mxu0
        %v2938 = vadd.f32 %v2889, %v2937
        %v2939 = vpop.f32.mrf.mxu0
        %v2940 = vadd.f32 %v2891, %v2939
        %2941 = vmatmul.bf16.gmra.mxu0 %v839
        %v2942 = vpop.f32.mrf.mxu0
        %v2943 = vadd.f32 %v2894, %v2942
        %v2944 = vpop.f32.mrf.mxu0
        %v2945 = vadd.f32 %v2896, %v2944
        %2946 = vmatmul.bf16.gmra.mxu0 %v842
        %v2947 = vpop.f32.mrf.mxu0
        %v2948 = vadd.f32 %v2899, %v2947
        %v2949 = vpop.f32.mrf.mxu0
        %v2950 = vadd.f32 %v2901, %v2949
        %2951 = vmatmul.bf16.gmra.mxu0 %v845
        %v2952 = vpop.f32.mrf.mxu0
        %v2953 = vadd.f32 %v2904, %v2952
        %v2954 = vpop.f32.mrf.mxu0
        %v2955 = vadd.f32 %v2906, %v2954
        %2956 = vmatmul.bf16.gmra.mxu0 %v848
        %v2957 = vpop.f32.mrf.mxu0
        %v2958 = vadd.f32 %v2909, %v2957
        %v2959 = vpop.f32.mrf.mxu0
        %v2960 = vadd.f32 %v2911, %v2959
        %2961 = vmatmul.bf16.gmra.mxu0 %v851
        %v2962 = vpop.f32.mrf.mxu0
        %v2963 = vadd.f32 %v2914, %v2962
        %v2964 = vpop.f32.mrf.mxu0
        %v2965 = vadd.f32 %v2916, %v2964
        %2966 = vdwg.mxu0
        %2967 = vmatpush.bf16.msra.mxu0 0
        %2968 = vmatpush.bf16.msra.mxu0 0
        %2969 = vmatpush.bf16.msra.mxu0 %v2677
        %2970 = vmatpush.bf16.msra.mxu0 %v2675
        %2971 = vmatpush.bf16.msra.mxu0 %v2673
        %2972 = vmatpush.bf16.msra.mxu0 %v2671
        %2973 = vmatpush.bf16.msra.mxu0 %v2669
        %2974 = vmatpush.bf16.msra.mxu0 %v2667
        %2975 = vmatmul.bf16.gmra.mxu0 %v1647
        %v2976 = vpop.f32.mrf.mxu0
        %v2977 = vadd.f32 %v2928, %v2976
        %v2978 = vpop.f32.mrf.mxu0
        %v2979 = vadd.f32 %v2930, %v2978
        %2980 = vmatmul.bf16.gmra.mxu0 %v1094
        %v2981 = vpop.f32.mrf.mxu0
        %v2982 = vadd.f32 %v2933, %v2981
        %v2983 = vpop.f32.mrf.mxu0
        %v2984 = vadd.f32 %v2935, %v2983
        %2985 = vmatmul.bf16.gmra.mxu0 %v1097
        %v2986 = vpop.f32.mrf.mxu0
        %v2987 = vadd.f32 %v2938, %v2986
        %v2988 = vpop.f32.mrf.mxu0
        %v2989 = vadd.f32 %v2940, %v2988
        %2990 = vmatmul.bf16.gmra.mxu0 %v1100
        %v2991 = vpop.f32.mrf.mxu0
        %v2992 = vadd.f32 %v2943, %v2991
        %v2993 = vpop.f32.mrf.mxu0
        %v2994 = vadd.f32 %v2945, %v2993
        %2995 = vmatmul.bf16.gmra.mxu0 %v1103
        %v2996 = vpop.f32.mrf.mxu0
        %v2997 = vadd.f32 %v2948, %v2996
        %v2998 = vpop.f32.mrf.mxu0
        %v2999 = vadd.f32 %v2950, %v2998
        %3000 = vmatmul.bf16.gmra.mxu0 %v1106
        %v3001 = vpop.f32.mrf.mxu0
        %v3002 = vadd.f32 %v2953, %v3001
        %v3003 = vpop.f32.mrf.mxu0
        %v3004 = vadd.f32 %v2955, %v3003
        %3005 = vmatmul.bf16.gmra.mxu0 %v1109
        %v3006 = vpop.f32.mrf.mxu0
        %v3007 = vadd.f32 %v2958, %v3006
        %v3008 = vpop.f32.mrf.mxu0
        %v3009 = vadd.f32 %v2960, %v3008
        %3010 = vmatmul.bf16.gmra.mxu0 %v1112
        %v3011 = vpop.f32.mrf.mxu0
        %v3012 = vadd.f32 %v2963, %v3011
        %v3013 = vpop.f32.mrf.mxu0
        %v3014 = vadd.f32 %v2965, %v3013
        %3015 = vdwg.mxu0
        %s3016 = scalar_lea.vmem %s1, 1760
        %v3017 = vld [vmem:[%s3016] sm:$0xff]
        %v3018 = vld [vmem:[%s3016 + $0x8] sm:$0xff]
        %v3019 = vld [vmem:[%s3016 + $0x10] sm:$0xff]
        %v3020 = vld [vmem:[%s3016 + $0x18] sm:$0xff]
        %v3021 = vld [vmem:[%s3016 + $0x20] sm:$0xff]
        %v3022 = vld [vmem:[%s3016 + $0x28] sm:$0xff]
        %v3023 = vld [vmem:[%s3016 + $0x30] sm:$0xff]
        %v3024 = vld [vmem:[%s3016 + $0x38] sm:$0xff]
        %v3025 = vld [vmem:[%s3016 + $0x40] sm:$0xff]
        %v3026 = vld [vmem:[%s3016 + $0x48] sm:$0xff]
        %v3027 = vld [vmem:[%s3016 + $0x50] sm:$0xff]
        %v3028 = vld [vmem:[%s3016 + $0x58] sm:$0xff]
        %v3029 = vld [vmem:[%s3016 + $0x60] sm:$0xff]
        %v3030 = vld [vmem:[%s3016 + $0x68] sm:$0xff]
        %v3031 = vld [vmem:[%s3016 + $0x70] sm:$0xff]
        %v3032 = vld [vmem:[%s3016 + $0x78] sm:$0xff]
        %v3033 = vld [vmem:[%s3016 + $0x80] sm:$0xff]
        %v3034 = vld [vmem:[%s3016 + $0x88] sm:$0xff]
        %v3035 = vld [vmem:[%s3016 + $0x90] sm:$0xff]
        %v3036 = vld [vmem:[%s3016 + $0x98] sm:$0xff]
        %v3037 = vld [vmem:[%s3016 + $0xa0] sm:$0xff]
        %v3038 = vld [vmem:[%s3016 + $0xa8] sm:$0xff]
        %v3039 = vld [vmem:[%s3016 + $0xb0] sm:$0xff]
        %v3040 = vld [vmem:[%s3016 + $0xb8] sm:$0xff]
        %v3041 = vld [vmem:[%s3016 + $0xc0] sm:$0xff]
        %v3042 = vld [vmem:[%s3016 + $0xc8] sm:$0xff]
        %v3043 = vld [vmem:[%s3016 + $0xd0] sm:$0xff]
        %v3044 = vld [vmem:[%s3016 + $0xd8] sm:$0xff]
        %v3045 = vld [vmem:[%s3016 + $0xe0] sm:$0xff]
        %v3046 = vld [vmem:[%s3016 + $0xe8] sm:$0xff]
        %v3047 = vld [vmem:[%s3016 + $0xf0] sm:$0xff]
        %v3048 = vld [vmem:[%s3016 + $0xf8] sm:$0xff]
        %v3049 = vld [vmem:[%s3016 + $0x100] sm:$0xff]
        %v3050 = vld [vmem:[%s3016 + $0x108] sm:$0xff]
        %v3051 = vld [vmem:[%s3016 + $0x110] sm:$0xff]
        %v3052 = vld [vmem:[%s3016 + $0x118] sm:$0xff]
        %v3053 = vld [vmem:[%s3016 + $0x120] sm:$0xff]
        %v3054 = vld [vmem:[%s3016 + $0x128] sm:$0xff]
        %v3055 = vld [vmem:[%s3016 + $0x130] sm:$0xff]
        %v3056 = vld [vmem:[%s3016 + $0x138] sm:$0xff]
        %v3057 = vld [vmem:[%s3016 + $0x140] sm:$0xff]
        %v3058 = vld [vmem:[%s3016 + $0x148] sm:$0xff]
        %v3059 = vld [vmem:[%s3016 + $0x150] sm:$0xff]
        %v3060 = vld [vmem:[%s3016 + $0x158] sm:$0xff]
        %v3105 = vunpack.c.l.b16 %v3017
        %v3106 = vunpack.c.h.b16 %v3017
        %v3107 = vunpack.c.l.b16 %v3018
        %v3108 = vunpack.c.h.b16 %v3018
        %v3109 = vunpack.c.l.b16 %v3019
        %v3110 = vunpack.c.h.b16 %v3019
        %v3111 = vunpack.c.l.b16 %v3020
        %v3112 = vunpack.c.h.b16 %v3020
        %v3113 = vunpack.c.l.b16 %v3021
        %v3114 = vunpack.c.h.b16 %v3021
        %v3115 = vunpack.c.l.b16 %v3022
        %v3116 = vunpack.c.h.b16 %v3022
        %v3117 = vunpack.c.l.b16 %v3023
        %v3118 = vunpack.c.h.b16 %v3023
        %v3119 = vunpack.c.l.b16 %v3024
        %v3120 = vunpack.c.h.b16 %v3024
        %v3121 = vunpack.c.l.b16 %v3025
        %v3122 = vunpack.c.h.b16 %v3025
        %v3123 = vunpack.c.l.b16 %v3026
        %v3124 = vunpack.c.h.b16 %v3026
        %v3125 = vunpack.c.l.b16 %v3027
        %v3126 = vunpack.c.h.b16 %v3027
        %v3127 = vunpack.c.l.b16 %v3028
        %v3128 = vunpack.c.h.b16 %v3028
        %v3129 = vunpack.c.l.b16 %v3029
        %v3130 = vunpack.c.h.b16 %v3029
        %v3131 = vunpack.c.l.b16 %v3030
        %v3132 = vunpack.c.h.b16 %v3030
        %v3133 = vunpack.c.l.b16 %v3031
        %v3134 = vunpack.c.h.b16 %v3031
        %v3135 = vunpack.c.l.b16 %v3032
        %v3136 = vunpack.c.h.b16 %v3032
        %v3137 = vunpack.c.l.b16 %v3033
        %v3138 = vunpack.c.h.b16 %v3033
        %v3139 = vunpack.c.l.b16 %v3034
        %v3140 = vunpack.c.h.b16 %v3034
        %v3141 = vunpack.c.l.b16 %v3035
        %v3142 = vunpack.c.h.b16 %v3035
        %v3143 = vunpack.c.l.b16 %v3036
        %v3144 = vunpack.c.h.b16 %v3036
        %v3145 = vunpack.c.l.b16 %v3037
        %v3146 = vunpack.c.h.b16 %v3037
        %v3147 = vunpack.c.l.b16 %v3038
        %v3148 = vunpack.c.h.b16 %v3038
        %v3149 = vunpack.c.l.b16 %v3039
        %v3150 = vunpack.c.h.b16 %v3039
        %v3151 = vunpack.c.l.b16 %v3040
        %v3152 = vunpack.c.h.b16 %v3040
        %v3153 = vunpack.c.l.b16 %v3041
        %v3154 = vunpack.c.h.b16 %v3041
        %v3155 = vunpack.c.l.b16 %v3042
        %v3156 = vunpack.c.h.b16 %v3042
        %v3157 = vunpack.c.l.b16 %v3043
        %v3158 = vunpack.c.h.b16 %v3043
        %v3159 = vunpack.c.l.b16 %v3044
        %v3160 = vunpack.c.h.b16 %v3044
        %v3161 = vunpack.c.l.b16 %v3045
        %v3162 = vunpack.c.h.b16 %v3045
        %v3163 = vunpack.c.l.b16 %v3046
        %v3164 = vunpack.c.h.b16 %v3046
        %v3165 = vunpack.c.l.b16 %v3047
        %v3166 = vunpack.c.h.b16 %v3047
        %v3167 = vunpack.c.l.b16 %v3048
        %v3168 = vunpack.c.h.b16 %v3048
        %v3169 = vunpack.c.l.b16 %v3049
        %v3170 = vunpack.c.h.b16 %v3049
        %v3171 = vunpack.c.l.b16 %v3050
        %v3172 = vunpack.c.h.b16 %v3050
        %v3173 = vunpack.c.l.b16 %v3051
        %v3174 = vunpack.c.h.b16 %v3051
        %v3175 = vunpack.c.l.b16 %v3052
        %v3176 = vunpack.c.h.b16 %v3052
        %v3177 = vunpack.c.l.b16 %v3053
        %v3178 = vunpack.c.h.b16 %v3053
        %v3179 = vunpack.c.l.b16 %v3054
        %v3180 = vunpack.c.h.b16 %v3054
        %v3181 = vunpack.c.l.b16 %v3055
        %v3182 = vunpack.c.h.b16 %v3055
        %v3183 = vunpack.c.l.b16 %v3056
        %v3184 = vunpack.c.h.b16 %v3056
        %v3185 = vunpack.c.l.b16 %v3057
        %v3186 = vunpack.c.h.b16 %v3057
        %v3187 = vunpack.c.l.b16 %v3058
        %v3188 = vunpack.c.h.b16 %v3058
        %v3189 = vunpack.c.l.b16 %v3059
        %v3190 = vunpack.c.h.b16 %v3059
        %v3191 = vunpack.c.l.b16 %v3060
        %v3192 = vunpack.c.h.b16 %v3060
        %v3193 = vpack.c.b16 %v3107, %v3105
        %v3194 = vpack.c.b16 %v3108, %v3106
        %v3195 = vpack.c.b16 %v3111, %v3109
        %v3196 = vpack.c.b16 %v3112, %v3110
        %v3197 = vpack.c.b16 %v3115, %v3113
        %v3198 = vpack.c.b16 %v3116, %v3114
        %v3199 = vpack.c.b16 %v3119, %v3117
        %v3200 = vpack.c.b16 %v3120, %v3118
        %v3201 = vpack.c.b16 %v3123, %v3121
        %v3202 = vpack.c.b16 %v3124, %v3122
        %v3203 = vpack.c.b16 %v3127, %v3125
        %v3204 = vpack.c.b16 %v3128, %v3126
        %v3205 = vpack.c.b16 %v3131, %v3129
        %v3206 = vpack.c.b16 %v3132, %v3130
        %v3207 = vpack.c.b16 %v3135, %v3133
        %v3208 = vpack.c.b16 %v3136, %v3134
        %v3209 = vpack.c.b16 %v3139, %v3137
        %v3210 = vpack.c.b16 %v3140, %v3138
        %v3211 = vpack.c.b16 %v3143, %v3141
        %v3212 = vpack.c.b16 %v3144, %v3142
        %v3213 = vpack.c.b16 %v3147, %v3145
        %v3214 = vpack.c.b16 %v3148, %v3146
        %v3215 = vpack.c.b16 %v3151, %v3149
        %v3216 = vpack.c.b16 %v3152, %v3150
        %v3217 = vpack.c.b16 %v3155, %v3153
        %v3218 = vpack.c.b16 %v3156, %v3154
        %v3219 = vpack.c.b16 %v3159, %v3157
        %v3220 = vpack.c.b16 %v3160, %v3158
        %v3221 = vpack.c.b16 %v3163, %v3161
        %v3222 = vpack.c.b16 %v3164, %v3162
        %v3223 = vpack.c.b16 %v3167, %v3165
        %v3224 = vpack.c.b16 %v3168, %v3166
        %v3225 = vpack.c.b16 %v3171, %v3169
        %v3226 = vpack.c.b16 %v3172, %v3170
        %v3227 = vpack.c.b16 %v3175, %v3173
        %v3228 = vpack.c.b16 %v3176, %v3174
        %v3229 = vpack.c.b16 %v3179, %v3177
        %v3230 = vpack.c.b16 %v3180, %v3178
        %v3231 = vpack.c.b16 %v3183, %v3181
        %v3232 = vpack.c.b16 %v3184, %v3182
        %v3233 = vpack.c.b16 %v3187, %v3185
        %v3234 = vpack.c.b16 %v3188, %v3186
        %v3235 = vpack.c.b16 %v3191, %v3189
        %v3236 = vpack.c.b16 %v3192, %v3190
        %3281 = vmatpush.bf16.msra.mxu0 %v3207
        %3282 = vmatpush.bf16.msra.mxu0 %v3205
        %3283 = vmatpush.bf16.msra.mxu0 %v3203
        %3284 = vmatpush.bf16.msra.mxu0 %v3201
        %3285 = vmatpush.bf16.msra.mxu0 %v3199
        %3286 = vmatpush.bf16.msra.mxu0 %v3197
        %3287 = vmatpush.bf16.msra.mxu0 %v3195
        %3288 = vmatpush.bf16.msra.mxu0 %v3193
        %3289 = vmatmul.bf16.gmra.mxu0 %v832
        %v3290 = vpop.f32.mrf.mxu0
        %v3291 = vadd.f32 0.0, %v3290
        %v3292 = vpop.f32.mrf.mxu0
        %v3293 = vadd.f32 0.0, %v3292
        %3294 = vmatmul.bf16.gmra.mxu0 %v835
        %v3295 = vpop.f32.mrf.mxu0
        %v3296 = vadd.f32 0.0, %v3295
        %v3297 = vpop.f32.mrf.mxu0
        %v3298 = vadd.f32 0.0, %v3297
        %3299 = vmatmul.bf16.gmra.mxu0 %v838
        %v3300 = vpop.f32.mrf.mxu0
        %v3301 = vadd.f32 0.0, %v3300
        %v3302 = vpop.f32.mrf.mxu0
        %v3303 = vadd.f32 0.0, %v3302
        %3304 = vmatmul.bf16.gmra.mxu0 %v841
        %v3305 = vpop.f32.mrf.mxu0
        %v3306 = vadd.f32 0.0, %v3305
        %v3307 = vpop.f32.mrf.mxu0
        %v3308 = vadd.f32 0.0, %v3307
        %3309 = vmatmul.bf16.gmra.mxu0 %v844
        %v3310 = vpop.f32.mrf.mxu0
        %v3311 = vadd.f32 0.0, %v3310
        %v3312 = vpop.f32.mrf.mxu0
        %v3313 = vadd.f32 0.0, %v3312
        %3314 = vmatmul.bf16.gmra.mxu0 %v847
        %v3315 = vpop.f32.mrf.mxu0
        %v3316 = vadd.f32 0.0, %v3315
        %v3317 = vpop.f32.mrf.mxu0
        %v3318 = vadd.f32 0.0, %v3317
        %3319 = vmatmul.bf16.gmra.mxu0 %v850
        %v3320 = vpop.f32.mrf.mxu0
        %v3321 = vadd.f32 0.0, %v3320
        %v3322 = vpop.f32.mrf.mxu0
        %v3323 = vadd.f32 0.0, %v3322
        %3324 = vmatmul.bf16.gmra.mxu0 %v853
        %v3325 = vpop.f32.mrf.mxu0
        %v3326 = vadd.f32 0.0, %v3325
        %v3327 = vpop.f32.mrf.mxu0
        %v3328 = vadd.f32 0.0, %v3327
        %3329 = vdwg.mxu0
        %3330 = vmatpush.bf16.msra.mxu0 %v3223
        %3331 = vmatpush.bf16.msra.mxu0 %v3221
        %3332 = vmatpush.bf16.msra.mxu0 %v3219
        %3333 = vmatpush.bf16.msra.mxu0 %v3217
        %3334 = vmatpush.bf16.msra.mxu0 %v3215
        %3335 = vmatpush.bf16.msra.mxu0 %v3213
        %3336 = vmatpush.bf16.msra.mxu0 %v3211
        %3337 = vmatpush.bf16.msra.mxu0 %v3209
        %3338 = vmatmul.bf16.gmra.mxu0 %v833
        %v3339 = vpop.f32.mrf.mxu0
        %v3340 = vadd.f32 %v3291, %v3339
        %v3341 = vpop.f32.mrf.mxu0
        %v3342 = vadd.f32 %v3293, %v3341
        %3343 = vmatmul.bf16.gmra.mxu0 %v836
        %v3344 = vpop.f32.mrf.mxu0
        %v3345 = vadd.f32 %v3296, %v3344
        %v3346 = vpop.f32.mrf.mxu0
        %v3347 = vadd.f32 %v3298, %v3346
        %3348 = vmatmul.bf16.gmra.mxu0 %v839
        %v3349 = vpop.f32.mrf.mxu0
        %v3350 = vadd.f32 %v3301, %v3349
        %v3351 = vpop.f32.mrf.mxu0
        %v3352 = vadd.f32 %v3303, %v3351
        %3353 = vmatmul.bf16.gmra.mxu0 %v842
        %v3354 = vpop.f32.mrf.mxu0
        %v3355 = vadd.f32 %v3306, %v3354
        %v3356 = vpop.f32.mrf.mxu0
        %v3357 = vadd.f32 %v3308, %v3356
        %3358 = vmatmul.bf16.gmra.mxu0 %v845
        %v3359 = vpop.f32.mrf.mxu0
        %v3360 = vadd.f32 %v3311, %v3359
        %v3361 = vpop.f32.mrf.mxu0
        %v3362 = vadd.f32 %v3313, %v3361
        %3363 = vmatmul.bf16.gmra.mxu0 %v848
        %v3364 = vpop.f32.mrf.mxu0
        %v3365 = vadd.f32 %v3316, %v3364
        %v3366 = vpop.f32.mrf.mxu0
        %v3367 = vadd.f32 %v3318, %v3366
        %3368 = vmatmul.bf16.gmra.mxu0 %v851
        %v3369 = vpop.f32.mrf.mxu0
        %v3370 = vadd.f32 %v3321, %v3369
        %v3371 = vpop.f32.mrf.mxu0
        %v3372 = vadd.f32 %v3323, %v3371
        %3373 = vmatmul.bf16.gmra.mxu0 %v854
        %v3374 = vpop.f32.mrf.mxu0
        %v3375 = vadd.f32 %v3326, %v3374
        %v3376 = vpop.f32.mrf.mxu0
        %v3377 = vadd.f32 %v3328, %v3376
        %3378 = vdwg.mxu0
        %3379 = vmatpush.bf16.msra.mxu0 0
        %3380 = vmatpush.bf16.msra.mxu0 0
        %3381 = vmatpush.bf16.msra.mxu0 %v3235
        %3382 = vmatpush.bf16.msra.mxu0 %v3233
        %3383 = vmatpush.bf16.msra.mxu0 %v3231
        %3384 = vmatpush.bf16.msra.mxu0 %v3229
        %3385 = vmatpush.bf16.msra.mxu0 %v3227
        %3386 = vmatpush.bf16.msra.mxu0 %v3225
        %3387 = vmatmul.bf16.gmra.mxu0 %v1094
        %v3388 = vpop.f32.mrf.mxu0
        %v3389 = vadd.f32 %v3340, %v3388
        %v3390 = vpop.f32.mrf.mxu0
        %v3391 = vadd.f32 %v3342, %v3390
        %3392 = vmatmul.bf16.gmra.mxu0 %v1097
        %v3393 = vpop.f32.mrf.mxu0
        %v3394 = vadd.f32 %v3345, %v3393
        %v3395 = vpop.f32.mrf.mxu0
        %v3396 = vadd.f32 %v3347, %v3395
        %3397 = vmatmul.bf16.gmra.mxu0 %v1100
        %v3398 = vpop.f32.mrf.mxu0
        %v3399 = vadd.f32 %v3350, %v3398
        %v3400 = vpop.f32.mrf.mxu0
        %v3401 = vadd.f32 %v3352, %v3400
        %3402 = vmatmul.bf16.gmra.mxu0 %v1103
        %v3403 = vpop.f32.mrf.mxu0
        %v3404 = vadd.f32 %v3355, %v3403
        %v3405 = vpop.f32.mrf.mxu0
        %v3406 = vadd.f32 %v3357, %v3405
        %3407 = vmatmul.bf16.gmra.mxu0 %v1106
        %v3408 = vpop.f32.mrf.mxu0
        %v3409 = vadd.f32 %v3360, %v3408
        %v3410 = vpop.f32.mrf.mxu0
        %v3411 = vadd.f32 %v3362, %v3410
        %3412 = vmatmul.bf16.gmra.mxu0 %v1109
        %v3413 = vpop.f32.mrf.mxu0
        %v3414 = vadd.f32 %v3365, %v3413
        %v3415 = vpop.f32.mrf.mxu0
        %v3416 = vadd.f32 %v3367, %v3415
        %3417 = vmatmul.bf16.gmra.mxu0 %v1112
        %v3418 = vpop.f32.mrf.mxu0
        %v3419 = vadd.f32 %v3370, %v3418
        %v3420 = vpop.f32.mrf.mxu0
        %v3421 = vadd.f32 %v3372, %v3420
        %3422 = vmatmul.bf16.gmra.mxu0 %v1115
        %v3423 = vpop.f32.mrf.mxu0
        %v3424 = vadd.f32 %v3375, %v3423
        %v3425 = vpop.f32.mrf.mxu0
        %v3426 = vadd.f32 %v3377, %v3425
        %3427 = vdwg.mxu0
        %3428 = vmatpush.bf16.msra.mxu0 %v3208
        %3429 = vmatpush.bf16.msra.mxu0 %v3206
        %3430 = vmatpush.bf16.msra.mxu0 %v3204
        %3431 = vmatpush.bf16.msra.mxu0 %v3202
        %3432 = vmatpush.bf16.msra.mxu0 %v3200
        %3433 = vmatpush.bf16.msra.mxu0 %v3198
        %3434 = vmatpush.bf16.msra.mxu0 %v3196
        %3435 = vmatpush.bf16.msra.mxu0 %v3194
        %3436 = vmatmul.bf16.gmra.mxu0 %v832
        %v3437 = vpop.f32.mrf.mxu0
        %v3438 = vadd.f32 0.0, %v3437
        %v3439 = vpop.f32.mrf.mxu0
        %v3440 = vadd.f32 0.0, %v3439
        %3441 = vmatmul.bf16.gmra.mxu0 %v835
        %v3442 = vpop.f32.mrf.mxu0
        %v3443 = vadd.f32 0.0, %v3442
        %v3444 = vpop.f32.mrf.mxu0
        %v3445 = vadd.f32 0.0, %v3444
        %3446 = vmatmul.bf16.gmra.mxu0 %v838
        %v3447 = vpop.f32.mrf.mxu0
        %v3448 = vadd.f32 0.0, %v3447
        %v3449 = vpop.f32.mrf.mxu0
        %v3450 = vadd.f32 0.0, %v3449
        %3451 = vmatmul.bf16.gmra.mxu0 %v841
        %v3452 = vpop.f32.mrf.mxu0
        %v3453 = vadd.f32 0.0, %v3452
        %v3454 = vpop.f32.mrf.mxu0
        %v3455 = vadd.f32 0.0, %v3454
        %3456 = vmatmul.bf16.gmra.mxu0 %v844
        %v3457 = vpop.f32.mrf.mxu0
        %v3458 = vadd.f32 0.0, %v3457
        %v3459 = vpop.f32.mrf.mxu0
        %v3460 = vadd.f32 0.0, %v3459
        %3461 = vmatmul.bf16.gmra.mxu0 %v847
        %v3462 = vpop.f32.mrf.mxu0
        %v3463 = vadd.f32 0.0, %v3462
        %v3464 = vpop.f32.mrf.mxu0
        %v3465 = vadd.f32 0.0, %v3464
        %3466 = vmatmul.bf16.gmra.mxu0 %v850
        %v3467 = vpop.f32.mrf.mxu0
        %v3468 = vadd.f32 0.0, %v3467
        %v3469 = vpop.f32.mrf.mxu0
        %v3470 = vadd.f32 0.0, %v3469
        %3471 = vmatmul.bf16.gmra.mxu0 %v853
        %v3472 = vpop.f32.mrf.mxu0
        %v3473 = vadd.f32 0.0, %v3472
        %v3474 = vpop.f32.mrf.mxu0
        %v3475 = vadd.f32 0.0, %v3474
        %3476 = vdwg.mxu0
        %3477 = vmatpush.bf16.msra.mxu0 %v3224
        %3478 = vmatpush.bf16.msra.mxu0 %v3222
        %3479 = vmatpush.bf16.msra.mxu0 %v3220
        %3480 = vmatpush.bf16.msra.mxu0 %v3218
        %3481 = vmatpush.bf16.msra.mxu0 %v3216
        %3482 = vmatpush.bf16.msra.mxu0 %v3214
        %3483 = vmatpush.bf16.msra.mxu0 %v3212
        %3484 = vmatpush.bf16.msra.mxu0 %v3210
        %3485 = vmatmul.bf16.gmra.mxu0 %v833
        %v3486 = vpop.f32.mrf.mxu0
        %v3487 = vadd.f32 %v3438, %v3486
        %v3488 = vpop.f32.mrf.mxu0
        %v3489 = vadd.f32 %v3440, %v3488
        %3490 = vmatmul.bf16.gmra.mxu0 %v836
        %v3491 = vpop.f32.mrf.mxu0
        %v3492 = vadd.f32 %v3443, %v3491
        %v3493 = vpop.f32.mrf.mxu0
        %v3494 = vadd.f32 %v3445, %v3493
        %3495 = vmatmul.bf16.gmra.mxu0 %v839
        %v3496 = vpop.f32.mrf.mxu0
        %v3497 = vadd.f32 %v3448, %v3496
        %v3498 = vpop.f32.mrf.mxu0
        %v3499 = vadd.f32 %v3450, %v3498
        %3500 = vmatmul.bf16.gmra.mxu0 %v842
        %v3501 = vpop.f32.mrf.mxu0
        %v3502 = vadd.f32 %v3453, %v3501
        %v3503 = vpop.f32.mrf.mxu0
        %v3504 = vadd.f32 %v3455, %v3503
        %3505 = vmatmul.bf16.gmra.mxu0 %v845
        %v3506 = vpop.f32.mrf.mxu0
        %v3507 = vadd.f32 %v3458, %v3506
        %v3508 = vpop.f32.mrf.mxu0
        %v3509 = vadd.f32 %v3460, %v3508
        %3510 = vmatmul.bf16.gmra.mxu0 %v848
        %v3511 = vpop.f32.mrf.mxu0
        %v3512 = vadd.f32 %v3463, %v3511
        %v3513 = vpop.f32.mrf.mxu0
        %v3514 = vadd.f32 %v3465, %v3513
        %3515 = vmatmul.bf16.gmra.mxu0 %v851
        %v3516 = vpop.f32.mrf.mxu0
        %v3517 = vadd.f32 %v3468, %v3516
        %v3518 = vpop.f32.mrf.mxu0
        %v3519 = vadd.f32 %v3470, %v3518
        %3520 = vmatmul.bf16.gmra.mxu0 %v854
        %v3521 = vpop.f32.mrf.mxu0
        %v3522 = vadd.f32 %v3473, %v3521
        %v3523 = vpop.f32.mrf.mxu0
        %v3524 = vadd.f32 %v3475, %v3523
        %3525 = vdwg.mxu0
        %3526 = vmatpush.bf16.msra.mxu0 0
        %3527 = vmatpush.bf16.msra.mxu0 0
        %3528 = vmatpush.bf16.msra.mxu0 %v3236
        %3529 = vmatpush.bf16.msra.mxu0 %v3234
        %3530 = vmatpush.bf16.msra.mxu0 %v3232
        %3531 = vmatpush.bf16.msra.mxu0 %v3230
        %3532 = vmatpush.bf16.msra.mxu0 %v3228
        %3533 = vmatpush.bf16.msra.mxu0 %v3226
        %3534 = vmatmul.bf16.gmra.mxu0 %v1094
        %v3535 = vpop.f32.mrf.mxu0
        %v3536 = vadd.f32 %v3487, %v3535
        %v3537 = vpop.f32.mrf.mxu0
        %v3538 = vadd.f32 %v3489, %v3537
        %3539 = vmatmul.bf16.gmra.mxu0 %v1097
        %v3540 = vpop.f32.mrf.mxu0
        %v3541 = vadd.f32 %v3492, %v3540
        %v3542 = vpop.f32.mrf.mxu0
        %v3543 = vadd.f32 %v3494, %v3542
        %3544 = vmatmul.bf16.gmra.mxu0 %v1100
        %v3545 = vpop.f32.mrf.mxu0
        %v3546 = vadd.f32 %v3497, %v3545
        %v3547 = vpop.f32.mrf.mxu0
        %v3548 = vadd.f32 %v3499, %v3547
        %3549 = vmatmul.bf16.gmra.mxu0 %v1103
        %v3550 = vpop.f32.mrf.mxu0
        %v3551 = vadd.f32 %v3502, %v3550
        %v3552 = vpop.f32.mrf.mxu0
        %v3553 = vadd.f32 %v3504, %v3552
        %3554 = vmatmul.bf16.gmra.mxu0 %v1106
        %v3555 = vpop.f32.mrf.mxu0
        %v3556 = vadd.f32 %v3507, %v3555
        %v3557 = vpop.f32.mrf.mxu0
        %v3558 = vadd.f32 %v3509, %v3557
        %3559 = vmatmul.bf16.gmra.mxu0 %v1109
        %v3560 = vpop.f32.mrf.mxu0
        %v3561 = vadd.f32 %v3512, %v3560
        %v3562 = vpop.f32.mrf.mxu0
        %v3563 = vadd.f32 %v3514, %v3562
        %3564 = vmatmul.bf16.gmra.mxu0 %v1112
        %v3565 = vpop.f32.mrf.mxu0
        %v3566 = vadd.f32 %v3517, %v3565
        %v3567 = vpop.f32.mrf.mxu0
        %v3568 = vadd.f32 %v3519, %v3567
        %3569 = vmatmul.bf16.gmra.mxu0 %v1115
        %v3570 = vpop.f32.mrf.mxu0
        %v3571 = vadd.f32 %v3522, %v3570
        %v3572 = vpop.f32.mrf.mxu0
        %v3573 = vadd.f32 %v3524, %v3572
        %3574 = vdwg.mxu0
        %v3619 = vunpack.c.l.b16 %v659
        %v3620 = vunpack.c.h.b16 %v659
        %v3621 = vunpack.c.l.b16 %v660
        %v3622 = vunpack.c.h.b16 %v660
        %v3623 = vunpack.c.l.b16 %v661
        %v3624 = vunpack.c.h.b16 %v661
        %v3625 = vunpack.c.l.b16 %v662
        %v3626 = vunpack.c.h.b16 %v662
        %v3627 = vunpack.c.l.b16 %v663
        %v3628 = vunpack.c.h.b16 %v663
        %v3629 = vunpack.c.l.b16 %v664
        %v3630 = vunpack.c.h.b16 %v664
        %v3631 = vunpack.c.l.b16 %v665
        %v3632 = vunpack.c.h.b16 %v665
        %v3633 = vunpack.c.l.b16 %v666
        %v3634 = vunpack.c.h.b16 %v666
        %v3635 = vunpack.c.l.b16 %v667
        %v3636 = vunpack.c.h.b16 %v667
        %v3637 = vunpack.c.l.b16 %v668
        %v3638 = vunpack.c.h.b16 %v668
        %v3639 = vunpack.c.l.b16 %v669
        %v3640 = vunpack.c.h.b16 %v669
        %v3641 = vunpack.c.l.b16 %v670
        %v3642 = vunpack.c.h.b16 %v670
        %v3643 = vunpack.c.l.b16 %v671
        %v3644 = vunpack.c.h.b16 %v671
        %v3645 = vunpack.c.l.b16 %v672
        %v3646 = vunpack.c.h.b16 %v672
        %v3647 = vunpack.c.l.b16 %v673
        %v3648 = vunpack.c.h.b16 %v673
        %v3649 = vunpack.c.l.b16 %v674
        %v3650 = vunpack.c.h.b16 %v674
        %v3651 = vunpack.c.l.b16 %v675
        %v3652 = vunpack.c.h.b16 %v675
        %v3653 = vunpack.c.l.b16 %v676
        %v3654 = vunpack.c.h.b16 %v676
        %v3655 = vunpack.c.l.b16 %v677
        %v3656 = vunpack.c.h.b16 %v677
        %v3657 = vunpack.c.l.b16 %v678
        %v3658 = vunpack.c.h.b16 %v678
        %v3659 = vunpack.c.l.b16 %v679
        %v3660 = vunpack.c.h.b16 %v679
        %v3661 = vunpack.c.l.b16 %v680
        %v3662 = vunpack.c.h.b16 %v680
        %v3663 = vunpack.c.l.b16 %v681
        %v3664 = vunpack.c.h.b16 %v681
        %v3665 = vunpack.c.l.b16 %v682
        %v3666 = vunpack.c.h.b16 %v682
        %v3667 = vunpack.c.l.b16 %v683
        %v3668 = vunpack.c.h.b16 %v683
        %v3669 = vunpack.c.l.b16 %v684
        %v3670 = vunpack.c.h.b16 %v684
        %v3671 = vunpack.c.l.b16 %v685
        %v3672 = vunpack.c.h.b16 %v685
        %v3673 = vunpack.c.l.b16 %v686
        %v3674 = vunpack.c.h.b16 %v686
        %v3675 = vunpack.c.l.b16 %v687
        %v3676 = vunpack.c.h.b16 %v687
        %v3677 = vunpack.c.l.b16 %v688
        %v3678 = vunpack.c.h.b16 %v688
        %v3679 = vunpack.c.l.b16 %v689
        %v3680 = vunpack.c.h.b16 %v689
        %v3681 = vunpack.c.l.b16 %v690
        %v3682 = vunpack.c.h.b16 %v690
        %v3683 = vunpack.c.l.b16 %v691
        %v3684 = vunpack.c.h.b16 %v691
        %v3685 = vunpack.c.l.b16 %v692
        %v3686 = vunpack.c.h.b16 %v692
        %v3687 = vunpack.c.l.b16 %v693
        %v3688 = vunpack.c.h.b16 %v693
        %v3689 = vunpack.c.l.b16 %v694
        %v3690 = vunpack.c.h.b16 %v694
        %v3691 = vunpack.c.l.b16 %v695
        %v3692 = vunpack.c.h.b16 %v695
        %v3693 = vunpack.c.l.b16 %v696
        %v3694 = vunpack.c.h.b16 %v696
        %v3695 = vunpack.c.l.b16 %v697
        %v3696 = vunpack.c.h.b16 %v697
        %v3697 = vunpack.c.l.b16 %v698
        %v3698 = vunpack.c.h.b16 %v698
        %v3699 = vunpack.c.l.b16 %v699
        %v3700 = vunpack.c.h.b16 %v699
        %v3701 = vunpack.c.l.b16 %v700
        %v3702 = vunpack.c.h.b16 %v700
        %v3703 = vunpack.c.l.b16 %v701
        %v3704 = vunpack.c.h.b16 %v701
        %v3705 = vunpack.c.l.b16 %v702
        %v3706 = vunpack.c.h.b16 %v702
        %v3707 = vpack.c.b16 %v3621, %v3619
        %v3708 = vpack.c.b16 %v3622, %v3620
        %v3709 = vpack.c.b16 %v3625, %v3623
        %v3710 = vpack.c.b16 %v3626, %v3624
        %v3711 = vpack.c.b16 %v3629, %v3627
        %v3712 = vpack.c.b16 %v3630, %v3628
        %v3713 = vpack.c.b16 %v3633, %v3631
        %v3714 = vpack.c.b16 %v3634, %v3632
        %v3715 = vpack.c.b16 %v3637, %v3635
        %v3716 = vpack.c.b16 %v3638, %v3636
        %v3717 = vpack.c.b16 %v3641, %v3639
        %v3718 = vpack.c.b16 %v3642, %v3640
        %v3719 = vpack.c.b16 %v3645, %v3643
        %v3720 = vpack.c.b16 %v3646, %v3644
        %v3721 = vpack.c.b16 %v3649, %v3647
        %v3722 = vpack.c.b16 %v3650, %v3648
        %v3723 = vpack.c.b16 %v3653, %v3651
        %v3724 = vpack.c.b16 %v3654, %v3652
        %v3725 = vpack.c.b16 %v3657, %v3655
        %v3726 = vpack.c.b16 %v3658, %v3656
        %v3727 = vpack.c.b16 %v3661, %v3659
        %v3728 = vpack.c.b16 %v3662, %v3660
        %v3729 = vpack.c.b16 %v3665, %v3663
        %v3730 = vpack.c.b16 %v3666, %v3664
        %v3731 = vpack.c.b16 %v3669, %v3667
        %v3732 = vpack.c.b16 %v3670, %v3668
        %v3733 = vpack.c.b16 %v3673, %v3671
        %v3734 = vpack.c.b16 %v3674, %v3672
        %v3735 = vpack.c.b16 %v3677, %v3675
        %v3736 = vpack.c.b16 %v3678, %v3676
        %v3737 = vpack.c.b16 %v3681, %v3679
        %v3738 = vpack.c.b16 %v3682, %v3680
        %v3739 = vpack.c.b16 %v3685, %v3683
        %v3740 = vpack.c.b16 %v3686, %v3684
        %v3741 = vpack.c.b16 %v3689, %v3687
        %v3742 = vpack.c.b16 %v3690, %v3688
        %v3743 = vpack.c.b16 %v3693, %v3691
        %v3744 = vpack.c.b16 %v3694, %v3692
        %v3745 = vpack.c.b16 %v3697, %v3695
        %v3746 = vpack.c.b16 %v3698, %v3696
        %v3747 = vpack.c.b16 %v3701, %v3699
        %v3748 = vpack.c.b16 %v3702, %v3700
        %v3749 = vpack.c.b16 %v3705, %v3703
        %v3750 = vpack.c.b16 %v3706, %v3704
        %3795 = vmatpush.bf16.msra.mxu0 %v3721
        %3796 = vmatpush.bf16.msra.mxu0 %v3719
        %3797 = vmatpush.bf16.msra.mxu0 %v3717
        %3798 = vmatpush.bf16.msra.mxu0 %v3715
        %3799 = vmatpush.bf16.msra.mxu0 %v3713
        %3800 = vmatpush.bf16.msra.mxu0 %v3711
        %3801 = vmatpush.bf16.msra.mxu0 %v3709
        %3802 = vmatpush.bf16.msra.mxu0 %v3707
        %3803 = vmatmul.bf16.gmra.mxu0 %v1421
        %v3804 = vpop.f32.mrf.mxu0
        %v3805 = vadd.f32 %v3389, %v3804
        %v3806 = vpop.f32.mrf.mxu0
        %v3807 = vadd.f32 %v3391, %v3806
        %3808 = vmatmul.bf16.gmra.mxu0 %v832
        %v3809 = vpop.f32.mrf.mxu0
        %v3810 = vadd.f32 %v3394, %v3809
        %v3811 = vpop.f32.mrf.mxu0
        %v3812 = vadd.f32 %v3396, %v3811
        %3813 = vmatmul.bf16.gmra.mxu0 %v835
        %v3814 = vpop.f32.mrf.mxu0
        %v3815 = vadd.f32 %v3399, %v3814
        %v3816 = vpop.f32.mrf.mxu0
        %v3817 = vadd.f32 %v3401, %v3816
        %3818 = vmatmul.bf16.gmra.mxu0 %v838
        %v3819 = vpop.f32.mrf.mxu0
        %v3820 = vadd.f32 %v3404, %v3819
        %v3821 = vpop.f32.mrf.mxu0
        %v3822 = vadd.f32 %v3406, %v3821
        %3823 = vmatmul.bf16.gmra.mxu0 %v841
        %v3824 = vpop.f32.mrf.mxu0
        %v3825 = vadd.f32 %v3409, %v3824
        %v3826 = vpop.f32.mrf.mxu0
        %v3827 = vadd.f32 %v3411, %v3826
        %3828 = vmatmul.bf16.gmra.mxu0 %v844
        %v3829 = vpop.f32.mrf.mxu0
        %v3830 = vadd.f32 %v3414, %v3829
        %v3831 = vpop.f32.mrf.mxu0
        %v3832 = vadd.f32 %v3416, %v3831
        %3833 = vmatmul.bf16.gmra.mxu0 %v847
        %v3834 = vpop.f32.mrf.mxu0
        %v3835 = vadd.f32 %v3419, %v3834
        %v3836 = vpop.f32.mrf.mxu0
        %v3837 = vadd.f32 %v3421, %v3836
        %3838 = vmatmul.bf16.gmra.mxu0 %v850
        %v3839 = vpop.f32.mrf.mxu0
        %v3840 = vadd.f32 %v3424, %v3839
        %v3841 = vpop.f32.mrf.mxu0
        %v3842 = vadd.f32 %v3426, %v3841
        %3843 = vdwg.mxu0
        %3844 = vmatpush.bf16.msra.mxu0 %v3737
        %3845 = vmatpush.bf16.msra.mxu0 %v3735
        %3846 = vmatpush.bf16.msra.mxu0 %v3733
        %3847 = vmatpush.bf16.msra.mxu0 %v3731
        %3848 = vmatpush.bf16.msra.mxu0 %v3729
        %3849 = vmatpush.bf16.msra.mxu0 %v3727
        %3850 = vmatpush.bf16.msra.mxu0 %v3725
        %3851 = vmatpush.bf16.msra.mxu0 %v3723
        %3852 = vmatmul.bf16.gmra.mxu0 %v1422
        %v3853 = vpop.f32.mrf.mxu0
        %v3854 = vadd.f32 %v3805, %v3853
        %v3855 = vpop.f32.mrf.mxu0
        %v3856 = vadd.f32 %v3807, %v3855
        %3857 = vmatmul.bf16.gmra.mxu0 %v833
        %v3858 = vpop.f32.mrf.mxu0
        %v3859 = vadd.f32 %v3810, %v3858
        %v3860 = vpop.f32.mrf.mxu0
        %v3861 = vadd.f32 %v3812, %v3860
        %3862 = vmatmul.bf16.gmra.mxu0 %v836
        %v3863 = vpop.f32.mrf.mxu0
        %v3864 = vadd.f32 %v3815, %v3863
        %v3865 = vpop.f32.mrf.mxu0
        %v3866 = vadd.f32 %v3817, %v3865
        %3867 = vmatmul.bf16.gmra.mxu0 %v839
        %v3868 = vpop.f32.mrf.mxu0
        %v3869 = vadd.f32 %v3820, %v3868
        %v3870 = vpop.f32.mrf.mxu0
        %v3871 = vadd.f32 %v3822, %v3870
        %3872 = vmatmul.bf16.gmra.mxu0 %v842
        %v3873 = vpop.f32.mrf.mxu0
        %v3874 = vadd.f32 %v3825, %v3873
        %v3875 = vpop.f32.mrf.mxu0
        %v3876 = vadd.f32 %v3827, %v3875
        %3877 = vmatmul.bf16.gmra.mxu0 %v845
        %v3878 = vpop.f32.mrf.mxu0
        %v3879 = vadd.f32 %v3830, %v3878
        %v3880 = vpop.f32.mrf.mxu0
        %v3881 = vadd.f32 %v3832, %v3880
        %3882 = vmatmul.bf16.gmra.mxu0 %v848
        %v3883 = vpop.f32.mrf.mxu0
        %v3884 = vadd.f32 %v3835, %v3883
        %v3885 = vpop.f32.mrf.mxu0
        %v3886 = vadd.f32 %v3837, %v3885
        %3887 = vmatmul.bf16.gmra.mxu0 %v851
        %v3888 = vpop.f32.mrf.mxu0
        %v3889 = vadd.f32 %v3840, %v3888
        %v3890 = vpop.f32.mrf.mxu0
        %v3891 = vadd.f32 %v3842, %v3890
        %3892 = vdwg.mxu0
        %3893 = vmatpush.bf16.msra.mxu0 0
        %3894 = vmatpush.bf16.msra.mxu0 0
        %3895 = vmatpush.bf16.msra.mxu0 %v3749
        %3896 = vmatpush.bf16.msra.mxu0 %v3747
        %3897 = vmatpush.bf16.msra.mxu0 %v3745
        %3898 = vmatpush.bf16.msra.mxu0 %v3743
        %3899 = vmatpush.bf16.msra.mxu0 %v3741
        %3900 = vmatpush.bf16.msra.mxu0 %v3739
        %3901 = vmatmul.bf16.gmra.mxu0 %v1647
        %v3902 = vpop.f32.mrf.mxu0
        %v3903 = vadd.f32 %v3854, %v3902
        %v3904 = vpop.f32.mrf.mxu0
        %v3905 = vadd.f32 %v3856, %v3904
        %3906 = vmatmul.bf16.gmra.mxu0 %v1094
        %v3907 = vpop.f32.mrf.mxu0
        %v3908 = vadd.f32 %v3859, %v3907
        %v3909 = vpop.f32.mrf.mxu0
        %v3910 = vadd.f32 %v3861, %v3909
        %3911 = vmatmul.bf16.gmra.mxu0 %v1097
        %v3912 = vpop.f32.mrf.mxu0
        %v3913 = vadd.f32 %v3864, %v3912
        %v3914 = vpop.f32.mrf.mxu0
        %v3915 = vadd.f32 %v3866, %v3914
        %3916 = vmatmul.bf16.gmra.mxu0 %v1100
        %v3917 = vpop.f32.mrf.mxu0
        %v3918 = vadd.f32 %v3869, %v3917
        %v3919 = vpop.f32.mrf.mxu0
        %v3920 = vadd.f32 %v3871, %v3919
        %3921 = vmatmul.bf16.gmra.mxu0 %v1103
        %v3922 = vpop.f32.mrf.mxu0
        %v3923 = vadd.f32 %v3874, %v3922
        %v3924 = vpop.f32.mrf.mxu0
        %v3925 = vadd.f32 %v3876, %v3924
        %3926 = vmatmul.bf16.gmra.mxu0 %v1106
        %v3927 = vpop.f32.mrf.mxu0
        %v3928 = vadd.f32 %v3879, %v3927
        %v3929 = vpop.f32.mrf.mxu0
        %v3930 = vadd.f32 %v3881, %v3929
        %3931 = vmatmul.bf16.gmra.mxu0 %v1109
        %v3932 = vpop.f32.mrf.mxu0
        %v3933 = vadd.f32 %v3884, %v3932
        %v3934 = vpop.f32.mrf.mxu0
        %v3935 = vadd.f32 %v3886, %v3934
        %3936 = vmatmul.bf16.gmra.mxu0 %v1112
        %v3937 = vpop.f32.mrf.mxu0
        %v3938 = vadd.f32 %v3889, %v3937
        %v3939 = vpop.f32.mrf.mxu0
        %v3940 = vadd.f32 %v3891, %v3939
        %3941 = vdwg.mxu0
        %3942 = vmatpush.bf16.msra.mxu0 %v3722
        %3943 = vmatpush.bf16.msra.mxu0 %v3720
        %3944 = vmatpush.bf16.msra.mxu0 %v3718
        %3945 = vmatpush.bf16.msra.mxu0 %v3716
        %3946 = vmatpush.bf16.msra.mxu0 %v3714
        %3947 = vmatpush.bf16.msra.mxu0 %v3712
        %3948 = vmatpush.bf16.msra.mxu0 %v3710
        %3949 = vmatpush.bf16.msra.mxu0 %v3708
        %3950 = vmatmul.bf16.gmra.mxu0 %v1421
        %v3951 = vpop.f32.mrf.mxu0
        %v3952 = vadd.f32 %v3536, %v3951
        %v3953 = vpop.f32.mrf.mxu0
        %v3954 = vadd.f32 %v3538, %v3953
        %3955 = vmatmul.bf16.gmra.mxu0 %v832
        %v3956 = vpop.f32.mrf.mxu0
        %v3957 = vadd.f32 %v3541, %v3956
        %v3958 = vpop.f32.mrf.mxu0
        %v3959 = vadd.f32 %v3543, %v3958
        %3960 = vmatmul.bf16.gmra.mxu0 %v835
        %v3961 = vpop.f32.mrf.mxu0
        %v3962 = vadd.f32 %v3546, %v3961
        %v3963 = vpop.f32.mrf.mxu0
        %v3964 = vadd.f32 %v3548, %v3963
        %3965 = vmatmul.bf16.gmra.mxu0 %v838
        %v3966 = vpop.f32.mrf.mxu0
        %v3967 = vadd.f32 %v3551, %v3966
        %v3968 = vpop.f32.mrf.mxu0
        %v3969 = vadd.f32 %v3553, %v3968
        %3970 = vmatmul.bf16.gmra.mxu0 %v841
        %v3971 = vpop.f32.mrf.mxu0
        %v3972 = vadd.f32 %v3556, %v3971
        %v3973 = vpop.f32.mrf.mxu0
        %v3974 = vadd.f32 %v3558, %v3973
        %3975 = vmatmul.bf16.gmra.mxu0 %v844
        %v3976 = vpop.f32.mrf.mxu0
        %v3977 = vadd.f32 %v3561, %v3976
        %v3978 = vpop.f32.mrf.mxu0
        %v3979 = vadd.f32 %v3563, %v3978
        %3980 = vmatmul.bf16.gmra.mxu0 %v847
        %v3981 = vpop.f32.mrf.mxu0
        %v3982 = vadd.f32 %v3566, %v3981
        %v3983 = vpop.f32.mrf.mxu0
        %v3984 = vadd.f32 %v3568, %v3983
        %3985 = vmatmul.bf16.gmra.mxu0 %v850
        %v3986 = vpop.f32.mrf.mxu0
        %v3987 = vadd.f32 %v3571, %v3986
        %v3988 = vpop.f32.mrf.mxu0
        %v3989 = vadd.f32 %v3573, %v3988
        %3990 = vdwg.mxu0
        %3991 = vmatpush.bf16.msra.mxu0 %v3738
        %3992 = vmatpush.bf16.msra.mxu0 %v3736
        %3993 = vmatpush.bf16.msra.mxu0 %v3734
        %3994 = vmatpush.bf16.msra.mxu0 %v3732
        %3995 = vmatpush.bf16.msra.mxu0 %v3730
        %3996 = vmatpush.bf16.msra.mxu0 %v3728
        %3997 = vmatpush.bf16.msra.mxu0 %v3726
        %3998 = vmatpush.bf16.msra.mxu0 %v3724
        %3999 = vmatmul.bf16.gmra.mxu0 %v1422
        %v4000 = vpop.f32.mrf.mxu0
        %v4001 = vadd.f32 %v3952, %v4000
        %v4002 = vpop.f32.mrf.mxu0
        %v4003 = vadd.f32 %v3954, %v4002
        %4004 = vmatmul.bf16.gmra.mxu0 %v833
        %v4005 = vpop.f32.mrf.mxu0
        %v4006 = vadd.f32 %v3957, %v4005
        %v4007 = vpop.f32.mrf.mxu0
        %v4008 = vadd.f32 %v3959, %v4007
        %4009 = vmatmul.bf16.gmra.mxu0 %v836
        %v4010 = vpop.f32.mrf.mxu0
        %v4011 = vadd.f32 %v3962, %v4010
        %v4012 = vpop.f32.mrf.mxu0
        %v4013 = vadd.f32 %v3964, %v4012
        %4014 = vmatmul.bf16.gmra.mxu0 %v839
        %v4015 = vpop.f32.mrf.mxu0
        %v4016 = vadd.f32 %v3967, %v4015
        %v4017 = vpop.f32.mrf.mxu0
        %v4018 = vadd.f32 %v3969, %v4017
        %4019 = vmatmul.bf16.gmra.mxu0 %v842
        %v4020 = vpop.f32.mrf.mxu0
        %v4021 = vadd.f32 %v3972, %v4020
        %v4022 = vpop.f32.mrf.mxu0
        %v4023 = vadd.f32 %v3974, %v4022
        %4024 = vmatmul.bf16.gmra.mxu0 %v845
        %v4025 = vpop.f32.mrf.mxu0
        %v4026 = vadd.f32 %v3977, %v4025
        %v4027 = vpop.f32.mrf.mxu0
        %v4028 = vadd.f32 %v3979, %v4027
        %4029 = vmatmul.bf16.gmra.mxu0 %v848
        %v4030 = vpop.f32.mrf.mxu0
        %v4031 = vadd.f32 %v3982, %v4030
        %v4032 = vpop.f32.mrf.mxu0
        %v4033 = vadd.f32 %v3984, %v4032
        %4034 = vmatmul.bf16.gmra.mxu0 %v851
        %v4035 = vpop.f32.mrf.mxu0
        %v4036 = vadd.f32 %v3987, %v4035
        %v4037 = vpop.f32.mrf.mxu0
        %v4038 = vadd.f32 %v3989, %v4037
        %4039 = vdwg.mxu0
        %4040 = vmatpush.bf16.msra.mxu0 0
        %4041 = vmatpush.bf16.msra.mxu0 0
        %4042 = vmatpush.bf16.msra.mxu0 %v3750
        %4043 = vmatpush.bf16.msra.mxu0 %v3748
        %4044 = vmatpush.bf16.msra.mxu0 %v3746
        %4045 = vmatpush.bf16.msra.mxu0 %v3744
        %4046 = vmatpush.bf16.msra.mxu0 %v3742
        %4047 = vmatpush.bf16.msra.mxu0 %v3740
        %4048 = vmatmul.bf16.gmra.mxu0 %v1647
        %v4049 = vpop.f32.mrf.mxu0
        %v4050 = vadd.f32 %v4001, %v4049
        %v4051 = vpop.f32.mrf.mxu0
        %v4052 = vadd.f32 %v4003, %v4051
        %4053 = vmatmul.bf16.gmra.mxu0 %v1094
        %v4054 = vpop.f32.mrf.mxu0
        %v4055 = vadd.f32 %v4006, %v4054
        %v4056 = vpop.f32.mrf.mxu0
        %v4057 = vadd.f32 %v4008, %v4056
        %4058 = vmatmul.bf16.gmra.mxu0 %v1097
        %v4059 = vpop.f32.mrf.mxu0
        %v4060 = vadd.f32 %v4011, %v4059
        %v4061 = vpop.f32.mrf.mxu0
        %v4062 = vadd.f32 %v4013, %v4061
        %4063 = vmatmul.bf16.gmra.mxu0 %v1100
        %v4064 = vpop.f32.mrf.mxu0
        %v4065 = vadd.f32 %v4016, %v4064
        %v4066 = vpop.f32.mrf.mxu0
        %v4067 = vadd.f32 %v4018, %v4066
        %4068 = vmatmul.bf16.gmra.mxu0 %v1103
        %v4069 = vpop.f32.mrf.mxu0
        %v4070 = vadd.f32 %v4021, %v4069
        %v4071 = vpop.f32.mrf.mxu0
        %v4072 = vadd.f32 %v4023, %v4071
        %4073 = vmatmul.bf16.gmra.mxu0 %v1106
        %v4074 = vpop.f32.mrf.mxu0
        %v4075 = vadd.f32 %v4026, %v4074
        %v4076 = vpop.f32.mrf.mxu0
        %v4077 = vadd.f32 %v4028, %v4076
        %4078 = vmatmul.bf16.gmra.mxu0 %v1109
        %v4079 = vpop.f32.mrf.mxu0
        %v4080 = vadd.f32 %v4031, %v4079
        %v4081 = vpop.f32.mrf.mxu0
        %v4082 = vadd.f32 %v4033, %v4081
        %4083 = vmatmul.bf16.gmra.mxu0 %v1112
        %v4084 = vpop.f32.mrf.mxu0
        %v4085 = vadd.f32 %v4036, %v4084
        %v4086 = vpop.f32.mrf.mxu0
        %v4087 = vadd.f32 %v4038, %v4086
        %4088 = vdwg.mxu0
        %v4089 = vld [vmem:[%s278 + $0x30] sm:$0xff]
        %v4090 = vld [vmem:[%s278 + $0x38] sm:$0xf]
        %v4091 = vld [vmem:[%s278 + $0x3c] sm:$0xff]
        %v4092 = vld [vmem:[%s278 + $0x44] sm:$0xf]
        %v4093 = vld [vmem:[%s278 + $0x48] sm:$0xff]
        %v4094 = vld [vmem:[%s278 + $0x50] sm:$0xf]
        %v4095 = vld [vmem:[%s278 + $0x54] sm:$0xff]
        %v4096 = vld [vmem:[%s278 + $0x5c] sm:$0xf]
        %v4097 = vld [vmem:[%s278 + $0x60] sm:$0xff]
        %v4098 = vld [vmem:[%s278 + $0x68] sm:$0xf]
        %v4099 = vld [vmem:[%s278 + $0x6c] sm:$0xff]
        %v4100 = vld [vmem:[%s278 + $0x74] sm:$0xf]
        %v4101 = vld [vmem:[%s278 + $0x78] sm:$0xff]
        %v4102 = vld [vmem:[%s278 + $0x80] sm:$0xf]
        %v4103 = vld [vmem:[%s278 + $0x84] sm:$0xff]
        %v4104 = vld [vmem:[%s278 + $0x8c] sm:$0xf]
        %v4105 = vld [vmem:[%s278 + $0x90] sm:$0xff]
        %v4106 = vld [vmem:[%s278 + $0x98] sm:$0xf]
        %v4107 = vld [vmem:[%s278 + $0x9c] sm:$0xff]
        %v4108 = vld [vmem:[%s278 + $0xa4] sm:$0xf]
        %v4109 = vld [vmem:[%s278 + $0xa8] sm:$0xff]
        %v4110 = vld [vmem:[%s278 + $0xb0] sm:$0xf]
        %v4111 = vld [vmem:[%s278 + $0xb4] sm:$0xff]
        %v4112 = vld [vmem:[%s278 + $0xbc] sm:$0xf]
        %v4113 = vld [vmem:[%s278 + $0xc0] sm:$0xff]
        %v4114 = vld [vmem:[%s278 + $0xc8] sm:$0xf]
        %v4115 = vld [vmem:[%s278 + $0xcc] sm:$0xff]
        %v4116 = vld [vmem:[%s278 + $0xd4] sm:$0xf]
        %v4117 = vld [vmem:[%s278 + $0xd8] sm:$0xff]
        %v4118 = vld [vmem:[%s278 + $0xe0] sm:$0xf]
        %v4119 = vld [vmem:[%s278 + $0xe4] sm:$0xff]
        %v4120 = vld [vmem:[%s278 + $0xec] sm:$0xf]
        %s4121 = scalar_lea.vmem %s1, 2112
        %v4122 = vld [vmem:[%s4121] sm:$0xff]
        %v4123 = vld [vmem:[%s4121 + $0x8] sm:$0xff]
        %v4124 = vld [vmem:[%s4121 + $0x10] sm:$0xff]
        %v4125 = vld [vmem:[%s4121 + $0x18] sm:$0xff]
        %v4126 = vld [vmem:[%s4121 + $0x20] sm:$0xff]
        %v4127 = vld [vmem:[%s4121 + $0x28] sm:$0xff]
        %v4128 = vld [vmem:[%s4121 + $0x30] sm:$0xff]
        %v4129 = vld [vmem:[%s4121 + $0x38] sm:$0xff]
        %v4130 = vld [vmem:[%s4121 + $0x40] sm:$0xff]
        %v4131 = vld [vmem:[%s4121 + $0x48] sm:$0xff]
        %v4132 = vld [vmem:[%s4121 + $0x50] sm:$0xff]
        %v4133 = vld [vmem:[%s4121 + $0x58] sm:$0xff]
        %v4134 = vld [vmem:[%s4121 + $0x60] sm:$0xff]
        %v4135 = vld [vmem:[%s4121 + $0x68] sm:$0xff]
        %v4136 = vld [vmem:[%s4121 + $0x70] sm:$0xff]
        %v4137 = vld [vmem:[%s4121 + $0x78] sm:$0xff]
        %v4138 = vld [vmem:[%s4121 + $0x80] sm:$0xff]
        %v4139 = vld [vmem:[%s4121 + $0x88] sm:$0xff]
        %v4140 = vld [vmem:[%s4121 + $0x90] sm:$0xff]
        %v4141 = vld [vmem:[%s4121 + $0x98] sm:$0xff]
        %v4142 = vld [vmem:[%s4121 + $0xa0] sm:$0xff]
        %v4143 = vld [vmem:[%s4121 + $0xa8] sm:$0xff]
        %v4144 = vld [vmem:[%s4121 + $0xb0] sm:$0xff]
        %v4145 = vld [vmem:[%s4121 + $0xb8] sm:$0xff]
        %v4146 = vld [vmem:[%s4121 + $0xc0] sm:$0xff]
        %v4147 = vld [vmem:[%s4121 + $0xc8] sm:$0xff]
        %v4148 = vld [vmem:[%s4121 + $0xd0] sm:$0xff]
        %v4149 = vld [vmem:[%s4121 + $0xd8] sm:$0xff]
        %v4150 = vld [vmem:[%s4121 + $0xe0] sm:$0xff]
        %v4151 = vld [vmem:[%s4121 + $0xe8] sm:$0xff]
        %v4152 = vld [vmem:[%s4121 + $0xf0] sm:$0xff]
        %v4153 = vld [vmem:[%s4121 + $0xf8] sm:$0xff]
        %v4154 = vld [vmem:[%s4121 + $0x100] sm:$0xff]
        %v4155 = vld [vmem:[%s4121 + $0x108] sm:$0xff]
        %v4156 = vld [vmem:[%s4121 + $0x110] sm:$0xff]
        %v4157 = vld [vmem:[%s4121 + $0x118] sm:$0xff]
        %v4158 = vld [vmem:[%s4121 + $0x120] sm:$0xff]
        %v4159 = vld [vmem:[%s4121 + $0x128] sm:$0xff]
        %v4160 = vld [vmem:[%s4121 + $0x130] sm:$0xff]
        %v4161 = vld [vmem:[%s4121 + $0x138] sm:$0xff]
        %v4162 = vld [vmem:[%s4121 + $0x140] sm:$0xff]
        %v4163 = vld [vmem:[%s4121 + $0x148] sm:$0xff]
        %v4164 = vld [vmem:[%s4121 + $0x150] sm:$0xff]
        %v4165 = vld [vmem:[%s4121 + $0x158] sm:$0xff]
        %v4198 = vunpack.c.l.b16 %v4089
        %v4199 = vunpack.c.h.b16 %v4089
        %v4200 = vunpack.c.l.b16 %v4090
        %v4201 = vunpack.c.l.b16 %v4091
        %v4202 = vunpack.c.h.b16 %v4091
        %v4203 = vunpack.c.l.b16 %v4092
        %v4204 = vunpack.c.l.b16 %v4093
        %v4205 = vunpack.c.h.b16 %v4093
        %v4206 = vunpack.c.l.b16 %v4094
        %v4207 = vunpack.c.l.b16 %v4095
        %v4208 = vunpack.c.h.b16 %v4095
        %v4209 = vunpack.c.l.b16 %v4096
        %v4210 = vunpack.c.l.b16 %v4097
        %v4211 = vunpack.c.h.b16 %v4097
        %v4212 = vunpack.c.l.b16 %v4098
        %v4213 = vunpack.c.l.b16 %v4099
        %v4214 = vunpack.c.h.b16 %v4099
        %v4215 = vunpack.c.l.b16 %v4100
        %v4216 = vunpack.c.l.b16 %v4101
        %v4217 = vunpack.c.h.b16 %v4101
        %v4218 = vunpack.c.l.b16 %v4102
        %v4219 = vunpack.c.l.b16 %v4103
        %v4220 = vunpack.c.h.b16 %v4103
        %v4221 = vunpack.c.l.b16 %v4104
        %v4222 = vunpack.c.l.b16 %v4105
        %v4223 = vunpack.c.h.b16 %v4105
        %v4224 = vunpack.c.l.b16 %v4106
        %v4225 = vunpack.c.l.b16 %v4107
        %v4226 = vunpack.c.h.b16 %v4107
        %v4227 = vunpack.c.l.b16 %v4108
        %v4228 = vunpack.c.l.b16 %v4109
        %v4229 = vunpack.c.h.b16 %v4109
        %v4230 = vunpack.c.l.b16 %v4110
        %v4231 = vunpack.c.l.b16 %v4111
        %v4232 = vunpack.c.h.b16 %v4111
        %v4233 = vunpack.c.l.b16 %v4112
        %v4234 = vunpack.c.l.b16 %v4113
        %v4235 = vunpack.c.h.b16 %v4113
        %v4236 = vunpack.c.l.b16 %v4114
        %v4237 = vunpack.c.l.b16 %v4115
        %v4238 = vunpack.c.h.b16 %v4115
        %v4239 = vunpack.c.l.b16 %v4116
        %v4240 = vunpack.c.l.b16 %v4117
        %v4241 = vunpack.c.h.b16 %v4117
        %v4242 = vunpack.c.l.b16 %v4118
        %v4243 = vunpack.c.l.b16 %v4119
        %v4244 = vunpack.c.h.b16 %v4119
        %v4245 = vunpack.c.l.b16 %v4120
        %v4246 = vpack.c.b16 %v4201, %v4198
        %v4247 = vpack.c.b16 %v4202, %v4199
        %v4248 = vpack.c.b16 %v4203, %v4200
        %v4249 = vpack.c.b16 %v4207, %v4204
        %v4250 = vpack.c.b16 %v4208, %v4205
        %v4251 = vpack.c.b16 %v4209, %v4206
        %v4252 = vpack.c.b16 %v4213, %v4210
        %v4253 = vpack.c.b16 %v4214, %v4211
        %v4254 = vpack.c.b16 %v4215, %v4212
        %v4255 = vpack.c.b16 %v4219, %v4216
        %v4256 = vpack.c.b16 %v4220, %v4217
        %v4257 = vpack.c.b16 %v4221, %v4218
        %v4258 = vpack.c.b16 %v4225, %v4222
        %v4259 = vpack.c.b16 %v4226, %v4223
        %v4260 = vpack.c.b16 %v4227, %v4224
        %v4261 = vpack.c.b16 %v4231, %v4228
        %v4262 = vpack.c.b16 %v4232, %v4229
        %v4263 = vpack.c.b16 %v4233, %v4230
        %v4264 = vpack.c.b16 %v4237, %v4234
        %v4265 = vpack.c.b16 %v4238, %v4235
        %v4266 = vpack.c.b16 %v4239, %v4236
        %v4267 = vpack.c.b16 %v4243, %v4240
        %v4268 = vpack.c.b16 %v4244, %v4241
        %v4269 = vpack.c.b16 %v4245, %v4242
        %v4330 = vunpack.c.l.b16 %v4122
        %v4331 = vunpack.c.h.b16 %v4122
        %v4332 = vunpack.c.l.b16 %v4123
        %v4333 = vunpack.c.h.b16 %v4123
        %v4334 = vunpack.c.l.b16 %v4124
        %v4335 = vunpack.c.h.b16 %v4124
        %v4336 = vunpack.c.l.b16 %v4125
        %v4337 = vunpack.c.h.b16 %v4125
        %v4338 = vunpack.c.l.b16 %v4126
        %v4339 = vunpack.c.h.b16 %v4126
        %v4340 = vunpack.c.l.b16 %v4127
        %v4341 = vunpack.c.h.b16 %v4127
        %v4342 = vunpack.c.l.b16 %v4128
        %v4343 = vunpack.c.h.b16 %v4128
        %v4344 = vunpack.c.l.b16 %v4129
        %v4345 = vunpack.c.h.b16 %v4129
        %v4346 = vunpack.c.l.b16 %v4130
        %v4347 = vunpack.c.h.b16 %v4130
        %v4348 = vunpack.c.l.b16 %v4131
        %v4349 = vunpack.c.h.b16 %v4131
        %v4350 = vunpack.c.l.b16 %v4132
        %v4351 = vunpack.c.h.b16 %v4132
        %v4352 = vunpack.c.l.b16 %v4133
        %v4353 = vunpack.c.h.b16 %v4133
        %v4354 = vunpack.c.l.b16 %v4134
        %v4355 = vunpack.c.h.b16 %v4134
        %v4356 = vunpack.c.l.b16 %v4135
        %v4357 = vunpack.c.h.b16 %v4135
        %v4358 = vunpack.c.l.b16 %v4136
        %v4359 = vunpack.c.h.b16 %v4136
        %v4360 = vunpack.c.l.b16 %v4137
        %v4361 = vunpack.c.h.b16 %v4137
        %v4362 = vunpack.c.l.b16 %v4138
        %v4363 = vunpack.c.h.b16 %v4138
        %v4364 = vunpack.c.l.b16 %v4139
        %v4365 = vunpack.c.h.b16 %v4139
        %v4366 = vunpack.c.l.b16 %v4140
        %v4367 = vunpack.c.h.b16 %v4140
        %v4368 = vunpack.c.l.b16 %v4141
        %v4369 = vunpack.c.h.b16 %v4141
        %v4370 = vunpack.c.l.b16 %v4142
        %v4371 = vunpack.c.h.b16 %v4142
        %v4372 = vunpack.c.l.b16 %v4143
        %v4373 = vunpack.c.h.b16 %v4143
        %v4374 = vunpack.c.l.b16 %v4144
        %v4375 = vunpack.c.h.b16 %v4144
        %v4376 = vunpack.c.l.b16 %v4145
        %v4377 = vunpack.c.h.b16 %v4145
        %v4378 = vunpack.c.l.b16 %v4146
        %v4379 = vunpack.c.h.b16 %v4146
        %v4380 = vunpack.c.l.b16 %v4147
        %v4381 = vunpack.c.h.b16 %v4147
        %v4382 = vunpack.c.l.b16 %v4148
        %v4383 = vunpack.c.h.b16 %v4148
        %v4384 = vunpack.c.l.b16 %v4149
        %v4385 = vunpack.c.h.b16 %v4149
        %v4386 = vunpack.c.l.b16 %v4150
        %v4387 = vunpack.c.h.b16 %v4150
        %v4388 = vunpack.c.l.b16 %v4151
        %v4389 = vunpack.c.h.b16 %v4151
        %v4390 = vunpack.c.l.b16 %v4152
        %v4391 = vunpack.c.h.b16 %v4152
        %v4392 = vunpack.c.l.b16 %v4153
        %v4393 = vunpack.c.h.b16 %v4153
        %v4394 = vunpack.c.l.b16 %v4154
        %v4395 = vunpack.c.h.b16 %v4154
        %v4396 = vunpack.c.l.b16 %v4155
        %v4397 = vunpack.c.h.b16 %v4155
        %v4398 = vunpack.c.l.b16 %v4156
        %v4399 = vunpack.c.h.b16 %v4156
        %v4400 = vunpack.c.l.b16 %v4157
        %v4401 = vunpack.c.h.b16 %v4157
        %v4402 = vunpack.c.l.b16 %v4158
        %v4403 = vunpack.c.h.b16 %v4158
        %v4404 = vunpack.c.l.b16 %v4159
        %v4405 = vunpack.c.h.b16 %v4159
        %v4406 = vunpack.c.l.b16 %v4160
        %v4407 = vunpack.c.h.b16 %v4160
        %v4408 = vunpack.c.l.b16 %v4161
        %v4409 = vunpack.c.h.b16 %v4161
        %v4410 = vunpack.c.l.b16 %v4162
        %v4411 = vunpack.c.h.b16 %v4162
        %v4412 = vunpack.c.l.b16 %v4163
        %v4413 = vunpack.c.h.b16 %v4163
        %v4414 = vunpack.c.l.b16 %v4164
        %v4415 = vunpack.c.h.b16 %v4164
        %v4416 = vunpack.c.l.b16 %v4165
        %v4417 = vunpack.c.h.b16 %v4165
        %v4418 = vpack.c.b16 %v4332, %v4330
        %v4419 = vpack.c.b16 %v4333, %v4331
        %v4420 = vpack.c.b16 %v4336, %v4334
        %v4421 = vpack.c.b16 %v4337, %v4335
        %v4422 = vpack.c.b16 %v4340, %v4338
        %v4423 = vpack.c.b16 %v4341, %v4339
        %v4424 = vpack.c.b16 %v4344, %v4342
        %v4425 = vpack.c.b16 %v4345, %v4343
        %v4426 = vpack.c.b16 %v4348, %v4346
        %v4427 = vpack.c.b16 %v4349, %v4347
        %v4428 = vpack.c.b16 %v4352, %v4350
        %v4429 = vpack.c.b16 %v4353, %v4351
        %v4430 = vpack.c.b16 %v4356, %v4354
        %v4431 = vpack.c.b16 %v4357, %v4355
        %v4432 = vpack.c.b16 %v4360, %v4358
        %v4433 = vpack.c.b16 %v4361, %v4359
        %v4434 = vpack.c.b16 %v4364, %v4362
        %v4435 = vpack.c.b16 %v4365, %v4363
        %v4436 = vpack.c.b16 %v4368, %v4366
        %v4437 = vpack.c.b16 %v4369, %v4367
        %v4438 = vpack.c.b16 %v4372, %v4370
        %v4439 = vpack.c.b16 %v4373, %v4371
        %v4440 = vpack.c.b16 %v4376, %v4374
        %v4441 = vpack.c.b16 %v4377, %v4375
        %v4442 = vpack.c.b16 %v4380, %v4378
        %v4443 = vpack.c.b16 %v4381, %v4379
        %v4444 = vpack.c.b16 %v4384, %v4382
        %v4445 = vpack.c.b16 %v4385, %v4383
        %v4446 = vpack.c.b16 %v4388, %v4386
        %v4447 = vpack.c.b16 %v4389, %v4387
        %v4448 = vpack.c.b16 %v4392, %v4390
        %v4449 = vpack.c.b16 %v4393, %v4391
        %v4450 = vpack.c.b16 %v4396, %v4394
        %v4451 = vpack.c.b16 %v4397, %v4395
        %v4452 = vpack.c.b16 %v4400, %v4398
        %v4453 = vpack.c.b16 %v4401, %v4399
        %v4454 = vpack.c.b16 %v4404, %v4402
        %v4455 = vpack.c.b16 %v4405, %v4403
        %v4456 = vpack.c.b16 %v4408, %v4406
        %v4457 = vpack.c.b16 %v4409, %v4407
        %v4458 = vpack.c.b16 %v4412, %v4410
        %v4459 = vpack.c.b16 %v4413, %v4411
        %v4460 = vpack.c.b16 %v4416, %v4414
        %v4461 = vpack.c.b16 %v4417, %v4415
        %v4507 = vsel %vm1092, %v4248, 0
        %v4510 = vsel %vm1092, %v4251, 0
        %v4513 = vsel %vm1092, %v4254, 0
        %v4516 = vsel %vm1092, %v4257, 0
        %v4519 = vsel %vm1092, %v4260, 0
        %v4522 = vsel %vm1092, %v4263, 0
        %v4525 = vsel %vm1092, %v4266, 0
        %v4528 = vsel %vm1092, %v4269, 0
        %4530 = vmatpush.bf16.msra.mxu0 %v4432
        %4531 = vmatpush.bf16.msra.mxu0 %v4430
        %4532 = vmatpush.bf16.msra.mxu0 %v4428
        %4533 = vmatpush.bf16.msra.mxu0 %v4426
        %4534 = vmatpush.bf16.msra.mxu0 %v4424
        %4535 = vmatpush.bf16.msra.mxu0 %v4422
        %4536 = vmatpush.bf16.msra.mxu0 %v4420
        %4537 = vmatpush.bf16.msra.mxu0 %v4418
        %4538 = vmatmul.bf16.gmra.mxu0 %v4246
        %v4539 = vpop.f32.mrf.mxu0
        %v4540 = vadd.f32 0.0, %v4539
        %v4541 = vpop.f32.mrf.mxu0
        %v4542 = vadd.f32 0.0, %v4541
        %4543 = vmatmul.bf16.gmra.mxu0 %v4249
        %v4544 = vpop.f32.mrf.mxu0
        %v4545 = vadd.f32 0.0, %v4544
        %v4546 = vpop.f32.mrf.mxu0
        %v4547 = vadd.f32 0.0, %v4546
        %4548 = vmatmul.bf16.gmra.mxu0 %v4252
        %v4549 = vpop.f32.mrf.mxu0
        %v4550 = vadd.f32 0.0, %v4549
        %v4551 = vpop.f32.mrf.mxu0
        %v4552 = vadd.f32 0.0, %v4551
        %4553 = vmatmul.bf16.gmra.mxu0 %v4255
        %v4554 = vpop.f32.mrf.mxu0
        %v4555 = vadd.f32 0.0, %v4554
        %v4556 = vpop.f32.mrf.mxu0
        %v4557 = vadd.f32 0.0, %v4556
        %4558 = vmatmul.bf16.gmra.mxu0 %v4258
        %v4559 = vpop.f32.mrf.mxu0
        %v4560 = vadd.f32 0.0, %v4559
        %v4561 = vpop.f32.mrf.mxu0
        %v4562 = vadd.f32 0.0, %v4561
        %4563 = vmatmul.bf16.gmra.mxu0 %v4261
        %v4564 = vpop.f32.mrf.mxu0
        %v4565 = vadd.f32 0.0, %v4564
        %v4566 = vpop.f32.mrf.mxu0
        %v4567 = vadd.f32 0.0, %v4566
        %4568 = vmatmul.bf16.gmra.mxu0 %v4264
        %v4569 = vpop.f32.mrf.mxu0
        %v4570 = vadd.f32 0.0, %v4569
        %v4571 = vpop.f32.mrf.mxu0
        %v4572 = vadd.f32 0.0, %v4571
        %4573 = vmatmul.bf16.gmra.mxu0 %v4267
        %v4574 = vpop.f32.mrf.mxu0
        %v4575 = vadd.f32 0.0, %v4574
        %v4576 = vpop.f32.mrf.mxu0
        %v4577 = vadd.f32 0.0, %v4576
        %4578 = vdwg.mxu0
        %4579 = vmatpush.bf16.msra.mxu0 %v4448
        %4580 = vmatpush.bf16.msra.mxu0 %v4446
        %4581 = vmatpush.bf16.msra.mxu0 %v4444
        %4582 = vmatpush.bf16.msra.mxu0 %v4442
        %4583 = vmatpush.bf16.msra.mxu0 %v4440
        %4584 = vmatpush.bf16.msra.mxu0 %v4438
        %4585 = vmatpush.bf16.msra.mxu0 %v4436
        %4586 = vmatpush.bf16.msra.mxu0 %v4434
        %4587 = vmatmul.bf16.gmra.mxu0 %v4247
        %v4588 = vpop.f32.mrf.mxu0
        %v4589 = vadd.f32 %v4540, %v4588
        %v4590 = vpop.f32.mrf.mxu0
        %v4591 = vadd.f32 %v4542, %v4590
        %4592 = vmatmul.bf16.gmra.mxu0 %v4250
        %v4593 = vpop.f32.mrf.mxu0
        %v4594 = vadd.f32 %v4545, %v4593
        %v4595 = vpop.f32.mrf.mxu0
        %v4596 = vadd.f32 %v4547, %v4595
        %4597 = vmatmul.bf16.gmra.mxu0 %v4253
        %v4598 = vpop.f32.mrf.mxu0
        %v4599 = vadd.f32 %v4550, %v4598
        %v4600 = vpop.f32.mrf.mxu0
        %v4601 = vadd.f32 %v4552, %v4600
        %4602 = vmatmul.bf16.gmra.mxu0 %v4256
        %v4603 = vpop.f32.mrf.mxu0
        %v4604 = vadd.f32 %v4555, %v4603
        %v4605 = vpop.f32.mrf.mxu0
        %v4606 = vadd.f32 %v4557, %v4605
        %4607 = vmatmul.bf16.gmra.mxu0 %v4259
        %v4608 = vpop.f32.mrf.mxu0
        %v4609 = vadd.f32 %v4560, %v4608
        %v4610 = vpop.f32.mrf.mxu0
        %v4611 = vadd.f32 %v4562, %v4610
        %4612 = vmatmul.bf16.gmra.mxu0 %v4262
        %v4613 = vpop.f32.mrf.mxu0
        %v4614 = vadd.f32 %v4565, %v4613
        %v4615 = vpop.f32.mrf.mxu0
        %v4616 = vadd.f32 %v4567, %v4615
        %4617 = vmatmul.bf16.gmra.mxu0 %v4265
        %v4618 = vpop.f32.mrf.mxu0
        %v4619 = vadd.f32 %v4570, %v4618
        %v4620 = vpop.f32.mrf.mxu0
        %v4621 = vadd.f32 %v4572, %v4620
        %4622 = vmatmul.bf16.gmra.mxu0 %v4268
        %v4623 = vpop.f32.mrf.mxu0
        %v4624 = vadd.f32 %v4575, %v4623
        %v4625 = vpop.f32.mrf.mxu0
        %v4626 = vadd.f32 %v4577, %v4625
        %4627 = vdwg.mxu0
        %4628 = vmatpush.bf16.msra.mxu0 0
        %4629 = vmatpush.bf16.msra.mxu0 0
        %4630 = vmatpush.bf16.msra.mxu0 %v4460
        %4631 = vmatpush.bf16.msra.mxu0 %v4458
        %4632 = vmatpush.bf16.msra.mxu0 %v4456
        %4633 = vmatpush.bf16.msra.mxu0 %v4454
        %4634 = vmatpush.bf16.msra.mxu0 %v4452
        %4635 = vmatpush.bf16.msra.mxu0 %v4450
        %4636 = vmatmul.bf16.gmra.mxu0 %v4507
        %v4637 = vpop.f32.mrf.mxu0
        %v4638 = vadd.f32 %v4589, %v4637
        %v4639 = vpop.f32.mrf.mxu0
        %v4640 = vadd.f32 %v4591, %v4639
        %4641 = vmatmul.bf16.gmra.mxu0 %v4510
        %v4642 = vpop.f32.mrf.mxu0
        %v4643 = vadd.f32 %v4594, %v4642
        %v4644 = vpop.f32.mrf.mxu0
        %v4645 = vadd.f32 %v4596, %v4644
        %4646 = vmatmul.bf16.gmra.mxu0 %v4513
        %v4647 = vpop.f32.mrf.mxu0
        %v4648 = vadd.f32 %v4599, %v4647
        %v4649 = vpop.f32.mrf.mxu0
        %v4650 = vadd.f32 %v4601, %v4649
        %4651 = vmatmul.bf16.gmra.mxu0 %v4516
        %v4652 = vpop.f32.mrf.mxu0
        %v4653 = vadd.f32 %v4604, %v4652
        %v4654 = vpop.f32.mrf.mxu0
        %v4655 = vadd.f32 %v4606, %v4654
        %4656 = vmatmul.bf16.gmra.mxu0 %v4519
        %v4657 = vpop.f32.mrf.mxu0
        %v4658 = vadd.f32 %v4609, %v4657
        %v4659 = vpop.f32.mrf.mxu0
        %v4660 = vadd.f32 %v4611, %v4659
        %4661 = vmatmul.bf16.gmra.mxu0 %v4522
        %v4662 = vpop.f32.mrf.mxu0
        %v4663 = vadd.f32 %v4614, %v4662
        %v4664 = vpop.f32.mrf.mxu0
        %v4665 = vadd.f32 %v4616, %v4664
        %4666 = vmatmul.bf16.gmra.mxu0 %v4525
        %v4667 = vpop.f32.mrf.mxu0
        %v4668 = vadd.f32 %v4619, %v4667
        %v4669 = vpop.f32.mrf.mxu0
        %v4670 = vadd.f32 %v4621, %v4669
        %4671 = vmatmul.bf16.gmra.mxu0 %v4528
        %v4672 = vpop.f32.mrf.mxu0
        %v4673 = vadd.f32 %v4624, %v4672
        %v4674 = vpop.f32.mrf.mxu0
        %v4675 = vadd.f32 %v4626, %v4674
        %4676 = vdwg.mxu0
        %4677 = vmatpush.bf16.msra.mxu0 %v4433
        %4678 = vmatpush.bf16.msra.mxu0 %v4431
        %4679 = vmatpush.bf16.msra.mxu0 %v4429
        %4680 = vmatpush.bf16.msra.mxu0 %v4427
        %4681 = vmatpush.bf16.msra.mxu0 %v4425
        %4682 = vmatpush.bf16.msra.mxu0 %v4423
        %4683 = vmatpush.bf16.msra.mxu0 %v4421
        %4684 = vmatpush.bf16.msra.mxu0 %v4419
        %4685 = vmatmul.bf16.gmra.mxu0 %v4246
        %v4686 = vpop.f32.mrf.mxu0
        %v4687 = vadd.f32 0.0, %v4686
        %v4688 = vpop.f32.mrf.mxu0
        %v4689 = vadd.f32 0.0, %v4688
        %4690 = vmatmul.bf16.gmra.mxu0 %v4249
        %v4691 = vpop.f32.mrf.mxu0
        %v4692 = vadd.f32 0.0, %v4691
        %v4693 = vpop.f32.mrf.mxu0
        %v4694 = vadd.f32 0.0, %v4693
        %4695 = vmatmul.bf16.gmra.mxu0 %v4252
        %v4696 = vpop.f32.mrf.mxu0
        %v4697 = vadd.f32 0.0, %v4696
        %v4698 = vpop.f32.mrf.mxu0
        %v4699 = vadd.f32 0.0, %v4698
        %4700 = vmatmul.bf16.gmra.mxu0 %v4255
        %v4701 = vpop.f32.mrf.mxu0
        %v4702 = vadd.f32 0.0, %v4701
        %v4703 = vpop.f32.mrf.mxu0
        %v4704 = vadd.f32 0.0, %v4703
        %4705 = vmatmul.bf16.gmra.mxu0 %v4258
        %v4706 = vpop.f32.mrf.mxu0
        %v4707 = vadd.f32 0.0, %v4706
        %v4708 = vpop.f32.mrf.mxu0
        %v4709 = vadd.f32 0.0, %v4708
        %4710 = vmatmul.bf16.gmra.mxu0 %v4261
        %v4711 = vpop.f32.mrf.mxu0
        %v4712 = vadd.f32 0.0, %v4711
        %v4713 = vpop.f32.mrf.mxu0
        %v4714 = vadd.f32 0.0, %v4713
        %4715 = vmatmul.bf16.gmra.mxu0 %v4264
        %v4716 = vpop.f32.mrf.mxu0
        %v4717 = vadd.f32 0.0, %v4716
        %v4718 = vpop.f32.mrf.mxu0
        %v4719 = vadd.f32 0.0, %v4718
        %4720 = vmatmul.bf16.gmra.mxu0 %v4267
        %v4721 = vpop.f32.mrf.mxu0
        %v4722 = vadd.f32 0.0, %v4721
        %v4723 = vpop.f32.mrf.mxu0
        %v4724 = vadd.f32 0.0, %v4723
        %4725 = vdwg.mxu0
        %4726 = vmatpush.bf16.msra.mxu0 %v4449
        %4727 = vmatpush.bf16.msra.mxu0 %v4447
        %4728 = vmatpush.bf16.msra.mxu0 %v4445
        %4729 = vmatpush.bf16.msra.mxu0 %v4443
        %4730 = vmatpush.bf16.msra.mxu0 %v4441
        %4731 = vmatpush.bf16.msra.mxu0 %v4439
        %4732 = vmatpush.bf16.msra.mxu0 %v4437
        %4733 = vmatpush.bf16.msra.mxu0 %v4435
        %4734 = vmatmul.bf16.gmra.mxu0 %v4247
        %v4735 = vpop.f32.mrf.mxu0
        %v4736 = vadd.f32 %v4687, %v4735
        %v4737 = vpop.f32.mrf.mxu0
        %v4738 = vadd.f32 %v4689, %v4737
        %4739 = vmatmul.bf16.gmra.mxu0 %v4250
        %v4740 = vpop.f32.mrf.mxu0
        %v4741 = vadd.f32 %v4692, %v4740
        %v4742 = vpop.f32.mrf.mxu0
        %v4743 = vadd.f32 %v4694, %v4742
        %4744 = vmatmul.bf16.gmra.mxu0 %v4253
        %v4745 = vpop.f32.mrf.mxu0
        %v4746 = vadd.f32 %v4697, %v4745
        %v4747 = vpop.f32.mrf.mxu0
        %v4748 = vadd.f32 %v4699, %v4747
        %4749 = vmatmul.bf16.gmra.mxu0 %v4256
        %v4750 = vpop.f32.mrf.mxu0
        %v4751 = vadd.f32 %v4702, %v4750
        %v4752 = vpop.f32.mrf.mxu0
        %v4753 = vadd.f32 %v4704, %v4752
        %4754 = vmatmul.bf16.gmra.mxu0 %v4259
        %v4755 = vpop.f32.mrf.mxu0
        %v4756 = vadd.f32 %v4707, %v4755
        %v4757 = vpop.f32.mrf.mxu0
        %v4758 = vadd.f32 %v4709, %v4757
        %4759 = vmatmul.bf16.gmra.mxu0 %v4262
        %v4760 = vpop.f32.mrf.mxu0
        %v4761 = vadd.f32 %v4712, %v4760
        %v4762 = vpop.f32.mrf.mxu0
        %v4763 = vadd.f32 %v4714, %v4762
        %4764 = vmatmul.bf16.gmra.mxu0 %v4265
        %v4765 = vpop.f32.mrf.mxu0
        %v4766 = vadd.f32 %v4717, %v4765
        %v4767 = vpop.f32.mrf.mxu0
        %v4768 = vadd.f32 %v4719, %v4767
        %4769 = vmatmul.bf16.gmra.mxu0 %v4268
        %v4770 = vpop.f32.mrf.mxu0
        %v4771 = vadd.f32 %v4722, %v4770
        %v4772 = vpop.f32.mrf.mxu0
        %v4773 = vadd.f32 %v4724, %v4772
        %4774 = vdwg.mxu0
        %4775 = vmatpush.bf16.msra.mxu0 0
        %4776 = vmatpush.bf16.msra.mxu0 0
        %4777 = vmatpush.bf16.msra.mxu0 %v4461
        %4778 = vmatpush.bf16.msra.mxu0 %v4459
        %4779 = vmatpush.bf16.msra.mxu0 %v4457
        %4780 = vmatpush.bf16.msra.mxu0 %v4455
        %4781 = vmatpush.bf16.msra.mxu0 %v4453
        %4782 = vmatpush.bf16.msra.mxu0 %v4451
        %4783 = vmatmul.bf16.gmra.mxu0 %v4507
        %v4784 = vpop.f32.mrf.mxu0
        %v4785 = vadd.f32 %v4736, %v4784
        %v4786 = vpop.f32.mrf.mxu0
        %v4787 = vadd.f32 %v4738, %v4786
        %4788 = vmatmul.bf16.gmra.mxu0 %v4510
        %v4789 = vpop.f32.mrf.mxu0
        %v4790 = vadd.f32 %v4741, %v4789
        %v4791 = vpop.f32.mrf.mxu0
        %v4792 = vadd.f32 %v4743, %v4791
        %4793 = vmatmul.bf16.gmra.mxu0 %v4513
        %v4794 = vpop.f32.mrf.mxu0
        %v4795 = vadd.f32 %v4746, %v4794
        %v4796 = vpop.f32.mrf.mxu0
        %v4797 = vadd.f32 %v4748, %v4796
        %4798 = vmatmul.bf16.gmra.mxu0 %v4516
        %v4799 = vpop.f32.mrf.mxu0
        %v4800 = vadd.f32 %v4751, %v4799
        %v4801 = vpop.f32.mrf.mxu0
        %v4802 = vadd.f32 %v4753, %v4801
        %4803 = vmatmul.bf16.gmra.mxu0 %v4519
        %v4804 = vpop.f32.mrf.mxu0
        %v4805 = vadd.f32 %v4756, %v4804
        %v4806 = vpop.f32.mrf.mxu0
        %v4807 = vadd.f32 %v4758, %v4806
        %4808 = vmatmul.bf16.gmra.mxu0 %v4522
        %v4809 = vpop.f32.mrf.mxu0
        %v4810 = vadd.f32 %v4761, %v4809
        %v4811 = vpop.f32.mrf.mxu0
        %v4812 = vadd.f32 %v4763, %v4811
        %4813 = vmatmul.bf16.gmra.mxu0 %v4525
        %v4814 = vpop.f32.mrf.mxu0
        %v4815 = vadd.f32 %v4766, %v4814
        %v4816 = vpop.f32.mrf.mxu0
        %v4817 = vadd.f32 %v4768, %v4816
        %4818 = vmatmul.bf16.gmra.mxu0 %v4528
        %v4819 = vpop.f32.mrf.mxu0
        %v4820 = vadd.f32 %v4771, %v4819
        %v4821 = vpop.f32.mrf.mxu0
        %v4822 = vadd.f32 %v4773, %v4821
        %4823 = vdwg.mxu0
        %v4824 = vadd.f32 %v1757, %v4638
        %v4825 = vadd.f32 %v1904, %v4785
        %v4826 = vadd.f32 %v1759, %v4640
        %v4827 = vadd.f32 %v1906, %v4787
        %v4828 = vadd.f32 %v1762, %v4643
        %v4829 = vadd.f32 %v1909, %v4790
        %v4830 = vadd.f32 %v1764, %v4645
        %v4831 = vadd.f32 %v1911, %v4792
        %v4832 = vadd.f32 %v1767, %v4648
        %v4833 = vadd.f32 %v1914, %v4795
        %v4834 = vadd.f32 %v1769, %v4650
        %v4835 = vadd.f32 %v1916, %v4797
        %v4836 = vadd.f32 %v1772, %v4653
        %v4837 = vadd.f32 %v1919, %v4800
        %v4838 = vadd.f32 %v1774, %v4655
        %v4839 = vadd.f32 %v1921, %v4802
        %v4840 = vadd.f32 %v1777, %v4658
        %v4841 = vadd.f32 %v1924, %v4805
        %v4842 = vadd.f32 %v1779, %v4660
        %v4843 = vadd.f32 %v1926, %v4807
        %v4844 = vadd.f32 %v1782, %v4663
        %v4845 = vadd.f32 %v1929, %v4810
        %v4846 = vadd.f32 %v1784, %v4665
        %v4847 = vadd.f32 %v1931, %v4812
        %v4848 = vadd.f32 %v1787, %v4668
        %v4849 = vadd.f32 %v1934, %v4815
        %v4850 = vadd.f32 %v1789, %v4670
        %v4851 = vadd.f32 %v1936, %v4817
        %v4852 = vadd.f32 %v1792, %v4673
        %v4853 = vadd.f32 %v1939, %v4820
        %v4854 = vadd.f32 %v1794, %v4675
        %v4855 = vadd.f32 %v1941, %v4822
        %s4856 = scalar_lea.vmem %s1, 2464
        %v4857 = vld [vmem:[%s4856] sm:$0xff]
        %v4858 = vld [vmem:[%s4856 + $0x8] sm:$0xff]
        %v4859 = vld [vmem:[%s4856 + $0x10] sm:$0xff]
        %v4860 = vld [vmem:[%s4856 + $0x18] sm:$0xff]
        %v4861 = vld [vmem:[%s4856 + $0x20] sm:$0xff]
        %v4862 = vld [vmem:[%s4856 + $0x28] sm:$0xff]
        %v4863 = vld [vmem:[%s4856 + $0x30] sm:$0xff]
        %v4864 = vld [vmem:[%s4856 + $0x38] sm:$0xff]
        %v4865 = vld [vmem:[%s4856 + $0x40] sm:$0xff]
        %v4866 = vld [vmem:[%s4856 + $0x48] sm:$0xff]
        %v4867 = vld [vmem:[%s4856 + $0x50] sm:$0xff]
        %v4868 = vld [vmem:[%s4856 + $0x58] sm:$0xff]
        %v4869 = vld [vmem:[%s4856 + $0x60] sm:$0xff]
        %v4870 = vld [vmem:[%s4856 + $0x68] sm:$0xff]
        %v4871 = vld [vmem:[%s4856 + $0x70] sm:$0xff]
        %v4872 = vld [vmem:[%s4856 + $0x78] sm:$0xff]
        %v4873 = vld [vmem:[%s4856 + $0x80] sm:$0xff]
        %v4874 = vld [vmem:[%s4856 + $0x88] sm:$0xff]
        %v4875 = vld [vmem:[%s4856 + $0x90] sm:$0xff]
        %v4876 = vld [vmem:[%s4856 + $0x98] sm:$0xff]
        %v4877 = vld [vmem:[%s4856 + $0xa0] sm:$0xff]
        %v4878 = vld [vmem:[%s4856 + $0xa8] sm:$0xff]
        %v4879 = vld [vmem:[%s4856 + $0xb0] sm:$0xff]
        %v4880 = vld [vmem:[%s4856 + $0xb8] sm:$0xff]
        %v4881 = vld [vmem:[%s4856 + $0xc0] sm:$0xff]
        %v4882 = vld [vmem:[%s4856 + $0xc8] sm:$0xff]
        %v4883 = vld [vmem:[%s4856 + $0xd0] sm:$0xff]
        %v4884 = vld [vmem:[%s4856 + $0xd8] sm:$0xff]
        %v4885 = vld [vmem:[%s4856 + $0xe0] sm:$0xff]
        %v4886 = vld [vmem:[%s4856 + $0xe8] sm:$0xff]
        %v4887 = vld [vmem:[%s4856 + $0xf0] sm:$0xff]
        %v4888 = vld [vmem:[%s4856 + $0xf8] sm:$0xff]
        %v4889 = vld [vmem:[%s4856 + $0x100] sm:$0xff]
        %v4890 = vld [vmem:[%s4856 + $0x108] sm:$0xff]
        %v4891 = vld [vmem:[%s4856 + $0x110] sm:$0xff]
        %v4892 = vld [vmem:[%s4856 + $0x118] sm:$0xff]
        %v4893 = vld [vmem:[%s4856 + $0x120] sm:$0xff]
        %v4894 = vld [vmem:[%s4856 + $0x128] sm:$0xff]
        %v4895 = vld [vmem:[%s4856 + $0x130] sm:$0xff]
        %v4896 = vld [vmem:[%s4856 + $0x138] sm:$0xff]
        %v4897 = vld [vmem:[%s4856 + $0x140] sm:$0xff]
        %v4898 = vld [vmem:[%s4856 + $0x148] sm:$0xff]
        %v4899 = vld [vmem:[%s4856 + $0x150] sm:$0xff]
        %v4900 = vld [vmem:[%s4856 + $0x158] sm:$0xff]
        %v4945 = vunpack.c.l.b16 %v4857
        %v4946 = vunpack.c.h.b16 %v4857
        %v4947 = vunpack.c.l.b16 %v4858
        %v4948 = vunpack.c.h.b16 %v4858
        %v4949 = vunpack.c.l.b16 %v4859
        %v4950 = vunpack.c.h.b16 %v4859
        %v4951 = vunpack.c.l.b16 %v4860
        %v4952 = vunpack.c.h.b16 %v4860
        %v4953 = vunpack.c.l.b16 %v4861
        %v4954 = vunpack.c.h.b16 %v4861
        %v4955 = vunpack.c.l.b16 %v4862
        %v4956 = vunpack.c.h.b16 %v4862
        %v4957 = vunpack.c.l.b16 %v4863
        %v4958 = vunpack.c.h.b16 %v4863
        %v4959 = vunpack.c.l.b16 %v4864
        %v4960 = vunpack.c.h.b16 %v4864
        %v4961 = vunpack.c.l.b16 %v4865
        %v4962 = vunpack.c.h.b16 %v4865
        %v4963 = vunpack.c.l.b16 %v4866
        %v4964 = vunpack.c.h.b16 %v4866
        %v4965 = vunpack.c.l.b16 %v4867
        %v4966 = vunpack.c.h.b16 %v4867
        %v4967 = vunpack.c.l.b16 %v4868
        %v4968 = vunpack.c.h.b16 %v4868
        %v4969 = vunpack.c.l.b16 %v4869
        %v4970 = vunpack.c.h.b16 %v4869
        %v4971 = vunpack.c.l.b16 %v4870
        %v4972 = vunpack.c.h.b16 %v4870
        %v4973 = vunpack.c.l.b16 %v4871
        %v4974 = vunpack.c.h.b16 %v4871
        %v4975 = vunpack.c.l.b16 %v4872
        %v4976 = vunpack.c.h.b16 %v4872
        %v4977 = vunpack.c.l.b16 %v4873
        %v4978 = vunpack.c.h.b16 %v4873
        %v4979 = vunpack.c.l.b16 %v4874
        %v4980 = vunpack.c.h.b16 %v4874
        %v4981 = vunpack.c.l.b16 %v4875
        %v4982 = vunpack.c.h.b16 %v4875
        %v4983 = vunpack.c.l.b16 %v4876
        %v4984 = vunpack.c.h.b16 %v4876
        %v4985 = vunpack.c.l.b16 %v4877
        %v4986 = vunpack.c.h.b16 %v4877
        %v4987 = vunpack.c.l.b16 %v4878
        %v4988 = vunpack.c.h.b16 %v4878
        %v4989 = vunpack.c.l.b16 %v4879
        %v4990 = vunpack.c.h.b16 %v4879
        %v4991 = vunpack.c.l.b16 %v4880
        %v4992 = vunpack.c.h.b16 %v4880
        %v4993 = vunpack.c.l.b16 %v4881
        %v4994 = vunpack.c.h.b16 %v4881
        %v4995 = vunpack.c.l.b16 %v4882
        %v4996 = vunpack.c.h.b16 %v4882
        %v4997 = vunpack.c.l.b16 %v4883
        %v4998 = vunpack.c.h.b16 %v4883
        %v4999 = vunpack.c.l.b16 %v4884
        %v5000 = vunpack.c.h.b16 %v4884
        %v5001 = vunpack.c.l.b16 %v4885
        %v5002 = vunpack.c.h.b16 %v4885
        %v5003 = vunpack.c.l.b16 %v4886
        %v5004 = vunpack.c.h.b16 %v4886
        %v5005 = vunpack.c.l.b16 %v4887
        %v5006 = vunpack.c.h.b16 %v4887
        %v5007 = vunpack.c.l.b16 %v4888
        %v5008 = vunpack.c.h.b16 %v4888
        %v5009 = vunpack.c.l.b16 %v4889
        %v5010 = vunpack.c.h.b16 %v4889
        %v5011 = vunpack.c.l.b16 %v4890
        %v5012 = vunpack.c.h.b16 %v4890
        %v5013 = vunpack.c.l.b16 %v4891
        %v5014 = vunpack.c.h.b16 %v4891
        %v5015 = vunpack.c.l.b16 %v4892
        %v5016 = vunpack.c.h.b16 %v4892
        %v5017 = vunpack.c.l.b16 %v4893
        %v5018 = vunpack.c.h.b16 %v4893
        %v5019 = vunpack.c.l.b16 %v4894
        %v5020 = vunpack.c.h.b16 %v4894
        %v5021 = vunpack.c.l.b16 %v4895
        %v5022 = vunpack.c.h.b16 %v4895
        %v5023 = vunpack.c.l.b16 %v4896
        %v5024 = vunpack.c.h.b16 %v4896
        %v5025 = vunpack.c.l.b16 %v4897
        %v5026 = vunpack.c.h.b16 %v4897
        %v5027 = vunpack.c.l.b16 %v4898
        %v5028 = vunpack.c.h.b16 %v4898
        %v5029 = vunpack.c.l.b16 %v4899
        %v5030 = vunpack.c.h.b16 %v4899
        %v5031 = vunpack.c.l.b16 %v4900
        %v5032 = vunpack.c.h.b16 %v4900
        %v5033 = vpack.c.b16 %v4947, %v4945
        %v5034 = vpack.c.b16 %v4948, %v4946
        %v5035 = vpack.c.b16 %v4951, %v4949
        %v5036 = vpack.c.b16 %v4952, %v4950
        %v5037 = vpack.c.b16 %v4955, %v4953
        %v5038 = vpack.c.b16 %v4956, %v4954
        %v5039 = vpack.c.b16 %v4959, %v4957
        %v5040 = vpack.c.b16 %v4960, %v4958
        %v5041 = vpack.c.b16 %v4963, %v4961
        %v5042 = vpack.c.b16 %v4964, %v4962
        %v5043 = vpack.c.b16 %v4967, %v4965
        %v5044 = vpack.c.b16 %v4968, %v4966
        %v5045 = vpack.c.b16 %v4971, %v4969
        %v5046 = vpack.c.b16 %v4972, %v4970
        %v5047 = vpack.c.b16 %v4975, %v4973
        %v5048 = vpack.c.b16 %v4976, %v4974
        %v5049 = vpack.c.b16 %v4979, %v4977
        %v5050 = vpack.c.b16 %v4980, %v4978
        %v5051 = vpack.c.b16 %v4983, %v4981
        %v5052 = vpack.c.b16 %v4984, %v4982
        %v5053 = vpack.c.b16 %v4987, %v4985
        %v5054 = vpack.c.b16 %v4988, %v4986
        %v5055 = vpack.c.b16 %v4991, %v4989
        %v5056 = vpack.c.b16 %v4992, %v4990
        %v5057 = vpack.c.b16 %v4995, %v4993
        %v5058 = vpack.c.b16 %v4996, %v4994
        %v5059 = vpack.c.b16 %v4999, %v4997
        %v5060 = vpack.c.b16 %v5000, %v4998
        %v5061 = vpack.c.b16 %v5003, %v5001
        %v5062 = vpack.c.b16 %v5004, %v5002
        %v5063 = vpack.c.b16 %v5007, %v5005
        %v5064 = vpack.c.b16 %v5008, %v5006
        %v5065 = vpack.c.b16 %v5011, %v5009
        %v5066 = vpack.c.b16 %v5012, %v5010
        %v5067 = vpack.c.b16 %v5015, %v5013
        %v5068 = vpack.c.b16 %v5016, %v5014
        %v5069 = vpack.c.b16 %v5019, %v5017
        %v5070 = vpack.c.b16 %v5020, %v5018
        %v5071 = vpack.c.b16 %v5023, %v5021
        %v5072 = vpack.c.b16 %v5024, %v5022
        %v5073 = vpack.c.b16 %v5027, %v5025
        %v5074 = vpack.c.b16 %v5028, %v5026
        %v5075 = vpack.c.b16 %v5031, %v5029
        %v5076 = vpack.c.b16 %v5032, %v5030
        %5121 = vmatpush.bf16.msra.mxu0 %v5047
        %5122 = vmatpush.bf16.msra.mxu0 %v5045
        %5123 = vmatpush.bf16.msra.mxu0 %v5043
        %5124 = vmatpush.bf16.msra.mxu0 %v5041
        %5125 = vmatpush.bf16.msra.mxu0 %v5039
        %5126 = vmatpush.bf16.msra.mxu0 %v5037
        %5127 = vmatpush.bf16.msra.mxu0 %v5035
        %5128 = vmatpush.bf16.msra.mxu0 %v5033
        %5129 = vmatmul.bf16.gmra.mxu0 %v4246
        %v5130 = vpop.f32.mrf.mxu0
        %v5131 = vadd.f32 0.0, %v5130
        %v5132 = vpop.f32.mrf.mxu0
        %v5133 = vadd.f32 0.0, %v5132
        %5134 = vmatmul.bf16.gmra.mxu0 %v4249
        %v5135 = vpop.f32.mrf.mxu0
        %v5136 = vadd.f32 0.0, %v5135
        %v5137 = vpop.f32.mrf.mxu0
        %v5138 = vadd.f32 0.0, %v5137
        %5139 = vmatmul.bf16.gmra.mxu0 %v4252
        %v5140 = vpop.f32.mrf.mxu0
        %v5141 = vadd.f32 0.0, %v5140
        %v5142 = vpop.f32.mrf.mxu0
        %v5143 = vadd.f32 0.0, %v5142
        %5144 = vmatmul.bf16.gmra.mxu0 %v4255
        %v5145 = vpop.f32.mrf.mxu0
        %v5146 = vadd.f32 0.0, %v5145
        %v5147 = vpop.f32.mrf.mxu0
        %v5148 = vadd.f32 0.0, %v5147
        %5149 = vmatmul.bf16.gmra.mxu0 %v4258
        %v5150 = vpop.f32.mrf.mxu0
        %v5151 = vadd.f32 0.0, %v5150
        %v5152 = vpop.f32.mrf.mxu0
        %v5153 = vadd.f32 0.0, %v5152
        %5154 = vmatmul.bf16.gmra.mxu0 %v4261
        %v5155 = vpop.f32.mrf.mxu0
        %v5156 = vadd.f32 0.0, %v5155
        %v5157 = vpop.f32.mrf.mxu0
        %v5158 = vadd.f32 0.0, %v5157
        %5159 = vmatmul.bf16.gmra.mxu0 %v4264
        %v5160 = vpop.f32.mrf.mxu0
        %v5161 = vadd.f32 0.0, %v5160
        %v5162 = vpop.f32.mrf.mxu0
        %v5163 = vadd.f32 0.0, %v5162
        %5164 = vmatmul.bf16.gmra.mxu0 %v4267
        %v5165 = vpop.f32.mrf.mxu0
        %v5166 = vadd.f32 0.0, %v5165
        %v5167 = vpop.f32.mrf.mxu0
        %v5168 = vadd.f32 0.0, %v5167
        %5169 = vdwg.mxu0
        %5170 = vmatpush.bf16.msra.mxu0 %v5063
        %5171 = vmatpush.bf16.msra.mxu0 %v5061
        %5172 = vmatpush.bf16.msra.mxu0 %v5059
        %5173 = vmatpush.bf16.msra.mxu0 %v5057
        %5174 = vmatpush.bf16.msra.mxu0 %v5055
        %5175 = vmatpush.bf16.msra.mxu0 %v5053
        %5176 = vmatpush.bf16.msra.mxu0 %v5051
        %5177 = vmatpush.bf16.msra.mxu0 %v5049
        %5178 = vmatmul.bf16.gmra.mxu0 %v4247
        %v5179 = vpop.f32.mrf.mxu0
        %v5180 = vadd.f32 %v5131, %v5179
        %v5181 = vpop.f32.mrf.mxu0
        %v5182 = vadd.f32 %v5133, %v5181
        %5183 = vmatmul.bf16.gmra.mxu0 %v4250
        %v5184 = vpop.f32.mrf.mxu0
        %v5185 = vadd.f32 %v5136, %v5184
        %v5186 = vpop.f32.mrf.mxu0
        %v5187 = vadd.f32 %v5138, %v5186
        %5188 = vmatmul.bf16.gmra.mxu0 %v4253
        %v5189 = vpop.f32.mrf.mxu0
        %v5190 = vadd.f32 %v5141, %v5189
        %v5191 = vpop.f32.mrf.mxu0
        %v5192 = vadd.f32 %v5143, %v5191
        %5193 = vmatmul.bf16.gmra.mxu0 %v4256
        %v5194 = vpop.f32.mrf.mxu0
        %v5195 = vadd.f32 %v5146, %v5194
        %v5196 = vpop.f32.mrf.mxu0
        %v5197 = vadd.f32 %v5148, %v5196
        %5198 = vmatmul.bf16.gmra.mxu0 %v4259
        %v5199 = vpop.f32.mrf.mxu0
        %v5200 = vadd.f32 %v5151, %v5199
        %v5201 = vpop.f32.mrf.mxu0
        %v5202 = vadd.f32 %v5153, %v5201
        %5203 = vmatmul.bf16.gmra.mxu0 %v4262
        %v5204 = vpop.f32.mrf.mxu0
        %v5205 = vadd.f32 %v5156, %v5204
        %v5206 = vpop.f32.mrf.mxu0
        %v5207 = vadd.f32 %v5158, %v5206
        %5208 = vmatmul.bf16.gmra.mxu0 %v4265
        %v5209 = vpop.f32.mrf.mxu0
        %v5210 = vadd.f32 %v5161, %v5209
        %v5211 = vpop.f32.mrf.mxu0
        %v5212 = vadd.f32 %v5163, %v5211
        %5213 = vmatmul.bf16.gmra.mxu0 %v4268
        %v5214 = vpop.f32.mrf.mxu0
        %v5215 = vadd.f32 %v5166, %v5214
        %v5216 = vpop.f32.mrf.mxu0
        %v5217 = vadd.f32 %v5168, %v5216
        %5218 = vdwg.mxu0
        %5219 = vmatpush.bf16.msra.mxu0 0
        %5220 = vmatpush.bf16.msra.mxu0 0
        %5221 = vmatpush.bf16.msra.mxu0 %v5075
        %5222 = vmatpush.bf16.msra.mxu0 %v5073
        %5223 = vmatpush.bf16.msra.mxu0 %v5071
        %5224 = vmatpush.bf16.msra.mxu0 %v5069
        %5225 = vmatpush.bf16.msra.mxu0 %v5067
        %5226 = vmatpush.bf16.msra.mxu0 %v5065
        %5227 = vmatmul.bf16.gmra.mxu0 %v4507
        %v5228 = vpop.f32.mrf.mxu0
        %v5229 = vadd.f32 %v5180, %v5228
        %v5230 = vpop.f32.mrf.mxu0
        %v5231 = vadd.f32 %v5182, %v5230
        %5232 = vmatmul.bf16.gmra.mxu0 %v4510
        %v5233 = vpop.f32.mrf.mxu0
        %v5234 = vadd.f32 %v5185, %v5233
        %v5235 = vpop.f32.mrf.mxu0
        %v5236 = vadd.f32 %v5187, %v5235
        %5237 = vmatmul.bf16.gmra.mxu0 %v4513
        %v5238 = vpop.f32.mrf.mxu0
        %v5239 = vadd.f32 %v5190, %v5238
        %v5240 = vpop.f32.mrf.mxu0
        %v5241 = vadd.f32 %v5192, %v5240
        %5242 = vmatmul.bf16.gmra.mxu0 %v4516
        %v5243 = vpop.f32.mrf.mxu0
        %v5244 = vadd.f32 %v5195, %v5243
        %v5245 = vpop.f32.mrf.mxu0
        %v5246 = vadd.f32 %v5197, %v5245
        %5247 = vmatmul.bf16.gmra.mxu0 %v4519
        %v5248 = vpop.f32.mrf.mxu0
        %v5249 = vadd.f32 %v5200, %v5248
        %v5250 = vpop.f32.mrf.mxu0
        %v5251 = vadd.f32 %v5202, %v5250
        %5252 = vmatmul.bf16.gmra.mxu0 %v4522
        %v5253 = vpop.f32.mrf.mxu0
        %v5254 = vadd.f32 %v5205, %v5253
        %v5255 = vpop.f32.mrf.mxu0
        %v5256 = vadd.f32 %v5207, %v5255
        %5257 = vmatmul.bf16.gmra.mxu0 %v4525
        %v5258 = vpop.f32.mrf.mxu0
        %v5259 = vadd.f32 %v5210, %v5258
        %v5260 = vpop.f32.mrf.mxu0
        %v5261 = vadd.f32 %v5212, %v5260
        %5262 = vmatmul.bf16.gmra.mxu0 %v4528
        %v5263 = vpop.f32.mrf.mxu0
        %v5264 = vadd.f32 %v5215, %v5263
        %v5265 = vpop.f32.mrf.mxu0
        %v5266 = vadd.f32 %v5217, %v5265
        %5267 = vdwg.mxu0
        %5268 = vmatpush.bf16.msra.mxu0 %v5048
        %5269 = vmatpush.bf16.msra.mxu0 %v5046
        %5270 = vmatpush.bf16.msra.mxu0 %v5044
        %5271 = vmatpush.bf16.msra.mxu0 %v5042
        %5272 = vmatpush.bf16.msra.mxu0 %v5040
        %5273 = vmatpush.bf16.msra.mxu0 %v5038
        %5274 = vmatpush.bf16.msra.mxu0 %v5036
        %5275 = vmatpush.bf16.msra.mxu0 %v5034
        %5276 = vmatmul.bf16.gmra.mxu0 %v4246
        %v5277 = vpop.f32.mrf.mxu0
        %v5278 = vadd.f32 0.0, %v5277
        %v5279 = vpop.f32.mrf.mxu0
        %v5280 = vadd.f32 0.0, %v5279
        %5281 = vmatmul.bf16.gmra.mxu0 %v4249
        %v5282 = vpop.f32.mrf.mxu0
        %v5283 = vadd.f32 0.0, %v5282
        %v5284 = vpop.f32.mrf.mxu0
        %v5285 = vadd.f32 0.0, %v5284
        %5286 = vmatmul.bf16.gmra.mxu0 %v4252
        %v5287 = vpop.f32.mrf.mxu0
        %v5288 = vadd.f32 0.0, %v5287
        %v5289 = vpop.f32.mrf.mxu0
        %v5290 = vadd.f32 0.0, %v5289
        %5291 = vmatmul.bf16.gmra.mxu0 %v4255
        %v5292 = vpop.f32.mrf.mxu0
        %v5293 = vadd.f32 0.0, %v5292
        %v5294 = vpop.f32.mrf.mxu0
        %v5295 = vadd.f32 0.0, %v5294
        %5296 = vmatmul.bf16.gmra.mxu0 %v4258
        %v5297 = vpop.f32.mrf.mxu0
        %v5298 = vadd.f32 0.0, %v5297
        %v5299 = vpop.f32.mrf.mxu0
        %v5300 = vadd.f32 0.0, %v5299
        %5301 = vmatmul.bf16.gmra.mxu0 %v4261
        %v5302 = vpop.f32.mrf.mxu0
        %v5303 = vadd.f32 0.0, %v5302
        %v5304 = vpop.f32.mrf.mxu0
        %v5305 = vadd.f32 0.0, %v5304
        %5306 = vmatmul.bf16.gmra.mxu0 %v4264
        %v5307 = vpop.f32.mrf.mxu0
        %v5308 = vadd.f32 0.0, %v5307
        %v5309 = vpop.f32.mrf.mxu0
        %v5310 = vadd.f32 0.0, %v5309
        %5311 = vmatmul.bf16.gmra.mxu0 %v4267
        %v5312 = vpop.f32.mrf.mxu0
        %v5313 = vadd.f32 0.0, %v5312
        %v5314 = vpop.f32.mrf.mxu0
        %v5315 = vadd.f32 0.0, %v5314
        %5316 = vdwg.mxu0
        %5317 = vmatpush.bf16.msra.mxu0 %v5064
        %5318 = vmatpush.bf16.msra.mxu0 %v5062
        %5319 = vmatpush.bf16.msra.mxu0 %v5060
        %5320 = vmatpush.bf16.msra.mxu0 %v5058
        %5321 = vmatpush.bf16.msra.mxu0 %v5056
        %5322 = vmatpush.bf16.msra.mxu0 %v5054
        %5323 = vmatpush.bf16.msra.mxu0 %v5052
        %5324 = vmatpush.bf16.msra.mxu0 %v5050
        %5325 = vmatmul.bf16.gmra.mxu0 %v4247
        %v5326 = vpop.f32.mrf.mxu0
        %v5327 = vadd.f32 %v5278, %v5326
        %v5328 = vpop.f32.mrf.mxu0
        %v5329 = vadd.f32 %v5280, %v5328
        %5330 = vmatmul.bf16.gmra.mxu0 %v4250
        %v5331 = vpop.f32.mrf.mxu0
        %v5332 = vadd.f32 %v5283, %v5331
        %v5333 = vpop.f32.mrf.mxu0
        %v5334 = vadd.f32 %v5285, %v5333
        %5335 = vmatmul.bf16.gmra.mxu0 %v4253
        %v5336 = vpop.f32.mrf.mxu0
        %v5337 = vadd.f32 %v5288, %v5336
        %v5338 = vpop.f32.mrf.mxu0
        %v5339 = vadd.f32 %v5290, %v5338
        %5340 = vmatmul.bf16.gmra.mxu0 %v4256
        %v5341 = vpop.f32.mrf.mxu0
        %v5342 = vadd.f32 %v5293, %v5341
        %v5343 = vpop.f32.mrf.mxu0
        %v5344 = vadd.f32 %v5295, %v5343
        %5345 = vmatmul.bf16.gmra.mxu0 %v4259
        %v5346 = vpop.f32.mrf.mxu0
        %v5347 = vadd.f32 %v5298, %v5346
        %v5348 = vpop.f32.mrf.mxu0
        %v5349 = vadd.f32 %v5300, %v5348
        %5350 = vmatmul.bf16.gmra.mxu0 %v4262
        %v5351 = vpop.f32.mrf.mxu0
        %v5352 = vadd.f32 %v5303, %v5351
        %v5353 = vpop.f32.mrf.mxu0
        %v5354 = vadd.f32 %v5305, %v5353
        %5355 = vmatmul.bf16.gmra.mxu0 %v4265
        %v5356 = vpop.f32.mrf.mxu0
        %v5357 = vadd.f32 %v5308, %v5356
        %v5358 = vpop.f32.mrf.mxu0
        %v5359 = vadd.f32 %v5310, %v5358
        %5360 = vmatmul.bf16.gmra.mxu0 %v4268
        %v5361 = vpop.f32.mrf.mxu0
        %v5362 = vadd.f32 %v5313, %v5361
        %v5363 = vpop.f32.mrf.mxu0
        %v5364 = vadd.f32 %v5315, %v5363
        %5365 = vdwg.mxu0
        %5366 = vmatpush.bf16.msra.mxu0 0
        %5367 = vmatpush.bf16.msra.mxu0 0
        %5368 = vmatpush.bf16.msra.mxu0 %v5076
        %5369 = vmatpush.bf16.msra.mxu0 %v5074
        %5370 = vmatpush.bf16.msra.mxu0 %v5072
        %5371 = vmatpush.bf16.msra.mxu0 %v5070
        %5372 = vmatpush.bf16.msra.mxu0 %v5068
        %5373 = vmatpush.bf16.msra.mxu0 %v5066
        %5374 = vmatmul.bf16.gmra.mxu0 %v4507
        %v5375 = vpop.f32.mrf.mxu0
        %v5376 = vadd.f32 %v5327, %v5375
        %v5377 = vpop.f32.mrf.mxu0
        %v5378 = vadd.f32 %v5329, %v5377
        %5379 = vmatmul.bf16.gmra.mxu0 %v4510
        %v5380 = vpop.f32.mrf.mxu0
        %v5381 = vadd.f32 %v5332, %v5380
        %v5382 = vpop.f32.mrf.mxu0
        %v5383 = vadd.f32 %v5334, %v5382
        %5384 = vmatmul.bf16.gmra.mxu0 %v4513
        %v5385 = vpop.f32.mrf.mxu0
        %v5386 = vadd.f32 %v5337, %v5385
        %v5387 = vpop.f32.mrf.mxu0
        %v5388 = vadd.f32 %v5339, %v5387
        %5389 = vmatmul.bf16.gmra.mxu0 %v4516
        %v5390 = vpop.f32.mrf.mxu0
        %v5391 = vadd.f32 %v5342, %v5390
        %v5392 = vpop.f32.mrf.mxu0
        %v5393 = vadd.f32 %v5344, %v5392
        %5394 = vmatmul.bf16.gmra.mxu0 %v4519
        %v5395 = vpop.f32.mrf.mxu0
        %v5396 = vadd.f32 %v5347, %v5395
        %v5397 = vpop.f32.mrf.mxu0
        %v5398 = vadd.f32 %v5349, %v5397
        %5399 = vmatmul.bf16.gmra.mxu0 %v4522
        %v5400 = vpop.f32.mrf.mxu0
        %v5401 = vadd.f32 %v5352, %v5400
        %v5402 = vpop.f32.mrf.mxu0
        %v5403 = vadd.f32 %v5354, %v5402
        %5404 = vmatmul.bf16.gmra.mxu0 %v4525
        %v5405 = vpop.f32.mrf.mxu0
        %v5406 = vadd.f32 %v5357, %v5405
        %v5407 = vpop.f32.mrf.mxu0
        %v5408 = vadd.f32 %v5359, %v5407
        %5409 = vmatmul.bf16.gmra.mxu0 %v4528
        %v5410 = vpop.f32.mrf.mxu0
        %v5411 = vadd.f32 %v5362, %v5410
        %v5412 = vpop.f32.mrf.mxu0
        %v5413 = vadd.f32 %v5364, %v5412
        %5414 = vdwg.mxu0
        %v5415 = vadd.f32 %v2830, %v5229
        %v5416 = vadd.f32 %v2977, %v5376
        %v5417 = vadd.f32 %v2832, %v5231
        %v5418 = vadd.f32 %v2979, %v5378
        %v5419 = vadd.f32 %v2835, %v5234
        %v5420 = vadd.f32 %v2982, %v5381
        %v5421 = vadd.f32 %v2837, %v5236
        %v5422 = vadd.f32 %v2984, %v5383
        %v5423 = vadd.f32 %v2840, %v5239
        %v5424 = vadd.f32 %v2987, %v5386
        %v5425 = vadd.f32 %v2842, %v5241
        %v5426 = vadd.f32 %v2989, %v5388
        %v5427 = vadd.f32 %v2845, %v5244
        %v5428 = vadd.f32 %v2992, %v5391
        %v5429 = vadd.f32 %v2847, %v5246
        %v5430 = vadd.f32 %v2994, %v5393
        %v5431 = vadd.f32 %v2850, %v5249
        %v5432 = vadd.f32 %v2997, %v5396
        %v5433 = vadd.f32 %v2852, %v5251
        %v5434 = vadd.f32 %v2999, %v5398
        %v5435 = vadd.f32 %v2855, %v5254
        %v5436 = vadd.f32 %v3002, %v5401
        %v5437 = vadd.f32 %v2857, %v5256
        %v5438 = vadd.f32 %v3004, %v5403
        %v5439 = vadd.f32 %v2860, %v5259
        %v5440 = vadd.f32 %v3007, %v5406
        %v5441 = vadd.f32 %v2862, %v5261
        %v5442 = vadd.f32 %v3009, %v5408
        %v5443 = vadd.f32 %v2865, %v5264
        %v5444 = vadd.f32 %v3012, %v5411
        %v5445 = vadd.f32 %v2867, %v5266
        %v5446 = vadd.f32 %v3014, %v5413
        %s5447 = scalar_lea.vmem %s1, 2816
        %v5448 = vld [vmem:[%s5447] sm:$0xff]
        %v5449 = vld [vmem:[%s5447 + $0x8] sm:$0xff]
        %v5450 = vld [vmem:[%s5447 + $0x10] sm:$0xff]
        %v5451 = vld [vmem:[%s5447 + $0x18] sm:$0xff]
        %v5452 = vld [vmem:[%s5447 + $0x20] sm:$0xff]
        %v5453 = vld [vmem:[%s5447 + $0x28] sm:$0xff]
        %v5454 = vld [vmem:[%s5447 + $0x30] sm:$0xff]
        %v5455 = vld [vmem:[%s5447 + $0x38] sm:$0xff]
        %v5456 = vld [vmem:[%s5447 + $0x40] sm:$0xff]
        %v5457 = vld [vmem:[%s5447 + $0x48] sm:$0xff]
        %v5458 = vld [vmem:[%s5447 + $0x50] sm:$0xff]
        %v5459 = vld [vmem:[%s5447 + $0x58] sm:$0xff]
        %v5460 = vld [vmem:[%s5447 + $0x60] sm:$0xff]
        %v5461 = vld [vmem:[%s5447 + $0x68] sm:$0xff]
        %v5462 = vld [vmem:[%s5447 + $0x70] sm:$0xff]
        %v5463 = vld [vmem:[%s5447 + $0x78] sm:$0xff]
        %v5464 = vld [vmem:[%s5447 + $0x80] sm:$0xff]
        %v5465 = vld [vmem:[%s5447 + $0x88] sm:$0xff]
        %v5466 = vld [vmem:[%s5447 + $0x90] sm:$0xff]
        %v5467 = vld [vmem:[%s5447 + $0x98] sm:$0xff]
        %v5468 = vld [vmem:[%s5447 + $0xa0] sm:$0xff]
        %v5469 = vld [vmem:[%s5447 + $0xa8] sm:$0xff]
        %v5470 = vld [vmem:[%s5447 + $0xb0] sm:$0xff]
        %v5471 = vld [vmem:[%s5447 + $0xb8] sm:$0xff]
        %v5472 = vld [vmem:[%s5447 + $0xc0] sm:$0xff]
        %v5473 = vld [vmem:[%s5447 + $0xc8] sm:$0xff]
        %v5474 = vld [vmem:[%s5447 + $0xd0] sm:$0xff]
        %v5475 = vld [vmem:[%s5447 + $0xd8] sm:$0xff]
        %v5476 = vld [vmem:[%s5447 + $0xe0] sm:$0xff]
        %v5477 = vld [vmem:[%s5447 + $0xe8] sm:$0xff]
        %v5478 = vld [vmem:[%s5447 + $0xf0] sm:$0xff]
        %v5479 = vld [vmem:[%s5447 + $0xf8] sm:$0xff]
        %v5480 = vld [vmem:[%s5447 + $0x100] sm:$0xff]
        %v5481 = vld [vmem:[%s5447 + $0x108] sm:$0xff]
        %v5482 = vld [vmem:[%s5447 + $0x110] sm:$0xff]
        %v5483 = vld [vmem:[%s5447 + $0x118] sm:$0xff]
        %v5484 = vld [vmem:[%s5447 + $0x120] sm:$0xff]
        %v5485 = vld [vmem:[%s5447 + $0x128] sm:$0xff]
        %v5486 = vld [vmem:[%s5447 + $0x130] sm:$0xff]
        %v5487 = vld [vmem:[%s5447 + $0x138] sm:$0xff]
        %v5488 = vld [vmem:[%s5447 + $0x140] sm:$0xff]
        %v5489 = vld [vmem:[%s5447 + $0x148] sm:$0xff]
        %v5490 = vld [vmem:[%s5447 + $0x150] sm:$0xff]
        %v5491 = vld [vmem:[%s5447 + $0x158] sm:$0xff]
        %v5536 = vunpack.c.l.b16 %v5448
        %v5537 = vunpack.c.h.b16 %v5448
        %v5538 = vunpack.c.l.b16 %v5449
        %v5539 = vunpack.c.h.b16 %v5449
        %v5540 = vunpack.c.l.b16 %v5450
        %v5541 = vunpack.c.h.b16 %v5450
        %v5542 = vunpack.c.l.b16 %v5451
        %v5543 = vunpack.c.h.b16 %v5451
        %v5544 = vunpack.c.l.b16 %v5452
        %v5545 = vunpack.c.h.b16 %v5452
        %v5546 = vunpack.c.l.b16 %v5453
        %v5547 = vunpack.c.h.b16 %v5453
        %v5548 = vunpack.c.l.b16 %v5454
        %v5549 = vunpack.c.h.b16 %v5454
        %v5550 = vunpack.c.l.b16 %v5455
        %v5551 = vunpack.c.h.b16 %v5455
        %v5552 = vunpack.c.l.b16 %v5456
        %v5553 = vunpack.c.h.b16 %v5456
        %v5554 = vunpack.c.l.b16 %v5457
        %v5555 = vunpack.c.h.b16 %v5457
        %v5556 = vunpack.c.l.b16 %v5458
        %v5557 = vunpack.c.h.b16 %v5458
        %v5558 = vunpack.c.l.b16 %v5459
        %v5559 = vunpack.c.h.b16 %v5459
        %v5560 = vunpack.c.l.b16 %v5460
        %v5561 = vunpack.c.h.b16 %v5460
        %v5562 = vunpack.c.l.b16 %v5461
        %v5563 = vunpack.c.h.b16 %v5461
        %v5564 = vunpack.c.l.b16 %v5462
        %v5565 = vunpack.c.h.b16 %v5462
        %v5566 = vunpack.c.l.b16 %v5463
        %v5567 = vunpack.c.h.b16 %v5463
        %v5568 = vunpack.c.l.b16 %v5464
        %v5569 = vunpack.c.h.b16 %v5464
        %v5570 = vunpack.c.l.b16 %v5465
        %v5571 = vunpack.c.h.b16 %v5465
        %v5572 = vunpack.c.l.b16 %v5466
        %v5573 = vunpack.c.h.b16 %v5466
        %v5574 = vunpack.c.l.b16 %v5467
        %v5575 = vunpack.c.h.b16 %v5467
        %v5576 = vunpack.c.l.b16 %v5468
        %v5577 = vunpack.c.h.b16 %v5468
        %v5578 = vunpack.c.l.b16 %v5469
        %v5579 = vunpack.c.h.b16 %v5469
        %v5580 = vunpack.c.l.b16 %v5470
        %v5581 = vunpack.c.h.b16 %v5470
        %v5582 = vunpack.c.l.b16 %v5471
        %v5583 = vunpack.c.h.b16 %v5471
        %v5584 = vunpack.c.l.b16 %v5472
        %v5585 = vunpack.c.h.b16 %v5472
        %v5586 = vunpack.c.l.b16 %v5473
        %v5587 = vunpack.c.h.b16 %v5473
        %v5588 = vunpack.c.l.b16 %v5474
        %v5589 = vunpack.c.h.b16 %v5474
        %v5590 = vunpack.c.l.b16 %v5475
        %v5591 = vunpack.c.h.b16 %v5475
        %v5592 = vunpack.c.l.b16 %v5476
        %v5593 = vunpack.c.h.b16 %v5476
        %v5594 = vunpack.c.l.b16 %v5477
        %v5595 = vunpack.c.h.b16 %v5477
        %v5596 = vunpack.c.l.b16 %v5478
        %v5597 = vunpack.c.h.b16 %v5478
        %v5598 = vunpack.c.l.b16 %v5479
        %v5599 = vunpack.c.h.b16 %v5479
        %v5600 = vunpack.c.l.b16 %v5480
        %v5601 = vunpack.c.h.b16 %v5480
        %v5602 = vunpack.c.l.b16 %v5481
        %v5603 = vunpack.c.h.b16 %v5481
        %v5604 = vunpack.c.l.b16 %v5482
        %v5605 = vunpack.c.h.b16 %v5482
        %v5606 = vunpack.c.l.b16 %v5483
        %v5607 = vunpack.c.h.b16 %v5483
        %v5608 = vunpack.c.l.b16 %v5484
        %v5609 = vunpack.c.h.b16 %v5484
        %v5610 = vunpack.c.l.b16 %v5485
        %v5611 = vunpack.c.h.b16 %v5485
        %v5612 = vunpack.c.l.b16 %v5486
        %v5613 = vunpack.c.h.b16 %v5486
        %v5614 = vunpack.c.l.b16 %v5487
        %v5615 = vunpack.c.h.b16 %v5487
        %v5616 = vunpack.c.l.b16 %v5488
        %v5617 = vunpack.c.h.b16 %v5488
        %v5618 = vunpack.c.l.b16 %v5489
        %v5619 = vunpack.c.h.b16 %v5489
        %v5620 = vunpack.c.l.b16 %v5490
        %v5621 = vunpack.c.h.b16 %v5490
        %v5622 = vunpack.c.l.b16 %v5491
        %v5623 = vunpack.c.h.b16 %v5491
        %v5624 = vpack.c.b16 %v5538, %v5536
        %v5625 = vpack.c.b16 %v5539, %v5537
        %v5626 = vpack.c.b16 %v5542, %v5540
        %v5627 = vpack.c.b16 %v5543, %v5541
        %v5628 = vpack.c.b16 %v5546, %v5544
        %v5629 = vpack.c.b16 %v5547, %v5545
        %v5630 = vpack.c.b16 %v5550, %v5548
        %v5631 = vpack.c.b16 %v5551, %v5549
        %v5632 = vpack.c.b16 %v5554, %v5552
        %v5633 = vpack.c.b16 %v5555, %v5553
        %v5634 = vpack.c.b16 %v5558, %v5556
        %v5635 = vpack.c.b16 %v5559, %v5557
        %v5636 = vpack.c.b16 %v5562, %v5560
        %v5637 = vpack.c.b16 %v5563, %v5561
        %v5638 = vpack.c.b16 %v5566, %v5564
        %v5639 = vpack.c.b16 %v5567, %v5565
        %v5640 = vpack.c.b16 %v5570, %v5568
        %v5641 = vpack.c.b16 %v5571, %v5569
        %v5642 = vpack.c.b16 %v5574, %v5572
        %v5643 = vpack.c.b16 %v5575, %v5573
        %v5644 = vpack.c.b16 %v5578, %v5576
        %v5645 = vpack.c.b16 %v5579, %v5577
        %v5646 = vpack.c.b16 %v5582, %v5580
        %v5647 = vpack.c.b16 %v5583, %v5581
        %v5648 = vpack.c.b16 %v5586, %v5584
        %v5649 = vpack.c.b16 %v5587, %v5585
        %v5650 = vpack.c.b16 %v5590, %v5588
        %v5651 = vpack.c.b16 %v5591, %v5589
        %v5652 = vpack.c.b16 %v5594, %v5592
        %v5653 = vpack.c.b16 %v5595, %v5593
        %v5654 = vpack.c.b16 %v5598, %v5596
        %v5655 = vpack.c.b16 %v5599, %v5597
        %v5656 = vpack.c.b16 %v5602, %v5600
        %v5657 = vpack.c.b16 %v5603, %v5601
        %v5658 = vpack.c.b16 %v5606, %v5604
        %v5659 = vpack.c.b16 %v5607, %v5605
        %v5660 = vpack.c.b16 %v5610, %v5608
        %v5661 = vpack.c.b16 %v5611, %v5609
        %v5662 = vpack.c.b16 %v5614, %v5612
        %v5663 = vpack.c.b16 %v5615, %v5613
        %v5664 = vpack.c.b16 %v5618, %v5616
        %v5665 = vpack.c.b16 %v5619, %v5617
        %v5666 = vpack.c.b16 %v5622, %v5620
        %v5667 = vpack.c.b16 %v5623, %v5621
        %5712 = vmatpush.bf16.msra.mxu0 %v5638
        %5713 = vmatpush.bf16.msra.mxu0 %v5636
        %5714 = vmatpush.bf16.msra.mxu0 %v5634
        %5715 = vmatpush.bf16.msra.mxu0 %v5632
        %5716 = vmatpush.bf16.msra.mxu0 %v5630
        %5717 = vmatpush.bf16.msra.mxu0 %v5628
        %5718 = vmatpush.bf16.msra.mxu0 %v5626
        %5719 = vmatpush.bf16.msra.mxu0 %v5624
        %5720 = vmatmul.bf16.gmra.mxu0 %v4246
        %v5721 = vpop.f32.mrf.mxu0
        %v5722 = vadd.f32 0.0, %v5721
        %v5723 = vpop.f32.mrf.mxu0
        %v5724 = vadd.f32 0.0, %v5723
        %5725 = vmatmul.bf16.gmra.mxu0 %v4249
        %v5726 = vpop.f32.mrf.mxu0
        %v5727 = vadd.f32 0.0, %v5726
        %v5728 = vpop.f32.mrf.mxu0
        %v5729 = vadd.f32 0.0, %v5728
        %5730 = vmatmul.bf16.gmra.mxu0 %v4252
        %v5731 = vpop.f32.mrf.mxu0
        %v5732 = vadd.f32 0.0, %v5731
        %v5733 = vpop.f32.mrf.mxu0
        %v5734 = vadd.f32 0.0, %v5733
        %5735 = vmatmul.bf16.gmra.mxu0 %v4255
        %v5736 = vpop.f32.mrf.mxu0
        %v5737 = vadd.f32 0.0, %v5736
        %v5738 = vpop.f32.mrf.mxu0
        %v5739 = vadd.f32 0.0, %v5738
        %5740 = vmatmul.bf16.gmra.mxu0 %v4258
        %v5741 = vpop.f32.mrf.mxu0
        %v5742 = vadd.f32 0.0, %v5741
        %v5743 = vpop.f32.mrf.mxu0
        %v5744 = vadd.f32 0.0, %v5743
        %5745 = vmatmul.bf16.gmra.mxu0 %v4261
        %v5746 = vpop.f32.mrf.mxu0
        %v5747 = vadd.f32 0.0, %v5746
        %v5748 = vpop.f32.mrf.mxu0
        %v5749 = vadd.f32 0.0, %v5748
        %5750 = vmatmul.bf16.gmra.mxu0 %v4264
        %v5751 = vpop.f32.mrf.mxu0
        %v5752 = vadd.f32 0.0, %v5751
        %v5753 = vpop.f32.mrf.mxu0
        %v5754 = vadd.f32 0.0, %v5753
        %5755 = vmatmul.bf16.gmra.mxu0 %v4267
        %v5756 = vpop.f32.mrf.mxu0
        %v5757 = vadd.f32 0.0, %v5756
        %v5758 = vpop.f32.mrf.mxu0
        %v5759 = vadd.f32 0.0, %v5758
        %5760 = vdwg.mxu0
        %5761 = vmatpush.bf16.msra.mxu0 %v5654
        %5762 = vmatpush.bf16.msra.mxu0 %v5652
        %5763 = vmatpush.bf16.msra.mxu0 %v5650
        %5764 = vmatpush.bf16.msra.mxu0 %v5648
        %5765 = vmatpush.bf16.msra.mxu0 %v5646
        %5766 = vmatpush.bf16.msra.mxu0 %v5644
        %5767 = vmatpush.bf16.msra.mxu0 %v5642
        %5768 = vmatpush.bf16.msra.mxu0 %v5640
        %5769 = vmatmul.bf16.gmra.mxu0 %v4247
        %v5770 = vpop.f32.mrf.mxu0
        %v5771 = vadd.f32 %v5722, %v5770
        %v5772 = vpop.f32.mrf.mxu0
        %v5773 = vadd.f32 %v5724, %v5772
        %5774 = vmatmul.bf16.gmra.mxu0 %v4250
        %v5775 = vpop.f32.mrf.mxu0
        %v5776 = vadd.f32 %v5727, %v5775
        %v5777 = vpop.f32.mrf.mxu0
        %v5778 = vadd.f32 %v5729, %v5777
        %5779 = vmatmul.bf16.gmra.mxu0 %v4253
        %v5780 = vpop.f32.mrf.mxu0
        %v5781 = vadd.f32 %v5732, %v5780
        %v5782 = vpop.f32.mrf.mxu0
        %v5783 = vadd.f32 %v5734, %v5782
        %5784 = vmatmul.bf16.gmra.mxu0 %v4256
        %v5785 = vpop.f32.mrf.mxu0
        %v5786 = vadd.f32 %v5737, %v5785
        %v5787 = vpop.f32.mrf.mxu0
        %v5788 = vadd.f32 %v5739, %v5787
        %5789 = vmatmul.bf16.gmra.mxu0 %v4259
        %v5790 = vpop.f32.mrf.mxu0
        %v5791 = vadd.f32 %v5742, %v5790
        %v5792 = vpop.f32.mrf.mxu0
        %v5793 = vadd.f32 %v5744, %v5792
        %5794 = vmatmul.bf16.gmra.mxu0 %v4262
        %v5795 = vpop.f32.mrf.mxu0
        %v5796 = vadd.f32 %v5747, %v5795
        %v5797 = vpop.f32.mrf.mxu0
        %v5798 = vadd.f32 %v5749, %v5797
        %5799 = vmatmul.bf16.gmra.mxu0 %v4265
        %v5800 = vpop.f32.mrf.mxu0
        %v5801 = vadd.f32 %v5752, %v5800
        %v5802 = vpop.f32.mrf.mxu0
        %v5803 = vadd.f32 %v5754, %v5802
        %5804 = vmatmul.bf16.gmra.mxu0 %v4268
        %v5805 = vpop.f32.mrf.mxu0
        %v5806 = vadd.f32 %v5757, %v5805
        %v5807 = vpop.f32.mrf.mxu0
        %v5808 = vadd.f32 %v5759, %v5807
        %5809 = vdwg.mxu0
        %5810 = vmatpush.bf16.msra.mxu0 0
        %5811 = vmatpush.bf16.msra.mxu0 0
        %5812 = vmatpush.bf16.msra.mxu0 %v5666
        %5813 = vmatpush.bf16.msra.mxu0 %v5664
        %5814 = vmatpush.bf16.msra.mxu0 %v5662
        %5815 = vmatpush.bf16.msra.mxu0 %v5660
        %5816 = vmatpush.bf16.msra.mxu0 %v5658
        %5817 = vmatpush.bf16.msra.mxu0 %v5656
        %5818 = vmatmul.bf16.gmra.mxu0 %v4507
        %v5819 = vpop.f32.mrf.mxu0
        %v5820 = vadd.f32 %v5771, %v5819
        %v5821 = vpop.f32.mrf.mxu0
        %v5822 = vadd.f32 %v5773, %v5821
        %5823 = vmatmul.bf16.gmra.mxu0 %v4510
        %v5824 = vpop.f32.mrf.mxu0
        %v5825 = vadd.f32 %v5776, %v5824
        %v5826 = vpop.f32.mrf.mxu0
        %v5827 = vadd.f32 %v5778, %v5826
        %5828 = vmatmul.bf16.gmra.mxu0 %v4513
        %v5829 = vpop.f32.mrf.mxu0
        %v5830 = vadd.f32 %v5781, %v5829
        %v5831 = vpop.f32.mrf.mxu0
        %v5832 = vadd.f32 %v5783, %v5831
        %5833 = vmatmul.bf16.gmra.mxu0 %v4516
        %v5834 = vpop.f32.mrf.mxu0
        %v5835 = vadd.f32 %v5786, %v5834
        %v5836 = vpop.f32.mrf.mxu0
        %v5837 = vadd.f32 %v5788, %v5836
        %5838 = vmatmul.bf16.gmra.mxu0 %v4519
        %v5839 = vpop.f32.mrf.mxu0
        %v5840 = vadd.f32 %v5791, %v5839
        %v5841 = vpop.f32.mrf.mxu0
        %v5842 = vadd.f32 %v5793, %v5841
        %5843 = vmatmul.bf16.gmra.mxu0 %v4522
        %v5844 = vpop.f32.mrf.mxu0
        %v5845 = vadd.f32 %v5796, %v5844
        %v5846 = vpop.f32.mrf.mxu0
        %v5847 = vadd.f32 %v5798, %v5846
        %5848 = vmatmul.bf16.gmra.mxu0 %v4525
        %v5849 = vpop.f32.mrf.mxu0
        %v5850 = vadd.f32 %v5801, %v5849
        %v5851 = vpop.f32.mrf.mxu0
        %v5852 = vadd.f32 %v5803, %v5851
        %5853 = vmatmul.bf16.gmra.mxu0 %v4528
        %v5854 = vpop.f32.mrf.mxu0
        %v5855 = vadd.f32 %v5806, %v5854
        %v5856 = vpop.f32.mrf.mxu0
        %v5857 = vadd.f32 %v5808, %v5856
        %5858 = vdwg.mxu0
        %5859 = vmatpush.bf16.msra.mxu0 %v5639
        %5860 = vmatpush.bf16.msra.mxu0 %v5637
        %5861 = vmatpush.bf16.msra.mxu0 %v5635
        %5862 = vmatpush.bf16.msra.mxu0 %v5633
        %5863 = vmatpush.bf16.msra.mxu0 %v5631
        %5864 = vmatpush.bf16.msra.mxu0 %v5629
        %5865 = vmatpush.bf16.msra.mxu0 %v5627
        %5866 = vmatpush.bf16.msra.mxu0 %v5625
        %5867 = vmatmul.bf16.gmra.mxu0 %v4246
        %v5868 = vpop.f32.mrf.mxu0
        %v5869 = vadd.f32 0.0, %v5868
        %v5870 = vpop.f32.mrf.mxu0
        %v5871 = vadd.f32 0.0, %v5870
        %5872 = vmatmul.bf16.gmra.mxu0 %v4249
        %v5873 = vpop.f32.mrf.mxu0
        %v5874 = vadd.f32 0.0, %v5873
        %v5875 = vpop.f32.mrf.mxu0
        %v5876 = vadd.f32 0.0, %v5875
        %5877 = vmatmul.bf16.gmra.mxu0 %v4252
        %v5878 = vpop.f32.mrf.mxu0
        %v5879 = vadd.f32 0.0, %v5878
        %v5880 = vpop.f32.mrf.mxu0
        %v5881 = vadd.f32 0.0, %v5880
        %5882 = vmatmul.bf16.gmra.mxu0 %v4255
        %v5883 = vpop.f32.mrf.mxu0
        %v5884 = vadd.f32 0.0, %v5883
        %v5885 = vpop.f32.mrf.mxu0
        %v5886 = vadd.f32 0.0, %v5885
        %5887 = vmatmul.bf16.gmra.mxu0 %v4258
        %v5888 = vpop.f32.mrf.mxu0
        %v5889 = vadd.f32 0.0, %v5888
        %v5890 = vpop.f32.mrf.mxu0
        %v5891 = vadd.f32 0.0, %v5890
        %5892 = vmatmul.bf16.gmra.mxu0 %v4261
        %v5893 = vpop.f32.mrf.mxu0
        %v5894 = vadd.f32 0.0, %v5893
        %v5895 = vpop.f32.mrf.mxu0
        %v5896 = vadd.f32 0.0, %v5895
        %5897 = vmatmul.bf16.gmra.mxu0 %v4264
        %v5898 = vpop.f32.mrf.mxu0
        %v5899 = vadd.f32 0.0, %v5898
        %v5900 = vpop.f32.mrf.mxu0
        %v5901 = vadd.f32 0.0, %v5900
        %5902 = vmatmul.bf16.gmra.mxu0 %v4267
        %v5903 = vpop.f32.mrf.mxu0
        %v5904 = vadd.f32 0.0, %v5903
        %v5905 = vpop.f32.mrf.mxu0
        %v5906 = vadd.f32 0.0, %v5905
        %5907 = vdwg.mxu0
        %5908 = vmatpush.bf16.msra.mxu0 %v5655
        %5909 = vmatpush.bf16.msra.mxu0 %v5653
        %5910 = vmatpush.bf16.msra.mxu0 %v5651
        %5911 = vmatpush.bf16.msra.mxu0 %v5649
        %5912 = vmatpush.bf16.msra.mxu0 %v5647
        %5913 = vmatpush.bf16.msra.mxu0 %v5645
        %5914 = vmatpush.bf16.msra.mxu0 %v5643
        %5915 = vmatpush.bf16.msra.mxu0 %v5641
        %5916 = vmatmul.bf16.gmra.mxu0 %v4247
        %v5917 = vpop.f32.mrf.mxu0
        %v5918 = vadd.f32 %v5869, %v5917
        %v5919 = vpop.f32.mrf.mxu0
        %v5920 = vadd.f32 %v5871, %v5919
        %5921 = vmatmul.bf16.gmra.mxu0 %v4250
        %v5922 = vpop.f32.mrf.mxu0
        %v5923 = vadd.f32 %v5874, %v5922
        %v5924 = vpop.f32.mrf.mxu0
        %v5925 = vadd.f32 %v5876, %v5924
        %5926 = vmatmul.bf16.gmra.mxu0 %v4253
        %v5927 = vpop.f32.mrf.mxu0
        %v5928 = vadd.f32 %v5879, %v5927
        %v5929 = vpop.f32.mrf.mxu0
        %v5930 = vadd.f32 %v5881, %v5929
        %5931 = vmatmul.bf16.gmra.mxu0 %v4256
        %v5932 = vpop.f32.mrf.mxu0
        %v5933 = vadd.f32 %v5884, %v5932
        %v5934 = vpop.f32.mrf.mxu0
        %v5935 = vadd.f32 %v5886, %v5934
        %5936 = vmatmul.bf16.gmra.mxu0 %v4259
        %v5937 = vpop.f32.mrf.mxu0
        %v5938 = vadd.f32 %v5889, %v5937
        %v5939 = vpop.f32.mrf.mxu0
        %v5940 = vadd.f32 %v5891, %v5939
        %5941 = vmatmul.bf16.gmra.mxu0 %v4262
        %v5942 = vpop.f32.mrf.mxu0
        %v5943 = vadd.f32 %v5894, %v5942
        %v5944 = vpop.f32.mrf.mxu0
        %v5945 = vadd.f32 %v5896, %v5944
        %5946 = vmatmul.bf16.gmra.mxu0 %v4265
        %v5947 = vpop.f32.mrf.mxu0
        %v5948 = vadd.f32 %v5899, %v5947
        %v5949 = vpop.f32.mrf.mxu0
        %v5950 = vadd.f32 %v5901, %v5949
        %5951 = vmatmul.bf16.gmra.mxu0 %v4268
        %v5952 = vpop.f32.mrf.mxu0
        %v5953 = vadd.f32 %v5904, %v5952
        %v5954 = vpop.f32.mrf.mxu0
        %v5955 = vadd.f32 %v5906, %v5954
        %5956 = vdwg.mxu0
        %5957 = vmatpush.bf16.msra.mxu0 0
        %5958 = vmatpush.bf16.msra.mxu0 0
        %5959 = vmatpush.bf16.msra.mxu0 %v5667
        %5960 = vmatpush.bf16.msra.mxu0 %v5665
        %5961 = vmatpush.bf16.msra.mxu0 %v5663
        %5962 = vmatpush.bf16.msra.mxu0 %v5661
        %5963 = vmatpush.bf16.msra.mxu0 %v5659
        %5964 = vmatpush.bf16.msra.mxu0 %v5657
        %5965 = vmatmul.bf16.gmra.mxu0 %v4507
        %v5966 = vpop.f32.mrf.mxu0
        %v5967 = vadd.f32 %v5918, %v5966
        %v5968 = vpop.f32.mrf.mxu0
        %v5969 = vadd.f32 %v5920, %v5968
        %5970 = vmatmul.bf16.gmra.mxu0 %v4510
        %v5971 = vpop.f32.mrf.mxu0
        %v5972 = vadd.f32 %v5923, %v5971
        %v5973 = vpop.f32.mrf.mxu0
        %v5974 = vadd.f32 %v5925, %v5973
        %5975 = vmatmul.bf16.gmra.mxu0 %v4513
        %v5976 = vpop.f32.mrf.mxu0
        %v5977 = vadd.f32 %v5928, %v5976
        %v5978 = vpop.f32.mrf.mxu0
        %v5979 = vadd.f32 %v5930, %v5978
        %5980 = vmatmul.bf16.gmra.mxu0 %v4516
        %v5981 = vpop.f32.mrf.mxu0
        %v5982 = vadd.f32 %v5933, %v5981
        %v5983 = vpop.f32.mrf.mxu0
        %v5984 = vadd.f32 %v5935, %v5983
        %5985 = vmatmul.bf16.gmra.mxu0 %v4519
        %v5986 = vpop.f32.mrf.mxu0
        %v5987 = vadd.f32 %v5938, %v5986
        %v5988 = vpop.f32.mrf.mxu0
        %v5989 = vadd.f32 %v5940, %v5988
        %5990 = vmatmul.bf16.gmra.mxu0 %v4522
        %v5991 = vpop.f32.mrf.mxu0
        %v5992 = vadd.f32 %v5943, %v5991
        %v5993 = vpop.f32.mrf.mxu0
        %v5994 = vadd.f32 %v5945, %v5993
        %5995 = vmatmul.bf16.gmra.mxu0 %v4525
        %v5996 = vpop.f32.mrf.mxu0
        %v5997 = vadd.f32 %v5948, %v5996
        %v5998 = vpop.f32.mrf.mxu0
        %v5999 = vadd.f32 %v5950, %v5998
        %6000 = vmatmul.bf16.gmra.mxu0 %v4528
        %v6001 = vpop.f32.mrf.mxu0
        %v6002 = vadd.f32 %v5953, %v6001
        %v6003 = vpop.f32.mrf.mxu0
        %v6004 = vadd.f32 %v5955, %v6003
        %6005 = vdwg.mxu0
        %v6006 = vadd.f32 %v3903, %v5820
        %v6007 = vadd.f32 %v4050, %v5967
        %v6008 = vadd.f32 %v3905, %v5822
        %v6009 = vadd.f32 %v4052, %v5969
        %v6010 = vadd.f32 %v3908, %v5825
        %v6011 = vadd.f32 %v4055, %v5972
        %v6012 = vadd.f32 %v3910, %v5827
        %v6013 = vadd.f32 %v4057, %v5974
        %v6014 = vadd.f32 %v3913, %v5830
        %v6015 = vadd.f32 %v4060, %v5977
        %v6016 = vadd.f32 %v3915, %v5832
        %v6017 = vadd.f32 %v4062, %v5979
        %v6018 = vadd.f32 %v3918, %v5835
        %v6019 = vadd.f32 %v4065, %v5982
        %v6020 = vadd.f32 %v3920, %v5837
        %v6021 = vadd.f32 %v4067, %v5984
        %v6022 = vadd.f32 %v3923, %v5840
        %v6023 = vadd.f32 %v4070, %v5987
        %v6024 = vadd.f32 %v3925, %v5842
        %v6025 = vadd.f32 %v4072, %v5989
        %v6026 = vadd.f32 %v3928, %v5845
        %v6027 = vadd.f32 %v4075, %v5992
        %v6028 = vadd.f32 %v3930, %v5847
        %v6029 = vadd.f32 %v4077, %v5994
        %v6030 = vadd.f32 %v3933, %v5850
        %v6031 = vadd.f32 %v4080, %v5997
        %v6032 = vadd.f32 %v3935, %v5852
        %v6033 = vadd.f32 %v4082, %v5999
        %v6034 = vadd.f32 %v3938, %v5855
        %v6035 = vadd.f32 %v4085, %v6002
        %v6036 = vadd.f32 %v3940, %v5857
        %v6037 = vadd.f32 %v4087, %v6004
        %6038 = vst [vmem:[#allocation4] sm:$0xff] 0.0
        %vm6039 = vcmask 556032
        %6040 = vst.msk [vmem:[#allocation4 + $0x8] sm:$0xff] %vm6039, 0.0
        %6041 = vst [vmem:[#allocation4 + $0x110] sm:$0xff] 0.0
        %6042 = vst.msk [vmem:[#allocation4 + $0x118] sm:$0xff] %vm6039, 0.0
        %6043 = vst [vmem:[#allocation4 + $0x10] sm:$0xff] %v4824
        %6044 = vst.msk [vmem:[#allocation4 + $0x18] sm:$0xff] %vm6039, %v4825
        %6045 = vst [vmem:[#allocation4 + $0x20] sm:$0xff] %v4826
        %6046 = vst.msk [vmem:[#allocation4 + $0x28] sm:$0xff] %vm6039, %v4827
        %6047 = vst [vmem:[#allocation4 + $0x30] sm:$0xff] %v4828
        %6048 = vst.msk [vmem:[#allocation4 + $0x38] sm:$0xff] %vm6039, %v4829
        %6049 = vst [vmem:[#allocation4 + $0x40] sm:$0xff] %v4830
        %6050 = vst.msk [vmem:[#allocation4 + $0x48] sm:$0xff] %vm6039, %v4831
        %6051 = vst [vmem:[#allocation4 + $0x50] sm:$0xff] %v4832
        %6052 = vst.msk [vmem:[#allocation4 + $0x58] sm:$0xff] %vm6039, %v4833
        %6053 = vst [vmem:[#allocation4 + $0x60] sm:$0xff] %v4834
        %6054 = vst.msk [vmem:[#allocation4 + $0x68] sm:$0xff] %vm6039, %v4835
        %6055 = vst [vmem:[#allocation4 + $0x70] sm:$0xff] %v4836
        %6056 = vst.msk [vmem:[#allocation4 + $0x78] sm:$0xff] %vm6039, %v4837
        %6057 = vst [vmem:[#allocation4 + $0x80] sm:$0xff] %v4838
        %6058 = vst.msk [vmem:[#allocation4 + $0x88] sm:$0xff] %vm6039, %v4839
        %6059 = vst [vmem:[#allocation4 + $0x90] sm:$0xff] %v4840
        %6060 = vst.msk [vmem:[#allocation4 + $0x98] sm:$0xff] %vm6039, %v4841
        %6061 = vst [vmem:[#allocation4 + $0xa0] sm:$0xff] %v4842
        %6062 = vst.msk [vmem:[#allocation4 + $0xa8] sm:$0xff] %vm6039, %v4843
        %6063 = vst [vmem:[#allocation4 + $0xb0] sm:$0xff] %v4844
        %6064 = vst.msk [vmem:[#allocation4 + $0xb8] sm:$0xff] %vm6039, %v4845
        %6065 = vst [vmem:[#allocation4 + $0xc0] sm:$0xff] %v4846
        %6066 = vst.msk [vmem:[#allocation4 + $0xc8] sm:$0xff] %vm6039, %v4847
        %6067 = vst [vmem:[#allocation4 + $0xd0] sm:$0xff] %v4848
        %6068 = vst.msk [vmem:[#allocation4 + $0xd8] sm:$0xff] %vm6039, %v4849
        %6069 = vst [vmem:[#allocation4 + $0xe0] sm:$0xff] %v4850
        %6070 = vst.msk [vmem:[#allocation4 + $0xe8] sm:$0xff] %vm6039, %v4851
        %6071 = vst [vmem:[#allocation4 + $0xf0] sm:$0xff] %v4852
        %6072 = vst.msk [vmem:[#allocation4 + $0xf8] sm:$0xff] %vm6039, %v4853
        %6073 = vst [vmem:[#allocation4 + $0x100] sm:$0xff] %v4854
        %6074 = vst.msk [vmem:[#allocation4 + $0x108] sm:$0xff] %vm6039, %v4855
        %v6075 = vld [vmem:[#allocation4] sm:$0x80]
        %v6076 = vld [vmem:[#allocation4 + $0x8] sm:$0x80]
        %v6077 = vld [vmem:[#allocation4 + $0x10] sm:$0xff]
        %v6078 = vld [vmem:[#allocation4 + $0x18] sm:$0xff]
        %v6079 = vld [vmem:[#allocation4 + $0x20] sm:$0xff]
        %v6080 = vld [vmem:[#allocation4 + $0x28] sm:$0xff]
        %v6081 = vld [vmem:[#allocation4 + $0x30] sm:$0xff]
        %v6082 = vld [vmem:[#allocation4 + $0x38] sm:$0xff]
        %v6083 = vld [vmem:[#allocation4 + $0x40] sm:$0xff]
        %v6084 = vld [vmem:[#allocation4 + $0x48] sm:$0xff]
        %v6085 = vld [vmem:[#allocation4 + $0x50] sm:$0xff]
        %v6086 = vld [vmem:[#allocation4 + $0x58] sm:$0xff]
        %v6087 = vld [vmem:[#allocation4 + $0x60] sm:$0xff]
        %v6088 = vld [vmem:[#allocation4 + $0x68] sm:$0xff]
        %v6089 = vld [vmem:[#allocation4 + $0x70] sm:$0xff]
        %v6090 = vld [vmem:[#allocation4 + $0x78] sm:$0xff]
        %v6091 = vld [vmem:[#allocation4 + $0x80] sm:$0xff]
        %v6092 = vld [vmem:[#allocation4 + $0x88] sm:$0xff]
        %v6093 = vld [vmem:[#allocation4 + $0x90] sm:$0xff]
        %v6094 = vld [vmem:[#allocation4 + $0x98] sm:$0xff]
        %v6095 = vld [vmem:[#allocation4 + $0xa0] sm:$0xff]
        %v6096 = vld [vmem:[#allocation4 + $0xa8] sm:$0xff]
        %v6097 = vld [vmem:[#allocation4 + $0xb0] sm:$0xff]
        %v6098 = vld [vmem:[#allocation4 + $0xb8] sm:$0xff]
        %v6099 = vld [vmem:[#allocation4 + $0xc0] sm:$0xff]
        %v6100 = vld [vmem:[#allocation4 + $0xc8] sm:$0xff]
        %v6101 = vld [vmem:[#allocation4 + $0xd0] sm:$0xff]
        %v6102 = vld [vmem:[#allocation4 + $0xd8] sm:$0xff]
        %v6103 = vld [vmem:[#allocation4 + $0xe0] sm:$0xff]
        %v6104 = vld [vmem:[#allocation4 + $0xe8] sm:$0xff]
        %v6105 = vld [vmem:[#allocation4 + $0xf0] sm:$0xff]
        %v6106 = vld [vmem:[#allocation4 + $0xf8] sm:$0xff]
        %v6107 = vld [vmem:[#allocation4 + $0x100] sm:$0x7f]
        %v6108 = vld [vmem:[#allocation4 + $0x108] sm:$0x7f]
        %vm6143 = vcmask 1040384
        %v6144 = vrot.slane %v6075, 7
        %v6145 = vrot.slane %v6077, 7
        %v6146 = vsel %vm6143, %v6144, %v6145
        %v6147 = vrot.slane %v6076, 7
        %v6148 = vrot.slane %v6078, 7
        %v6149 = vsel %vm6143, %v6147, %v6148
        %v6150 = vrot.slane %v6079, 7
        %v6151 = vsel %vm6143, %v6145, %v6150
        %v6152 = vrot.slane %v6080, 7
        %v6153 = vsel %vm6143, %v6148, %v6152
        %v6154 = vrot.slane %v6081, 7
        %v6155 = vsel %vm6143, %v6150, %v6154
        %v6156 = vrot.slane %v6082, 7
        %v6157 = vsel %vm6143, %v6152, %v6156
        %v6158 = vrot.slane %v6083, 7
        %v6159 = vsel %vm6143, %v6154, %v6158
        %v6160 = vrot.slane %v6084, 7
        %v6161 = vsel %vm6143, %v6156, %v6160
        %v6162 = vrot.slane %v6085, 7
        %v6163 = vsel %vm6143, %v6158, %v6162
        %v6164 = vrot.slane %v6086, 7
        %v6165 = vsel %vm6143, %v6160, %v6164
        %v6166 = vrot.slane %v6087, 7
        %v6167 = vsel %vm6143, %v6162, %v6166
        %v6168 = vrot.slane %v6088, 7
        %v6169 = vsel %vm6143, %v6164, %v6168
        %v6170 = vrot.slane %v6089, 7
        %v6171 = vsel %vm6143, %v6166, %v6170
        %v6172 = vrot.slane %v6090, 7
        %v6173 = vsel %vm6143, %v6168, %v6172
        %v6174 = vrot.slane %v6091, 7
        %v6175 = vsel %vm6143, %v6170, %v6174
        %v6176 = vrot.slane %v6092, 7
        %v6177 = vsel %vm6143, %v6172, %v6176
        %v6178 = vrot.slane %v6093, 7
        %v6179 = vsel %vm6143, %v6174, %v6178
        %v6180 = vrot.slane %v6094, 7
        %v6181 = vsel %vm6143, %v6176, %v6180
        %v6182 = vrot.slane %v6095, 7
        %v6183 = vsel %vm6143, %v6178, %v6182
        %v6184 = vrot.slane %v6096, 7
        %v6185 = vsel %vm6143, %v6180, %v6184
        %v6186 = vrot.slane %v6097, 7
        %v6187 = vsel %vm6143, %v6182, %v6186
        %v6188 = vrot.slane %v6098, 7
        %v6189 = vsel %vm6143, %v6184, %v6188
        %v6190 = vrot.slane %v6099, 7
        %v6191 = vsel %vm6143, %v6186, %v6190
        %v6192 = vrot.slane %v6100, 7
        %v6193 = vsel %vm6143, %v6188, %v6192
        %v6194 = vrot.slane %v6101, 7
        %v6195 = vsel %vm6143, %v6190, %v6194
        %v6196 = vrot.slane %v6102, 7
        %v6197 = vsel %vm6143, %v6192, %v6196
        %v6198 = vrot.slane %v6103, 7
        %v6199 = vsel %vm6143, %v6194, %v6198
        %v6200 = vrot.slane %v6104, 7
        %v6201 = vsel %vm6143, %v6196, %v6200
        %v6202 = vrot.slane %v6105, 7
        %v6203 = vsel %vm6143, %v6198, %v6202
        %v6204 = vrot.slane %v6106, 7
        %v6205 = vsel %vm6143, %v6200, %v6204
        %v6206 = vrot.slane %v6107, 7
        %v6207 = vsel %vm6143, %v6202, %v6206
        %v6208 = vrot.slane %v6108, 7
        %v6209 = vsel %vm6143, %v6204, %v6208
        %v6242 = vadd.f32 %v5415, %v6146
        %v6243 = vadd.f32 %v5416, %v6149
        %v6244 = vadd.f32 %v5417, %v6151
        %v6245 = vadd.f32 %v5418, %v6153
        %v6246 = vadd.f32 %v5419, %v6155
        %v6247 = vadd.f32 %v5420, %v6157
        %v6248 = vadd.f32 %v5421, %v6159
        %v6249 = vadd.f32 %v5422, %v6161
        %v6250 = vadd.f32 %v5423, %v6163
        %v6251 = vadd.f32 %v5424, %v6165
        %v6252 = vadd.f32 %v5425, %v6167
        %v6253 = vadd.f32 %v5426, %v6169
        %v6254 = vadd.f32 %v5427, %v6171
        %v6255 = vadd.f32 %v5428, %v6173
        %v6256 = vadd.f32 %v5429, %v6175
        %v6257 = vadd.f32 %v5430, %v6177
        %v6258 = vadd.f32 %v5431, %v6179
        %v6259 = vadd.f32 %v5432, %v6181
        %v6260 = vadd.f32 %v5433, %v6183
        %v6261 = vadd.f32 %v5434, %v6185
        %v6262 = vadd.f32 %v5435, %v6187
        %v6263 = vadd.f32 %v5436, %v6189
        %v6264 = vadd.f32 %v5437, %v6191
        %v6265 = vadd.f32 %v5438, %v6193
        %v6266 = vadd.f32 %v5439, %v6195
        %v6267 = vadd.f32 %v5440, %v6197
        %v6268 = vadd.f32 %v5441, %v6199
        %v6269 = vadd.f32 %v5442, %v6201
        %v6270 = vadd.f32 %v5443, %v6203
        %v6271 = vadd.f32 %v5444, %v6205
        %v6272 = vadd.f32 %v5445, %v6207
        %v6273 = vadd.f32 %v5446, %v6209
        %6274 = vst [vmem:[#allocation4 + $0x10] sm:$0xff] %v6006
        %6275 = vst.msk [vmem:[#allocation4 + $0x18] sm:$0xff] %vm6039, %v6007
        %6276 = vst [vmem:[#allocation4 + $0x20] sm:$0xff] %v6008
        %6277 = vst.msk [vmem:[#allocation4 + $0x28] sm:$0xff] %vm6039, %v6009
        %6278 = vst [vmem:[#allocation4 + $0x30] sm:$0xff] %v6010
        %6279 = vst.msk [vmem:[#allocation4 + $0x38] sm:$0xff] %vm6039, %v6011
        %6280 = vst [vmem:[#allocation4 + $0x40] sm:$0xff] %v6012
        %6281 = vst.msk [vmem:[#allocation4 + $0x48] sm:$0xff] %vm6039, %v6013
        %6282 = vst [vmem:[#allocation4 + $0x50] sm:$0xff] %v6014
        %6283 = vst.msk [vmem:[#allocation4 + $0x58] sm:$0xff] %vm6039, %v6015
        %6284 = vst [vmem:[#allocation4 + $0x60] sm:$0xff] %v6016
        %6285 = vst.msk [vmem:[#allocation4 + $0x68] sm:$0xff] %vm6039, %v6017
        %6286 = vst [vmem:[#allocation4 + $0x70] sm:$0xff] %v6018
        %6287 = vst.msk [vmem:[#allocation4 + $0x78] sm:$0xff] %vm6039, %v6019
        %6288 = vst [vmem:[#allocation4 + $0x80] sm:$0xff] %v6020
        %6289 = vst.msk [vmem:[#allocation4 + $0x88] sm:$0xff] %vm6039, %v6021
        %6290 = vst [vmem:[#allocation4 + $0x90] sm:$0xff] %v6022
        %6291 = vst.msk [vmem:[#allocation4 + $0x98] sm:$0xff] %vm6039, %v6023
        %6292 = vst [vmem:[#allocation4 + $0xa0] sm:$0xff] %v6024
        %6293 = vst.msk [vmem:[#allocation4 + $0xa8] sm:$0xff] %vm6039, %v6025
        %6294 = vst [vmem:[#allocation4 + $0xb0] sm:$0xff] %v6026
        %6295 = vst.msk [vmem:[#allocation4 + $0xb8] sm:$0xff] %vm6039, %v6027
        %6296 = vst [vmem:[#allocation4 + $0xc0] sm:$0xff] %v6028
        %6297 = vst.msk [vmem:[#allocation4 + $0xc8] sm:$0xff] %vm6039, %v6029
        %6298 = vst [vmem:[#allocation4 + $0xd0] sm:$0xff] %v6030
        %6299 = vst.msk [vmem:[#allocation4 + $0xd8] sm:$0xff] %vm6039, %v6031
        %6300 = vst [vmem:[#allocation4 + $0xe0] sm:$0xff] %v6032
        %6301 = vst.msk [vmem:[#allocation4 + $0xe8] sm:$0xff] %vm6039, %v6033
        %6302 = vst [vmem:[#allocation4 + $0xf0] sm:$0xff] %v6034
        %6303 = vst.msk [vmem:[#allocation4 + $0xf8] sm:$0xff] %vm6039, %v6035
        %6304 = vst [vmem:[#allocation4 + $0x100] sm:$0xff] %v6036
        %6305 = vst.msk [vmem:[#allocation4 + $0x108] sm:$0xff] %vm6039, %v6037
        %v6306 = vld [vmem:[#allocation4 + $0x10] sm:$0xfe]
        %v6307 = vld [vmem:[#allocation4 + $0x18] sm:$0xfe]
        %v6308 = vld [vmem:[#allocation4 + $0x20] sm:$0xff]
        %v6309 = vld [vmem:[#allocation4 + $0x28] sm:$0xff]
        %v6310 = vld [vmem:[#allocation4 + $0x30] sm:$0xff]
        %v6311 = vld [vmem:[#allocation4 + $0x38] sm:$0xff]
        %v6312 = vld [vmem:[#allocation4 + $0x40] sm:$0xff]
        %v6313 = vld [vmem:[#allocation4 + $0x48] sm:$0xff]
        %v6314 = vld [vmem:[#allocation4 + $0x50] sm:$0xff]
        %v6315 = vld [vmem:[#allocation4 + $0x58] sm:$0xff]
        %v6316 = vld [vmem:[#allocation4 + $0x60] sm:$0xff]
        %v6317 = vld [vmem:[#allocation4 + $0x68] sm:$0xff]
        %v6318 = vld [vmem:[#allocation4 + $0x70] sm:$0xff]
        %v6319 = vld [vmem:[#allocation4 + $0x78] sm:$0xff]
        %v6320 = vld [vmem:[#allocation4 + $0x80] sm:$0xff]
        %v6321 = vld [vmem:[#allocation4 + $0x88] sm:$0xff]
        %v6322 = vld [vmem:[#allocation4 + $0x90] sm:$0xff]
        %v6323 = vld [vmem:[#allocation4 + $0x98] sm:$0xff]
        %v6324 = vld [vmem:[#allocation4 + $0xa0] sm:$0xff]
        %v6325 = vld [vmem:[#allocation4 + $0xa8] sm:$0xff]
        %v6326 = vld [vmem:[#allocation4 + $0xb0] sm:$0xff]
        %v6327 = vld [vmem:[#allocation4 + $0xb8] sm:$0xff]
        %v6328 = vld [vmem:[#allocation4 + $0xc0] sm:$0xff]
        %v6329 = vld [vmem:[#allocation4 + $0xc8] sm:$0xff]
        %v6330 = vld [vmem:[#allocation4 + $0xd0] sm:$0xff]
        %v6331 = vld [vmem:[#allocation4 + $0xd8] sm:$0xff]
        %v6332 = vld [vmem:[#allocation4 + $0xe0] sm:$0xff]
        %v6333 = vld [vmem:[#allocation4 + $0xe8] sm:$0xff]
        %v6334 = vld [vmem:[#allocation4 + $0xf0] sm:$0xff]
        %v6335 = vld [vmem:[#allocation4 + $0xf8] sm:$0xff]
        %v6336 = vld [vmem:[#allocation4 + $0x100] sm:$0xff]
        %v6337 = vld [vmem:[#allocation4 + $0x108] sm:$0xff]
        %v6338 = vld [vmem:[#allocation4 + $0x110] sm:$0x1]
        %v6339 = vld [vmem:[#allocation4 + $0x118] sm:$0x1]
        %vm6374 = vcmask 1046528
        %v6375 = vrot.slane %v6306, 1
        %v6376 = vrot.slane %v6308, 1
        %v6377 = vsel %vm6374, %v6375, %v6376
        %v6378 = vrot.slane %v6307, 1
        %v6379 = vrot.slane %v6309, 1
        %v6380 = vsel %vm6374, %v6378, %v6379
        %v6381 = vrot.slane %v6310, 1
        %v6382 = vsel %vm6374, %v6376, %v6381
        %v6383 = vrot.slane %v6311, 1
        %v6384 = vsel %vm6374, %v6379, %v6383
        %v6385 = vrot.slane %v6312, 1
        %v6386 = vsel %vm6374, %v6381, %v6385
        %v6387 = vrot.slane %v6313, 1
        %v6388 = vsel %vm6374, %v6383, %v6387
        %v6389 = vrot.slane %v6314, 1
        %v6390 = vsel %vm6374, %v6385, %v6389
        %v6391 = vrot.slane %v6315, 1
        %v6392 = vsel %vm6374, %v6387, %v6391
        %v6393 = vrot.slane %v6316, 1
        %v6394 = vsel %vm6374, %v6389, %v6393
        %v6395 = vrot.slane %v6317, 1
        %v6396 = vsel %vm6374, %v6391, %v6395
        %v6397 = vrot.slane %v6318, 1
        %v6398 = vsel %vm6374, %v6393, %v6397
        %v6399 = vrot.slane %v6319, 1
        %v6400 = vsel %vm6374, %v6395, %v6399
        %v6401 = vrot.slane %v6320, 1
        %v6402 = vsel %vm6374, %v6397, %v6401
        %v6403 = vrot.slane %v6321, 1
        %v6404 = vsel %vm6374, %v6399, %v6403
        %v6405 = vrot.slane %v6322, 1
        %v6406 = vsel %vm6374, %v6401, %v6405
        %v6407 = vrot.slane %v6323, 1
        %v6408 = vsel %vm6374, %v6403, %v6407
        %v6409 = vrot.slane %v6324, 1
        %v6410 = vsel %vm6374, %v6405, %v6409
        %v6411 = vrot.slane %v6325, 1
        %v6412 = vsel %vm6374, %v6407, %v6411
        %v6413 = vrot.slane %v6326, 1
        %v6414 = vsel %vm6374, %v6409, %v6413
        %v6415 = vrot.slane %v6327, 1
        %v6416 = vsel %vm6374, %v6411, %v6415
        %v6417 = vrot.slane %v6328, 1
        %v6418 = vsel %vm6374, %v6413, %v6417
        %v6419 = vrot.slane %v6329, 1
        %v6420 = vsel %vm6374, %v6415, %v6419
        %v6421 = vrot.slane %v6330, 1
        %v6422 = vsel %vm6374, %v6417, %v6421
        %v6423 = vrot.slane %v6331, 1
        %v6424 = vsel %vm6374, %v6419, %v6423
        %v6425 = vrot.slane %v6332, 1
        %v6426 = vsel %vm6374, %v6421, %v6425
        %v6427 = vrot.slane %v6333, 1
        %v6428 = vsel %vm6374, %v6423, %v6427
        %v6429 = vrot.slane %v6334, 1
        %v6430 = vsel %vm6374, %v6425, %v6429
        %v6431 = vrot.slane %v6335, 1
        %v6432 = vsel %vm6374, %v6427, %v6431
        %v6433 = vrot.slane %v6336, 1
        %v6434 = vsel %vm6374, %v6429, %v6433
        %v6435 = vrot.slane %v6337, 1
        %v6436 = vsel %vm6374, %v6431, %v6435
        %v6437 = vrot.slane %v6338, 1
        %v6438 = vsel %vm6374, %v6433, %v6437
        %v6439 = vrot.slane %v6339, 1
        %v6440 = vsel %vm6374, %v6435, %v6439
        %v6473 = vadd.f32 %v6242, %v6377
        %v6474 = vadd.f32 %v6243, %v6380
        %v6475 = vadd.f32 %v6244, %v6382
        %v6476 = vadd.f32 %v6245, %v6384
        %v6477 = vadd.f32 %v6246, %v6386
        %v6478 = vadd.f32 %v6247, %v6388
        %v6479 = vadd.f32 %v6248, %v6390
        %v6480 = vadd.f32 %v6249, %v6392
        %v6481 = vadd.f32 %v6250, %v6394
        %v6482 = vadd.f32 %v6251, %v6396
        %v6483 = vadd.f32 %v6252, %v6398
        %v6484 = vadd.f32 %v6253, %v6400
        %v6485 = vadd.f32 %v6254, %v6402
        %v6486 = vadd.f32 %v6255, %v6404
        %v6487 = vadd.f32 %v6256, %v6406
        %v6488 = vadd.f32 %v6257, %v6408
        %v6489 = vadd.f32 %v6258, %v6410
        %v6490 = vadd.f32 %v6259, %v6412
        %v6491 = vadd.f32 %v6260, %v6414
        %v6492 = vadd.f32 %v6261, %v6416
        %v6493 = vadd.f32 %v6262, %v6418
        %v6494 = vadd.f32 %v6263, %v6420
        %v6495 = vadd.f32 %v6264, %v6422
        %v6496 = vadd.f32 %v6265, %v6424
        %v6497 = vadd.f32 %v6266, %v6426
        %v6498 = vadd.f32 %v6267, %v6428
        %v6499 = vadd.f32 %v6268, %v6430
        %v6500 = vadd.f32 %v6269, %v6432
        %v6501 = vadd.f32 %v6270, %v6434
        %v6502 = vadd.f32 %v6271, %v6436
        %v6503 = vadd.f32 %v6272, %v6438
        %v6504 = vadd.f32 %v6273, %v6440
        %v6505 = vld [vmem:[%s2] sm:$0x3]
        %v6507 = vperm.slane %v6505, 0
        %v6508 = vperm.slane %v6505, 1
        %v6511 = vadd.f32 %v6473, %v6507
        %v6512 = vadd.f32 %v6474, %v6508
        %v6513 = vadd.f32 %v6475, %v6507
        %v6514 = vadd.f32 %v6476, %v6508
        %v6515 = vadd.f32 %v6477, %v6507
        %v6516 = vadd.f32 %v6478, %v6508
        %v6517 = vadd.f32 %v6479, %v6507
        %v6518 = vadd.f32 %v6480, %v6508
        %v6519 = vadd.f32 %v6481, %v6507
        %v6520 = vadd.f32 %v6482, %v6508
        %v6521 = vadd.f32 %v6483, %v6507
        %v6522 = vadd.f32 %v6484, %v6508
        %v6523 = vadd.f32 %v6485, %v6507
        %v6524 = vadd.f32 %v6486, %v6508
        %v6525 = vadd.f32 %v6487, %v6507
        %v6526 = vadd.f32 %v6488, %v6508
        %v6527 = vadd.f32 %v6489, %v6507
        %v6528 = vadd.f32 %v6490, %v6508
        %v6529 = vadd.f32 %v6491, %v6507
        %v6530 = vadd.f32 %v6492, %v6508
        %v6531 = vadd.f32 %v6493, %v6507
        %v6532 = vadd.f32 %v6494, %v6508
        %v6533 = vadd.f32 %v6495, %v6507
        %v6534 = vadd.f32 %v6496, %v6508
        %v6535 = vadd.f32 %v6497, %v6507
        %v6536 = vadd.f32 %v6498, %v6508
        %v6537 = vadd.f32 %v6499, %v6507
        %v6538 = vadd.f32 %v6500, %v6508
        %v6539 = vadd.f32 %v6501, %v6507
        %v6540 = vadd.f32 %v6502, %v6508
        %v6541 = vadd.f32 %v6503, %v6507
        %v6542 = vadd.f32 %v6504, %v6508
        %vm6543 = vcmp.ge.f32.partialorder %v6511, 0.0
        %vm6544 = vcmp.ge.f32.partialorder %v6512, 0.0
        %vm6545 = vcmp.ge.f32.partialorder %v6513, 0.0
        %vm6546 = vcmp.ge.f32.partialorder %v6514, 0.0
        %vm6547 = vcmp.ge.f32.partialorder %v6515, 0.0
        %vm6548 = vcmp.ge.f32.partialorder %v6516, 0.0
        %vm6549 = vcmp.ge.f32.partialorder %v6517, 0.0
        %vm6550 = vcmp.ge.f32.partialorder %v6518, 0.0
        %vm6551 = vcmp.ge.f32.partialorder %v6519, 0.0
        %vm6552 = vcmp.ge.f32.partialorder %v6520, 0.0
        %vm6553 = vcmp.ge.f32.partialorder %v6521, 0.0
        %vm6554 = vcmp.ge.f32.partialorder %v6522, 0.0
        %vm6555 = vcmp.ge.f32.partialorder %v6523, 0.0
        %vm6556 = vcmp.ge.f32.partialorder %v6524, 0.0
        %vm6557 = vcmp.ge.f32.partialorder %v6525, 0.0
        %vm6558 = vcmp.ge.f32.partialorder %v6526, 0.0
        %vm6559 = vcmp.ge.f32.partialorder %v6527, 0.0
        %vm6560 = vcmp.ge.f32.partialorder %v6528, 0.0
        %vm6561 = vcmp.ge.f32.partialorder %v6529, 0.0
        %vm6562 = vcmp.ge.f32.partialorder %v6530, 0.0
        %vm6563 = vcmp.ge.f32.partialorder %v6531, 0.0
        %vm6564 = vcmp.ge.f32.partialorder %v6532, 0.0
        %vm6565 = vcmp.ge.f32.partialorder %v6533, 0.0
        %vm6566 = vcmp.ge.f32.partialorder %v6534, 0.0
        %vm6567 = vcmp.ge.f32.partialorder %v6535, 0.0
        %vm6568 = vcmp.ge.f32.partialorder %v6536, 0.0
        %vm6569 = vcmp.ge.f32.partialorder %v6537, 0.0
        %vm6570 = vcmp.ge.f32.partialorder %v6538, 0.0
        %vm6571 = vcmp.ge.f32.partialorder %v6539, 0.0
        %vm6572 = vcmp.ge.f32.partialorder %v6540, 0.0
        %vm6573 = vcmp.ge.f32.partialorder %v6541, 0.0
        %vm6574 = vcmp.ge.f32.partialorder %v6542, 0.0
        %v6575 = vmul.f32 %v6511, 0.1
        %v6576 = vmul.f32 %v6512, 0.1
        %v6577 = vmul.f32 %v6513, 0.1
        %v6578 = vmul.f32 %v6514, 0.1
        %v6579 = vmul.f32 %v6515, 0.1
        %v6580 = vmul.f32 %v6516, 0.1
        %v6581 = vmul.f32 %v6517, 0.1
        %v6582 = vmul.f32 %v6518, 0.1
        %v6583 = vmul.f32 %v6519, 0.1
        %v6584 = vmul.f32 %v6520, 0.1
        %v6585 = vmul.f32 %v6521, 0.1
        %v6586 = vmul.f32 %v6522, 0.1
        %v6587 = vmul.f32 %v6523, 0.1
        %v6588 = vmul.f32 %v6524, 0.1
        %v6589 = vmul.f32 %v6525, 0.1
        %v6590 = vmul.f32 %v6526, 0.1
        %v6591 = vmul.f32 %v6527, 0.1
        %v6592 = vmul.f32 %v6528, 0.1
        %v6593 = vmul.f32 %v6529, 0.1
        %v6594 = vmul.f32 %v6530, 0.1
        %v6595 = vmul.f32 %v6531, 0.1
        %v6596 = vmul.f32 %v6532, 0.1
        %v6597 = vmul.f32 %v6533, 0.1
        %v6598 = vmul.f32 %v6534, 0.1
        %v6599 = vmul.f32 %v6535, 0.1
        %v6600 = vmul.f32 %v6536, 0.1
        %v6601 = vmul.f32 %v6537, 0.1
        %v6602 = vmul.f32 %v6538, 0.1
        %v6603 = vmul.f32 %v6539, 0.1
        %v6604 = vmul.f32 %v6540, 0.1
        %v6605 = vmul.f32 %v6541, 0.1
        %v6606 = vmul.f32 %v6542, 0.1
        %v6607 = vsel %vm6543, %v6511, %v6575
        %v6608 = vsel %vm6544, %v6512, %v6576
        %v6609 = vsel %vm6545, %v6513, %v6577
        %v6610 = vsel %vm6546, %v6514, %v6578
        %v6611 = vsel %vm6547, %v6515, %v6579
        %v6612 = vsel %vm6548, %v6516, %v6580
        %v6613 = vsel %vm6549, %v6517, %v6581
        %v6614 = vsel %vm6550, %v6518, %v6582
        %v6615 = vsel %vm6551, %v6519, %v6583
        %v6616 = vsel %vm6552, %v6520, %v6584
        %v6617 = vsel %vm6553, %v6521, %v6585
        %v6618 = vsel %vm6554, %v6522, %v6586
        %v6619 = vsel %vm6555, %v6523, %v6587
        %v6620 = vsel %vm6556, %v6524, %v6588
        %v6621 = vsel %vm6557, %v6525, %v6589
        %v6622 = vsel %vm6558, %v6526, %v6590
        %v6623 = vsel %vm6559, %v6527, %v6591
        %v6624 = vsel %vm6560, %v6528, %v6592
        %v6625 = vsel %vm6561, %v6529, %v6593
        %v6626 = vsel %vm6562, %v6530, %v6594
        %v6627 = vsel %vm6563, %v6531, %v6595
        %v6628 = vsel %vm6564, %v6532, %v6596
        %v6629 = vsel %vm6565, %v6533, %v6597
        %v6630 = vsel %vm6566, %v6534, %v6598
        %v6631 = vsel %vm6567, %v6535, %v6599
        %v6632 = vsel %vm6568, %v6536, %v6600
        %v6633 = vsel %vm6569, %v6537, %v6601
        %v6634 = vsel %vm6570, %v6538, %v6602
        %v6635 = vsel %vm6571, %v6539, %v6603
        %v6636 = vsel %vm6572, %v6540, %v6604
        %v6637 = vsel %vm6573, %v6541, %v6605
        %v6638 = vsel %vm6574, %v6542, %v6606
        %v6639 = vsel %vm521, 1, 0
        %v6640 = vsel %vm522, 1, 0
        %v6641 = vsel %vm523, 1, 0
        %v6642 = vsel %vm524, 1, 0
        %v6643 = vsel %vm525, 1, 0
        %v6644 = vsel %vm526, 1, 0
        %v6645 = vsel %vm527, 1, 0
        %v6646 = vsel %vm528, 1, 0
        %v6647 = vsel %vm529, 1, 0
        %v6648 = vsel %vm530, 1, 0
        %v6649 = vsel %vm531, 1, 0
        %v6650 = vsel %vm532, 1, 0
        %v6651 = vsel %vm533, 1, 0
        %v6652 = vsel %vm534, 1, 0
        %v6653 = vsel %vm535, 1, 0
        %v6654 = vsel %vm536, 1, 0
        %vm6655 = vcmp.eq.s32.totalorder %v6639, 1
        %vm6656 = vcmp.eq.s32.totalorder %v6640, 1
        %vm6657 = vcmp.eq.s32.totalorder %v6641, 1
        %vm6658 = vcmp.eq.s32.totalorder %v6642, 1
        %vm6659 = vcmp.eq.s32.totalorder %v6643, 1
        %vm6660 = vcmp.eq.s32.totalorder %v6644, 1
        %vm6661 = vcmp.eq.s32.totalorder %v6645, 1
        %vm6662 = vcmp.eq.s32.totalorder %v6646, 1
        %vm6663 = vcmp.eq.s32.totalorder %v6647, 1
        %vm6664 = vcmp.eq.s32.totalorder %v6648, 1
        %vm6665 = vcmp.eq.s32.totalorder %v6649, 1
        %vm6666 = vcmp.eq.s32.totalorder %v6650, 1
        %vm6667 = vcmp.eq.s32.totalorder %v6651, 1
        %vm6668 = vcmp.eq.s32.totalorder %v6652, 1
        %vm6669 = vcmp.eq.s32.totalorder %v6653, 1
        %vm6670 = vcmp.eq.s32.totalorder %v6654, 1
        %v6671 = vsel %vm6655, %v6607, 0.0
        %v6672 = vsel %vm6655, %v6608, 0.0
        %v6673 = vsel %vm6656, %v6609, 0.0
        %v6674 = vsel %vm6656, %v6610, 0.0
        %v6675 = vsel %vm6657, %v6611, 0.0
        %v6676 = vsel %vm6657, %v6612, 0.0
        %v6677 = vsel %vm6658, %v6613, 0.0
        %v6678 = vsel %vm6658, %v6614, 0.0
        %v6679 = vsel %vm6659, %v6615, 0.0
        %v6680 = vsel %vm6659, %v6616, 0.0
        %v6681 = vsel %vm6660, %v6617, 0.0
        %v6682 = vsel %vm6660, %v6618, 0.0
        %v6683 = vsel %vm6661, %v6619, 0.0
        %v6684 = vsel %vm6661, %v6620, 0.0
        %v6685 = vsel %vm6662, %v6621, 0.0
        %v6686 = vsel %vm6662, %v6622, 0.0
        %v6687 = vsel %vm6663, %v6623, 0.0
        %v6688 = vsel %vm6663, %v6624, 0.0
        %v6689 = vsel %vm6664, %v6625, 0.0
        %v6690 = vsel %vm6664, %v6626, 0.0
        %v6691 = vsel %vm6665, %v6627, 0.0
        %v6692 = vsel %vm6665, %v6628, 0.0
        %v6693 = vsel %vm6666, %v6629, 0.0
        %v6694 = vsel %vm6666, %v6630, 0.0
        %v6695 = vsel %vm6667, %v6631, 0.0
        %v6696 = vsel %vm6667, %v6632, 0.0
        %v6697 = vsel %vm6668, %v6633, 0.0
        %v6698 = vsel %vm6668, %v6634, 0.0
        %v6699 = vsel %vm6669, %v6635, 0.0
        %v6700 = vsel %vm6669, %v6636, 0.0
        %v6701 = vsel %vm6670, %v6637, 0.0
        %v6702 = vsel %vm6670, %v6638, 0.0
        %vm6703 = vcmask 1043456
        %vm6704 = vcmask 556036
        %vm6705 = vmor %vm6704, %vm6703
        %6706 = vst.msk [vmem:[#allocation2] sm:$0xff] %vm6705, 0
        %6707 = vst.msk [vmem:[#allocation2 + $0x8] sm:$0xff] %vm6705, 0
        %v6708 = vpack.c.bf16 %v6672, %v6671
        %v6709 = vpack.c.bf16 %v6674, %v6673
        %v6710 = vpack.c.bf16 %v6676, %v6675
        %v6711 = vpack.c.bf16 %v6678, %v6677
        %v6712 = vpack.c.bf16 %v6680, %v6679
        %v6713 = vpack.c.bf16 %v6682, %v6681
        %v6714 = vpack.c.bf16 %v6684, %v6683
        %v6715 = vpack.c.bf16 %v6686, %v6685
        %v6716 = vpack.c.bf16 %v6688, %v6687
        %v6717 = vpack.c.bf16 %v6690, %v6689
        %v6718 = vpack.c.bf16 %v6692, %v6691
        %v6719 = vpack.c.bf16 %v6694, %v6693
        %v6720 = vpack.c.bf16 %v6696, %v6695
        %v6721 = vpack.c.bf16 %v6698, %v6697
        %v6722 = vpack.c.bf16 %v6700, %v6699
        %v6723 = vpack.c.bf16 %v6702, %v6701
        %6724 = vst.msk [vmem:[#allocation2 + $0x10] sm:$0xff] %vm6705, %v6708
        %6725 = vst.msk [vmem:[#allocation2 + $0x18] sm:$0xff] %vm6705, %v6709
        %6726 = vst.msk [vmem:[#allocation2 + $0x20] sm:$0xff] %vm6705, %v6710
        %6727 = vst.msk [vmem:[#allocation2 + $0x28] sm:$0xff] %vm6705, %v6711
        %6728 = vst.msk [vmem:[#allocation2 + $0x30] sm:$0xff] %vm6705, %v6712
        %6729 = vst.msk [vmem:[#allocation2 + $0x38] sm:$0xff] %vm6705, %v6713
        %6730 = vst.msk [vmem:[#allocation2 + $0x40] sm:$0xff] %vm6705, %v6714
        %6731 = vst.msk [vmem:[#allocation2 + $0x48] sm:$0xff] %vm6705, %v6715
        %6732 = vst.msk [vmem:[#allocation2 + $0x50] sm:$0xff] %vm6705, %v6716
        %6733 = vst.msk [vmem:[#allocation2 + $0x58] sm:$0xff] %vm6705, %v6717
        %6734 = vst.msk [vmem:[#allocation2 + $0x60] sm:$0xff] %vm6705, %v6718
        %6735 = vst.msk [vmem:[#allocation2 + $0x68] sm:$0xff] %vm6705, %v6719
        %6736 = vst.msk [vmem:[#allocation2 + $0x70] sm:$0xff] %vm6705, %v6720
        %6737 = vst.msk [vmem:[#allocation2 + $0x78] sm:$0xff] %vm6705, %v6721
        %6738 = vst.msk [vmem:[#allocation2 + $0x80] sm:$0xff] %vm6705, %v6722
        %6739 = vst.msk [vmem:[#allocation2 + $0x88] sm:$0xff] %vm6705, %v6723
        %6740 = vst.msk [vmem:[#allocation2 + $0x90] sm:$0xff] %vm6705, 0
        %6741 = vst.msk [vmem:[#allocation2 + $0x98] sm:$0xff] %vm6705, 0
        %v6742 = vld [vmem:[#allocation2] sm:$0xff]
        %v6743 = vld [vmem:[#allocation2 + $0x8] sm:$0xff]
        %v6744 = vld [vmem:[#allocation2 + $0x10] sm:$0xff]
        %v6745 = vld [vmem:[#allocation2 + $0x18] sm:$0xff]
        %v6746 = vld [vmem:[#allocation2 + $0x20] sm:$0xff]
        %v6747 = vld [vmem:[#allocation2 + $0x28] sm:$0xff]
        %v6748 = vld [vmem:[#allocation2 + $0x30] sm:$0xff]
        %v6749 = vld [vmem:[#allocation2 + $0x38] sm:$0xff]
        %v6750 = vld [vmem:[#allocation2 + $0x40] sm:$0xff]
        %v6751 = vld [vmem:[#allocation2 + $0x48] sm:$0xff]
        %v6752 = vld [vmem:[#allocation2 + $0x50] sm:$0xff]
        %v6753 = vld [vmem:[#allocation2 + $0x58] sm:$0xff]
        %v6754 = vld [vmem:[#allocation2 + $0x60] sm:$0xff]
        %v6755 = vld [vmem:[#allocation2 + $0x68] sm:$0xff]
        %v6756 = vld [vmem:[#allocation2 + $0x70] sm:$0xff]
        %v6757 = vld [vmem:[#allocation2 + $0x78] sm:$0xff]
        %v6758 = vld [vmem:[%s3] sm:$0xf]
        %v6759 = vld [vmem:[%s3 + $0x4] sm:$0xf]
        %v6760 = vld [vmem:[%s3 + $0x8] sm:$0xf]
        %v6761 = vld [vmem:[%s3 + $0xc] sm:$0xf]
        %v6762 = vld [vmem:[%s3 + $0x10] sm:$0xf]
        %v6763 = vld [vmem:[%s3 + $0x14] sm:$0xf]
        %v6764 = vld [vmem:[%s3 + $0x18] sm:$0xf]
        %v6765 = vld [vmem:[%s3 + $0x1c] sm:$0xf]
        %v6766 = vld [vmem:[%s3 + $0x20] sm:$0xf]
        %v6767 = vld [vmem:[%s3 + $0x24] sm:$0xf]
        %v6768 = vld [vmem:[%s3 + $0x28] sm:$0xf]
        %v6769 = vld [vmem:[%s3 + $0x2c] sm:$0xf]
        %v6770 = vld [vmem:[%s3 + $0x30] sm:$0xf]
        %v6771 = vld [vmem:[%s3 + $0x34] sm:$0xf]
        %v6772 = vld [vmem:[%s3 + $0x38] sm:$0xf]
        %v6773 = vld [vmem:[%s3 + $0x3c] sm:$0xf]
        %v6774 = vld [vmem:[%s3 + $0x40] sm:$0xf]
        %v6775 = vld [vmem:[%s3 + $0x44] sm:$0xf]
        %v6776 = vld [vmem:[%s3 + $0x48] sm:$0xf]
        %v6777 = vld [vmem:[%s3 + $0x4c] sm:$0xf]
        %v6778 = vld [vmem:[%s3 + $0x50] sm:$0xf]
        %v6779 = vld [vmem:[%s3 + $0x54] sm:$0xf]
        %v6780 = vld [vmem:[%s3 + $0x58] sm:$0xf]
        %v6781 = vld [vmem:[%s3 + $0x5c] sm:$0xf]
        %v6782 = vld [vmem:[%s3 + $0x60] sm:$0x3]
        %s6783 = scalar_lea.vmem %s3, 100
        %v6784 = vld [vmem:[%s6783] sm:$0xf]
        %v6785 = vld [vmem:[%s6783 + $0x4] sm:$0xf]
        %v6786 = vld [vmem:[%s6783 + $0x8] sm:$0xf]
        %v6787 = vld [vmem:[%s6783 + $0xc] sm:$0xf]
        %v6788 = vld [vmem:[%s6783 + $0x10] sm:$0xf]
        %v6789 = vld [vmem:[%s6783 + $0x14] sm:$0xf]
        %v6790 = vld [vmem:[%s6783 + $0x18] sm:$0xf]
        %v6791 = vld [vmem:[%s6783 + $0x1c] sm:$0xf]
        %v6792 = vld [vmem:[%s6783 + $0x20] sm:$0xf]
        %v6793 = vld [vmem:[%s6783 + $0x24] sm:$0xf]
        %v6794 = vld [vmem:[%s6783 + $0x28] sm:$0xf]
        %v6795 = vld [vmem:[%s6783 + $0x2c] sm:$0xf]
        %v6796 = vld [vmem:[%s6783 + $0x30] sm:$0xf]
        %v6797 = vld [vmem:[%s6783 + $0x34] sm:$0xf]
        %v6798 = vld [vmem:[%s6783 + $0x38] sm:$0xf]
        %v6799 = vld [vmem:[%s6783 + $0x3c] sm:$0xf]
        %v6800 = vld [vmem:[%s6783 + $0x40] sm:$0xf]
        %v6801 = vld [vmem:[%s6783 + $0x44] sm:$0xf]
        %v6802 = vld [vmem:[%s6783 + $0x48] sm:$0xf]
        %v6803 = vld [vmem:[%s6783 + $0x4c] sm:$0xf]
        %v6804 = vld [vmem:[%s6783 + $0x50] sm:$0xf]
        %v6805 = vld [vmem:[%s6783 + $0x54] sm:$0xf]
        %v6806 = vld [vmem:[%s6783 + $0x58] sm:$0xf]
        %v6807 = vld [vmem:[%s6783 + $0x5c] sm:$0xf]
        %v6808 = vld [vmem:[%s6783 + $0x60] sm:$0x3]
        %s6809 = scalar_lea.vmem %s3, 200
        %v6810 = vld [vmem:[%s6809] sm:$0xf]
        %v6811 = vld [vmem:[%s6809 + $0x4] sm:$0xf]
        %v6812 = vld [vmem:[%s6809 + $0x8] sm:$0xf]
        %v6813 = vld [vmem:[%s6809 + $0xc] sm:$0xf]
        %v6814 = vld [vmem:[%s6809 + $0x10] sm:$0xf]
        %v6815 = vld [vmem:[%s6809 + $0x14] sm:$0xf]
        %v6816 = vld [vmem:[%s6809 + $0x18] sm:$0xf]
        %v6817 = vld [vmem:[%s6809 + $0x1c] sm:$0xf]
        %v6818 = vld [vmem:[%s6809 + $0x20] sm:$0xf]
        %v6819 = vld [vmem:[%s6809 + $0x24] sm:$0xf]
        %v6820 = vld [vmem:[%s6809 + $0x28] sm:$0xf]
        %v6821 = vld [vmem:[%s6809 + $0x2c] sm:$0xf]
        %v6822 = vld [vmem:[%s6809 + $0x30] sm:$0xf]
        %v6823 = vld [vmem:[%s6809 + $0x34] sm:$0xf]
        %v6824 = vld [vmem:[%s6809 + $0x38] sm:$0xf]
        %v6825 = vld [vmem:[%s6809 + $0x3c] sm:$0xf]
        %v6826 = vld [vmem:[%s6809 + $0x40] sm:$0xf]
        %v6827 = vld [vmem:[%s6809 + $0x44] sm:$0xf]
        %v6828 = vld [vmem:[%s6809 + $0x48] sm:$0xf]
        %v6829 = vld [vmem:[%s6809 + $0x4c] sm:$0xf]
        %v6830 = vld [vmem:[%s6809 + $0x50] sm:$0xf]
        %v6831 = vld [vmem:[%s6809 + $0x54] sm:$0xf]
        %v6832 = vld [vmem:[%s6809 + $0x58] sm:$0xf]
        %v6833 = vld [vmem:[%s6809 + $0x5c] sm:$0xf]
        %v6834 = vld [vmem:[%s6809 + $0x60] sm:$0x3]
        %v6835 = vld [vmem:[#allocation2 + $0x80] sm:$0xff]
        %v6836 = vld [vmem:[#allocation2 + $0x88] sm:$0xff]
        %s6837 = scalar_lea.vmem %s3, 300
        %v6838 = vld [vmem:[%s6837] sm:$0xf]
        %v6839 = vld [vmem:[%s6837 + $0x4] sm:$0xf]
        %v6840 = vld [vmem:[%s6837 + $0x8] sm:$0xf]
        %v6841 = vld [vmem:[%s6837 + $0xc] sm:$0xf]
        %v6842 = vld [vmem:[%s6837 + $0x10] sm:$0xf]
        %v6843 = vld [vmem:[%s6837 + $0x14] sm:$0xf]
        %v6844 = vld [vmem:[%s6837 + $0x18] sm:$0xf]
        %v6845 = vld [vmem:[%s6837 + $0x1c] sm:$0xf]
        %v6846 = vld [vmem:[%s6837 + $0x20] sm:$0xf]
        %v6847 = vld [vmem:[%s6837 + $0x24] sm:$0xf]
        %v6848 = vld [vmem:[%s6837 + $0x28] sm:$0xf]
        %v6849 = vld [vmem:[%s6837 + $0x2c] sm:$0xf]
        %v6850 = vld [vmem:[%s6837 + $0x30] sm:$0xf]
        %v6851 = vld [vmem:[%s6837 + $0x34] sm:$0xf]
        %v6852 = vld [vmem:[%s6837 + $0x38] sm:$0xf]
        %v6853 = vld [vmem:[%s6837 + $0x3c] sm:$0xf]
        %v6854 = vld [vmem:[%s6837 + $0x40] sm:$0xf]
        %v6855 = vld [vmem:[%s6837 + $0x44] sm:$0xf]
        %v6856 = vld [vmem:[%s6837 + $0x48] sm:$0xf]
        %v6857 = vld [vmem:[%s6837 + $0x4c] sm:$0xf]
        %v6858 = vld [vmem:[%s6837 + $0x50] sm:$0xf]
        %v6859 = vld [vmem:[%s6837 + $0x54] sm:$0xf]
        %v6860 = vld [vmem:[%s6837 + $0x58] sm:$0xf]
        %v6861 = vld [vmem:[%s6837 + $0x5c] sm:$0xf]
        %v6862 = vld [vmem:[%s6837 + $0x60] sm:$0x3]
        %v6879 = vunpack.c.l.b16 %v6744
        %v6880 = vunpack.c.h.b16 %v6744
        %v6881 = vunpack.c.l.b16 %v6745
        %v6882 = vunpack.c.h.b16 %v6745
        %v6883 = vunpack.c.l.b16 %v6746
        %v6884 = vunpack.c.h.b16 %v6746
        %v6885 = vunpack.c.l.b16 %v6747
        %v6886 = vunpack.c.h.b16 %v6747
        %v6887 = vunpack.c.l.b16 %v6748
        %v6888 = vunpack.c.h.b16 %v6748
        %v6889 = vunpack.c.l.b16 %v6749
        %v6890 = vunpack.c.h.b16 %v6749
        %v6891 = vunpack.c.l.b16 %v6750
        %v6892 = vunpack.c.h.b16 %v6750
        %v6893 = vunpack.c.l.b16 %v6751
        %v6894 = vunpack.c.h.b16 %v6751
        %v6895 = vunpack.c.l.b16 %v6752
        %v6896 = vunpack.c.h.b16 %v6752
        %v6897 = vunpack.c.l.b16 %v6753
        %v6898 = vunpack.c.h.b16 %v6753
        %v6899 = vunpack.c.l.b16 %v6754
        %v6900 = vunpack.c.h.b16 %v6754
        %v6901 = vunpack.c.l.b16 %v6755
        %v6902 = vunpack.c.h.b16 %v6755
        %v6903 = vunpack.c.l.b16 %v6756
        %v6904 = vunpack.c.h.b16 %v6756
        %v6905 = vunpack.c.l.b16 %v6757
        %v6906 = vunpack.c.h.b16 %v6757
        %v6907 = vunpack.c.l.b16 %v6835
        %v6908 = vunpack.c.h.b16 %v6835
        %v6909 = vunpack.c.l.b16 %v6836
        %v6910 = vunpack.c.h.b16 %v6836
        %v6911 = vpack.c.b16 %v6881, %v6879
        %v6912 = vpack.c.b16 %v6882, %v6880
        %v6913 = vpack.c.b16 %v6885, %v6883
        %v6914 = vpack.c.b16 %v6886, %v6884
        %v6915 = vpack.c.b16 %v6889, %v6887
        %v6916 = vpack.c.b16 %v6890, %v6888
        %v6917 = vpack.c.b16 %v6893, %v6891
        %v6918 = vpack.c.b16 %v6894, %v6892
        %v6919 = vpack.c.b16 %v6897, %v6895
        %v6920 = vpack.c.b16 %v6898, %v6896
        %v6921 = vpack.c.b16 %v6901, %v6899
        %v6922 = vpack.c.b16 %v6902, %v6900
        %v6923 = vpack.c.b16 %v6905, %v6903
        %v6924 = vpack.c.b16 %v6906, %v6904
        %v6925 = vpack.c.b16 %v6909, %v6907
        %v6926 = vpack.c.b16 %v6910, %v6908
        %v6960 = vunpack.c.l.b16 %v6838
        %v6961 = vunpack.c.l.b16 %v6839
        %v6962 = vunpack.c.l.b16 %v6840
        %v6963 = vunpack.c.l.b16 %v6841
        %v6964 = vunpack.c.l.b16 %v6842
        %v6965 = vunpack.c.l.b16 %v6843
        %v6966 = vunpack.c.l.b16 %v6844
        %v6967 = vunpack.c.l.b16 %v6845
        %v6968 = vunpack.c.l.b16 %v6846
        %v6969 = vunpack.c.l.b16 %v6847
        %v6970 = vunpack.c.l.b16 %v6848
        %v6971 = vunpack.c.l.b16 %v6849
        %v6972 = vunpack.c.l.b16 %v6850
        %v6973 = vunpack.c.l.b16 %v6851
        %v6974 = vunpack.c.l.b16 %v6852
        %v6975 = vunpack.c.l.b16 %v6853
        %v6976 = vunpack.c.l.b16 %v6854
        %v6977 = vunpack.c.l.b16 %v6855
        %v6978 = vunpack.c.l.b16 %v6856
        %v6979 = vunpack.c.l.b16 %v6857
        %v6980 = vunpack.c.l.b16 %v6858
        %v6981 = vunpack.c.l.b16 %v6859
        %v6982 = vunpack.c.l.b16 %v6860
        %v6983 = vunpack.c.l.b16 %v6861
        %v6984 = vunpack.c.l.b16 %v6862
        %v6985 = vpack.c.b16 %v6961, %v6960
        %v6986 = vpack.c.b16 %v6963, %v6962
        %v6987 = vpack.c.b16 %v6965, %v6964
        %v6988 = vpack.c.b16 %v6967, %v6966
        %v6989 = vpack.c.b16 %v6969, %v6968
        %v6990 = vpack.c.b16 %v6971, %v6970
        %v6991 = vpack.c.b16 %v6973, %v6972
        %v6992 = vpack.c.b16 %v6975, %v6974
        %v6993 = vpack.c.b16 %v6977, %v6976
        %v6994 = vpack.c.b16 %v6979, %v6978
        %v6995 = vpack.c.b16 %v6981, %v6980
        %v6996 = vpack.c.b16 %v6983, %v6982
        %v6997 = vpack.c.b16 %v6984, %v6984
        %v7011 = vsel %vm6039, %v6912, 0
        %v7014 = vsel %vm6039, %v6914, 0
        %v7017 = vsel %vm6039, %v6916, 0
        %v7020 = vsel %vm6039, %v6918, 0
        %v7023 = vsel %vm6039, %v6920, 0
        %v7026 = vsel %vm6039, %v6922, 0
        %v7029 = vsel %vm6039, %v6924, 0
        %v7032 = vsel %vm6039, %v6926, 0
        %vm7034 = vcmask 1041408
        %v7036 = vsel %vm7034, %v6997, 0
        %7038 = vmatpush.bf16.msra.mxu0 %v6992
        %7039 = vmatpush.bf16.msra.mxu0 %v6991
        %7040 = vmatpush.bf16.msra.mxu0 %v6990
        %7041 = vmatpush.bf16.msra.mxu0 %v6989
        %7042 = vmatpush.bf16.msra.mxu0 %v6988
        %7043 = vmatpush.bf16.msra.mxu0 %v6987
        %7044 = vmatpush.bf16.msra.mxu0 %v6986
        %7045 = vmatpush.bf16.msra.mxu0 %v6985
        %7046 = vmatmul.bf16.gmra.mxu0 %v6911
        %v7047 = vpop.f32.mrf.mxu0
        %v7048 = vadd.f32 0.0, %v7047
        %v7049 = vpop.f32.mrf.mxu0
        %v7050 = vadd.f32 0.0, %v7049
        %7051 = vmatmul.bf16.gmra.mxu0 %v6913
        %v7052 = vpop.f32.mrf.mxu0
        %v7053 = vadd.f32 0.0, %v7052
        %v7054 = vpop.f32.mrf.mxu0
        %v7055 = vadd.f32 0.0, %v7054
        %7056 = vmatmul.bf16.gmra.mxu0 %v6915
        %v7057 = vpop.f32.mrf.mxu0
        %v7058 = vadd.f32 0.0, %v7057
        %v7059 = vpop.f32.mrf.mxu0
        %v7060 = vadd.f32 0.0, %v7059
        %7061 = vmatmul.bf16.gmra.mxu0 %v6917
        %v7062 = vpop.f32.mrf.mxu0
        %v7063 = vadd.f32 0.0, %v7062
        %v7064 = vpop.f32.mrf.mxu0
        %v7065 = vadd.f32 0.0, %v7064
        %7066 = vmatmul.bf16.gmra.mxu0 %v6919
        %v7067 = vpop.f32.mrf.mxu0
        %v7068 = vadd.f32 0.0, %v7067
        %v7069 = vpop.f32.mrf.mxu0
        %v7070 = vadd.f32 0.0, %v7069
        %7071 = vmatmul.bf16.gmra.mxu0 %v6921
        %v7072 = vpop.f32.mrf.mxu0
        %v7073 = vadd.f32 0.0, %v7072
        %v7074 = vpop.f32.mrf.mxu0
        %v7075 = vadd.f32 0.0, %v7074
        %7076 = vmatmul.bf16.gmra.mxu0 %v6923
        %v7077 = vpop.f32.mrf.mxu0
        %v7078 = vadd.f32 0.0, %v7077
        %v7079 = vpop.f32.mrf.mxu0
        %v7080 = vadd.f32 0.0, %v7079
        %7081 = vmatmul.bf16.gmra.mxu0 %v6925
        %v7082 = vpop.f32.mrf.mxu0
        %v7083 = vadd.f32 0.0, %v7082
        %v7084 = vpop.f32.mrf.mxu0
        %v7085 = vadd.f32 0.0, %v7084
        %7086 = vdwg.mxu0
        %7087 = vmatpush.bf16.msra.mxu0 0
        %7088 = vmatpush.bf16.msra.mxu0 0
        %7089 = vmatpush.bf16.msra.mxu0 0
        %7090 = vmatpush.bf16.msra.mxu0 %v7036
        %7091 = vmatpush.bf16.msra.mxu0 %v6996
        %7092 = vmatpush.bf16.msra.mxu0 %v6995
        %7093 = vmatpush.bf16.msra.mxu0 %v6994
        %7094 = vmatpush.bf16.msra.mxu0 %v6993
        %7095 = vmatmul.bf16.gmra.mxu0 %v7011
        %v7096 = vpop.f32.mrf.mxu0
        %v7097 = vadd.f32 %v7048, %v7096
        %v7098 = vpop.f32.mrf.mxu0
        %v7099 = vadd.f32 %v7050, %v7098
        %7100 = vmatmul.bf16.gmra.mxu0 %v7014
        %v7101 = vpop.f32.mrf.mxu0
        %v7102 = vadd.f32 %v7053, %v7101
        %v7103 = vpop.f32.mrf.mxu0
        %v7104 = vadd.f32 %v7055, %v7103
        %7105 = vmatmul.bf16.gmra.mxu0 %v7017
        %v7106 = vpop.f32.mrf.mxu0
        %v7107 = vadd.f32 %v7058, %v7106
        %v7108 = vpop.f32.mrf.mxu0
        %v7109 = vadd.f32 %v7060, %v7108
        %7110 = vmatmul.bf16.gmra.mxu0 %v7020
        %v7111 = vpop.f32.mrf.mxu0
        %v7112 = vadd.f32 %v7063, %v7111
        %v7113 = vpop.f32.mrf.mxu0
        %v7114 = vadd.f32 %v7065, %v7113
        %7115 = vmatmul.bf16.gmra.mxu0 %v7023
        %v7116 = vpop.f32.mrf.mxu0
        %v7117 = vadd.f32 %v7068, %v7116
        %v7118 = vpop.f32.mrf.mxu0
        %v7119 = vadd.f32 %v7070, %v7118
        %7120 = vmatmul.bf16.gmra.mxu0 %v7026
        %v7121 = vpop.f32.mrf.mxu0
        %v7122 = vadd.f32 %v7073, %v7121
        %v7123 = vpop.f32.mrf.mxu0
        %v7124 = vadd.f32 %v7075, %v7123
        %7125 = vmatmul.bf16.gmra.mxu0 %v7029
        %v7126 = vpop.f32.mrf.mxu0
        %v7127 = vadd.f32 %v7078, %v7126
        %v7128 = vpop.f32.mrf.mxu0
        %v7129 = vadd.f32 %v7080, %v7128
        %7130 = vmatmul.bf16.gmra.mxu0 %v7032
        %v7131 = vpop.f32.mrf.mxu0
        %v7132 = vadd.f32 %v7083, %v7131
        %v7133 = vpop.f32.mrf.mxu0
        %v7134 = vadd.f32 %v7085, %v7133
        %7135 = vdwg.mxu0
        %v7138 = vunpack.c.l.b16 %v6742
        %v7139 = vunpack.c.h.b16 %v6742
        %v7140 = vunpack.c.l.b16 %v6743
        %v7141 = vunpack.c.h.b16 %v6743
        %v7142 = vpack.c.b16 %v7140, %v7138
        %v7143 = vpack.c.b16 %v7141, %v7139
        %v7170 = vunpack.c.l.b16 %v6758
        %v7171 = vunpack.c.l.b16 %v6759
        %v7172 = vunpack.c.l.b16 %v6760
        %v7173 = vunpack.c.l.b16 %v6761
        %v7174 = vunpack.c.l.b16 %v6762
        %v7175 = vunpack.c.l.b16 %v6763
        %v7176 = vunpack.c.l.b16 %v6764
        %v7177 = vunpack.c.l.b16 %v6765
        %v7178 = vunpack.c.l.b16 %v6766
        %v7179 = vunpack.c.l.b16 %v6767
        %v7180 = vunpack.c.l.b16 %v6768
        %v7181 = vunpack.c.l.b16 %v6769
        %v7182 = vunpack.c.l.b16 %v6770
        %v7183 = vunpack.c.l.b16 %v6771
        %v7184 = vunpack.c.l.b16 %v6772
        %v7185 = vunpack.c.l.b16 %v6773
        %v7186 = vunpack.c.l.b16 %v6774
        %v7187 = vunpack.c.l.b16 %v6775
        %v7188 = vunpack.c.l.b16 %v6776
        %v7189 = vunpack.c.l.b16 %v6777
        %v7190 = vunpack.c.l.b16 %v6778
        %v7191 = vunpack.c.l.b16 %v6779
        %v7192 = vunpack.c.l.b16 %v6780
        %v7193 = vunpack.c.l.b16 %v6781
        %v7194 = vunpack.c.l.b16 %v6782
        %v7195 = vpack.c.b16 %v7171, %v7170
        %v7196 = vpack.c.b16 %v7173, %v7172
        %v7197 = vpack.c.b16 %v7175, %v7174
        %v7198 = vpack.c.b16 %v7177, %v7176
        %v7199 = vpack.c.b16 %v7179, %v7178
        %v7200 = vpack.c.b16 %v7181, %v7180
        %v7201 = vpack.c.b16 %v7183, %v7182
        %v7202 = vpack.c.b16 %v7185, %v7184
        %v7203 = vpack.c.b16 %v7187, %v7186
        %v7204 = vpack.c.b16 %v7189, %v7188
        %v7205 = vpack.c.b16 %v7191, %v7190
        %v7206 = vpack.c.b16 %v7193, %v7192
        %v7207 = vpack.c.b16 %v7194, %v7194
        %v7221 = vsel %vm6039, %v7143, 0
        %v7224 = vsel %vm7034, %v7207, 0
        %7226 = vmatpush.bf16.msra.mxu0 %v7202
        %7227 = vmatpush.bf16.msra.mxu0 %v7201
        %7228 = vmatpush.bf16.msra.mxu0 %v7200
        %7229 = vmatpush.bf16.msra.mxu0 %v7199
        %7230 = vmatpush.bf16.msra.mxu0 %v7198
        %7231 = vmatpush.bf16.msra.mxu0 %v7197
        %7232 = vmatpush.bf16.msra.mxu0 %v7196
        %7233 = vmatpush.bf16.msra.mxu0 %v7195
        %7234 = vmatmul.bf16.gmra.mxu0 %v7142
        %v7235 = vpop.f32.mrf.mxu0
        %v7236 = vadd.f32 %v7097, %v7235
        %v7237 = vpop.f32.mrf.mxu0
        %v7238 = vadd.f32 %v7099, %v7237
        %7239 = vmatmul.bf16.gmra.mxu0 %v6911
        %v7240 = vpop.f32.mrf.mxu0
        %v7241 = vadd.f32 %v7102, %v7240
        %v7242 = vpop.f32.mrf.mxu0
        %v7243 = vadd.f32 %v7104, %v7242
        %7244 = vmatmul.bf16.gmra.mxu0 %v6913
        %v7245 = vpop.f32.mrf.mxu0
        %v7246 = vadd.f32 %v7107, %v7245
        %v7247 = vpop.f32.mrf.mxu0
        %v7248 = vadd.f32 %v7109, %v7247
        %7249 = vmatmul.bf16.gmra.mxu0 %v6915
        %v7250 = vpop.f32.mrf.mxu0
        %v7251 = vadd.f32 %v7112, %v7250
        %v7252 = vpop.f32.mrf.mxu0
        %v7253 = vadd.f32 %v7114, %v7252
        %7254 = vmatmul.bf16.gmra.mxu0 %v6917
        %v7255 = vpop.f32.mrf.mxu0
        %v7256 = vadd.f32 %v7117, %v7255
        %v7257 = vpop.f32.mrf.mxu0
        %v7258 = vadd.f32 %v7119, %v7257
        %7259 = vmatmul.bf16.gmra.mxu0 %v6919
        %v7260 = vpop.f32.mrf.mxu0
        %v7261 = vadd.f32 %v7122, %v7260
        %v7262 = vpop.f32.mrf.mxu0
        %v7263 = vadd.f32 %v7124, %v7262
        %7264 = vmatmul.bf16.gmra.mxu0 %v6921
        %v7265 = vpop.f32.mrf.mxu0
        %v7266 = vadd.f32 %v7127, %v7265
        %v7267 = vpop.f32.mrf.mxu0
        %v7268 = vadd.f32 %v7129, %v7267
        %7269 = vmatmul.bf16.gmra.mxu0 %v6923
        %v7270 = vpop.f32.mrf.mxu0
        %v7271 = vadd.f32 %v7132, %v7270
        %v7272 = vpop.f32.mrf.mxu0
        %v7273 = vadd.f32 %v7134, %v7272
        %7274 = vdwg.mxu0
        %7275 = vmatpush.bf16.msra.mxu0 0
        %7276 = vmatpush.bf16.msra.mxu0 0
        %7277 = vmatpush.bf16.msra.mxu0 0
        %7278 = vmatpush.bf16.msra.mxu0 %v7224
        %7279 = vmatpush.bf16.msra.mxu0 %v7206
        %7280 = vmatpush.bf16.msra.mxu0 %v7205
        %7281 = vmatpush.bf16.msra.mxu0 %v7204
        %7282 = vmatpush.bf16.msra.mxu0 %v7203
        %7283 = vmatmul.bf16.gmra.mxu0 %v7221
        %v7284 = vpop.f32.mrf.mxu0
        %v7285 = vadd.f32 %v7236, %v7284
        %v7286 = vpop.f32.mrf.mxu0
        %v7287 = vadd.f32 %v7238, %v7286
        %7288 = vmatmul.bf16.gmra.mxu0 %v7011
        %v7289 = vpop.f32.mrf.mxu0
        %v7290 = vadd.f32 %v7241, %v7289
        %v7291 = vpop.f32.mrf.mxu0
        %v7292 = vadd.f32 %v7243, %v7291
        %7293 = vmatmul.bf16.gmra.mxu0 %v7014
        %v7294 = vpop.f32.mrf.mxu0
        %v7295 = vadd.f32 %v7246, %v7294
        %v7296 = vpop.f32.mrf.mxu0
        %v7297 = vadd.f32 %v7248, %v7296
        %7298 = vmatmul.bf16.gmra.mxu0 %v7017
        %v7299 = vpop.f32.mrf.mxu0
        %v7300 = vadd.f32 %v7251, %v7299
        %v7301 = vpop.f32.mrf.mxu0
        %v7302 = vadd.f32 %v7253, %v7301
        %7303 = vmatmul.bf16.gmra.mxu0 %v7020
        %v7304 = vpop.f32.mrf.mxu0
        %v7305 = vadd.f32 %v7256, %v7304
        %v7306 = vpop.f32.mrf.mxu0
        %v7307 = vadd.f32 %v7258, %v7306
        %7308 = vmatmul.bf16.gmra.mxu0 %v7023
        %v7309 = vpop.f32.mrf.mxu0
        %v7310 = vadd.f32 %v7261, %v7309
        %v7311 = vpop.f32.mrf.mxu0
        %v7312 = vadd.f32 %v7263, %v7311
        %7313 = vmatmul.bf16.gmra.mxu0 %v7026
        %v7314 = vpop.f32.mrf.mxu0
        %v7315 = vadd.f32 %v7266, %v7314
        %v7316 = vpop.f32.mrf.mxu0
        %v7317 = vadd.f32 %v7268, %v7316
        %7318 = vmatmul.bf16.gmra.mxu0 %v7029
        %v7319 = vpop.f32.mrf.mxu0
        %v7320 = vadd.f32 %v7271, %v7319
        %v7321 = vpop.f32.mrf.mxu0
        %v7322 = vadd.f32 %v7273, %v7321
        %7323 = vdwg.mxu0
        %s7324 = scalar_lea.vmem %s3, 400
        %v7325 = vld [vmem:[%s7324] sm:$0xf]
        %v7326 = vld [vmem:[%s7324 + $0x4] sm:$0xf]
        %v7327 = vld [vmem:[%s7324 + $0x8] sm:$0xf]
        %v7328 = vld [vmem:[%s7324 + $0xc] sm:$0xf]
        %v7329 = vld [vmem:[%s7324 + $0x10] sm:$0xf]
        %v7330 = vld [vmem:[%s7324 + $0x14] sm:$0xf]
        %v7331 = vld [vmem:[%s7324 + $0x18] sm:$0xf]
        %v7332 = vld [vmem:[%s7324 + $0x1c] sm:$0xf]
        %v7333 = vld [vmem:[%s7324 + $0x20] sm:$0xf]
        %v7334 = vld [vmem:[%s7324 + $0x24] sm:$0xf]
        %v7335 = vld [vmem:[%s7324 + $0x28] sm:$0xf]
        %v7336 = vld [vmem:[%s7324 + $0x2c] sm:$0xf]
        %v7337 = vld [vmem:[%s7324 + $0x30] sm:$0xf]
        %v7338 = vld [vmem:[%s7324 + $0x34] sm:$0xf]
        %v7339 = vld [vmem:[%s7324 + $0x38] sm:$0xf]
        %v7340 = vld [vmem:[%s7324 + $0x3c] sm:$0xf]
        %v7341 = vld [vmem:[%s7324 + $0x40] sm:$0xf]
        %v7342 = vld [vmem:[%s7324 + $0x44] sm:$0xf]
        %v7343 = vld [vmem:[%s7324 + $0x48] sm:$0xf]
        %v7344 = vld [vmem:[%s7324 + $0x4c] sm:$0xf]
        %v7345 = vld [vmem:[%s7324 + $0x50] sm:$0xf]
        %v7346 = vld [vmem:[%s7324 + $0x54] sm:$0xf]
        %v7347 = vld [vmem:[%s7324 + $0x58] sm:$0xf]
        %v7348 = vld [vmem:[%s7324 + $0x5c] sm:$0xf]
        %v7349 = vld [vmem:[%s7324 + $0x60] sm:$0x3]
        %v7375 = vunpack.c.l.b16 %v7325
        %v7376 = vunpack.c.l.b16 %v7326
        %v7377 = vunpack.c.l.b16 %v7327
        %v7378 = vunpack.c.l.b16 %v7328
        %v7379 = vunpack.c.l.b16 %v7329
        %v7380 = vunpack.c.l.b16 %v7330
        %v7381 = vunpack.c.l.b16 %v7331
        %v7382 = vunpack.c.l.b16 %v7332
        %v7383 = vunpack.c.l.b16 %v7333
        %v7384 = vunpack.c.l.b16 %v7334
        %v7385 = vunpack.c.l.b16 %v7335
        %v7386 = vunpack.c.l.b16 %v7336
        %v7387 = vunpack.c.l.b16 %v7337
        %v7388 = vunpack.c.l.b16 %v7338
        %v7389 = vunpack.c.l.b16 %v7339
        %v7390 = vunpack.c.l.b16 %v7340
        %v7391 = vunpack.c.l.b16 %v7341
        %v7392 = vunpack.c.l.b16 %v7342
        %v7393 = vunpack.c.l.b16 %v7343
        %v7394 = vunpack.c.l.b16 %v7344
        %v7395 = vunpack.c.l.b16 %v7345
        %v7396 = vunpack.c.l.b16 %v7346
        %v7397 = vunpack.c.l.b16 %v7347
        %v7398 = vunpack.c.l.b16 %v7348
        %v7399 = vunpack.c.l.b16 %v7349
        %v7400 = vpack.c.b16 %v7376, %v7375
        %v7401 = vpack.c.b16 %v7378, %v7377
        %v7402 = vpack.c.b16 %v7380, %v7379
        %v7403 = vpack.c.b16 %v7382, %v7381
        %v7404 = vpack.c.b16 %v7384, %v7383
        %v7405 = vpack.c.b16 %v7386, %v7385
        %v7406 = vpack.c.b16 %v7388, %v7387
        %v7407 = vpack.c.b16 %v7390, %v7389
        %v7408 = vpack.c.b16 %v7392, %v7391
        %v7409 = vpack.c.b16 %v7394, %v7393
        %v7410 = vpack.c.b16 %v7396, %v7395
        %v7411 = vpack.c.b16 %v7398, %v7397
        %v7412 = vpack.c.b16 %v7399, %v7399
        %v7426 = vsel %vm7034, %v7412, 0
        %7428 = vmatpush.bf16.msra.mxu0 %v7407
        %7429 = vmatpush.bf16.msra.mxu0 %v7406
        %7430 = vmatpush.bf16.msra.mxu0 %v7405
        %7431 = vmatpush.bf16.msra.mxu0 %v7404
        %7432 = vmatpush.bf16.msra.mxu0 %v7403
        %7433 = vmatpush.bf16.msra.mxu0 %v7402
        %7434 = vmatpush.bf16.msra.mxu0 %v7401
        %7435 = vmatpush.bf16.msra.mxu0 %v7400
        %7436 = vmatmul.bf16.gmra.mxu0 %v6911
        %v7437 = vpop.f32.mrf.mxu0
        %v7438 = vadd.f32 0.0, %v7437
        %v7439 = vpop.f32.mrf.mxu0
        %v7440 = vadd.f32 0.0, %v7439
        %7441 = vmatmul.bf16.gmra.mxu0 %v6913
        %v7442 = vpop.f32.mrf.mxu0
        %v7443 = vadd.f32 0.0, %v7442
        %v7444 = vpop.f32.mrf.mxu0
        %v7445 = vadd.f32 0.0, %v7444
        %7446 = vmatmul.bf16.gmra.mxu0 %v6915
        %v7447 = vpop.f32.mrf.mxu0
        %v7448 = vadd.f32 0.0, %v7447
        %v7449 = vpop.f32.mrf.mxu0
        %v7450 = vadd.f32 0.0, %v7449
        %7451 = vmatmul.bf16.gmra.mxu0 %v6917
        %v7452 = vpop.f32.mrf.mxu0
        %v7453 = vadd.f32 0.0, %v7452
        %v7454 = vpop.f32.mrf.mxu0
        %v7455 = vadd.f32 0.0, %v7454
        %7456 = vmatmul.bf16.gmra.mxu0 %v6919
        %v7457 = vpop.f32.mrf.mxu0
        %v7458 = vadd.f32 0.0, %v7457
        %v7459 = vpop.f32.mrf.mxu0
        %v7460 = vadd.f32 0.0, %v7459
        %7461 = vmatmul.bf16.gmra.mxu0 %v6921
        %v7462 = vpop.f32.mrf.mxu0
        %v7463 = vadd.f32 0.0, %v7462
        %v7464 = vpop.f32.mrf.mxu0
        %v7465 = vadd.f32 0.0, %v7464
        %7466 = vmatmul.bf16.gmra.mxu0 %v6923
        %v7467 = vpop.f32.mrf.mxu0
        %v7468 = vadd.f32 0.0, %v7467
        %v7469 = vpop.f32.mrf.mxu0
        %v7470 = vadd.f32 0.0, %v7469
        %7471 = vmatmul.bf16.gmra.mxu0 %v6925
        %v7472 = vpop.f32.mrf.mxu0
        %v7473 = vadd.f32 0.0, %v7472
        %v7474 = vpop.f32.mrf.mxu0
        %v7475 = vadd.f32 0.0, %v7474
        %7476 = vdwg.mxu0
        %7477 = vmatpush.bf16.msra.mxu0 0
        %7478 = vmatpush.bf16.msra.mxu0 0
        %7479 = vmatpush.bf16.msra.mxu0 0
        %7480 = vmatpush.bf16.msra.mxu0 %v7426
        %7481 = vmatpush.bf16.msra.mxu0 %v7411
        %7482 = vmatpush.bf16.msra.mxu0 %v7410
        %7483 = vmatpush.bf16.msra.mxu0 %v7409
        %7484 = vmatpush.bf16.msra.mxu0 %v7408
        %7485 = vmatmul.bf16.gmra.mxu0 %v7011
        %v7486 = vpop.f32.mrf.mxu0
        %v7487 = vadd.f32 %v7438, %v7486
        %v7488 = vpop.f32.mrf.mxu0
        %v7489 = vadd.f32 %v7440, %v7488
        %7490 = vmatmul.bf16.gmra.mxu0 %v7014
        %v7491 = vpop.f32.mrf.mxu0
        %v7492 = vadd.f32 %v7443, %v7491
        %v7493 = vpop.f32.mrf.mxu0
        %v7494 = vadd.f32 %v7445, %v7493
        %7495 = vmatmul.bf16.gmra.mxu0 %v7017
        %v7496 = vpop.f32.mrf.mxu0
        %v7497 = vadd.f32 %v7448, %v7496
        %v7498 = vpop.f32.mrf.mxu0
        %v7499 = vadd.f32 %v7450, %v7498
        %7500 = vmatmul.bf16.gmra.mxu0 %v7020
        %v7501 = vpop.f32.mrf.mxu0
        %v7502 = vadd.f32 %v7453, %v7501
        %v7503 = vpop.f32.mrf.mxu0
        %v7504 = vadd.f32 %v7455, %v7503
        %7505 = vmatmul.bf16.gmra.mxu0 %v7023
        %v7506 = vpop.f32.mrf.mxu0
        %v7507 = vadd.f32 %v7458, %v7506
        %v7508 = vpop.f32.mrf.mxu0
        %v7509 = vadd.f32 %v7460, %v7508
        %7510 = vmatmul.bf16.gmra.mxu0 %v7026
        %v7511 = vpop.f32.mrf.mxu0
        %v7512 = vadd.f32 %v7463, %v7511
        %v7513 = vpop.f32.mrf.mxu0
        %v7514 = vadd.f32 %v7465, %v7513
        %7515 = vmatmul.bf16.gmra.mxu0 %v7029
        %v7516 = vpop.f32.mrf.mxu0
        %v7517 = vadd.f32 %v7468, %v7516
        %v7518 = vpop.f32.mrf.mxu0
        %v7519 = vadd.f32 %v7470, %v7518
        %7520 = vmatmul.bf16.gmra.mxu0 %v7032
        %v7521 = vpop.f32.mrf.mxu0
        %v7522 = vadd.f32 %v7473, %v7521
        %v7523 = vpop.f32.mrf.mxu0
        %v7524 = vadd.f32 %v7475, %v7523
        %7525 = vdwg.mxu0
        %v7551 = vunpack.c.l.b16 %v6784
        %v7552 = vunpack.c.l.b16 %v6785
        %v7553 = vunpack.c.l.b16 %v6786
        %v7554 = vunpack.c.l.b16 %v6787
        %v7555 = vunpack.c.l.b16 %v6788
        %v7556 = vunpack.c.l.b16 %v6789
        %v7557 = vunpack.c.l.b16 %v6790
        %v7558 = vunpack.c.l.b16 %v6791
        %v7559 = vunpack.c.l.b16 %v6792
        %v7560 = vunpack.c.l.b16 %v6793
        %v7561 = vunpack.c.l.b16 %v6794
        %v7562 = vunpack.c.l.b16 %v6795
        %v7563 = vunpack.c.l.b16 %v6796
        %v7564 = vunpack.c.l.b16 %v6797
        %v7565 = vunpack.c.l.b16 %v6798
        %v7566 = vunpack.c.l.b16 %v6799
        %v7567 = vunpack.c.l.b16 %v6800
        %v7568 = vunpack.c.l.b16 %v6801
        %v7569 = vunpack.c.l.b16 %v6802
        %v7570 = vunpack.c.l.b16 %v6803
        %v7571 = vunpack.c.l.b16 %v6804
        %v7572 = vunpack.c.l.b16 %v6805
        %v7573 = vunpack.c.l.b16 %v6806
        %v7574 = vunpack.c.l.b16 %v6807
        %v7575 = vunpack.c.l.b16 %v6808
        %v7576 = vpack.c.b16 %v7552, %v7551
        %v7577 = vpack.c.b16 %v7554, %v7553
        %v7578 = vpack.c.b16 %v7556, %v7555
        %v7579 = vpack.c.b16 %v7558, %v7557
        %v7580 = vpack.c.b16 %v7560, %v7559
        %v7581 = vpack.c.b16 %v7562, %v7561
        %v7582 = vpack.c.b16 %v7564, %v7563
        %v7583 = vpack.c.b16 %v7566, %v7565
        %v7584 = vpack.c.b16 %v7568, %v7567
        %v7585 = vpack.c.b16 %v7570, %v7569
        %v7586 = vpack.c.b16 %v7572, %v7571
        %v7587 = vpack.c.b16 %v7574, %v7573
        %v7588 = vpack.c.b16 %v7575, %v7575
        %v7602 = vsel %vm7034, %v7588, 0
        %7604 = vmatpush.bf16.msra.mxu0 %v7583
        %7605 = vmatpush.bf16.msra.mxu0 %v7582
        %7606 = vmatpush.bf16.msra.mxu0 %v7581
        %7607 = vmatpush.bf16.msra.mxu0 %v7580
        %7608 = vmatpush.bf16.msra.mxu0 %v7579
        %7609 = vmatpush.bf16.msra.mxu0 %v7578
        %7610 = vmatpush.bf16.msra.mxu0 %v7577
        %7611 = vmatpush.bf16.msra.mxu0 %v7576
        %7612 = vmatmul.bf16.gmra.mxu0 %v7142
        %v7613 = vpop.f32.mrf.mxu0
        %v7614 = vadd.f32 %v7487, %v7613
        %v7615 = vpop.f32.mrf.mxu0
        %v7616 = vadd.f32 %v7489, %v7615
        %7617 = vmatmul.bf16.gmra.mxu0 %v6911
        %v7618 = vpop.f32.mrf.mxu0
        %v7619 = vadd.f32 %v7492, %v7618
        %v7620 = vpop.f32.mrf.mxu0
        %v7621 = vadd.f32 %v7494, %v7620
        %7622 = vmatmul.bf16.gmra.mxu0 %v6913
        %v7623 = vpop.f32.mrf.mxu0
        %v7624 = vadd.f32 %v7497, %v7623
        %v7625 = vpop.f32.mrf.mxu0
        %v7626 = vadd.f32 %v7499, %v7625
        %7627 = vmatmul.bf16.gmra.mxu0 %v6915
        %v7628 = vpop.f32.mrf.mxu0
        %v7629 = vadd.f32 %v7502, %v7628
        %v7630 = vpop.f32.mrf.mxu0
        %v7631 = vadd.f32 %v7504, %v7630
        %7632 = vmatmul.bf16.gmra.mxu0 %v6917
        %v7633 = vpop.f32.mrf.mxu0
        %v7634 = vadd.f32 %v7507, %v7633
        %v7635 = vpop.f32.mrf.mxu0
        %v7636 = vadd.f32 %v7509, %v7635
        %7637 = vmatmul.bf16.gmra.mxu0 %v6919
        %v7638 = vpop.f32.mrf.mxu0
        %v7639 = vadd.f32 %v7512, %v7638
        %v7640 = vpop.f32.mrf.mxu0
        %v7641 = vadd.f32 %v7514, %v7640
        %7642 = vmatmul.bf16.gmra.mxu0 %v6921
        %v7643 = vpop.f32.mrf.mxu0
        %v7644 = vadd.f32 %v7517, %v7643
        %v7645 = vpop.f32.mrf.mxu0
        %v7646 = vadd.f32 %v7519, %v7645
        %7647 = vmatmul.bf16.gmra.mxu0 %v6923
        %v7648 = vpop.f32.mrf.mxu0
        %v7649 = vadd.f32 %v7522, %v7648
        %v7650 = vpop.f32.mrf.mxu0
        %v7651 = vadd.f32 %v7524, %v7650
        %7652 = vdwg.mxu0
        %7653 = vmatpush.bf16.msra.mxu0 0
        %7654 = vmatpush.bf16.msra.mxu0 0
        %7655 = vmatpush.bf16.msra.mxu0 0
        %7656 = vmatpush.bf16.msra.mxu0 %v7602
        %7657 = vmatpush.bf16.msra.mxu0 %v7587
        %7658 = vmatpush.bf16.msra.mxu0 %v7586
        %7659 = vmatpush.bf16.msra.mxu0 %v7585
        %7660 = vmatpush.bf16.msra.mxu0 %v7584
        %7661 = vmatmul.bf16.gmra.mxu0 %v7221
        %v7662 = vpop.f32.mrf.mxu0
        %v7663 = vadd.f32 %v7614, %v7662
        %v7664 = vpop.f32.mrf.mxu0
        %v7665 = vadd.f32 %v7616, %v7664
        %7666 = vmatmul.bf16.gmra.mxu0 %v7011
        %v7667 = vpop.f32.mrf.mxu0
        %v7668 = vadd.f32 %v7619, %v7667
        %v7669 = vpop.f32.mrf.mxu0
        %v7670 = vadd.f32 %v7621, %v7669
        %7671 = vmatmul.bf16.gmra.mxu0 %v7014
        %v7672 = vpop.f32.mrf.mxu0
        %v7673 = vadd.f32 %v7624, %v7672
        %v7674 = vpop.f32.mrf.mxu0
        %v7675 = vadd.f32 %v7626, %v7674
        %7676 = vmatmul.bf16.gmra.mxu0 %v7017
        %v7677 = vpop.f32.mrf.mxu0
        %v7678 = vadd.f32 %v7629, %v7677
        %v7679 = vpop.f32.mrf.mxu0
        %v7680 = vadd.f32 %v7631, %v7679
        %7681 = vmatmul.bf16.gmra.mxu0 %v7020
        %v7682 = vpop.f32.mrf.mxu0
        %v7683 = vadd.f32 %v7634, %v7682
        %v7684 = vpop.f32.mrf.mxu0
        %v7685 = vadd.f32 %v7636, %v7684
        %7686 = vmatmul.bf16.gmra.mxu0 %v7023
        %v7687 = vpop.f32.mrf.mxu0
        %v7688 = vadd.f32 %v7639, %v7687
        %v7689 = vpop.f32.mrf.mxu0
        %v7690 = vadd.f32 %v7641, %v7689
        %7691 = vmatmul.bf16.gmra.mxu0 %v7026
        %v7692 = vpop.f32.mrf.mxu0
        %v7693 = vadd.f32 %v7644, %v7692
        %v7694 = vpop.f32.mrf.mxu0
        %v7695 = vadd.f32 %v7646, %v7694
        %7696 = vmatmul.bf16.gmra.mxu0 %v7029
        %v7697 = vpop.f32.mrf.mxu0
        %v7698 = vadd.f32 %v7649, %v7697
        %v7699 = vpop.f32.mrf.mxu0
        %v7700 = vadd.f32 %v7651, %v7699
        %7701 = vdwg.mxu0
        %s7702 = scalar_lea.vmem %s3, 500
        %v7703 = vld [vmem:[%s7702] sm:$0xf]
        %v7704 = vld [vmem:[%s7702 + $0x4] sm:$0xf]
        %v7705 = vld [vmem:[%s7702 + $0x8] sm:$0xf]
        %v7706 = vld [vmem:[%s7702 + $0xc] sm:$0xf]
        %v7707 = vld [vmem:[%s7702 + $0x10] sm:$0xf]
        %v7708 = vld [vmem:[%s7702 + $0x14] sm:$0xf]
        %v7709 = vld [vmem:[%s7702 + $0x18] sm:$0xf]
        %v7710 = vld [vmem:[%s7702 + $0x1c] sm:$0xf]
        %v7711 = vld [vmem:[%s7702 + $0x20] sm:$0xf]
        %v7712 = vld [vmem:[%s7702 + $0x24] sm:$0xf]
        %v7713 = vld [vmem:[%s7702 + $0x28] sm:$0xf]
        %v7714 = vld [vmem:[%s7702 + $0x2c] sm:$0xf]
        %v7715 = vld [vmem:[%s7702 + $0x30] sm:$0xf]
        %v7716 = vld [vmem:[%s7702 + $0x34] sm:$0xf]
        %v7717 = vld [vmem:[%s7702 + $0x38] sm:$0xf]
        %v7718 = vld [vmem:[%s7702 + $0x3c] sm:$0xf]
        %v7719 = vld [vmem:[%s7702 + $0x40] sm:$0xf]
        %v7720 = vld [vmem:[%s7702 + $0x44] sm:$0xf]
        %v7721 = vld [vmem:[%s7702 + $0x48] sm:$0xf]
        %v7722 = vld [vmem:[%s7702 + $0x4c] sm:$0xf]
        %v7723 = vld [vmem:[%s7702 + $0x50] sm:$0xf]
        %v7724 = vld [vmem:[%s7702 + $0x54] sm:$0xf]
        %v7725 = vld [vmem:[%s7702 + $0x58] sm:$0xf]
        %v7726 = vld [vmem:[%s7702 + $0x5c] sm:$0xf]
        %v7727 = vld [vmem:[%s7702 + $0x60] sm:$0x3]
        %v7753 = vunpack.c.l.b16 %v7703
        %v7754 = vunpack.c.l.b16 %v7704
        %v7755 = vunpack.c.l.b16 %v7705
        %v7756 = vunpack.c.l.b16 %v7706
        %v7757 = vunpack.c.l.b16 %v7707
        %v7758 = vunpack.c.l.b16 %v7708
        %v7759 = vunpack.c.l.b16 %v7709
        %v7760 = vunpack.c.l.b16 %v7710
        %v7761 = vunpack.c.l.b16 %v7711
        %v7762 = vunpack.c.l.b16 %v7712
        %v7763 = vunpack.c.l.b16 %v7713
        %v7764 = vunpack.c.l.b16 %v7714
        %v7765 = vunpack.c.l.b16 %v7715
        %v7766 = vunpack.c.l.b16 %v7716
        %v7767 = vunpack.c.l.b16 %v7717
        %v7768 = vunpack.c.l.b16 %v7718
        %v7769 = vunpack.c.l.b16 %v7719
        %v7770 = vunpack.c.l.b16 %v7720
        %v7771 = vunpack.c.l.b16 %v7721
        %v7772 = vunpack.c.l.b16 %v7722
        %v7773 = vunpack.c.l.b16 %v7723
        %v7774 = vunpack.c.l.b16 %v7724
        %v7775 = vunpack.c.l.b16 %v7725
        %v7776 = vunpack.c.l.b16 %v7726
        %v7777 = vunpack.c.l.b16 %v7727
        %v7778 = vpack.c.b16 %v7754, %v7753
        %v7779 = vpack.c.b16 %v7756, %v7755
        %v7780 = vpack.c.b16 %v7758, %v7757
        %v7781 = vpack.c.b16 %v7760, %v7759
        %v7782 = vpack.c.b16 %v7762, %v7761
        %v7783 = vpack.c.b16 %v7764, %v7763
        %v7784 = vpack.c.b16 %v7766, %v7765
        %v7785 = vpack.c.b16 %v7768, %v7767
        %v7786 = vpack.c.b16 %v7770, %v7769
        %v7787 = vpack.c.b16 %v7772, %v7771
        %v7788 = vpack.c.b16 %v7774, %v7773
        %v7789 = vpack.c.b16 %v7776, %v7775
        %v7790 = vpack.c.b16 %v7777, %v7777
        %v7804 = vsel %vm7034, %v7790, 0
        %7806 = vmatpush.bf16.msra.mxu0 %v7785
        %7807 = vmatpush.bf16.msra.mxu0 %v7784
        %7808 = vmatpush.bf16.msra.mxu0 %v7783
        %7809 = vmatpush.bf16.msra.mxu0 %v7782
        %7810 = vmatpush.bf16.msra.mxu0 %v7781
        %7811 = vmatpush.bf16.msra.mxu0 %v7780
        %7812 = vmatpush.bf16.msra.mxu0 %v7779
        %7813 = vmatpush.bf16.msra.mxu0 %v7778
        %7814 = vmatmul.bf16.gmra.mxu0 %v6911
        %v7815 = vpop.f32.mrf.mxu0
        %v7816 = vadd.f32 0.0, %v7815
        %v7817 = vpop.f32.mrf.mxu0
        %v7818 = vadd.f32 0.0, %v7817
        %7819 = vmatmul.bf16.gmra.mxu0 %v6913
        %v7820 = vpop.f32.mrf.mxu0
        %v7821 = vadd.f32 0.0, %v7820
        %v7822 = vpop.f32.mrf.mxu0
        %v7823 = vadd.f32 0.0, %v7822
        %7824 = vmatmul.bf16.gmra.mxu0 %v6915
        %v7825 = vpop.f32.mrf.mxu0
        %v7826 = vadd.f32 0.0, %v7825
        %v7827 = vpop.f32.mrf.mxu0
        %v7828 = vadd.f32 0.0, %v7827
        %7829 = vmatmul.bf16.gmra.mxu0 %v6917
        %v7830 = vpop.f32.mrf.mxu0
        %v7831 = vadd.f32 0.0, %v7830
        %v7832 = vpop.f32.mrf.mxu0
        %v7833 = vadd.f32 0.0, %v7832
        %7834 = vmatmul.bf16.gmra.mxu0 %v6919
        %v7835 = vpop.f32.mrf.mxu0
        %v7836 = vadd.f32 0.0, %v7835
        %v7837 = vpop.f32.mrf.mxu0
        %v7838 = vadd.f32 0.0, %v7837
        %7839 = vmatmul.bf16.gmra.mxu0 %v6921
        %v7840 = vpop.f32.mrf.mxu0
        %v7841 = vadd.f32 0.0, %v7840
        %v7842 = vpop.f32.mrf.mxu0
        %v7843 = vadd.f32 0.0, %v7842
        %7844 = vmatmul.bf16.gmra.mxu0 %v6923
        %v7845 = vpop.f32.mrf.mxu0
        %v7846 = vadd.f32 0.0, %v7845
        %v7847 = vpop.f32.mrf.mxu0
        %v7848 = vadd.f32 0.0, %v7847
        %7849 = vmatmul.bf16.gmra.mxu0 %v6925
        %v7850 = vpop.f32.mrf.mxu0
        %v7851 = vadd.f32 0.0, %v7850
        %v7852 = vpop.f32.mrf.mxu0
        %v7853 = vadd.f32 0.0, %v7852
        %7854 = vdwg.mxu0
        %7855 = vmatpush.bf16.msra.mxu0 0
        %7856 = vmatpush.bf16.msra.mxu0 0
        %7857 = vmatpush.bf16.msra.mxu0 0
        %7858 = vmatpush.bf16.msra.mxu0 %v7804
        %7859 = vmatpush.bf16.msra.mxu0 %v7789
        %7860 = vmatpush.bf16.msra.mxu0 %v7788
        %7861 = vmatpush.bf16.msra.mxu0 %v7787
        %7862 = vmatpush.bf16.msra.mxu0 %v7786
        %7863 = vmatmul.bf16.gmra.mxu0 %v7011
        %v7864 = vpop.f32.mrf.mxu0
        %v7865 = vadd.f32 %v7816, %v7864
        %v7866 = vpop.f32.mrf.mxu0
        %v7867 = vadd.f32 %v7818, %v7866
        %7868 = vmatmul.bf16.gmra.mxu0 %v7014
        %v7869 = vpop.f32.mrf.mxu0
        %v7870 = vadd.f32 %v7821, %v7869
        %v7871 = vpop.f32.mrf.mxu0
        %v7872 = vadd.f32 %v7823, %v7871
        %7873 = vmatmul.bf16.gmra.mxu0 %v7017
        %v7874 = vpop.f32.mrf.mxu0
        %v7875 = vadd.f32 %v7826, %v7874
        %v7876 = vpop.f32.mrf.mxu0
        %v7877 = vadd.f32 %v7828, %v7876
        %7878 = vmatmul.bf16.gmra.mxu0 %v7020
        %v7879 = vpop.f32.mrf.mxu0
        %v7880 = vadd.f32 %v7831, %v7879
        %v7881 = vpop.f32.mrf.mxu0
        %v7882 = vadd.f32 %v7833, %v7881
        %7883 = vmatmul.bf16.gmra.mxu0 %v7023
        %v7884 = vpop.f32.mrf.mxu0
        %v7885 = vadd.f32 %v7836, %v7884
        %v7886 = vpop.f32.mrf.mxu0
        %v7887 = vadd.f32 %v7838, %v7886
        %7888 = vmatmul.bf16.gmra.mxu0 %v7026
        %v7889 = vpop.f32.mrf.mxu0
        %v7890 = vadd.f32 %v7841, %v7889
        %v7891 = vpop.f32.mrf.mxu0
        %v7892 = vadd.f32 %v7843, %v7891
        %7893 = vmatmul.bf16.gmra.mxu0 %v7029
        %v7894 = vpop.f32.mrf.mxu0
        %v7895 = vadd.f32 %v7846, %v7894
        %v7896 = vpop.f32.mrf.mxu0
        %v7897 = vadd.f32 %v7848, %v7896
        %7898 = vmatmul.bf16.gmra.mxu0 %v7032
        %v7899 = vpop.f32.mrf.mxu0
        %v7900 = vadd.f32 %v7851, %v7899
        %v7901 = vpop.f32.mrf.mxu0
        %v7902 = vadd.f32 %v7853, %v7901
        %7903 = vdwg.mxu0
        %v7929 = vunpack.c.l.b16 %v6810
        %v7930 = vunpack.c.l.b16 %v6811
        %v7931 = vunpack.c.l.b16 %v6812
        %v7932 = vunpack.c.l.b16 %v6813
        %v7933 = vunpack.c.l.b16 %v6814
        %v7934 = vunpack.c.l.b16 %v6815
        %v7935 = vunpack.c.l.b16 %v6816
        %v7936 = vunpack.c.l.b16 %v6817
        %v7937 = vunpack.c.l.b16 %v6818
        %v7938 = vunpack.c.l.b16 %v6819
        %v7939 = vunpack.c.l.b16 %v6820
        %v7940 = vunpack.c.l.b16 %v6821
        %v7941 = vunpack.c.l.b16 %v6822
        %v7942 = vunpack.c.l.b16 %v6823
        %v7943 = vunpack.c.l.b16 %v6824
        %v7944 = vunpack.c.l.b16 %v6825
        %v7945 = vunpack.c.l.b16 %v6826
        %v7946 = vunpack.c.l.b16 %v6827
        %v7947 = vunpack.c.l.b16 %v6828
        %v7948 = vunpack.c.l.b16 %v6829
        %v7949 = vunpack.c.l.b16 %v6830
        %v7950 = vunpack.c.l.b16 %v6831
        %v7951 = vunpack.c.l.b16 %v6832
        %v7952 = vunpack.c.l.b16 %v6833
        %v7953 = vunpack.c.l.b16 %v6834
        %v7954 = vpack.c.b16 %v7930, %v7929
        %v7955 = vpack.c.b16 %v7932, %v7931
        %v7956 = vpack.c.b16 %v7934, %v7933
        %v7957 = vpack.c.b16 %v7936, %v7935
        %v7958 = vpack.c.b16 %v7938, %v7937
        %v7959 = vpack.c.b16 %v7940, %v7939
        %v7960 = vpack.c.b16 %v7942, %v7941
        %v7961 = vpack.c.b16 %v7944, %v7943
        %v7962 = vpack.c.b16 %v7946, %v7945
        %v7963 = vpack.c.b16 %v7948, %v7947
        %v7964 = vpack.c.b16 %v7950, %v7949
        %v7965 = vpack.c.b16 %v7952, %v7951
        %v7966 = vpack.c.b16 %v7953, %v7953
        %v7980 = vsel %vm7034, %v7966, 0
        %7982 = vmatpush.bf16.msra.mxu0 %v7961
        %7983 = vmatpush.bf16.msra.mxu0 %v7960
        %7984 = vmatpush.bf16.msra.mxu0 %v7959
        %7985 = vmatpush.bf16.msra.mxu0 %v7958
        %7986 = vmatpush.bf16.msra.mxu0 %v7957
        %7987 = vmatpush.bf16.msra.mxu0 %v7956
        %7988 = vmatpush.bf16.msra.mxu0 %v7955
        %7989 = vmatpush.bf16.msra.mxu0 %v7954
        %7990 = vmatmul.bf16.gmra.mxu0 %v7142
        %v7991 = vpop.f32.mrf.mxu0
        %v7992 = vadd.f32 %v7865, %v7991
        %v7993 = vpop.f32.mrf.mxu0
        %v7994 = vadd.f32 %v7867, %v7993
        %7995 = vmatmul.bf16.gmra.mxu0 %v6911
        %v7996 = vpop.f32.mrf.mxu0
        %v7997 = vadd.f32 %v7870, %v7996
        %v7998 = vpop.f32.mrf.mxu0
        %v7999 = vadd.f32 %v7872, %v7998
        %8000 = vmatmul.bf16.gmra.mxu0 %v6913
        %v8001 = vpop.f32.mrf.mxu0
        %v8002 = vadd.f32 %v7875, %v8001
        %v8003 = vpop.f32.mrf.mxu0
        %v8004 = vadd.f32 %v7877, %v8003
        %8005 = vmatmul.bf16.gmra.mxu0 %v6915
        %v8006 = vpop.f32.mrf.mxu0
        %v8007 = vadd.f32 %v7880, %v8006
        %v8008 = vpop.f32.mrf.mxu0
        %v8009 = vadd.f32 %v7882, %v8008
        %8010 = vmatmul.bf16.gmra.mxu0 %v6917
        %v8011 = vpop.f32.mrf.mxu0
        %v8012 = vadd.f32 %v7885, %v8011
        %v8013 = vpop.f32.mrf.mxu0
        %v8014 = vadd.f32 %v7887, %v8013
        %8015 = vmatmul.bf16.gmra.mxu0 %v6919
        %v8016 = vpop.f32.mrf.mxu0
        %v8017 = vadd.f32 %v7890, %v8016
        %v8018 = vpop.f32.mrf.mxu0
        %v8019 = vadd.f32 %v7892, %v8018
        %8020 = vmatmul.bf16.gmra.mxu0 %v6921
        %v8021 = vpop.f32.mrf.mxu0
        %v8022 = vadd.f32 %v7895, %v8021
        %v8023 = vpop.f32.mrf.mxu0
        %v8024 = vadd.f32 %v7897, %v8023
        %8025 = vmatmul.bf16.gmra.mxu0 %v6923
        %v8026 = vpop.f32.mrf.mxu0
        %v8027 = vadd.f32 %v7900, %v8026
        %v8028 = vpop.f32.mrf.mxu0
        %v8029 = vadd.f32 %v7902, %v8028
        %8030 = vdwg.mxu0
        %8031 = vmatpush.bf16.msra.mxu0 0
        %8032 = vmatpush.bf16.msra.mxu0 0
        %8033 = vmatpush.bf16.msra.mxu0 0
        %8034 = vmatpush.bf16.msra.mxu0 %v7980
        %8035 = vmatpush.bf16.msra.mxu0 %v7965
        %8036 = vmatpush.bf16.msra.mxu0 %v7964
        %8037 = vmatpush.bf16.msra.mxu0 %v7963
        %8038 = vmatpush.bf16.msra.mxu0 %v7962
        %8039 = vmatmul.bf16.gmra.mxu0 %v7221
        %v8040 = vpop.f32.mrf.mxu0
        %v8041 = vadd.f32 %v7992, %v8040
        %v8042 = vpop.f32.mrf.mxu0
        %v8043 = vadd.f32 %v7994, %v8042
        %8044 = vmatmul.bf16.gmra.mxu0 %v7011
        %v8045 = vpop.f32.mrf.mxu0
        %v8046 = vadd.f32 %v7997, %v8045
        %v8047 = vpop.f32.mrf.mxu0
        %v8048 = vadd.f32 %v7999, %v8047
        %8049 = vmatmul.bf16.gmra.mxu0 %v7014
        %v8050 = vpop.f32.mrf.mxu0
        %v8051 = vadd.f32 %v8002, %v8050
        %v8052 = vpop.f32.mrf.mxu0
        %v8053 = vadd.f32 %v8004, %v8052
        %8054 = vmatmul.bf16.gmra.mxu0 %v7017
        %v8055 = vpop.f32.mrf.mxu0
        %v8056 = vadd.f32 %v8007, %v8055
        %v8057 = vpop.f32.mrf.mxu0
        %v8058 = vadd.f32 %v8009, %v8057
        %8059 = vmatmul.bf16.gmra.mxu0 %v7020
        %v8060 = vpop.f32.mrf.mxu0
        %v8061 = vadd.f32 %v8012, %v8060
        %v8062 = vpop.f32.mrf.mxu0
        %v8063 = vadd.f32 %v8014, %v8062
        %8064 = vmatmul.bf16.gmra.mxu0 %v7023
        %v8065 = vpop.f32.mrf.mxu0
        %v8066 = vadd.f32 %v8017, %v8065
        %v8067 = vpop.f32.mrf.mxu0
        %v8068 = vadd.f32 %v8019, %v8067
        %8069 = vmatmul.bf16.gmra.mxu0 %v7026
        %v8070 = vpop.f32.mrf.mxu0
        %v8071 = vadd.f32 %v8022, %v8070
        %v8072 = vpop.f32.mrf.mxu0
        %v8073 = vadd.f32 %v8024, %v8072
        %8074 = vmatmul.bf16.gmra.mxu0 %v7029
        %v8075 = vpop.f32.mrf.mxu0
        %v8076 = vadd.f32 %v8027, %v8075
        %v8077 = vpop.f32.mrf.mxu0
        %v8078 = vadd.f32 %v8029, %v8077
        %8079 = vdwg.mxu0
        %v8080 = vld [vmem:[#allocation2 + $0x20] sm:$0xff]
        %v8081 = vld [vmem:[#allocation2 + $0x28] sm:$0xff]
        %v8082 = vld [vmem:[#allocation2 + $0x30] sm:$0xff]
        %v8083 = vld [vmem:[#allocation2 + $0x38] sm:$0xff]
        %v8084 = vld [vmem:[#allocation2 + $0x40] sm:$0xff]
        %v8085 = vld [vmem:[#allocation2 + $0x48] sm:$0xff]
        %v8086 = vld [vmem:[#allocation2 + $0x50] sm:$0xff]
        %v8087 = vld [vmem:[#allocation2 + $0x58] sm:$0xff]
        %v8088 = vld [vmem:[#allocation2 + $0x60] sm:$0xff]
        %v8089 = vld [vmem:[#allocation2 + $0x68] sm:$0xff]
        %v8090 = vld [vmem:[#allocation2 + $0x70] sm:$0xff]
        %v8091 = vld [vmem:[#allocation2 + $0x78] sm:$0xff]
        %v8092 = vld [vmem:[#allocation2 + $0x80] sm:$0xff]
        %v8093 = vld [vmem:[#allocation2 + $0x88] sm:$0xff]
        %v8094 = vld [vmem:[#allocation2 + $0x90] sm:$0xff]
        %v8095 = vld [vmem:[#allocation2 + $0x98] sm:$0xff]
        %s8096 = scalar_lea.vmem %s3, 600
        %v8097 = vld [vmem:[%s8096] sm:$0xf]
        %v8098 = vld [vmem:[%s8096 + $0x4] sm:$0xf]
        %v8099 = vld [vmem:[%s8096 + $0x8] sm:$0xf]
        %v8100 = vld [vmem:[%s8096 + $0xc] sm:$0xf]
        %v8101 = vld [vmem:[%s8096 + $0x10] sm:$0xf]
        %v8102 = vld [vmem:[%s8096 + $0x14] sm:$0xf]
        %v8103 = vld [vmem:[%s8096 + $0x18] sm:$0xf]
        %v8104 = vld [vmem:[%s8096 + $0x1c] sm:$0xf]
        %v8105 = vld [vmem:[%s8096 + $0x20] sm:$0xf]
        %v8106 = vld [vmem:[%s8096 + $0x24] sm:$0xf]
        %v8107 = vld [vmem:[%s8096 + $0x28] sm:$0xf]
        %v8108 = vld [vmem:[%s8096 + $0x2c] sm:$0xf]
        %v8109 = vld [vmem:[%s8096 + $0x30] sm:$0xf]
        %v8110 = vld [vmem:[%s8096 + $0x34] sm:$0xf]
        %v8111 = vld [vmem:[%s8096 + $0x38] sm:$0xf]
        %v8112 = vld [vmem:[%s8096 + $0x3c] sm:$0xf]
        %v8113 = vld [vmem:[%s8096 + $0x40] sm:$0xf]
        %v8114 = vld [vmem:[%s8096 + $0x44] sm:$0xf]
        %v8115 = vld [vmem:[%s8096 + $0x48] sm:$0xf]
        %v8116 = vld [vmem:[%s8096 + $0x4c] sm:$0xf]
        %v8117 = vld [vmem:[%s8096 + $0x50] sm:$0xf]
        %v8118 = vld [vmem:[%s8096 + $0x54] sm:$0xf]
        %v8119 = vld [vmem:[%s8096 + $0x58] sm:$0xf]
        %v8120 = vld [vmem:[%s8096 + $0x5c] sm:$0xf]
        %v8121 = vld [vmem:[%s8096 + $0x60] sm:$0x3]
        %v8138 = vunpack.c.l.b16 %v8080
        %v8139 = vunpack.c.h.b16 %v8080
        %v8140 = vunpack.c.l.b16 %v8081
        %v8141 = vunpack.c.h.b16 %v8081
        %v8142 = vunpack.c.l.b16 %v8082
        %v8143 = vunpack.c.h.b16 %v8082
        %v8144 = vunpack.c.l.b16 %v8083
        %v8145 = vunpack.c.h.b16 %v8083
        %v8146 = vunpack.c.l.b16 %v8084
        %v8147 = vunpack.c.h.b16 %v8084
        %v8148 = vunpack.c.l.b16 %v8085
        %v8149 = vunpack.c.h.b16 %v8085
        %v8150 = vunpack.c.l.b16 %v8086
        %v8151 = vunpack.c.h.b16 %v8086
        %v8152 = vunpack.c.l.b16 %v8087
        %v8153 = vunpack.c.h.b16 %v8087
        %v8154 = vunpack.c.l.b16 %v8088
        %v8155 = vunpack.c.h.b16 %v8088
        %v8156 = vunpack.c.l.b16 %v8089
        %v8157 = vunpack.c.h.b16 %v8089
        %v8158 = vunpack.c.l.b16 %v8090
        %v8159 = vunpack.c.h.b16 %v8090
        %v8160 = vunpack.c.l.b16 %v8091
        %v8161 = vunpack.c.h.b16 %v8091
        %v8162 = vunpack.c.l.b16 %v8092
        %v8163 = vunpack.c.h.b16 %v8092
        %v8164 = vunpack.c.l.b16 %v8093
        %v8165 = vunpack.c.h.b16 %v8093
        %v8166 = vunpack.c.l.b16 %v8094
        %v8167 = vunpack.c.h.b16 %v8094
        %v8168 = vunpack.c.l.b16 %v8095
        %v8169 = vunpack.c.h.b16 %v8095
        %v8170 = vpack.c.b16 %v8140, %v8138
        %v8171 = vpack.c.b16 %v8141, %v8139
        %v8172 = vpack.c.b16 %v8144, %v8142
        %v8173 = vpack.c.b16 %v8145, %v8143
        %v8174 = vpack.c.b16 %v8148, %v8146
        %v8175 = vpack.c.b16 %v8149, %v8147
        %v8176 = vpack.c.b16 %v8152, %v8150
        %v8177 = vpack.c.b16 %v8153, %v8151
        %v8178 = vpack.c.b16 %v8156, %v8154
        %v8179 = vpack.c.b16 %v8157, %v8155
        %v8180 = vpack.c.b16 %v8160, %v8158
        %v8181 = vpack.c.b16 %v8161, %v8159
        %v8182 = vpack.c.b16 %v8164, %v8162
        %v8183 = vpack.c.b16 %v8165, %v8163
        %v8184 = vpack.c.b16 %v8168, %v8166
        %v8185 = vpack.c.b16 %v8169, %v8167
        %v8219 = vunpack.c.l.b16 %v8097
        %v8220 = vunpack.c.l.b16 %v8098
        %v8221 = vunpack.c.l.b16 %v8099
        %v8222 = vunpack.c.l.b16 %v8100
        %v8223 = vunpack.c.l.b16 %v8101
        %v8224 = vunpack.c.l.b16 %v8102
        %v8225 = vunpack.c.l.b16 %v8103
        %v8226 = vunpack.c.l.b16 %v8104
        %v8227 = vunpack.c.l.b16 %v8105
        %v8228 = vunpack.c.l.b16 %v8106
        %v8229 = vunpack.c.l.b16 %v8107
        %v8230 = vunpack.c.l.b16 %v8108
        %v8231 = vunpack.c.l.b16 %v8109
        %v8232 = vunpack.c.l.b16 %v8110
        %v8233 = vunpack.c.l.b16 %v8111
        %v8234 = vunpack.c.l.b16 %v8112
        %v8235 = vunpack.c.l.b16 %v8113
        %v8236 = vunpack.c.l.b16 %v8114
        %v8237 = vunpack.c.l.b16 %v8115
        %v8238 = vunpack.c.l.b16 %v8116
        %v8239 = vunpack.c.l.b16 %v8117
        %v8240 = vunpack.c.l.b16 %v8118
        %v8241 = vunpack.c.l.b16 %v8119
        %v8242 = vunpack.c.l.b16 %v8120
        %v8243 = vunpack.c.l.b16 %v8121
        %v8244 = vpack.c.b16 %v8220, %v8219
        %v8245 = vpack.c.b16 %v8222, %v8221
        %v8246 = vpack.c.b16 %v8224, %v8223
        %v8247 = vpack.c.b16 %v8226, %v8225
        %v8248 = vpack.c.b16 %v8228, %v8227
        %v8249 = vpack.c.b16 %v8230, %v8229
        %v8250 = vpack.c.b16 %v8232, %v8231
        %v8251 = vpack.c.b16 %v8234, %v8233
        %v8252 = vpack.c.b16 %v8236, %v8235
        %v8253 = vpack.c.b16 %v8238, %v8237
        %v8254 = vpack.c.b16 %v8240, %v8239
        %v8255 = vpack.c.b16 %v8242, %v8241
        %v8256 = vpack.c.b16 %v8243, %v8243
        %v8270 = vsel %vm6039, %v8171, 0
        %v8273 = vsel %vm6039, %v8173, 0
        %v8276 = vsel %vm6039, %v8175, 0
        %v8279 = vsel %vm6039, %v8177, 0
        %v8282 = vsel %vm6039, %v8179, 0
        %v8285 = vsel %vm6039, %v8181, 0
        %v8288 = vsel %vm6039, %v8183, 0
        %v8291 = vsel %vm6039, %v8185, 0
        %v8294 = vsel %vm7034, %v8256, 0
        %8296 = vmatpush.bf16.msra.mxu0 %v8251
        %8297 = vmatpush.bf16.msra.mxu0 %v8250
        %8298 = vmatpush.bf16.msra.mxu0 %v8249
        %8299 = vmatpush.bf16.msra.mxu0 %v8248
        %8300 = vmatpush.bf16.msra.mxu0 %v8247
        %8301 = vmatpush.bf16.msra.mxu0 %v8246
        %8302 = vmatpush.bf16.msra.mxu0 %v8245
        %8303 = vmatpush.bf16.msra.mxu0 %v8244
        %8304 = vmatmul.bf16.gmra.mxu0 %v8170
        %v8305 = vpop.f32.mrf.mxu0
        %v8306 = vadd.f32 0.0, %v8305
        %v8307 = vpop.f32.mrf.mxu0
        %v8308 = vadd.f32 0.0, %v8307
        %8309 = vmatmul.bf16.gmra.mxu0 %v8172
        %v8310 = vpop.f32.mrf.mxu0
        %v8311 = vadd.f32 0.0, %v8310
        %v8312 = vpop.f32.mrf.mxu0
        %v8313 = vadd.f32 0.0, %v8312
        %8314 = vmatmul.bf16.gmra.mxu0 %v8174
        %v8315 = vpop.f32.mrf.mxu0
        %v8316 = vadd.f32 0.0, %v8315
        %v8317 = vpop.f32.mrf.mxu0
        %v8318 = vadd.f32 0.0, %v8317
        %8319 = vmatmul.bf16.gmra.mxu0 %v8176
        %v8320 = vpop.f32.mrf.mxu0
        %v8321 = vadd.f32 0.0, %v8320
        %v8322 = vpop.f32.mrf.mxu0
        %v8323 = vadd.f32 0.0, %v8322
        %8324 = vmatmul.bf16.gmra.mxu0 %v8178
        %v8325 = vpop.f32.mrf.mxu0
        %v8326 = vadd.f32 0.0, %v8325
        %v8327 = vpop.f32.mrf.mxu0
        %v8328 = vadd.f32 0.0, %v8327
        %8329 = vmatmul.bf16.gmra.mxu0 %v8180
        %v8330 = vpop.f32.mrf.mxu0
        %v8331 = vadd.f32 0.0, %v8330
        %v8332 = vpop.f32.mrf.mxu0
        %v8333 = vadd.f32 0.0, %v8332
        %8334 = vmatmul.bf16.gmra.mxu0 %v8182
        %v8335 = vpop.f32.mrf.mxu0
        %v8336 = vadd.f32 0.0, %v8335
        %v8337 = vpop.f32.mrf.mxu0
        %v8338 = vadd.f32 0.0, %v8337
        %8339 = vmatmul.bf16.gmra.mxu0 %v8184
        %v8340 = vpop.f32.mrf.mxu0
        %v8341 = vadd.f32 0.0, %v8340
        %v8342 = vpop.f32.mrf.mxu0
        %v8343 = vadd.f32 0.0, %v8342
        %8344 = vdwg.mxu0
        %8345 = vmatpush.bf16.msra.mxu0 0
        %8346 = vmatpush.bf16.msra.mxu0 0
        %8347 = vmatpush.bf16.msra.mxu0 0
        %8348 = vmatpush.bf16.msra.mxu0 %v8294
        %8349 = vmatpush.bf16.msra.mxu0 %v8255
        %8350 = vmatpush.bf16.msra.mxu0 %v8254
        %8351 = vmatpush.bf16.msra.mxu0 %v8253
        %8352 = vmatpush.bf16.msra.mxu0 %v8252
        %8353 = vmatmul.bf16.gmra.mxu0 %v8270
        %v8354 = vpop.f32.mrf.mxu0
        %v8355 = vadd.f32 %v8306, %v8354
        %v8356 = vpop.f32.mrf.mxu0
        %v8357 = vadd.f32 %v8308, %v8356
        %8358 = vmatmul.bf16.gmra.mxu0 %v8273
        %v8359 = vpop.f32.mrf.mxu0
        %v8360 = vadd.f32 %v8311, %v8359
        %v8361 = vpop.f32.mrf.mxu0
        %v8362 = vadd.f32 %v8313, %v8361
        %8363 = vmatmul.bf16.gmra.mxu0 %v8276
        %v8364 = vpop.f32.mrf.mxu0
        %v8365 = vadd.f32 %v8316, %v8364
        %v8366 = vpop.f32.mrf.mxu0
        %v8367 = vadd.f32 %v8318, %v8366
        %8368 = vmatmul.bf16.gmra.mxu0 %v8279
        %v8369 = vpop.f32.mrf.mxu0
        %v8370 = vadd.f32 %v8321, %v8369
        %v8371 = vpop.f32.mrf.mxu0
        %v8372 = vadd.f32 %v8323, %v8371
        %8373 = vmatmul.bf16.gmra.mxu0 %v8282
        %v8374 = vpop.f32.mrf.mxu0
        %v8375 = vadd.f32 %v8326, %v8374
        %v8376 = vpop.f32.mrf.mxu0
        %v8377 = vadd.f32 %v8328, %v8376
        %8378 = vmatmul.bf16.gmra.mxu0 %v8285
        %v8379 = vpop.f32.mrf.mxu0
        %v8380 = vadd.f32 %v8331, %v8379
        %v8381 = vpop.f32.mrf.mxu0
        %v8382 = vadd.f32 %v8333, %v8381
        %8383 = vmatmul.bf16.gmra.mxu0 %v8288
        %v8384 = vpop.f32.mrf.mxu0
        %v8385 = vadd.f32 %v8336, %v8384
        %v8386 = vpop.f32.mrf.mxu0
        %v8387 = vadd.f32 %v8338, %v8386
        %8388 = vmatmul.bf16.gmra.mxu0 %v8291
        %v8389 = vpop.f32.mrf.mxu0
        %v8390 = vadd.f32 %v8341, %v8389
        %v8391 = vpop.f32.mrf.mxu0
        %v8392 = vadd.f32 %v8343, %v8391
        %8393 = vdwg.mxu0
        %v8394 = vadd.f32 %v7285, %v8355
        %v8395 = vadd.f32 %v7287, %v8357
        %v8396 = vadd.f32 %v7290, %v8360
        %v8397 = vadd.f32 %v7292, %v8362
        %v8398 = vadd.f32 %v7295, %v8365
        %v8399 = vadd.f32 %v7297, %v8367
        %v8400 = vadd.f32 %v7300, %v8370
        %v8401 = vadd.f32 %v7302, %v8372
        %v8402 = vadd.f32 %v7305, %v8375
        %v8403 = vadd.f32 %v7307, %v8377
        %v8404 = vadd.f32 %v7310, %v8380
        %v8405 = vadd.f32 %v7312, %v8382
        %v8406 = vadd.f32 %v7315, %v8385
        %v8407 = vadd.f32 %v7317, %v8387
        %v8408 = vadd.f32 %v7320, %v8390
        %v8409 = vadd.f32 %v7322, %v8392
        %s8410 = scalar_lea.vmem %s3, 700
        %v8411 = vld [vmem:[%s8410] sm:$0xf]
        %v8412 = vld [vmem:[%s8410 + $0x4] sm:$0xf]
        %v8413 = vld [vmem:[%s8410 + $0x8] sm:$0xf]
        %v8414 = vld [vmem:[%s8410 + $0xc] sm:$0xf]
        %v8415 = vld [vmem:[%s8410 + $0x10] sm:$0xf]
        %v8416 = vld [vmem:[%s8410 + $0x14] sm:$0xf]
        %v8417 = vld [vmem:[%s8410 + $0x18] sm:$0xf]
        %v8418 = vld [vmem:[%s8410 + $0x1c] sm:$0xf]
        %v8419 = vld [vmem:[%s8410 + $0x20] sm:$0xf]
        %v8420 = vld [vmem:[%s8410 + $0x24] sm:$0xf]
        %v8421 = vld [vmem:[%s8410 + $0x28] sm:$0xf]
        %v8422 = vld [vmem:[%s8410 + $0x2c] sm:$0xf]
        %v8423 = vld [vmem:[%s8410 + $0x30] sm:$0xf]
        %v8424 = vld [vmem:[%s8410 + $0x34] sm:$0xf]
        %v8425 = vld [vmem:[%s8410 + $0x38] sm:$0xf]
        %v8426 = vld [vmem:[%s8410 + $0x3c] sm:$0xf]
        %v8427 = vld [vmem:[%s8410 + $0x40] sm:$0xf]
        %v8428 = vld [vmem:[%s8410 + $0x44] sm:$0xf]
        %v8429 = vld [vmem:[%s8410 + $0x48] sm:$0xf]
        %v8430 = vld [vmem:[%s8410 + $0x4c] sm:$0xf]
        %v8431 = vld [vmem:[%s8410 + $0x50] sm:$0xf]
        %v8432 = vld [vmem:[%s8410 + $0x54] sm:$0xf]
        %v8433 = vld [vmem:[%s8410 + $0x58] sm:$0xf]
        %v8434 = vld [vmem:[%s8410 + $0x5c] sm:$0xf]
        %v8435 = vld [vmem:[%s8410 + $0x60] sm:$0x3]
        %v8461 = vunpack.c.l.b16 %v8411
        %v8462 = vunpack.c.l.b16 %v8412
        %v8463 = vunpack.c.l.b16 %v8413
        %v8464 = vunpack.c.l.b16 %v8414
        %v8465 = vunpack.c.l.b16 %v8415
        %v8466 = vunpack.c.l.b16 %v8416
        %v8467 = vunpack.c.l.b16 %v8417
        %v8468 = vunpack.c.l.b16 %v8418
        %v8469 = vunpack.c.l.b16 %v8419
        %v8470 = vunpack.c.l.b16 %v8420
        %v8471 = vunpack.c.l.b16 %v8421
        %v8472 = vunpack.c.l.b16 %v8422
        %v8473 = vunpack.c.l.b16 %v8423
        %v8474 = vunpack.c.l.b16 %v8424
        %v8475 = vunpack.c.l.b16 %v8425
        %v8476 = vunpack.c.l.b16 %v8426
        %v8477 = vunpack.c.l.b16 %v8427
        %v8478 = vunpack.c.l.b16 %v8428
        %v8479 = vunpack.c.l.b16 %v8429
        %v8480 = vunpack.c.l.b16 %v8430
        %v8481 = vunpack.c.l.b16 %v8431
        %v8482 = vunpack.c.l.b16 %v8432
        %v8483 = vunpack.c.l.b16 %v8433
        %v8484 = vunpack.c.l.b16 %v8434
        %v8485 = vunpack.c.l.b16 %v8435
        %v8486 = vpack.c.b16 %v8462, %v8461
        %v8487 = vpack.c.b16 %v8464, %v8463
        %v8488 = vpack.c.b16 %v8466, %v8465
        %v8489 = vpack.c.b16 %v8468, %v8467
        %v8490 = vpack.c.b16 %v8470, %v8469
        %v8491 = vpack.c.b16 %v8472, %v8471
        %v8492 = vpack.c.b16 %v8474, %v8473
        %v8493 = vpack.c.b16 %v8476, %v8475
        %v8494 = vpack.c.b16 %v8478, %v8477
        %v8495 = vpack.c.b16 %v8480, %v8479
        %v8496 = vpack.c.b16 %v8482, %v8481
        %v8497 = vpack.c.b16 %v8484, %v8483
        %v8498 = vpack.c.b16 %v8485, %v8485
        %v8512 = vsel %vm7034, %v8498, 0
        %8514 = vmatpush.bf16.msra.mxu0 %v8493
        %8515 = vmatpush.bf16.msra.mxu0 %v8492
        %8516 = vmatpush.bf16.msra.mxu0 %v8491
        %8517 = vmatpush.bf16.msra.mxu0 %v8490
        %8518 = vmatpush.bf16.msra.mxu0 %v8489
        %8519 = vmatpush.bf16.msra.mxu0 %v8488
        %8520 = vmatpush.bf16.msra.mxu0 %v8487
        %8521 = vmatpush.bf16.msra.mxu0 %v8486
        %8522 = vmatmul.bf16.gmra.mxu0 %v8170
        %v8523 = vpop.f32.mrf.mxu0
        %v8524 = vadd.f32 0.0, %v8523
        %v8525 = vpop.f32.mrf.mxu0
        %v8526 = vadd.f32 0.0, %v8525
        %8527 = vmatmul.bf16.gmra.mxu0 %v8172
        %v8528 = vpop.f32.mrf.mxu0
        %v8529 = vadd.f32 0.0, %v8528
        %v8530 = vpop.f32.mrf.mxu0
        %v8531 = vadd.f32 0.0, %v8530
        %8532 = vmatmul.bf16.gmra.mxu0 %v8174
        %v8533 = vpop.f32.mrf.mxu0
        %v8534 = vadd.f32 0.0, %v8533
        %v8535 = vpop.f32.mrf.mxu0
        %v8536 = vadd.f32 0.0, %v8535
        %8537 = vmatmul.bf16.gmra.mxu0 %v8176
        %v8538 = vpop.f32.mrf.mxu0
        %v8539 = vadd.f32 0.0, %v8538
        %v8540 = vpop.f32.mrf.mxu0
        %v8541 = vadd.f32 0.0, %v8540
        %8542 = vmatmul.bf16.gmra.mxu0 %v8178
        %v8543 = vpop.f32.mrf.mxu0
        %v8544 = vadd.f32 0.0, %v8543
        %v8545 = vpop.f32.mrf.mxu0
        %v8546 = vadd.f32 0.0, %v8545
        %8547 = vmatmul.bf16.gmra.mxu0 %v8180
        %v8548 = vpop.f32.mrf.mxu0
        %v8549 = vadd.f32 0.0, %v8548
        %v8550 = vpop.f32.mrf.mxu0
        %v8551 = vadd.f32 0.0, %v8550
        %8552 = vmatmul.bf16.gmra.mxu0 %v8182
        %v8553 = vpop.f32.mrf.mxu0
        %v8554 = vadd.f32 0.0, %v8553
        %v8555 = vpop.f32.mrf.mxu0
        %v8556 = vadd.f32 0.0, %v8555
        %8557 = vmatmul.bf16.gmra.mxu0 %v8184
        %v8558 = vpop.f32.mrf.mxu0
        %v8559 = vadd.f32 0.0, %v8558
        %v8560 = vpop.f32.mrf.mxu0
        %v8561 = vadd.f32 0.0, %v8560
        %8562 = vdwg.mxu0
        %8563 = vmatpush.bf16.msra.mxu0 0
        %8564 = vmatpush.bf16.msra.mxu0 0
        %8565 = vmatpush.bf16.msra.mxu0 0
        %8566 = vmatpush.bf16.msra.mxu0 %v8512
        %8567 = vmatpush.bf16.msra.mxu0 %v8497
        %8568 = vmatpush.bf16.msra.mxu0 %v8496
        %8569 = vmatpush.bf16.msra.mxu0 %v8495
        %8570 = vmatpush.bf16.msra.mxu0 %v8494
        %8571 = vmatmul.bf16.gmra.mxu0 %v8270
        %v8572 = vpop.f32.mrf.mxu0
        %v8573 = vadd.f32 %v8524, %v8572
        %v8574 = vpop.f32.mrf.mxu0
        %v8575 = vadd.f32 %v8526, %v8574
        %8576 = vmatmul.bf16.gmra.mxu0 %v8273
        %v8577 = vpop.f32.mrf.mxu0
        %v8578 = vadd.f32 %v8529, %v8577
        %v8579 = vpop.f32.mrf.mxu0
        %v8580 = vadd.f32 %v8531, %v8579
        %8581 = vmatmul.bf16.gmra.mxu0 %v8276
        %v8582 = vpop.f32.mrf.mxu0
        %v8583 = vadd.f32 %v8534, %v8582
        %v8584 = vpop.f32.mrf.mxu0
        %v8585 = vadd.f32 %v8536, %v8584
        %8586 = vmatmul.bf16.gmra.mxu0 %v8279
        %v8587 = vpop.f32.mrf.mxu0
        %v8588 = vadd.f32 %v8539, %v8587
        %v8589 = vpop.f32.mrf.mxu0
        %v8590 = vadd.f32 %v8541, %v8589
        %8591 = vmatmul.bf16.gmra.mxu0 %v8282
        %v8592 = vpop.f32.mrf.mxu0
        %v8593 = vadd.f32 %v8544, %v8592
        %v8594 = vpop.f32.mrf.mxu0
        %v8595 = vadd.f32 %v8546, %v8594
        %8596 = vmatmul.bf16.gmra.mxu0 %v8285
        %v8597 = vpop.f32.mrf.mxu0
        %v8598 = vadd.f32 %v8549, %v8597
        %v8599 = vpop.f32.mrf.mxu0
        %v8600 = vadd.f32 %v8551, %v8599
        %8601 = vmatmul.bf16.gmra.mxu0 %v8288
        %v8602 = vpop.f32.mrf.mxu0
        %v8603 = vadd.f32 %v8554, %v8602
        %v8604 = vpop.f32.mrf.mxu0
        %v8605 = vadd.f32 %v8556, %v8604
        %8606 = vmatmul.bf16.gmra.mxu0 %v8291
        %v8607 = vpop.f32.mrf.mxu0
        %v8608 = vadd.f32 %v8559, %v8607
        %v8609 = vpop.f32.mrf.mxu0
        %v8610 = vadd.f32 %v8561, %v8609
        %8611 = vdwg.mxu0
        %v8612 = vadd.f32 %v7663, %v8573
        %v8613 = vadd.f32 %v7665, %v8575
        %v8614 = vadd.f32 %v7668, %v8578
        %v8615 = vadd.f32 %v7670, %v8580
        %v8616 = vadd.f32 %v7673, %v8583
        %v8617 = vadd.f32 %v7675, %v8585
        %v8618 = vadd.f32 %v7678, %v8588
        %v8619 = vadd.f32 %v7680, %v8590
        %v8620 = vadd.f32 %v7683, %v8593
        %v8621 = vadd.f32 %v7685, %v8595
        %v8622 = vadd.f32 %v7688, %v8598
        %v8623 = vadd.f32 %v7690, %v8600
        %v8624 = vadd.f32 %v7693, %v8603
        %v8625 = vadd.f32 %v7695, %v8605
        %v8626 = vadd.f32 %v7698, %v8608
        %v8627 = vadd.f32 %v7700, %v8610
        %s8628 = scalar_lea.vmem %s3, 800
        %v8629 = vld [vmem:[%s8628] sm:$0xf]
        %v8630 = vld [vmem:[%s8628 + $0x4] sm:$0xf]
        %v8631 = vld [vmem:[%s8628 + $0x8] sm:$0xf]
        %v8632 = vld [vmem:[%s8628 + $0xc] sm:$0xf]
        %v8633 = vld [vmem:[%s8628 + $0x10] sm:$0xf]
        %v8634 = vld [vmem:[%s8628 + $0x14] sm:$0xf]
        %v8635 = vld [vmem:[%s8628 + $0x18] sm:$0xf]
        %v8636 = vld [vmem:[%s8628 + $0x1c] sm:$0xf]
        %v8637 = vld [vmem:[%s8628 + $0x20] sm:$0xf]
        %v8638 = vld [vmem:[%s8628 + $0x24] sm:$0xf]
        %v8639 = vld [vmem:[%s8628 + $0x28] sm:$0xf]
        %v8640 = vld [vmem:[%s8628 + $0x2c] sm:$0xf]
        %v8641 = vld [vmem:[%s8628 + $0x30] sm:$0xf]
        %v8642 = vld [vmem:[%s8628 + $0x34] sm:$0xf]
        %v8643 = vld [vmem:[%s8628 + $0x38] sm:$0xf]
        %v8644 = vld [vmem:[%s8628 + $0x3c] sm:$0xf]
        %v8645 = vld [vmem:[%s8628 + $0x40] sm:$0xf]
        %v8646 = vld [vmem:[%s8628 + $0x44] sm:$0xf]
        %v8647 = vld [vmem:[%s8628 + $0x48] sm:$0xf]
        %v8648 = vld [vmem:[%s8628 + $0x4c] sm:$0xf]
        %v8649 = vld [vmem:[%s8628 + $0x50] sm:$0xf]
        %v8650 = vld [vmem:[%s8628 + $0x54] sm:$0xf]
        %v8651 = vld [vmem:[%s8628 + $0x58] sm:$0xf]
        %v8652 = vld [vmem:[%s8628 + $0x5c] sm:$0xf]
        %v8653 = vld [vmem:[%s8628 + $0x60] sm:$0x3]
        %v8679 = vunpack.c.l.b16 %v8629
        %v8680 = vunpack.c.l.b16 %v8630
        %v8681 = vunpack.c.l.b16 %v8631
        %v8682 = vunpack.c.l.b16 %v8632
        %v8683 = vunpack.c.l.b16 %v8633
        %v8684 = vunpack.c.l.b16 %v8634
        %v8685 = vunpack.c.l.b16 %v8635
        %v8686 = vunpack.c.l.b16 %v8636
        %v8687 = vunpack.c.l.b16 %v8637
        %v8688 = vunpack.c.l.b16 %v8638
        %v8689 = vunpack.c.l.b16 %v8639
        %v8690 = vunpack.c.l.b16 %v8640
        %v8691 = vunpack.c.l.b16 %v8641
        %v8692 = vunpack.c.l.b16 %v8642
        %v8693 = vunpack.c.l.b16 %v8643
        %v8694 = vunpack.c.l.b16 %v8644
        %v8695 = vunpack.c.l.b16 %v8645
        %v8696 = vunpack.c.l.b16 %v8646
        %v8697 = vunpack.c.l.b16 %v8647
        %v8698 = vunpack.c.l.b16 %v8648
        %v8699 = vunpack.c.l.b16 %v8649
        %v8700 = vunpack.c.l.b16 %v8650
        %v8701 = vunpack.c.l.b16 %v8651
        %v8702 = vunpack.c.l.b16 %v8652
        %v8703 = vunpack.c.l.b16 %v8653
        %v8704 = vpack.c.b16 %v8680, %v8679
        %v8705 = vpack.c.b16 %v8682, %v8681
        %v8706 = vpack.c.b16 %v8684, %v8683
        %v8707 = vpack.c.b16 %v8686, %v8685
        %v8708 = vpack.c.b16 %v8688, %v8687
        %v8709 = vpack.c.b16 %v8690, %v8689
        %v8710 = vpack.c.b16 %v8692, %v8691
        %v8711 = vpack.c.b16 %v8694, %v8693
        %v8712 = vpack.c.b16 %v8696, %v8695
        %v8713 = vpack.c.b16 %v8698, %v8697
        %v8714 = vpack.c.b16 %v8700, %v8699
        %v8715 = vpack.c.b16 %v8702, %v8701
        %v8716 = vpack.c.b16 %v8703, %v8703
        %v8730 = vsel %vm7034, %v8716, 0
        %8732 = vmatpush.bf16.msra.mxu0 %v8711
        %8733 = vmatpush.bf16.msra.mxu0 %v8710
        %8734 = vmatpush.bf16.msra.mxu0 %v8709
        %8735 = vmatpush.bf16.msra.mxu0 %v8708
        %8736 = vmatpush.bf16.msra.mxu0 %v8707
        %8737 = vmatpush.bf16.msra.mxu0 %v8706
        %8738 = vmatpush.bf16.msra.mxu0 %v8705
        %8739 = vmatpush.bf16.msra.mxu0 %v8704
        %8740 = vmatmul.bf16.gmra.mxu0 %v8170
        %v8741 = vpop.f32.mrf.mxu0
        %v8742 = vadd.f32 0.0, %v8741
        %v8743 = vpop.f32.mrf.mxu0
        %v8744 = vadd.f32 0.0, %v8743
        %8745 = vmatmul.bf16.gmra.mxu0 %v8172
        %v8746 = vpop.f32.mrf.mxu0
        %v8747 = vadd.f32 0.0, %v8746
        %v8748 = vpop.f32.mrf.mxu0
        %v8749 = vadd.f32 0.0, %v8748
        %8750 = vmatmul.bf16.gmra.mxu0 %v8174
        %v8751 = vpop.f32.mrf.mxu0
        %v8752 = vadd.f32 0.0, %v8751
        %v8753 = vpop.f32.mrf.mxu0
        %v8754 = vadd.f32 0.0, %v8753
        %8755 = vmatmul.bf16.gmra.mxu0 %v8176
        %v8756 = vpop.f32.mrf.mxu0
        %v8757 = vadd.f32 0.0, %v8756
        %v8758 = vpop.f32.mrf.mxu0
        %v8759 = vadd.f32 0.0, %v8758
        %8760 = vmatmul.bf16.gmra.mxu0 %v8178
        %v8761 = vpop.f32.mrf.mxu0
        %v8762 = vadd.f32 0.0, %v8761
        %v8763 = vpop.f32.mrf.mxu0
        %v8764 = vadd.f32 0.0, %v8763
        %8765 = vmatmul.bf16.gmra.mxu0 %v8180
        %v8766 = vpop.f32.mrf.mxu0
        %v8767 = vadd.f32 0.0, %v8766
        %v8768 = vpop.f32.mrf.mxu0
        %v8769 = vadd.f32 0.0, %v8768
        %8770 = vmatmul.bf16.gmra.mxu0 %v8182
        %v8771 = vpop.f32.mrf.mxu0
        %v8772 = vadd.f32 0.0, %v8771
        %v8773 = vpop.f32.mrf.mxu0
        %v8774 = vadd.f32 0.0, %v8773
        %8775 = vmatmul.bf16.gmra.mxu0 %v8184
        %v8776 = vpop.f32.mrf.mxu0
        %v8777 = vadd.f32 0.0, %v8776
        %v8778 = vpop.f32.mrf.mxu0
        %v8779 = vadd.f32 0.0, %v8778
        %8780 = vdwg.mxu0
        %8781 = vmatpush.bf16.msra.mxu0 0
        %8782 = vmatpush.bf16.msra.mxu0 0
        %8783 = vmatpush.bf16.msra.mxu0 0
        %8784 = vmatpush.bf16.msra.mxu0 %v8730
        %8785 = vmatpush.bf16.msra.mxu0 %v8715
        %8786 = vmatpush.bf16.msra.mxu0 %v8714
        %8787 = vmatpush.bf16.msra.mxu0 %v8713
        %8788 = vmatpush.bf16.msra.mxu0 %v8712
        %8789 = vmatmul.bf16.gmra.mxu0 %v8270
        %v8790 = vpop.f32.mrf.mxu0
        %v8791 = vadd.f32 %v8742, %v8790
        %v8792 = vpop.f32.mrf.mxu0
        %v8793 = vadd.f32 %v8744, %v8792
        %8794 = vmatmul.bf16.gmra.mxu0 %v8273
        %v8795 = vpop.f32.mrf.mxu0
        %v8796 = vadd.f32 %v8747, %v8795
        %v8797 = vpop.f32.mrf.mxu0
        %v8798 = vadd.f32 %v8749, %v8797
        %8799 = vmatmul.bf16.gmra.mxu0 %v8276
        %v8800 = vpop.f32.mrf.mxu0
        %v8801 = vadd.f32 %v8752, %v8800
        %v8802 = vpop.f32.mrf.mxu0
        %v8803 = vadd.f32 %v8754, %v8802
        %8804 = vmatmul.bf16.gmra.mxu0 %v8279
        %v8805 = vpop.f32.mrf.mxu0
        %v8806 = vadd.f32 %v8757, %v8805
        %v8807 = vpop.f32.mrf.mxu0
        %v8808 = vadd.f32 %v8759, %v8807
        %8809 = vmatmul.bf16.gmra.mxu0 %v8282
        %v8810 = vpop.f32.mrf.mxu0
        %v8811 = vadd.f32 %v8762, %v8810
        %v8812 = vpop.f32.mrf.mxu0
        %v8813 = vadd.f32 %v8764, %v8812
        %8814 = vmatmul.bf16.gmra.mxu0 %v8285
        %v8815 = vpop.f32.mrf.mxu0
        %v8816 = vadd.f32 %v8767, %v8815
        %v8817 = vpop.f32.mrf.mxu0
        %v8818 = vadd.f32 %v8769, %v8817
        %8819 = vmatmul.bf16.gmra.mxu0 %v8288
        %v8820 = vpop.f32.mrf.mxu0
        %v8821 = vadd.f32 %v8772, %v8820
        %v8822 = vpop.f32.mrf.mxu0
        %v8823 = vadd.f32 %v8774, %v8822
        %8824 = vmatmul.bf16.gmra.mxu0 %v8291
        %v8825 = vpop.f32.mrf.mxu0
        %v8826 = vadd.f32 %v8777, %v8825
        %v8827 = vpop.f32.mrf.mxu0
        %v8828 = vadd.f32 %v8779, %v8827
        %8829 = vdwg.mxu0
        %v8830 = vadd.f32 %v8041, %v8791
        %v8831 = vadd.f32 %v8043, %v8793
        %v8832 = vadd.f32 %v8046, %v8796
        %v8833 = vadd.f32 %v8048, %v8798
        %v8834 = vadd.f32 %v8051, %v8801
        %v8835 = vadd.f32 %v8053, %v8803
        %v8836 = vadd.f32 %v8056, %v8806
        %v8837 = vadd.f32 %v8058, %v8808
        %v8838 = vadd.f32 %v8061, %v8811
        %v8839 = vadd.f32 %v8063, %v8813
        %v8840 = vadd.f32 %v8066, %v8816
        %v8841 = vadd.f32 %v8068, %v8818
        %v8842 = vadd.f32 %v8071, %v8821
        %v8843 = vadd.f32 %v8073, %v8823
        %v8844 = vadd.f32 %v8076, %v8826
        %v8845 = vadd.f32 %v8078, %v8828
        %vm8846 = vcmask 523264
        %8847 = vst.msk [vmem:[#allocation5] sm:$0xff] %vm8846, 0.0
        %8848 = vst.msk [vmem:[#allocation5 + $0x88] sm:$0xff] %vm8846, 0.0
        %8849 = vst.msk [vmem:[#allocation5 + $0x8] sm:$0xff] %vm8846, %v8394
        %8850 = vst.msk [vmem:[#allocation5 + $0x10] sm:$0xff] %vm8846, %v8395
        %8851 = vst.msk [vmem:[#allocation5 + $0x18] sm:$0xff] %vm8846, %v8396
        %8852 = vst.msk [vmem:[#allocation5 + $0x20] sm:$0xff] %vm8846, %v8397
        %8853 = vst.msk [vmem:[#allocation5 + $0x28] sm:$0xff] %vm8846, %v8398
        %8854 = vst.msk [vmem:[#allocation5 + $0x30] sm:$0xff] %vm8846, %v8399
        %8855 = vst.msk [vmem:[#allocation5 + $0x38] sm:$0xff] %vm8846, %v8400
        %8856 = vst.msk [vmem:[#allocation5 + $0x40] sm:$0xff] %vm8846, %v8401
        %8857 = vst.msk [vmem:[#allocation5 + $0x48] sm:$0xff] %vm8846, %v8402
        %8858 = vst.msk [vmem:[#allocation5 + $0x50] sm:$0xff] %vm8846, %v8403
        %8859 = vst.msk [vmem:[#allocation5 + $0x58] sm:$0xff] %vm8846, %v8404
        %8860 = vst.msk [vmem:[#allocation5 + $0x60] sm:$0xff] %vm8846, %v8405
        %8861 = vst.msk [vmem:[#allocation5 + $0x68] sm:$0xff] %vm8846, %v8406
        %8862 = vst.msk [vmem:[#allocation5 + $0x70] sm:$0xff] %vm8846, %v8407
        %8863 = vst.msk [vmem:[#allocation5 + $0x78] sm:$0xff] %vm8846, %v8408
        %8864 = vst.msk [vmem:[#allocation5 + $0x80] sm:$0xff] %vm8846, %v8409
        %v8865 = vld [vmem:[#allocation5 + $0x7] sm:$0xff]
        %v8866 = vld [vmem:[#allocation5 + $0xf] sm:$0xff]
        %v8867 = vld [vmem:[#allocation5 + $0x17] sm:$0xff]
        %v8868 = vld [vmem:[#allocation5 + $0x1f] sm:$0xff]
        %v8869 = vld [vmem:[#allocation5 + $0x27] sm:$0xff]
        %v8870 = vld [vmem:[#allocation5 + $0x2f] sm:$0xff]
        %v8871 = vld [vmem:[#allocation5 + $0x37] sm:$0xff]
        %v8872 = vld [vmem:[#allocation5 + $0x3f] sm:$0xff]
        %v8873 = vld [vmem:[#allocation5 + $0x47] sm:$0xff]
        %v8874 = vld [vmem:[#allocation5 + $0x4f] sm:$0xff]
        %v8875 = vld [vmem:[#allocation5 + $0x57] sm:$0xff]
        %v8876 = vld [vmem:[#allocation5 + $0x5f] sm:$0xff]
        %v8877 = vld [vmem:[#allocation5 + $0x67] sm:$0xff]
        %v8878 = vld [vmem:[#allocation5 + $0x6f] sm:$0xff]
        %v8879 = vld [vmem:[#allocation5 + $0x77] sm:$0xff]
        %v8880 = vld [vmem:[#allocation5 + $0x7f] sm:$0xff]
        %v8881 = vadd.f32 %v8612, %v8865
        %v8882 = vadd.f32 %v8613, %v8866
        %v8883 = vadd.f32 %v8614, %v8867
        %v8884 = vadd.f32 %v8615, %v8868
        %v8885 = vadd.f32 %v8616, %v8869
        %v8886 = vadd.f32 %v8617, %v8870
        %v8887 = vadd.f32 %v8618, %v8871
        %v8888 = vadd.f32 %v8619, %v8872
        %v8889 = vadd.f32 %v8620, %v8873
        %v8890 = vadd.f32 %v8621, %v8874
        %v8891 = vadd.f32 %v8622, %v8875
        %v8892 = vadd.f32 %v8623, %v8876
        %v8893 = vadd.f32 %v8624, %v8877
        %v8894 = vadd.f32 %v8625, %v8878
        %v8895 = vadd.f32 %v8626, %v8879
        %v8896 = vadd.f32 %v8627, %v8880
        %8897 = vst.msk [vmem:[#allocation5 + $0x8] sm:$0xff] %vm8846, %v8830
        %8898 = vst.msk [vmem:[#allocation5 + $0x10] sm:$0xff] %vm8846, %v8831
        %8899 = vst.msk [vmem:[#allocation5 + $0x18] sm:$0xff] %vm8846, %v8832
        %8900 = vst.msk [vmem:[#allocation5 + $0x20] sm:$0xff] %vm8846, %v8833
        %8901 = vst.msk [vmem:[#allocation5 + $0x28] sm:$0xff] %vm8846, %v8834
        %8902 = vst.msk [vmem:[#allocation5 + $0x30] sm:$0xff] %vm8846, %v8835
        %8903 = vst.msk [vmem:[#allocation5 + $0x38] sm:$0xff] %vm8846, %v8836
        %8904 = vst.msk [vmem:[#allocation5 + $0x40] sm:$0xff] %vm8846, %v8837
        %8905 = vst.msk [vmem:[#allocation5 + $0x48] sm:$0xff] %vm8846, %v8838
        %8906 = vst.msk [vmem:[#allocation5 + $0x50] sm:$0xff] %vm8846, %v8839
        %8907 = vst.msk [vmem:[#allocation5 + $0x58] sm:$0xff] %vm8846, %v8840
        %8908 = vst.msk [vmem:[#allocation5 + $0x60] sm:$0xff] %vm8846, %v8841
        %8909 = vst.msk [vmem:[#allocation5 + $0x68] sm:$0xff] %vm8846, %v8842
        %8910 = vst.msk [vmem:[#allocation5 + $0x70] sm:$0xff] %vm8846, %v8843
        %8911 = vst.msk [vmem:[#allocation5 + $0x78] sm:$0xff] %vm8846, %v8844
        %8912 = vst.msk [vmem:[#allocation5 + $0x80] sm:$0xff] %vm8846, %v8845
        %v8913 = vld [vmem:[#allocation5 + $0x9] sm:$0xff]
        %v8914 = vld [vmem:[#allocation5 + $0x11] sm:$0xff]
        %v8915 = vld [vmem:[#allocation5 + $0x19] sm:$0xff]
        %v8916 = vld [vmem:[#allocation5 + $0x21] sm:$0xff]
        %v8917 = vld [vmem:[#allocation5 + $0x29] sm:$0xff]
        %v8918 = vld [vmem:[#allocation5 + $0x31] sm:$0xff]
        %v8919 = vld [vmem:[#allocation5 + $0x39] sm:$0xff]
        %v8920 = vld [vmem:[#allocation5 + $0x41] sm:$0xff]
        %v8921 = vld [vmem:[#allocation5 + $0x49] sm:$0xff]
        %v8922 = vld [vmem:[#allocation5 + $0x51] sm:$0xff]
        %v8923 = vld [vmem:[#allocation5 + $0x59] sm:$0xff]
        %v8924 = vld [vmem:[#allocation5 + $0x61] sm:$0xff]
        %v8925 = vld [vmem:[#allocation5 + $0x69] sm:$0xff]
        %v8926 = vld [vmem:[#allocation5 + $0x71] sm:$0xff]
        %v8927 = vld [vmem:[#allocation5 + $0x79] sm:$0xff]
        %v8928 = vld [vmem:[#allocation5 + $0x81] sm:$0xff]
        %v8929 = vadd.f32 %v8881, %v8913
        %v8930 = vadd.f32 %v8882, %v8914
        %v8931 = vadd.f32 %v8883, %v8915
        %v8932 = vadd.f32 %v8884, %v8916
        %v8933 = vadd.f32 %v8885, %v8917
        %v8934 = vadd.f32 %v8886, %v8918
        %v8935 = vadd.f32 %v8887, %v8919
        %v8936 = vadd.f32 %v8888, %v8920
        %v8937 = vadd.f32 %v8889, %v8921
        %v8938 = vadd.f32 %v8890, %v8922
        %v8939 = vadd.f32 %v8891, %v8923
        %v8940 = vadd.f32 %v8892, %v8924
        %v8941 = vadd.f32 %v8893, %v8925
        %v8942 = vadd.f32 %v8894, %v8926
        %v8943 = vadd.f32 %v8895, %v8927
        %v8944 = vadd.f32 %v8896, %v8928
        %v8945 = vld [vmem:[%s4] sm:$0x1]
        %v8947 = vperm.slane %v8945, 0
        %v8949 = vadd.f32 %v8929, %v8947
        %v8950 = vadd.f32 %v8930, %v8947
        %v8951 = vadd.f32 %v8931, %v8947
        %v8952 = vadd.f32 %v8932, %v8947
        %v8953 = vadd.f32 %v8933, %v8947
        %v8954 = vadd.f32 %v8934, %v8947
        %v8955 = vadd.f32 %v8935, %v8947
        %v8956 = vadd.f32 %v8936, %v8947
        %v8957 = vadd.f32 %v8937, %v8947
        %v8958 = vadd.f32 %v8938, %v8947
        %v8959 = vadd.f32 %v8939, %v8947
        %v8960 = vadd.f32 %v8940, %v8947
        %v8961 = vadd.f32 %v8941, %v8947
        %v8962 = vadd.f32 %v8942, %v8947
        %v8963 = vadd.f32 %v8943, %v8947
        %v8964 = vadd.f32 %v8944, %v8947
        %vm8965 = vcmp.ge.f32.partialorder %v8949, 0.0
        %vm8966 = vcmp.ge.f32.partialorder %v8950, 0.0
        %vm8967 = vcmp.ge.f32.partialorder %v8951, 0.0
        %vm8968 = vcmp.ge.f32.partialorder %v8952, 0.0
        %vm8969 = vcmp.ge.f32.partialorder %v8953, 0.0
        %vm8970 = vcmp.ge.f32.partialorder %v8954, 0.0
        %vm8971 = vcmp.ge.f32.partialorder %v8955, 0.0
        %vm8972 = vcmp.ge.f32.partialorder %v8956, 0.0
        %vm8973 = vcmp.ge.f32.partialorder %v8957, 0.0
        %vm8974 = vcmp.ge.f32.partialorder %v8958, 0.0
        %vm8975 = vcmp.ge.f32.partialorder %v8959, 0.0
        %vm8976 = vcmp.ge.f32.partialorder %v8960, 0.0
        %vm8977 = vcmp.ge.f32.partialorder %v8961, 0.0
        %vm8978 = vcmp.ge.f32.partialorder %v8962, 0.0
        %vm8979 = vcmp.ge.f32.partialorder %v8963, 0.0
        %vm8980 = vcmp.ge.f32.partialorder %v8964, 0.0
        %v8981 = vmul.f32 %v8949, 0.1
        %v8982 = vmul.f32 %v8950, 0.1
        %v8983 = vmul.f32 %v8951, 0.1
        %v8984 = vmul.f32 %v8952, 0.1
        %v8985 = vmul.f32 %v8953, 0.1
        %v8986 = vmul.f32 %v8954, 0.1
        %v8987 = vmul.f32 %v8955, 0.1
        %v8988 = vmul.f32 %v8956, 0.1
        %v8989 = vmul.f32 %v8957, 0.1
        %v8990 = vmul.f32 %v8958, 0.1
        %v8991 = vmul.f32 %v8959, 0.1
        %v8992 = vmul.f32 %v8960, 0.1
        %v8993 = vmul.f32 %v8961, 0.1
        %v8994 = vmul.f32 %v8962, 0.1
        %v8995 = vmul.f32 %v8963, 0.1
        %v8996 = vmul.f32 %v8964, 0.1
        %v8997 = vsel %vm8965, %v8949, %v8981
        %v8998 = vsel %vm8966, %v8950, %v8982
        %v8999 = vsel %vm8967, %v8951, %v8983
        %v9000 = vsel %vm8968, %v8952, %v8984
        %v9001 = vsel %vm8969, %v8953, %v8985
        %v9002 = vsel %vm8970, %v8954, %v8986
        %v9003 = vsel %vm8971, %v8955, %v8987
        %v9004 = vsel %vm8972, %v8956, %v8988
        %v9005 = vsel %vm8973, %v8957, %v8989
        %v9006 = vsel %vm8974, %v8958, %v8990
        %v9007 = vsel %vm8975, %v8959, %v8991
        %v9008 = vsel %vm8976, %v8960, %v8992
        %v9009 = vsel %vm8977, %v8961, %v8993
        %v9010 = vsel %vm8978, %v8962, %v8994
        %v9011 = vsel %vm8979, %v8963, %v8995
        %v9012 = vsel %vm8980, %v8964, %v8996
        %v9013 = vsel %vm6655, %v8997, 0.0
        %v9014 = vsel %vm6656, %v8998, 0.0
        %v9015 = vsel %vm6657, %v8999, 0.0
        %v9016 = vsel %vm6658, %v9000, 0.0
        %v9017 = vsel %vm6659, %v9001, 0.0
        %v9018 = vsel %vm6660, %v9002, 0.0
        %v9019 = vsel %vm6661, %v9003, 0.0
        %v9020 = vsel %vm6662, %v9004, 0.0
        %v9021 = vsel %vm6663, %v9005, 0.0
        %v9022 = vsel %vm6664, %v9006, 0.0
        %v9023 = vsel %vm6665, %v9007, 0.0
        %v9024 = vsel %vm6666, %v9008, 0.0
        %v9025 = vsel %vm6667, %v9009, 0.0
        %v9026 = vsel %vm6668, %v9010, 0.0
        %v9027 = vsel %vm6669, %v9011, 0.0
        %v9028 = vsel %vm6670, %v9012, 0.0
        %9029 = vst.msk [vmem:[#allocation3] sm:$0xff] %vm8846, 0.0
        %9030 = vst.msk [vmem:[#allocation3 + $0x8] sm:$0xff] %vm8846, 0.0
        %9031 = vst.msk [vmem:[#allocation3 + $0x10] sm:$0xff] %vm8846, %v9013
        %9032 = vst.msk [vmem:[#allocation3 + $0x18] sm:$0xff] %vm8846, %v9014
        %9033 = vst.msk [vmem:[#allocation3 + $0x20] sm:$0xff] %vm8846, %v9015
        %9034 = vst.msk [vmem:[#allocation3 + $0x28] sm:$0xff] %vm8846, %v9016
        %9035 = vst.msk [vmem:[#allocation3 + $0x30] sm:$0xff] %vm8846, %v9017
        %9036 = vst.msk [vmem:[#allocation3 + $0x38] sm:$0xff] %vm8846, %v9018
        %9037 = vst.msk [vmem:[#allocation3 + $0x40] sm:$0xff] %vm8846, %v9019
        %9038 = vst.msk [vmem:[#allocation3 + $0x48] sm:$0xff] %vm8846, %v9020
        %9039 = vst.msk [vmem:[#allocation3 + $0x50] sm:$0xff] %vm8846, %v9021
        %9040 = vst.msk [vmem:[#allocation3 + $0x58] sm:$0xff] %vm8846, %v9022
        %9041 = vst.msk [vmem:[#allocation3 + $0x60] sm:$0xff] %vm8846, %v9023
        %9042 = vst.msk [vmem:[#allocation3 + $0x68] sm:$0xff] %vm8846, %v9024
        %9043 = vst.msk [vmem:[#allocation3 + $0x70] sm:$0xff] %vm8846, %v9025
        %9044 = vst.msk [vmem:[#allocation3 + $0x78] sm:$0xff] %vm8846, %v9026
        %9045 = vst.msk [vmem:[#allocation3 + $0x80] sm:$0xff] %vm8846, %v9027
        %9046 = vst.msk [vmem:[#allocation3 + $0x88] sm:$0xff] %vm8846, %v9028
        %9047 = vst.msk [vmem:[#allocation3 + $0x90] sm:$0xff] %vm8846, 0.0
        %9048 = vst.msk [vmem:[#allocation3 + $0x98] sm:$0xff] %vm8846, 0.0
        %v9049 = vld [vmem:[#allocation3] sm:$0xff]
        %v9050 = vld [vmem:[#allocation3 + $0x8] sm:$0xff]
        %v9051 = vld [vmem:[#allocation3 + $0x10] sm:$0xff]
        %v9052 = vld [vmem:[#allocation3 + $0x18] sm:$0xff]
        %v9053 = vld [vmem:[#allocation3 + $0x20] sm:$0xff]
        %v9054 = vld [vmem:[#allocation3 + $0x28] sm:$0xff]
        %v9055 = vld [vmem:[#allocation3 + $0x30] sm:$0xff]
        %v9056 = vld [vmem:[#allocation3 + $0x38] sm:$0xff]
        %v9057 = vld [vmem:[#allocation3 + $0x40] sm:$0xff]
        %v9058 = vld [vmem:[#allocation3 + $0x48] sm:$0xff]
        %v9059 = vld [vmem:[#allocation3 + $0x50] sm:$0xff]
        %v9060 = vld [vmem:[#allocation3 + $0x58] sm:$0xff]
        %v9061 = vld [vmem:[#allocation3 + $0x60] sm:$0xff]
        %v9062 = vld [vmem:[#allocation3 + $0x68] sm:$0xff]
        %v9063 = vld [vmem:[#allocation3 + $0x70] sm:$0xff]
        %v9064 = vld [vmem:[#allocation3 + $0x78] sm:$0xff]
        %v9065 = vld [vmem:[%s5] sm:$0x1]
        %v9067 = vperm.slane %v9065, 0
        %v9069 = vmul.f32 %v9049, %v9067
        %v9070 = vmul.f32 %v9051, %v9067
        %v9071 = vmul.f32 %v9053, %v9067
        %v9072 = vmul.f32 %v9055, %v9067
        %v9073 = vmul.f32 %v9057, %v9067
        %v9074 = vmul.f32 %v9059, %v9067
        %v9075 = vmul.f32 %v9061, %v9067
        %v9076 = vmul.f32 %v9063, %v9067
        %v9077 = vsel %vm8846, %v9069, 0.0
        %9078 = vadd.xlane.f32.xlu0 %v9077
        %v9079 = vpop.xlane.xlu0 %9078
        %v9080 = vsel %vm8846, %v9070, 0.0
        %9081 = vadd.xlane.f32.xlu0 %v9080
        %v9082 = vpop.xlane.xlu0 %9081
        %v9083 = vsel %vm8846, %v9071, 0.0
        %9084 = vadd.xlane.f32.xlu0 %v9083
        %v9085 = vpop.xlane.xlu0 %9084
        %v9086 = vsel %vm8846, %v9072, 0.0
        %9087 = vadd.xlane.f32.xlu0 %v9086
        %v9088 = vpop.xlane.xlu0 %9087
        %v9089 = vsel %vm8846, %v9073, 0.0
        %9090 = vadd.xlane.f32.xlu0 %v9089
        %v9091 = vpop.xlane.xlu0 %9090
        %v9092 = vsel %vm8846, %v9074, 0.0
        %9093 = vadd.xlane.f32.xlu0 %v9092
        %v9094 = vpop.xlane.xlu0 %9093
        %v9095 = vsel %vm8846, %v9075, 0.0
        %9096 = vadd.xlane.f32.xlu0 %v9095
        %v9097 = vpop.xlane.xlu0 %9096
        %v9098 = vsel %vm8846, %v9076, 0.0
        %9099 = vadd.xlane.f32.xlu0 %v9098
        %v9100 = vpop.xlane.xlu0 %9099
        %v9101 = vadd.f32 %v9079, 0.0
        %v9102 = vadd.f32 %v9082, 0.0
        %v9103 = vadd.f32 %v9085, 0.0
        %v9104 = vadd.f32 %v9088, 0.0
        %v9105 = vadd.f32 %v9091, 0.0
        %v9106 = vadd.f32 %v9094, 0.0
        %v9107 = vadd.f32 %v9097, 0.0
        %v9108 = vadd.f32 %v9100, 0.0
        %s9109 = scalar_lea.vmem %s5, 1
        %v9110 = vld [vmem:[%s9109] sm:$0x1]
        %v9112 = vperm.slane %v9110, 0
        %v9114 = vmul.f32 %v9049, %v9112
        %v9115 = vmul.f32 %v9050, %v9112
        %v9116 = vmul.f32 %v9051, %v9112
        %v9117 = vmul.f32 %v9052, %v9112
        %v9118 = vmul.f32 %v9053, %v9112
        %v9119 = vmul.f32 %v9054, %v9112
        %v9120 = vmul.f32 %v9055, %v9112
        %v9121 = vmul.f32 %v9056, %v9112
        %v9122 = vmul.f32 %v9057, %v9112
        %v9123 = vmul.f32 %v9058, %v9112
        %v9124 = vmul.f32 %v9059, %v9112
        %v9125 = vmul.f32 %v9060, %v9112
        %v9126 = vmul.f32 %v9061, %v9112
        %v9127 = vmul.f32 %v9062, %v9112
        %v9128 = vmul.f32 %v9063, %v9112
        %v9129 = vmul.f32 %v9064, %v9112
        %v9130 = vsel %vm8846, %v9114, 0.0
        %9131 = vadd.xlane.f32.xlu0 %v9130
        %v9132 = vpop.xlane.xlu0 %9131
        %v9133 = vsel %vm8846, %v9115, 0.0
        %9134 = vadd.xlane.f32.xlu0 %v9133
        %v9135 = vpop.xlane.xlu0 %9134
        %v9136 = vsel %vm8846, %v9116, 0.0
        %9137 = vadd.xlane.f32.xlu0 %v9136
        %v9138 = vpop.xlane.xlu0 %9137
        %v9139 = vsel %vm8846, %v9117, 0.0
        %9140 = vadd.xlane.f32.xlu0 %v9139
        %v9141 = vpop.xlane.xlu0 %9140
        %v9142 = vsel %vm8846, %v9118, 0.0
        %9143 = vadd.xlane.f32.xlu0 %v9142
        %v9144 = vpop.xlane.xlu0 %9143
        %v9145 = vsel %vm8846, %v9119, 0.0
        %9146 = vadd.xlane.f32.xlu0 %v9145
        %v9147 = vpop.xlane.xlu0 %9146
        %v9148 = vsel %vm8846, %v9120, 0.0
        %9149 = vadd.xlane.f32.xlu0 %v9148
        %v9150 = vpop.xlane.xlu0 %9149
        %v9151 = vsel %vm8846, %v9121, 0.0
        %9152 = vadd.xlane.f32.xlu0 %v9151
        %v9153 = vpop.xlane.xlu0 %9152
        %v9154 = vsel %vm8846, %v9122, 0.0
        %9155 = vadd.xlane.f32.xlu0 %v9154
        %v9156 = vpop.xlane.xlu0 %9155
        %v9157 = vsel %vm8846, %v9123, 0.0
        %9158 = vadd.xlane.f32.xlu0 %v9157
        %v9159 = vpop.xlane.xlu0 %9158
        %v9160 = vsel %vm8846, %v9124, 0.0
        %9161 = vadd.xlane.f32.xlu0 %v9160
        %v9162 = vpop.xlane.xlu0 %9161
        %v9163 = vsel %vm8846, %v9125, 0.0
        %9164 = vadd.xlane.f32.xlu0 %v9163
        %v9165 = vpop.xlane.xlu0 %9164
        %v9166 = vsel %vm8846, %v9126, 0.0
        %9167 = vadd.xlane.f32.xlu0 %v9166
        %v9168 = vpop.xlane.xlu0 %9167
        %v9169 = vsel %vm8846, %v9127, 0.0
        %9170 = vadd.xlane.f32.xlu0 %v9169
        %v9171 = vpop.xlane.xlu0 %9170
        %v9172 = vsel %vm8846, %v9128, 0.0
        %9173 = vadd.xlane.f32.xlu0 %v9172
        %v9174 = vpop.xlane.xlu0 %9173
        %v9175 = vsel %vm8846, %v9129, 0.0
        %9176 = vadd.xlane.f32.xlu0 %v9175
        %v9177 = vpop.xlane.xlu0 %9176
        %v9178 = vadd.f32 %v9132, 0.0
        %v9179 = vadd.f32 %v9135, 0.0
        %v9180 = vadd.f32 %v9138, 0.0
        %v9181 = vadd.f32 %v9141, 0.0
        %v9182 = vadd.f32 %v9144, 0.0
        %v9183 = vadd.f32 %v9147, 0.0
        %v9184 = vadd.f32 %v9150, 0.0
        %v9185 = vadd.f32 %v9153, 0.0
        %v9186 = vadd.f32 %v9156, 0.0
        %v9187 = vadd.f32 %v9159, 0.0
        %v9188 = vadd.f32 %v9162, 0.0
        %v9189 = vadd.f32 %v9165, 0.0
        %v9190 = vadd.f32 %v9168, 0.0
        %v9191 = vadd.f32 %v9171, 0.0
        %v9192 = vadd.f32 %v9174, 0.0
        %v9193 = vadd.f32 %v9177, 0.0
        %s9194 = scalar_lea.vmem %s5, 2
        %v9195 = vld [vmem:[%s9194] sm:$0x1]
        %v9197 = vperm.slane %v9195, 0
        %v9199 = vmul.f32 %v9049, %v9197
        %v9200 = vmul.f32 %v9050, %v9197
        %v9201 = vmul.f32 %v9051, %v9197
        %v9202 = vmul.f32 %v9052, %v9197
        %v9203 = vmul.f32 %v9053, %v9197
        %v9204 = vmul.f32 %v9054, %v9197
        %v9205 = vmul.f32 %v9055, %v9197
        %v9206 = vmul.f32 %v9056, %v9197
        %v9207 = vmul.f32 %v9057, %v9197
        %v9208 = vmul.f32 %v9058, %v9197
        %v9209 = vmul.f32 %v9059, %v9197
        %v9210 = vmul.f32 %v9060, %v9197
        %v9211 = vmul.f32 %v9061, %v9197
        %v9212 = vmul.f32 %v9062, %v9197
        %v9213 = vmul.f32 %v9063, %v9197
        %v9214 = vmul.f32 %v9064, %v9197
        %v9215 = vsel %vm8846, %v9199, 0.0
        %9216 = vadd.xlane.f32.xlu0 %v9215
        %v9217 = vpop.xlane.xlu0 %9216
        %v9218 = vsel %vm8846, %v9200, 0.0
        %9219 = vadd.xlane.f32.xlu0 %v9218
        %v9220 = vpop.xlane.xlu0 %9219
        %v9221 = vsel %vm8846, %v9201, 0.0
        %9222 = vadd.xlane.f32.xlu0 %v9221
        %v9223 = vpop.xlane.xlu0 %9222
        %v9224 = vsel %vm8846, %v9202, 0.0
        %9225 = vadd.xlane.f32.xlu0 %v9224
        %v9226 = vpop.xlane.xlu0 %9225
        %v9227 = vsel %vm8846, %v9203, 0.0
        %9228 = vadd.xlane.f32.xlu0 %v9227
        %v9229 = vpop.xlane.xlu0 %9228
        %v9230 = vsel %vm8846, %v9204, 0.0
        %9231 = vadd.xlane.f32.xlu0 %v9230
        %v9232 = vpop.xlane.xlu0 %9231
        %v9233 = vsel %vm8846, %v9205, 0.0
        %9234 = vadd.xlane.f32.xlu0 %v9233
        %v9235 = vpop.xlane.xlu0 %9234
        %v9236 = vsel %vm8846, %v9206, 0.0
        %9237 = vadd.xlane.f32.xlu0 %v9236
        %v9238 = vpop.xlane.xlu0 %9237
        %v9239 = vsel %vm8846, %v9207, 0.0
        %9240 = vadd.xlane.f32.xlu0 %v9239
        %v9241 = vpop.xlane.xlu0 %9240
        %v9242 = vsel %vm8846, %v9208, 0.0
        %9243 = vadd.xlane.f32.xlu0 %v9242
        %v9244 = vpop.xlane.xlu0 %9243
        %v9245 = vsel %vm8846, %v9209, 0.0
        %9246 = vadd.xlane.f32.xlu0 %v9245
        %v9247 = vpop.xlane.xlu0 %9246
        %v9248 = vsel %vm8846, %v9210, 0.0
        %9249 = vadd.xlane.f32.xlu0 %v9248
        %v9250 = vpop.xlane.xlu0 %9249
        %v9251 = vsel %vm8846, %v9211, 0.0
        %9252 = vadd.xlane.f32.xlu0 %v9251
        %v9253 = vpop.xlane.xlu0 %9252
        %v9254 = vsel %vm8846, %v9212, 0.0
        %9255 = vadd.xlane.f32.xlu0 %v9254
        %v9256 = vpop.xlane.xlu0 %9255
        %v9257 = vsel %vm8846, %v9213, 0.0
        %9258 = vadd.xlane.f32.xlu0 %v9257
        %v9259 = vpop.xlane.xlu0 %9258
        %v9260 = vsel %vm8846, %v9214, 0.0
        %9261 = vadd.xlane.f32.xlu0 %v9260
        %v9262 = vpop.xlane.xlu0 %9261
        %v9263 = vadd.f32 %v9217, 0.0
        %v9264 = vadd.f32 %v9220, 0.0
        %v9265 = vadd.f32 %v9223, 0.0
        %v9266 = vadd.f32 %v9226, 0.0
        %v9267 = vadd.f32 %v9229, 0.0
        %v9268 = vadd.f32 %v9232, 0.0
        %v9269 = vadd.f32 %v9235, 0.0
        %v9270 = vadd.f32 %v9238, 0.0
        %v9271 = vadd.f32 %v9241, 0.0
        %v9272 = vadd.f32 %v9244, 0.0
        %v9273 = vadd.f32 %v9247, 0.0
        %v9274 = vadd.f32 %v9250, 0.0
        %v9275 = vadd.f32 %v9253, 0.0
        %v9276 = vadd.f32 %v9256, 0.0
        %v9277 = vadd.f32 %v9259, 0.0
        %v9278 = vadd.f32 %v9262, 0.0
        %v9279 = vld [vmem:[#allocation3 + $0x80] sm:$0xff]
        %v9280 = vld [vmem:[#allocation3 + $0x88] sm:$0xff]
        %s9281 = scalar_lea.vmem %s5, 3
        %v9282 = vld [vmem:[%s9281] sm:$0x1]
        %v9284 = vperm.slane %v9282, 0
        %v9286 = vmul.f32 %v9051, %v9284
        %v9287 = vmul.f32 %v9053, %v9284
        %v9288 = vmul.f32 %v9055, %v9284
        %v9289 = vmul.f32 %v9057, %v9284
        %v9290 = vmul.f32 %v9059, %v9284
        %v9291 = vmul.f32 %v9061, %v9284
        %v9292 = vmul.f32 %v9063, %v9284
        %v9293 = vmul.f32 %v9279, %v9284
        %v9294 = vsel %vm8846, %v9286, 0.0
        %9295 = vadd.xlane.f32.xlu0 %v9294
        %v9296 = vpop.xlane.xlu0 %9295
        %v9297 = vsel %vm8846, %v9287, 0.0
        %9298 = vadd.xlane.f32.xlu0 %v9297
        %v9299 = vpop.xlane.xlu0 %9298
        %v9300 = vsel %vm8846, %v9288, 0.0
        %9301 = vadd.xlane.f32.xlu0 %v9300
        %v9302 = vpop.xlane.xlu0 %9301
        %v9303 = vsel %vm8846, %v9289, 0.0
        %9304 = vadd.xlane.f32.xlu0 %v9303
        %v9305 = vpop.xlane.xlu0 %9304
        %v9306 = vsel %vm8846, %v9290, 0.0
        %9307 = vadd.xlane.f32.xlu0 %v9306
        %v9308 = vpop.xlane.xlu0 %9307
        %v9309 = vsel %vm8846, %v9291, 0.0
        %9310 = vadd.xlane.f32.xlu0 %v9309
        %v9311 = vpop.xlane.xlu0 %9310
        %v9312 = vsel %vm8846, %v9292, 0.0
        %9313 = vadd.xlane.f32.xlu0 %v9312
        %v9314 = vpop.xlane.xlu0 %9313
        %v9315 = vsel %vm8846, %v9293, 0.0
        %9316 = vadd.xlane.f32.xlu0 %v9315
        %v9317 = vpop.xlane.xlu0 %9316
        %v9318 = vadd.f32 %v9101, %v9296
        %v9319 = vadd.f32 %v9102, %v9299
        %v9320 = vadd.f32 %v9103, %v9302
        %v9321 = vadd.f32 %v9104, %v9305
        %v9322 = vadd.f32 %v9105, %v9308
        %v9323 = vadd.f32 %v9106, %v9311
        %v9324 = vadd.f32 %v9107, %v9314
        %v9325 = vadd.f32 %v9108, %v9317
        %s9326 = scalar_lea.vmem %s5, 4
        %v9327 = vld [vmem:[%s9326] sm:$0x1]
        %v9329 = vperm.slane %v9327, 0
        %v9331 = vmul.f32 %v9051, %v9329
        %v9332 = vmul.f32 %v9052, %v9329
        %v9333 = vmul.f32 %v9053, %v9329
        %v9334 = vmul.f32 %v9054, %v9329
        %v9335 = vmul.f32 %v9055, %v9329
        %v9336 = vmul.f32 %v9056, %v9329
        %v9337 = vmul.f32 %v9057, %v9329
        %v9338 = vmul.f32 %v9058, %v9329
        %v9339 = vmul.f32 %v9059, %v9329
        %v9340 = vmul.f32 %v9060, %v9329
        %v9341 = vmul.f32 %v9061, %v9329
        %v9342 = vmul.f32 %v9062, %v9329
        %v9343 = vmul.f32 %v9063, %v9329
        %v9344 = vmul.f32 %v9064, %v9329
        %v9345 = vmul.f32 %v9279, %v9329
        %v9346 = vmul.f32 %v9280, %v9329
        %v9347 = vsel %vm8846, %v9331, 0.0
        %9348 = vadd.xlane.f32.xlu0 %v9347
        %v9349 = vpop.xlane.xlu0 %9348
        %v9350 = vsel %vm8846, %v9332, 0.0
        %9351 = vadd.xlane.f32.xlu0 %v9350
        %v9352 = vpop.xlane.xlu0 %9351
        %v9353 = vsel %vm8846, %v9333, 0.0
        %9354 = vadd.xlane.f32.xlu0 %v9353
        %v9355 = vpop.xlane.xlu0 %9354
        %v9356 = vsel %vm8846, %v9334, 0.0
        %9357 = vadd.xlane.f32.xlu0 %v9356
        %v9358 = vpop.xlane.xlu0 %9357
        %v9359 = vsel %vm8846, %v9335, 0.0
        %9360 = vadd.xlane.f32.xlu0 %v9359
        %v9361 = vpop.xlane.xlu0 %9360
        %v9362 = vsel %vm8846, %v9336, 0.0
        %9363 = vadd.xlane.f32.xlu0 %v9362
        %v9364 = vpop.xlane.xlu0 %9363
        %v9365 = vsel %vm8846, %v9337, 0.0
        %9366 = vadd.xlane.f32.xlu0 %v9365
        %v9367 = vpop.xlane.xlu0 %9366
        %v9368 = vsel %vm8846, %v9338, 0.0
        %9369 = vadd.xlane.f32.xlu0 %v9368
        %v9370 = vpop.xlane.xlu0 %9369
        %v9371 = vsel %vm8846, %v9339, 0.0
        %9372 = vadd.xlane.f32.xlu0 %v9371
        %v9373 = vpop.xlane.xlu0 %9372
        %v9374 = vsel %vm8846, %v9340, 0.0
        %9375 = vadd.xlane.f32.xlu0 %v9374
        %v9376 = vpop.xlane.xlu0 %9375
        %v9377 = vsel %vm8846, %v9341, 0.0
        %9378 = vadd.xlane.f32.xlu0 %v9377
        %v9379 = vpop.xlane.xlu0 %9378
        %v9380 = vsel %vm8846, %v9342, 0.0
        %9381 = vadd.xlane.f32.xlu0 %v9380
        %v9382 = vpop.xlane.xlu0 %9381
        %v9383 = vsel %vm8846, %v9343, 0.0
        %9384 = vadd.xlane.f32.xlu0 %v9383
        %v9385 = vpop.xlane.xlu0 %9384
        %v9386 = vsel %vm8846, %v9344, 0.0
        %9387 = vadd.xlane.f32.xlu0 %v9386
        %v9388 = vpop.xlane.xlu0 %9387
        %v9389 = vsel %vm8846, %v9345, 0.0
        %9390 = vadd.xlane.f32.xlu0 %v9389
        %v9391 = vpop.xlane.xlu0 %9390
        %v9392 = vsel %vm8846, %v9346, 0.0
        %9393 = vadd.xlane.f32.xlu0 %v9392
        %v9394 = vpop.xlane.xlu0 %9393
        %v9395 = vadd.f32 %v9178, %v9349
        %v9396 = vadd.f32 %v9179, %v9352
        %v9397 = vadd.f32 %v9180, %v9355
        %v9398 = vadd.f32 %v9181, %v9358
        %v9399 = vadd.f32 %v9182, %v9361
        %v9400 = vadd.f32 %v9183, %v9364
        %v9401 = vadd.f32 %v9184, %v9367
        %v9402 = vadd.f32 %v9185, %v9370
        %v9403 = vadd.f32 %v9186, %v9373
        %v9404 = vadd.f32 %v9187, %v9376
        %v9405 = vadd.f32 %v9188, %v9379
        %v9406 = vadd.f32 %v9189, %v9382
        %v9407 = vadd.f32 %v9190, %v9385
        %v9408 = vadd.f32 %v9191, %v9388
        %v9409 = vadd.f32 %v9192, %v9391
        %v9410 = vadd.f32 %v9193, %v9394
        %s9411 = scalar_lea.vmem %s5, 5
        %v9412 = vld [vmem:[%s9411] sm:$0x1]
        %v9414 = vperm.slane %v9412, 0
        %v9416 = vmul.f32 %v9051, %v9414
        %v9417 = vmul.f32 %v9052, %v9414
        %v9418 = vmul.f32 %v9053, %v9414
        %v9419 = vmul.f32 %v9054, %v9414
        %v9420 = vmul.f32 %v9055, %v9414
        %v9421 = vmul.f32 %v9056, %v9414
        %v9422 = vmul.f32 %v9057, %v9414
        %v9423 = vmul.f32 %v9058, %v9414
        %v9424 = vmul.f32 %v9059, %v9414
        %v9425 = vmul.f32 %v9060, %v9414
        %v9426 = vmul.f32 %v9061, %v9414
        %v9427 = vmul.f32 %v9062, %v9414
        %v9428 = vmul.f32 %v9063, %v9414
        %v9429 = vmul.f32 %v9064, %v9414
        %v9430 = vmul.f32 %v9279, %v9414
        %v9431 = vmul.f32 %v9280, %v9414
        %v9432 = vsel %vm8846, %v9416, 0.0
        %9433 = vadd.xlane.f32.xlu0 %v9432
        %v9434 = vpop.xlane.xlu0 %9433
        %v9435 = vsel %vm8846, %v9417, 0.0
        %9436 = vadd.xlane.f32.xlu0 %v9435
        %v9437 = vpop.xlane.xlu0 %9436
        %v9438 = vsel %vm8846, %v9418, 0.0
        %9439 = vadd.xlane.f32.xlu0 %v9438
        %v9440 = vpop.xlane.xlu0 %9439
        %v9441 = vsel %vm8846, %v9419, 0.0
        %9442 = vadd.xlane.f32.xlu0 %v9441
        %v9443 = vpop.xlane.xlu0 %9442
        %v9444 = vsel %vm8846, %v9420, 0.0
        %9445 = vadd.xlane.f32.xlu0 %v9444
        %v9446 = vpop.xlane.xlu0 %9445
        %v9447 = vsel %vm8846, %v9421, 0.0
        %9448 = vadd.xlane.f32.xlu0 %v9447
        %v9449 = vpop.xlane.xlu0 %9448
        %v9450 = vsel %vm8846, %v9422, 0.0
        %9451 = vadd.xlane.f32.xlu0 %v9450
        %v9452 = vpop.xlane.xlu0 %9451
        %v9453 = vsel %vm8846, %v9423, 0.0
        %9454 = vadd.xlane.f32.xlu0 %v9453
        %v9455 = vpop.xlane.xlu0 %9454
        %v9456 = vsel %vm8846, %v9424, 0.0
        %9457 = vadd.xlane.f32.xlu0 %v9456
        %v9458 = vpop.xlane.xlu0 %9457
        %v9459 = vsel %vm8846, %v9425, 0.0
        %9460 = vadd.xlane.f32.xlu0 %v9459
        %v9461 = vpop.xlane.xlu0 %9460
        %v9462 = vsel %vm8846, %v9426, 0.0
        %9463 = vadd.xlane.f32.xlu0 %v9462
        %v9464 = vpop.xlane.xlu0 %9463
        %v9465 = vsel %vm8846, %v9427, 0.0
        %9466 = vadd.xlane.f32.xlu0 %v9465
        %v9467 = vpop.xlane.xlu0 %9466
        %v9468 = vsel %vm8846, %v9428, 0.0
        %9469 = vadd.xlane.f32.xlu0 %v9468
        %v9470 = vpop.xlane.xlu0 %9469
        %v9471 = vsel %vm8846, %v9429, 0.0
        %9472 = vadd.xlane.f32.xlu0 %v9471
        %v9473 = vpop.xlane.xlu0 %9472
        %v9474 = vsel %vm8846, %v9430, 0.0
        %9475 = vadd.xlane.f32.xlu0 %v9474
        %v9476 = vpop.xlane.xlu0 %9475
        %v9477 = vsel %vm8846, %v9431, 0.0
        %9478 = vadd.xlane.f32.xlu0 %v9477
        %v9479 = vpop.xlane.xlu0 %9478
        %v9480 = vadd.f32 %v9263, %v9434
        %v9481 = vadd.f32 %v9264, %v9437
        %v9482 = vadd.f32 %v9265, %v9440
        %v9483 = vadd.f32 %v9266, %v9443
        %v9484 = vadd.f32 %v9267, %v9446
        %v9485 = vadd.f32 %v9268, %v9449
        %v9486 = vadd.f32 %v9269, %v9452
        %v9487 = vadd.f32 %v9270, %v9455
        %v9488 = vadd.f32 %v9271, %v9458
        %v9489 = vadd.f32 %v9272, %v9461
        %v9490 = vadd.f32 %v9273, %v9464
        %v9491 = vadd.f32 %v9274, %v9467
        %v9492 = vadd.f32 %v9275, %v9470
        %v9493 = vadd.f32 %v9276, %v9473
        %v9494 = vadd.f32 %v9277, %v9476
        %v9495 = vadd.f32 %v9278, %v9479
        %v9496 = vld [vmem:[#allocation3 + $0x90] sm:$0xff]
        %v9497 = vld [vmem:[#allocation3 + $0x98] sm:$0xff]
        %s9498 = scalar_lea.vmem %s5, 6
        %v9499 = vld [vmem:[%s9498] sm:$0x1]
        %v9501 = vperm.slane %v9499, 0
        %v9503 = vmul.f32 %v9053, %v9501
        %v9504 = vmul.f32 %v9055, %v9501
        %v9505 = vmul.f32 %v9057, %v9501
        %v9506 = vmul.f32 %v9059, %v9501
        %v9507 = vmul.f32 %v9061, %v9501
        %v9508 = vmul.f32 %v9063, %v9501
        %v9509 = vmul.f32 %v9279, %v9501
        %v9510 = vmul.f32 %v9496, %v9501
        %v9511 = vsel %vm8846, %v9503, 0.0
        %9512 = vadd.xlane.f32.xlu0 %v9511
        %v9513 = vpop.xlane.xlu0 %9512
        %v9514 = vsel %vm8846, %v9504, 0.0
        %9515 = vadd.xlane.f32.xlu0 %v9514
        %v9516 = vpop.xlane.xlu0 %9515
        %v9517 = vsel %vm8846, %v9505, 0.0
        %9518 = vadd.xlane.f32.xlu0 %v9517
        %v9519 = vpop.xlane.xlu0 %9518
        %v9520 = vsel %vm8846, %v9506, 0.0
        %9521 = vadd.xlane.f32.xlu0 %v9520
        %v9522 = vpop.xlane.xlu0 %9521
        %v9523 = vsel %vm8846, %v9507, 0.0
        %9524 = vadd.xlane.f32.xlu0 %v9523
        %v9525 = vpop.xlane.xlu0 %9524
        %v9526 = vsel %vm8846, %v9508, 0.0
        %9527 = vadd.xlane.f32.xlu0 %v9526
        %v9528 = vpop.xlane.xlu0 %9527
        %v9529 = vsel %vm8846, %v9509, 0.0
        %9530 = vadd.xlane.f32.xlu0 %v9529
        %v9531 = vpop.xlane.xlu0 %9530
        %v9532 = vsel %vm8846, %v9510, 0.0
        %9533 = vadd.xlane.f32.xlu0 %v9532
        %v9534 = vpop.xlane.xlu0 %9533
        %v9535 = vadd.f32 %v9318, %v9513
        %v9536 = vadd.f32 %v9319, %v9516
        %v9537 = vadd.f32 %v9320, %v9519
        %v9538 = vadd.f32 %v9321, %v9522
        %v9539 = vadd.f32 %v9322, %v9525
        %v9540 = vadd.f32 %v9323, %v9528
        %v9541 = vadd.f32 %v9324, %v9531
        %v9542 = vadd.f32 %v9325, %v9534
        %s9543 = scalar_lea.vmem %s5, 7
        %v9544 = vld [vmem:[%s9543] sm:$0x1]
        %v9546 = vperm.slane %v9544, 0
        %v9548 = vmul.f32 %v9053, %v9546
        %v9549 = vmul.f32 %v9054, %v9546
        %v9550 = vmul.f32 %v9055, %v9546
        %v9551 = vmul.f32 %v9056, %v9546
        %v9552 = vmul.f32 %v9057, %v9546
        %v9553 = vmul.f32 %v9058, %v9546
        %v9554 = vmul.f32 %v9059, %v9546
        %v9555 = vmul.f32 %v9060, %v9546
        %v9556 = vmul.f32 %v9061, %v9546
        %v9557 = vmul.f32 %v9062, %v9546
        %v9558 = vmul.f32 %v9063, %v9546
        %v9559 = vmul.f32 %v9064, %v9546
        %v9560 = vmul.f32 %v9279, %v9546
        %v9561 = vmul.f32 %v9280, %v9546
        %v9562 = vmul.f32 %v9496, %v9546
        %v9563 = vmul.f32 %v9497, %v9546
        %v9564 = vsel %vm8846, %v9548, 0.0
        %9565 = vadd.xlane.f32.xlu0 %v9564
        %v9566 = vpop.xlane.xlu0 %9565
        %v9567 = vsel %vm8846, %v9549, 0.0
        %9568 = vadd.xlane.f32.xlu0 %v9567
        %v9569 = vpop.xlane.xlu0 %9568
        %v9570 = vsel %vm8846, %v9550, 0.0
        %9571 = vadd.xlane.f32.xlu0 %v9570
        %v9572 = vpop.xlane.xlu0 %9571
        %v9573 = vsel %vm8846, %v9551, 0.0
        %9574 = vadd.xlane.f32.xlu0 %v9573
        %v9575 = vpop.xlane.xlu0 %9574
        %v9576 = vsel %vm8846, %v9552, 0.0
        %9577 = vadd.xlane.f32.xlu0 %v9576
        %v9578 = vpop.xlane.xlu0 %9577
        %v9579 = vsel %vm8846, %v9553, 0.0
        %9580 = vadd.xlane.f32.xlu0 %v9579
        %v9581 = vpop.xlane.xlu0 %9580
        %v9582 = vsel %vm8846, %v9554, 0.0
        %9583 = vadd.xlane.f32.xlu0 %v9582
        %v9584 = vpop.xlane.xlu0 %9583
        %v9585 = vsel %vm8846, %v9555, 0.0
        %9586 = vadd.xlane.f32.xlu0 %v9585
        %v9587 = vpop.xlane.xlu0 %9586
        %v9588 = vsel %vm8846, %v9556, 0.0
        %9589 = vadd.xlane.f32.xlu0 %v9588
        %v9590 = vpop.xlane.xlu0 %9589
        %v9591 = vsel %vm8846, %v9557, 0.0
        %9592 = vadd.xlane.f32.xlu0 %v9591
        %v9593 = vpop.xlane.xlu0 %9592
        %v9594 = vsel %vm8846, %v9558, 0.0
        %9595 = vadd.xlane.f32.xlu0 %v9594
        %v9596 = vpop.xlane.xlu0 %9595
        %v9597 = vsel %vm8846, %v9559, 0.0
        %9598 = vadd.xlane.f32.xlu0 %v9597
        %v9599 = vpop.xlane.xlu0 %9598
        %v9600 = vsel %vm8846, %v9560, 0.0
        %9601 = vadd.xlane.f32.xlu0 %v9600
        %v9602 = vpop.xlane.xlu0 %9601
        %v9603 = vsel %vm8846, %v9561, 0.0
        %9604 = vadd.xlane.f32.xlu0 %v9603
        %v9605 = vpop.xlane.xlu0 %9604
        %v9606 = vsel %vm8846, %v9562, 0.0
        %9607 = vadd.xlane.f32.xlu0 %v9606
        %v9608 = vpop.xlane.xlu0 %9607
        %v9609 = vsel %vm8846, %v9563, 0.0
        %9610 = vadd.xlane.f32.xlu0 %v9609
        %v9611 = vpop.xlane.xlu0 %9610
        %v9612 = vadd.f32 %v9395, %v9566
        %v9613 = vadd.f32 %v9396, %v9569
        %v9614 = vadd.f32 %v9397, %v9572
        %v9615 = vadd.f32 %v9398, %v9575
        %v9616 = vadd.f32 %v9399, %v9578
        %v9617 = vadd.f32 %v9400, %v9581
        %v9618 = vadd.f32 %v9401, %v9584
        %v9619 = vadd.f32 %v9402, %v9587
        %v9620 = vadd.f32 %v9403, %v9590
        %v9621 = vadd.f32 %v9404, %v9593
        %v9622 = vadd.f32 %v9405, %v9596
        %v9623 = vadd.f32 %v9406, %v9599
        %v9624 = vadd.f32 %v9407, %v9602
        %v9625 = vadd.f32 %v9408, %v9605
        %v9626 = vadd.f32 %v9409, %v9608
        %v9627 = vadd.f32 %v9410, %v9611
        %s9628 = scalar_lea.vmem %s5, 8
        %v9629 = vld [vmem:[%s9628] sm:$0x1]
        %v9631 = vperm.slane %v9629, 0
        %v9633 = vmul.f32 %v9053, %v9631
        %v9634 = vmul.f32 %v9054, %v9631
        %v9635 = vmul.f32 %v9055, %v9631
        %v9636 = vmul.f32 %v9056, %v9631
        %v9637 = vmul.f32 %v9057, %v9631
        %v9638 = vmul.f32 %v9058, %v9631
        %v9639 = vmul.f32 %v9059, %v9631
        %v9640 = vmul.f32 %v9060, %v9631
        %v9641 = vmul.f32 %v9061, %v9631
        %v9642 = vmul.f32 %v9062, %v9631
        %v9643 = vmul.f32 %v9063, %v9631
        %v9644 = vmul.f32 %v9064, %v9631
        %v9645 = vmul.f32 %v9279, %v9631
        %v9646 = vmul.f32 %v9280, %v9631
        %v9647 = vmul.f32 %v9496, %v9631
        %v9648 = vmul.f32 %v9497, %v9631
        %v9649 = vsel %vm8846, %v9633, 0.0
        %9650 = vadd.xlane.f32.xlu0 %v9649
        %v9651 = vpop.xlane.xlu0 %9650
        %v9652 = vsel %vm8846, %v9634, 0.0
        %9653 = vadd.xlane.f32.xlu0 %v9652
        %v9654 = vpop.xlane.xlu0 %9653
        %v9655 = vsel %vm8846, %v9635, 0.0
        %9656 = vadd.xlane.f32.xlu0 %v9655
        %v9657 = vpop.xlane.xlu0 %9656
        %v9658 = vsel %vm8846, %v9636, 0.0
        %9659 = vadd.xlane.f32.xlu0 %v9658
        %v9660 = vpop.xlane.xlu0 %9659
        %v9661 = vsel %vm8846, %v9637, 0.0
        %9662 = vadd.xlane.f32.xlu0 %v9661
        %v9663 = vpop.xlane.xlu0 %9662
        %v9664 = vsel %vm8846, %v9638, 0.0
        %9665 = vadd.xlane.f32.xlu0 %v9664
        %v9666 = vpop.xlane.xlu0 %9665
        %v9667 = vsel %vm8846, %v9639, 0.0
        %9668 = vadd.xlane.f32.xlu0 %v9667
        %v9669 = vpop.xlane.xlu0 %9668
        %v9670 = vsel %vm8846, %v9640, 0.0
        %9671 = vadd.xlane.f32.xlu0 %v9670
        %v9672 = vpop.xlane.xlu0 %9671
        %v9673 = vsel %vm8846, %v9641, 0.0
        %9674 = vadd.xlane.f32.xlu0 %v9673
        %v9675 = vpop.xlane.xlu0 %9674
        %v9676 = vsel %vm8846, %v9642, 0.0
        %9677 = vadd.xlane.f32.xlu0 %v9676
        %v9678 = vpop.xlane.xlu0 %9677
        %v9679 = vsel %vm8846, %v9643, 0.0
        %9680 = vadd.xlane.f32.xlu0 %v9679
        %v9681 = vpop.xlane.xlu0 %9680
        %v9682 = vsel %vm8846, %v9644, 0.0
        %9683 = vadd.xlane.f32.xlu0 %v9682
        %v9684 = vpop.xlane.xlu0 %9683
        %v9685 = vsel %vm8846, %v9645, 0.0
        %9686 = vadd.xlane.f32.xlu0 %v9685
        %v9687 = vpop.xlane.xlu0 %9686
        %v9688 = vsel %vm8846, %v9646, 0.0
        %9689 = vadd.xlane.f32.xlu0 %v9688
        %v9690 = vpop.xlane.xlu0 %9689
        %v9691 = vsel %vm8846, %v9647, 0.0
        %9692 = vadd.xlane.f32.xlu0 %v9691
        %v9693 = vpop.xlane.xlu0 %9692
        %v9694 = vsel %vm8846, %v9648, 0.0
        %9695 = vadd.xlane.f32.xlu0 %v9694
        %v9696 = vpop.xlane.xlu0 %9695
        %v9697 = vadd.f32 %v9480, %v9651
        %v9698 = vadd.f32 %v9481, %v9654
        %v9699 = vadd.f32 %v9482, %v9657
        %v9700 = vadd.f32 %v9483, %v9660
        %v9701 = vadd.f32 %v9484, %v9663
        %v9702 = vadd.f32 %v9485, %v9666
        %v9703 = vadd.f32 %v9486, %v9669
        %v9704 = vadd.f32 %v9487, %v9672
        %v9705 = vadd.f32 %v9488, %v9675
        %v9706 = vadd.f32 %v9489, %v9678
        %v9707 = vadd.f32 %v9490, %v9681
        %v9708 = vadd.f32 %v9491, %v9684
        %v9709 = vadd.f32 %v9492, %v9687
        %v9710 = vadd.f32 %v9493, %v9690
        %v9711 = vadd.f32 %v9494, %v9693
        %v9712 = vadd.f32 %v9495, %v9696
        %v9729 = vrot.slane %v9612, 1
        %v9730 = vrot.slane %v9613, 1
        %v9731 = vsel %vm6374, %v9729, %v9730
        %v9732 = vrot.slane %v9614, 1
        %v9733 = vrot.slane %v9615, 1
        %v9734 = vsel %vm6374, %v9732, %v9733
        %v9735 = vrot.slane %v9616, 1
        %v9736 = vrot.slane %v9617, 1
        %v9737 = vsel %vm6374, %v9735, %v9736
        %v9738 = vrot.slane %v9618, 1
        %v9739 = vrot.slane %v9619, 1
        %v9740 = vsel %vm6374, %v9738, %v9739
        %v9741 = vrot.slane %v9620, 1
        %v9742 = vrot.slane %v9621, 1
        %v9743 = vsel %vm6374, %v9741, %v9742
        %v9744 = vrot.slane %v9622, 1
        %v9745 = vrot.slane %v9623, 1
        %v9746 = vsel %vm6374, %v9744, %v9745
        %v9747 = vrot.slane %v9624, 1
        %v9748 = vrot.slane %v9625, 1
        %v9749 = vsel %vm6374, %v9747, %v9748
        %v9750 = vrot.slane %v9626, 1
        %v9751 = vrot.slane %v9627, 1
        %v9752 = vsel %vm6374, %v9750, %v9751
        %v9761 = vadd.f32 %v9535, %v9731
        %v9762 = vadd.f32 %v9536, %v9734
        %v9763 = vadd.f32 %v9537, %v9737
        %v9764 = vadd.f32 %v9538, %v9740
        %v9765 = vadd.f32 %v9539, %v9743
        %v9766 = vadd.f32 %v9540, %v9746
        %v9767 = vadd.f32 %v9541, %v9749
        %v9768 = vadd.f32 %v9542, %v9752
        %vm9785 = vcmask 1045504
        %v9786 = vrot.slane %v9697, 2
        %v9787 = vrot.slane %v9698, 2
        %v9788 = vsel %vm9785, %v9786, %v9787
        %v9789 = vrot.slane %v9699, 2
        %v9790 = vrot.slane %v9700, 2
        %v9791 = vsel %vm9785, %v9789, %v9790
        %v9792 = vrot.slane %v9701, 2
        %v9793 = vrot.slane %v9702, 2
        %v9794 = vsel %vm9785, %v9792, %v9793
        %v9795 = vrot.slane %v9703, 2
        %v9796 = vrot.slane %v9704, 2
        %v9797 = vsel %vm9785, %v9795, %v9796
        %v9798 = vrot.slane %v9705, 2
        %v9799 = vrot.slane %v9706, 2
        %v9800 = vsel %vm9785, %v9798, %v9799
        %v9801 = vrot.slane %v9707, 2
        %v9802 = vrot.slane %v9708, 2
        %v9803 = vsel %vm9785, %v9801, %v9802
        %v9804 = vrot.slane %v9709, 2
        %v9805 = vrot.slane %v9710, 2
        %v9806 = vsel %vm9785, %v9804, %v9805
        %v9807 = vrot.slane %v9711, 2
        %v9808 = vrot.slane %v9712, 2
        %v9809 = vsel %vm9785, %v9807, %v9808
        %v9818 = vadd.f32 %v9761, %v9788
        %v9819 = vadd.f32 %v9762, %v9791
        %v9820 = vadd.f32 %v9763, %v9794
        %v9821 = vadd.f32 %v9764, %v9797
        %v9822 = vadd.f32 %v9765, %v9800
        %v9823 = vadd.f32 %v9766, %v9803
        %v9824 = vadd.f32 %v9767, %v9806
        %v9825 = vadd.f32 %v9768, %v9809
        %v9826 = vld [vmem:[#allocation6] sm:$0x1]
        %v9828 = vperm.slane %v9826, 0
        %9829 = vset.pattern.permute.xlu0 0
        %9830 = vperm.xlu0 %9829, %v9828
        %v9831 = vpop.permute.xlu0 %9830
        %v9833 = vadd.f32 %v9818, %v9831
        %v9834 = vadd.f32 %v9819, %v9831
        %v9835 = vadd.f32 %v9820, %v9831
        %v9836 = vadd.f32 %v9821, %v9831
        %v9837 = vadd.f32 %v9822, %v9831
        %v9838 = vadd.f32 %v9823, %v9831
        %v9839 = vadd.f32 %v9824, %v9831
        %v9840 = vadd.f32 %v9825, %v9831
        %9849 = vset.pattern.permute.xlu0 0
        %9850 = vperm.xlu0 %9849, %v9833
        %v9851 = vpop.permute.xlu0 %9850
        %9852 = vset.pattern.permute.xlu0 0
        %9853 = vperm.xlu0 %9852, %v9834
        %v9854 = vpop.permute.xlu0 %9853
        %9855 = vset.pattern.permute.xlu0 0
        %9856 = vperm.xlu0 %9855, %v9835
        %v9857 = vpop.permute.xlu0 %9856
        %9858 = vset.pattern.permute.xlu0 0
        %9859 = vperm.xlu0 %9858, %v9836
        %v9860 = vpop.permute.xlu0 %9859
        %9861 = vset.pattern.permute.xlu0 0
        %9862 = vperm.xlu0 %9861, %v9837
        %v9863 = vpop.permute.xlu0 %9862
        %9864 = vset.pattern.permute.xlu0 0
        %9865 = vperm.xlu0 %9864, %v9838
        %v9866 = vpop.permute.xlu0 %9865
        %9867 = vset.pattern.permute.xlu0 0
        %9868 = vperm.xlu0 %9867, %v9839
        %v9869 = vpop.permute.xlu0 %9868
        %9870 = vset.pattern.permute.xlu0 0
        %9871 = vperm.xlu0 %9870, %v9840
        %v9872 = vpop.permute.xlu0 %9871
        %v9873 = vlaneseq
        %v9874 = vand.u32 %v9873, 127
        %v9875 = vperm.slane %v9851, %v9874
        %v9876 = vperm.slane %v9854, %v9874
        %v9877 = vperm.slane %v9857, %v9874
        %v9878 = vperm.slane %v9860, %v9874
        %v9879 = vperm.slane %v9863, %v9874
        %v9880 = vperm.slane %v9866, %v9874
        %v9881 = vperm.slane %v9869, %v9874
        %v9882 = vperm.slane %v9872, %v9874
        %vm9883 = vcmask 1041409
        %v9884 = vsel %vm9883, %v9876, %v9875
        %vm9885 = vcmask 1042434
        %v9886 = vsel %vm9885, %v9877, %v9884
        %vm9887 = vcmask 1043459
        %v9888 = vsel %vm9887, %v9878, %v9886
        %vm9889 = vcmask 1044484
        %v9890 = vsel %vm9889, %v9879, %v9888
        %vm9891 = vcmask 1045509
        %v9892 = vsel %vm9891, %v9880, %v9890
        %vm9893 = vcmask 1046534
        %v9894 = vsel %vm9893, %v9881, %v9892
        %vm9895 = vcmask 1047559
        %v9896 = vsel %vm9895, %v9882, %v9894
        %vm9898 = vcmask 64512
        %9899 = vst.msk [vmem:[%s273] sm:$0xff] %vm9898, %v9896
        %s9900 = sand.u32 %s183, 1
        %s9901 = scalar_lea.sflag [#allocation8], %s9900
        %s9902 = sand.u32 %s183, 1
        %s9903 = smul.addr %s9902, 8
        %s9904 = scalar_lea.vmem [#allocation7], %s9903
        // Predicated region
        $region49: #{tpu_custom_call.1} parent=47 // pred_check
          %p9905 = pneg %p193
        $region50: #{tpu_custom_call.1} parent=47 // pred_check_branch
          %9907 = sbr.rel (%p9905) target = $region52
        $region51: #{tpu_custom_call.1} parent=47 // pred_region
          %9909 = vsyncadd %s9901, 0
          %s9910 = smul.addr %s23, 8
          %s9911 = scalar_lea.hbm %s7, %s9910
          %s9913 = sshll.u32 %s9904, 4
          %s9914 = int_to_ptr.vmem [resolvable:$true] %s9913
          %s9915 = sshll.u32 %s9911, 4
          %s9916 = int_to_ptr.hbm [resolvable:$true] %s9915
          %9918 = dma.vmem_to_hbm [thread:$0]  %s9914, 128, %s9916, %s9901
        $region52: #{tpu_custom_call.1} parent=47 // pred_fallthru
          _
      $region48: #{tpu_custom_call.1} parent=5 // pred_fallthru
        _
      %p9919 = scmp.le.s32.totalorder 2, %s18
      // Predicated region
      $region53: #{tpu_custom_call.1} parent=5 // pred_check
        %p9920 = pneg %p9919
      $region54: #{tpu_custom_call.1} parent=5 // pred_check_branch
        %9922 = sbr.rel (%p9920) target = $region56
      $region55: #{tpu_custom_call.1} parent=5 // pred_region
        %s9923 = ssub.s32 %s18, 2
        // Predicated region
        $region57: #{tpu_custom_call.1} parent=55 // pred_check
          %p9924 = pneg %p199
        $region58: #{tpu_custom_call.1} parent=55 // pred_check_branch
          %9926 = sbr.rel (%p9924) target = $region60
        $region59: #{tpu_custom_call.1} parent=55 // pred_region
          %s9927 = sand.u32 %s184, 1
          %s9928 = scalar_lea.sflag [#allocation8], %s9927
          %s9929 = sand.u32 %s184, 1
          %s9930 = smul.addr %s9929, 8
          %s9931 = scalar_lea.vmem [#allocation7], %s9930
          %9933 = dma.done %s9928, 128
        $region60: #{tpu_custom_call.1} parent=55 // pred_fallthru
          _
      $region56: #{tpu_custom_call.1} parent=5 // pred_fallthru
        _
    $region6: #{tpu_custom_call.1} parent=1 // loop_footer
      %s22 = sadd.s32 1, %s18
    $region7: #{tpu_custom_call.1} parent=1 // loop_footer_branch
      %17 = sbr.rel target = $region3
    $region8: #{tpu_custom_call.1} parent=1 // loop_exit
      _
    %9934 = vsyncpa [#allocation8], 1
    %s9935 = scalar_lea.sflag [#allocation8], 1
    %9936 = vsyncpa %s9935, 1

</llo_original>
